<compile_context>
chip_gen: v6e
topology: v6e:2x2x1
jax: 0.10.0
libtpu: 0.0.40
codegen_flags: <defaults>
</compile_context>

<pallas_src>
import numpy as np
import jax
import jax.numpy as jnp
from jax.experimental import pallas as pl
from jax.experimental.pallas import tpu as pltpu

BN_EPS = 1e-5

# (row offset into the zero-padded input, kernel tap) per output parity for
# ConvTranspose2d(kernel=4, stride=2, padding=1): output row 2m+q reads padded rows m+off.
_TAPS = {0: ((0, 3), (1, 1)), 1: ((1, 2), (2, 0))}


# ----------------------------- fused generator kernel -------------------------------

def _generator_kernel(z_ref, cv_ref, ew_ref, eb_ref,
                      w0_ref, g0_ref, b0_ref,
                      w1_ref, g1_ref, b1_ref,
                      w2_ref, g2_ref, b2_ref,
                      w3_ref, g3_ref, b3_ref,
                      w4_ref,
                      out_ref,
                      buf_a, buf_b, buf_c, buf_d):
    """Whole generator forward in one kernel; activations never leave VMEM."""
    B = z_ref.shape[0]

    def group_sum(row, c):
        # (1, G*c) -> (1, c) per-channel sum; G is a power of two -> halving tree.
        while row.shape[-1] > c:
            h = row.shape[-1] // 2
            row = row[:, :h] + row[:, h:]
        return row

    def group_tile(vec, reps):
        # (1, c) -> (1, reps*c) by doubling (reps is a power of two).
        out = vec
        while out.shape[-1] < reps * vec.shape[-1]:
            out = jnp.concatenate([out, out], axis=-1)
        return out

    def batchnorm_relu(ys, g_ref, bta_ref, count):
        # Train-mode BatchNorm2d (biased batch variance, centred two-pass, f32) + ReLU.
        c = g_ref.shape[-1]
        reps = ys[0].shape[-1] // c
        rowsum = ys[0].sum(axis=0, keepdims=True)
        for y in ys[1:]:
            rowsum = rowsum + y.sum(axis=0, keepdims=True)
        mean_c = group_sum(rowsum, c) * (1.0 / count)            # (1, c)
        mean = group_tile(mean_c, reps)
        sq = ((ys[0] - mean) ** 2).sum(axis=0, keepdims=True)
        for y in ys[1:]:
            sq = sq + ((y - mean) ** 2).sum(axis=0, keepdims=True)
        var_c = group_sum(sq, c) * (1.0 / count)
        scale_c = g_ref[...] * jax.lax.rsqrt(var_c + BN_EPS)
        shift_c = bta_ref[...] - mean_c * scale_c
        scale = group_tile(scale_c, reps)
        shift = group_tile(shift_c, reps)
        return [jnp.maximum(y * scale + shift, 0.0) for y in ys]

    def conv_transpose(buf, w_ref):
        # Stride-2 ConvT(k4, p1) as one matmul per batch element.
        #   A rows  = input image rows m (plus zero pad rows handled by the shift),
        #   A lanes = 3 vertically shifted copies of the padded image, (col, cin) flattened,
        #   result lanes = (row parity qy, out col, cout)  -> directly storable rows.
        hin = buf.shape[1] - 2
        ys = []
        for b in range(B):
            a = jnp.concatenate([buf[b, r:r + hin, :] for r in range(3)],
                                axis=-1).astype(jnp.bfloat16)         # (hin, 3*Win*Cin)
            ys.append(jnp.dot(a, w_ref[...], preferred_element_type=jnp.float32))
        return ys

    def scatter_rows(buf, ys):
        # Write normalised activations into the next block's zero-padded input buffer.
        # Buffer row 1+2m+qy is one full output image row (lane-dense, offset 0).
        hin = ys[0].shape[0]
        wrow = ys[0].shape[-1] // 2
        assert buf.shape[-1] == wrow
        buf[...] = jnp.zeros(buf.shape, buf.dtype)
        for b in range(B):
            for m in range(hin):
                for qy in range(2):
                    buf[b, 1 + 2 * m + qy:2 + 2 * m + qy, :] = \
                        ys[b][m:m + 1, qy * wrow:(qy + 1) * wrow]

    # ---- class embedding (Linear) + torch.cat([z, embed], dim=1) ----
    emb = jnp.dot(cv_ref[...].astype(jnp.bfloat16), ew_ref[...],
                  preferred_element_type=jnp.float32) + eb_ref[...]
    x0 = jnp.concatenate([z_ref[...], emb], axis=-1).astype(jnp.bfloat16)   # (B, 2*nz)

    # ---- block 0: ConvT(2nz -> 8ngf, k4 s1 p0) + BN + ReLU    1x1 -> 4x4 ----
    c0 = g0_ref.shape[-1]
    y0 = jnp.dot(x0, w0_ref[...], preferred_element_type=jnp.float32)       # (B, 16*c0)
    n0 = batchnorm_relu([y0], g0_ref, b0_ref, B * 16)[0]
    buf_a[...] = jnp.zeros(buf_a.shape, buf_a.dtype)
    for b in range(B):
        for ky in range(4):
            buf_a[b, 1 + ky:2 + ky, :] = n0[b:b + 1, ky * 4 * c0:(ky + 1) * 4 * c0]

    # ---- blocks 1-3: ConvT(k4 s2 p1) + BN + ReLU    4 -> 8 -> 16 -> 32 ----
    y1 = conv_transpose(buf_a, w1_ref)
    scatter_rows(buf_b, batchnorm_relu(y1, g1_ref, b1_ref, B * 8 * 8))
    y2 = conv_transpose(buf_b, w2_ref)
    scatter_rows(buf_c, batchnorm_relu(y2, g2_ref, b2_ref, B * 16 * 16))
    y3 = conv_transpose(buf_c, w3_ref)
    scatter_rows(buf_d, batchnorm_relu(y3, g3_ref, b3_ref, B * 32 * 32))

    # ---- block 4: ConvT(ngf -> nc, k4 s2 p1) + Tanh    32 -> 64 ----
    y4 = conv_transpose(buf_d, w4_ref)
    for b in range(B):
        out_ref[b, :, :] = jnp.tanh(y4[b])


# ----------------------------- parameters & prep ------------------------------------

def init_params(key, nz, ngf, nc, n_classes):
    """Raw parameters in the PyTorch layouts of the reference module."""
    ks = jax.random.split(key, 16)
    s = 0.02
    p = {"embed_w": jax.random.normal(ks[0], (nz, n_classes), jnp.float32) * s,
         "embed_b": jax.random.normal(ks[1], (nz,), jnp.float32) * s}
    chans = [(nz * 2, ngf * 8), (ngf * 8, ngf * 4), (ngf * 4, ngf * 2),
             (ngf * 2, ngf), (ngf, nc)]
    for i, (cin, cout) in enumerate(chans):
        p[f"w{i}"] = jax.random.normal(ks[2 + i], (cin, cout, 4, 4), jnp.float32) * s
    for i, c in enumerate([ngf * 8, ngf * 4, ngf * 2, ngf]):
        p[f"gamma{i}"] = 1.0 + 0.1 * jax.random.normal(ks[8 + i], (c,), jnp.float32)
        p[f"beta{i}"] = 0.1 * jax.random.normal(ks[12 + i], (c,), jnp.float32)
    return p


def _structured_convt_weight(w, win):
    """PyTorch ConvT(k4,s2,p1) weight (Cin,Cout,4,4) -> (3*win*Cin, 4*win*Cout) matmul weight.

    Rows: (vertical shift roff, input col s, cin); cols: (row parity qy, out col n, col parity
    qx, cout).  Encodes the 2x2 sub-pixel taps and horizontal zero-padding so the in-kernel
    conv is a single dense matmul over whole image rows (MXU is idle, the zeros are free)."""
    w = np.asarray(w, np.float32)
    cin, cout = w.shape[:2]
    mats = []
    for roff in range(3):
        m = np.zeros((win, cin, 2, win, 2, cout), np.float32)
        for qy in range(2):
            for ro, ky in _TAPS[qy]:
                if ro != roff:
                    continue
                for qx in range(2):
                    for co, kx in _TAPS[qx]:
                        for n in range(win):
                            s = n + co - 1                 # un-padded input column
                            if 0 <= s < win:
                                m[s, :, qy, n, qx, :] += w[:, :, ky, kx]
        mats.append(m.reshape(win * cin, 4 * win * cout))
    return np.concatenate(mats, axis=0)


def prepare_params(raw):
    """One-time re-layout of raw (PyTorch-layout) weights into kernel matmul form (outside jit)."""
    w0 = np.asarray(raw["w0"], np.float32)                               # (2nz, c0, 4, 4)
    prep = {
        "embed_wt": jnp.asarray(np.asarray(raw["embed_w"]).T, jnp.bfloat16),
        "embed_b": jnp.asarray(np.asarray(raw["embed_b"])[None, :], jnp.float32),
        "w0": jnp.asarray(np.transpose(w0, (0, 2, 3, 1)).reshape(w0.shape[0], -1),
                          jnp.bfloat16),                                 # (2nz, 16*c0)
    }
    for i, win in zip(range(1, 5), (4, 8, 16, 32)):
        prep[f"w{i}"] = jnp.asarray(_structured_convt_weight(raw[f"w{i}"], win),
                                    jnp.bfloat16)
    for i in range(4):
        prep[f"gamma{i}"] = jnp.asarray(np.asarray(raw[f"gamma{i}"])[None, :], jnp.float32)
        prep[f"beta{i}"] = jnp.asarray(np.asarray(raw[f"beta{i}"])[None, :], jnp.float32)
    return prep


# ----------------------------- generator forward ------------------------------------

@jax.jit
def generator_forward(params, z, class_vector):
    """z: (B, nz, 1, 1) NCHW, class_vector: (B, n_classes) -> (B, nc, 64, 64) NCHW."""
    B, nz = z.shape[0], z.shape[1]
    c0 = params["gamma0"].shape[-1]
    c1 = params["gamma1"].shape[-1]
    c2 = params["gamma2"].shape[-1]
    c3 = params["gamma3"].shape[-1]
    nc = params["w4"].shape[-1] // (4 * 32)

    out = pl.pallas_call(
        _generator_kernel,
        out_shape=jax.ShapeDtypeStruct((B, 32, 4 * 32 * nc), jnp.float32),
        scratch_shapes=[
            pltpu.VMEM((B, 6, 4 * c0), jnp.float32),      # padded 4x4   activations
            pltpu.VMEM((B, 10, 8 * c1), jnp.float32),     # padded 8x8
            pltpu.VMEM((B, 18, 16 * c2), jnp.float32),    # padded 16x16
            pltpu.VMEM((B, 34, 32 * c3), jnp.float32),    # padded 32x32
        ],
    )(z.reshape(B, nz).astype(jnp.float32),
      class_vector.astype(jnp.float32),
      params["embed_wt"], params["embed_b"],
      params["w0"], params["gamma0"], params["beta0"],
      params["w1"], params["gamma1"], params["beta1"],
      params["w2"], params["gamma2"], params["beta2"],
      params["w3"], params["gamma3"], params["beta3"],
      params["w4"])

    # (B, 32, (qy, col, c)) -> (B, nc, 64, 64): tiny final re-layout left to XLA.
    out = out.reshape(B, 32, 2, 64, nc)
    return jnp.transpose(out, (0, 4, 1, 2, 3)).reshape(B, nc, 64, 64)


# ----------------------------- pure-JAX reference (for verification) ----------------

def _convt_ref(x, w, stride, pad):
    """Direct transcription of nn.ConvTranspose2d(kernel=4, bias=False), NCHW float32."""
    B, _, H, W = x.shape
    cout = w.shape[1]
    hf, wf = (H - 1) * stride + 4, (W - 1) * stride + 4
    y = jnp.zeros((B, cout, hf, wf), jnp.float32)
    for ky in range(4):
        for kx in range(4):
            contrib = jnp.einsum("bihw,io->bohw", x, w[:, :, ky, kx],
                                 precision=jax.lax.Precision.HIGHEST)
            y = y.at[:, :, ky:ky + (H - 1) * stride + 1:stride,
                           kx:kx + (W - 1) * stride + 1:stride].add(contrib)
    ho, wo = hf - 2 * pad, wf - 2 * pad
    return y[:, :, pad:pad + ho, pad:pad + wo]


def _bn_ref(x, gamma, beta):
    mean = x.mean(axis=(0, 2, 3), keepdims=True)
    var = ((x - mean) ** 2).mean(axis=(0, 2, 3), keepdims=True)
    xn = (x - mean) * jax.lax.rsqrt(var + BN_EPS)
    return xn * gamma[None, :, None, None] + beta[None, :, None, None]


def reference_forward(raw, z, class_vector):
    """Pure-JAX float32 transcription of the PyTorch module (train-mode BatchNorm)."""
    B = z.shape[0]
    emb = class_vector @ raw["embed_w"].T + raw["embed_b"]
    x = jnp.concatenate([z.reshape(B, -1), emb], axis=1)[:, :, None, None]
    x = _convt_ref(x, raw["w0"], 1, 0)
    x = jax.nn.relu(_bn_ref(x, raw["gamma0"], raw["beta0"]))
    for i in range(1, 4):
        x = _convt_ref(x, raw[f"w{i}"], 2, 1)
        x = jax.nn.relu(_bn_ref(x, raw[f"gamma{i}"], raw[f"beta{i}"]))
    return jnp.tanh(_convt_ref(x, raw["w4"], 2, 1))


# ----------------------------- main --------------------------------------------------

if __name__ == "__main__":
    nz, ngf, nc, n_classes = 16, 8, 3, 10
    B = 2

    key = jax.random.PRNGKey(0)
    k_param, k_z, k_c = jax.random.split(key, 3)
    raw = init_params(k_param, nz, ngf, nc, n_classes)
    params = prepare_params(raw)                     # one-time weight re-layout, outside jit

    z = jax.random.normal(k_z, (B, nz, 1, 1), jnp.float32)
    class_vector = jax.random.normal(k_c, (B, n_classes), jnp.float32)

    out = jax.block_until_ready(generator_forward(params, z, class_vector))
    assert out.shape == (B, nc, 64, 64), out.shape
    assert bool(jnp.all(jnp.isfinite(out)))
    assert bool(jnp.all(jnp.abs(out) <= 1.0 + 1e-6))     # tanh range

    # Verify the sub-pixel tap table / structured-weight re-layout numerically against a
    # pure-JAX transcription of the PyTorch module (bf16 matmul inputs -> small tolerance).
    ref = jax.block_until_ready(jax.jit(reference_forward)(raw, z, class_vector))
    max_err = float(jnp.max(jnp.abs(out - ref)))
    mean_err = float(jnp.mean(jnp.abs(out - ref)))
    assert max_err < 0.1 and mean_err < 0.02, (max_err, mean_err)

    print("KERNEL_OK")
</pallas_src>

<mosaic_0001>
module attributes {stable_mosaic.version = 11 : i64} {
  func.func @_generator_kernel(%arg0: memref<2x16xf32, #tpu.memory_space<vmem>>, %arg1: memref<2x10xf32, #tpu.memory_space<vmem>>, %arg2: memref<10x16xbf16, #tpu.memory_space<vmem>>, %arg3: memref<1x16xf32, #tpu.memory_space<vmem>>, %arg4: memref<32x1024xbf16, #tpu.memory_space<vmem>>, %arg5: memref<1x64xf32, #tpu.memory_space<vmem>>, %arg6: memref<1x64xf32, #tpu.memory_space<vmem>>, %arg7: memref<768x512xbf16, #tpu.memory_space<vmem>>, %arg8: memref<1x32xf32, #tpu.memory_space<vmem>>, %arg9: memref<1x32xf32, #tpu.memory_space<vmem>>, %arg10: memref<768x512xbf16, #tpu.memory_space<vmem>>, %arg11: memref<1x16xf32, #tpu.memory_space<vmem>>, %arg12: memref<1x16xf32, #tpu.memory_space<vmem>>, %arg13: memref<768x512xbf16, #tpu.memory_space<vmem>>, %arg14: memref<1x8xf32, #tpu.memory_space<vmem>>, %arg15: memref<1x8xf32, #tpu.memory_space<vmem>>, %arg16: memref<768x384xbf16, #tpu.memory_space<vmem>>, %arg17: memref<2x32x384xf32, #tpu.memory_space<vmem>>, %arg18: memref<2x6x256xf32, #tpu.memory_space<vmem>>, %arg19: memref<2x10x256xf32, #tpu.memory_space<vmem>>, %arg20: memref<2x18x256xf32, #tpu.memory_space<vmem>>, %arg21: memref<2x34x256xf32, #tpu.memory_space<vmem>>) attributes {dimension_semantics = [], scalar_prefetch = 0 : i64, scratch_operands = 4 : i64, tpu.core_type = #tpu.core_type<tc>} {
    %c0 = arith.constant 0 : index
    %c0_0 = arith.constant 0 : index
    %0 = vector.load %arg1[%c0, %c0_0] : memref<2x10xf32, #tpu.memory_space<vmem>>, vector<2x10xf32>
    %1 = arith.truncf %0 : vector<2x10xf32> to vector<2x10xbf16>
    %c0_1 = arith.constant 0 : index
    %c0_2 = arith.constant 0 : index
    %2 = vector.load %arg2[%c0_1, %c0_2] : memref<10x16xbf16, #tpu.memory_space<vmem>>, vector<10x16xbf16>
    %cst = arith.constant dense<0.000000e+00> : vector<2x16xf32>
    %3 = tpu.matmul %1, %2, %cst {dimension_numbers = #tpu.dot_dimension_numbers<[1], [0], [0], [1], [0, 0, 1, 1], [], []>} : vector<2x10xbf16>, vector<10x16xbf16>, vector<2x16xf32> -> vector<2x16xf32>
    %c0_3 = arith.constant 0 : index
    %c0_4 = arith.constant 0 : index
    %4 = vector.load %arg3[%c0_3, %c0_4] : memref<1x16xf32, #tpu.memory_space<vmem>>, vector<1x16xf32>
    %5 = vector.broadcast %4 : vector<1x16xf32> to vector<2x16xf32>
    %6 = arith.addf %3, %5 : vector<2x16xf32>
    %c0_5 = arith.constant 0 : index
    %c0_6 = arith.constant 0 : index
    %7 = vector.load %arg0[%c0_5, %c0_6] : memref<2x16xf32, #tpu.memory_space<vmem>>, vector<2x16xf32>
    %8 = tpu.concatenate %7, %6 in 1 : vector<2x16xf32>, vector<2x16xf32> -> vector<2x32xf32>
    %9 = arith.truncf %8 : vector<2x32xf32> to vector<2x32xbf16>
    %c0_7 = arith.constant 0 : index
    %c0_8 = arith.constant 0 : index
    %10 = vector.load %arg4[%c0_7, %c0_8] : memref<32x1024xbf16, #tpu.memory_space<vmem>>, vector<32x1024xbf16>
    %cst_9 = arith.constant dense<0.000000e+00> : vector<2x1024xf32>
    %11 = tpu.matmul %9, %10, %cst_9 {dimension_numbers = #tpu.dot_dimension_numbers<[1], [0], [0], [1], [0, 0, 1, 1], [], []>} : vector<2x32xbf16>, vector<32x1024xbf16>, vector<2x1024xf32> -> vector<2x1024xf32>
    %cst_10 = arith.constant dense<0.000000e+00> : vector<1024xf32>
    %12 = vector.multi_reduction <add>, %11, %cst_10 [0] : vector<2x1024xf32> to vector<1024xf32>
    %13 = vector.shape_cast %12 : vector<1024xf32> to vector<1x1024xf32>
    %14 = vector.extract_strided_slice %13 {offsets = [0, 0], sizes = [1, 512], strides = [1, 1]} : vector<1x1024xf32> to vector<1x512xf32>
    %15 = vector.extract_strided_slice %13 {offsets = [0, 512], sizes = [1, 512], strides = [1, 1]} : vector<1x1024xf32> to vector<1x512xf32>
    %16 = arith.addf %14, %15 : vector<1x512xf32>
    %17 = vector.extract_strided_slice %16 {offsets = [0, 0], sizes = [1, 256], strides = [1, 1]} : vector<1x512xf32> to vector<1x256xf32>
    %18 = vector.extract_strided_slice %16 {offsets = [0, 256], sizes = [1, 256], strides = [1, 1]} : vector<1x512xf32> to vector<1x256xf32>
    %19 = arith.addf %17, %18 : vector<1x256xf32>
    %20 = vector.extract_strided_slice %19 {offsets = [0, 0], sizes = [1, 128], strides = [1, 1]} : vector<1x256xf32> to vector<1x128xf32>
    %21 = vector.extract_strided_slice %19 {offsets = [0, 128], sizes = [1, 128], strides = [1, 1]} : vector<1x256xf32> to vector<1x128xf32>
    %22 = arith.addf %20, %21 : vector<1x128xf32>
    %23 = vector.extract_strided_slice %22 {offsets = [0, 0], sizes = [1, 64], strides = [1, 1]} : vector<1x128xf32> to vector<1x64xf32>
    %24 = vector.extract_strided_slice %22 {offsets = [0, 64], sizes = [1, 64], strides = [1, 1]} : vector<1x128xf32> to vector<1x64xf32>
    %25 = arith.addf %23, %24 : vector<1x64xf32>
    %cst_11 = arith.constant 3.125000e-02 : f32
    %26 = vector.broadcast %cst_11 : f32 to vector<1x64xf32>
    %27 = arith.mulf %25, %26 : vector<1x64xf32>
    %28 = tpu.concatenate %27, %27 in 1 : vector<1x64xf32>, vector<1x64xf32> -> vector<1x128xf32>
    %29 = tpu.concatenate %28, %28 in 1 : vector<1x128xf32>, vector<1x128xf32> -> vector<1x256xf32>
    %30 = tpu.concatenate %29, %29 in 1 : vector<1x256xf32>, vector<1x256xf32> -> vector<1x512xf32>
    %31 = tpu.concatenate %30, %30 in 1 : vector<1x512xf32>, vector<1x512xf32> -> vector<1x1024xf32>
    %32 = vector.broadcast %31 : vector<1x1024xf32> to vector<2x1024xf32>
    %33 = arith.subf %11, %32 : vector<2x1024xf32>
    %34 = arith.mulf %33, %33 : vector<2x1024xf32>
    %cst_12 = arith.constant dense<0.000000e+00> : vector<1024xf32>
    %35 = vector.multi_reduction <add>, %34, %cst_12 [0] : vector<2x1024xf32> to vector<1024xf32>
    %36 = vector.shape_cast %35 : vector<1024xf32> to vector<1x1024xf32>
    %37 = vector.extract_strided_slice %36 {offsets = [0, 0], sizes = [1, 512], strides = [1, 1]} : vector<1x1024xf32> to vector<1x512xf32>
    %38 = vector.extract_strided_slice %36 {offsets = [0, 512], sizes = [1, 512], strides = [1, 1]} : vector<1x1024xf32> to vector<1x512xf32>
    %39 = arith.addf %37, %38 : vector<1x512xf32>
    %40 = vector.extract_strided_slice %39 {offsets = [0, 0], sizes = [1, 256], strides = [1, 1]} : vector<1x512xf32> to vector<1x256xf32>
    %41 = vector.extract_strided_slice %39 {offsets = [0, 256], sizes = [1, 256], strides = [1, 1]} : vector<1x512xf32> to vector<1x256xf32>
    %42 = arith.addf %40, %41 : vector<1x256xf32>
    %43 = vector.extract_strided_slice %42 {offsets = [0, 0], sizes = [1, 128], strides = [1, 1]} : vector<1x256xf32> to vector<1x128xf32>
    %44 = vector.extract_strided_slice %42 {offsets = [0, 128], sizes = [1, 128], strides = [1, 1]} : vector<1x256xf32> to vector<1x128xf32>
    %45 = arith.addf %43, %44 : vector<1x128xf32>
    %46 = vector.extract_strided_slice %45 {offsets = [0, 0], sizes = [1, 64], strides = [1, 1]} : vector<1x128xf32> to vector<1x64xf32>
    %47 = vector.extract_strided_slice %45 {offsets = [0, 64], sizes = [1, 64], strides = [1, 1]} : vector<1x128xf32> to vector<1x64xf32>
    %48 = arith.addf %46, %47 : vector<1x64xf32>
    %cst_13 = arith.constant 3.125000e-02 : f32
    %49 = vector.broadcast %cst_13 : f32 to vector<1x64xf32>
    %50 = arith.mulf %48, %49 : vector<1x64xf32>
    %c0_14 = arith.constant 0 : index
    %c0_15 = arith.constant 0 : index
    %51 = vector.load %arg5[%c0_14, %c0_15] : memref<1x64xf32, #tpu.memory_space<vmem>>, vector<1x64xf32>
    %cst_16 = arith.constant 9.99999974E-6 : f32
    %52 = vector.broadcast %cst_16 : f32 to vector<1x64xf32>
    %53 = arith.addf %50, %52 : vector<1x64xf32>
    %54 = math.rsqrt %53 : vector<1x64xf32>
    %55 = arith.mulf %51, %54 : vector<1x64xf32>
    %c0_17 = arith.constant 0 : index
    %c0_18 = arith.constant 0 : index
    %56 = vector.load %arg6[%c0_17, %c0_18] : memref<1x64xf32, #tpu.memory_space<vmem>>, vector<1x64xf32>
    %57 = arith.mulf %27, %55 : vector<1x64xf32>
    %58 = arith.subf %56, %57 : vector<1x64xf32>
    %59 = tpu.concatenate %55, %55 in 1 : vector<1x64xf32>, vector<1x64xf32> -> vector<1x128xf32>
    %60 = tpu.concatenate %59, %59 in 1 : vector<1x128xf32>, vector<1x128xf32> -> vector<1x256xf32>
    %61 = tpu.concatenate %60, %60 in 1 : vector<1x256xf32>, vector<1x256xf32> -> vector<1x512xf32>
    %62 = tpu.concatenate %61, %61 in 1 : vector<1x512xf32>, vector<1x512xf32> -> vector<1x1024xf32>
    %63 = tpu.concatenate %58, %58 in 1 : vector<1x64xf32>, vector<1x64xf32> -> vector<1x128xf32>
    %64 = tpu.concatenate %63, %63 in 1 : vector<1x128xf32>, vector<1x128xf32> -> vector<1x256xf32>
    %65 = tpu.concatenate %64, %64 in 1 : vector<1x256xf32>, vector<1x256xf32> -> vector<1x512xf32>
    %66 = tpu.concatenate %65, %65 in 1 : vector<1x512xf32>, vector<1x512xf32> -> vector<1x1024xf32>
    %67 = vector.broadcast %62 : vector<1x1024xf32> to vector<2x1024xf32>
    %68 = arith.mulf %11, %67 : vector<2x1024xf32>
    %69 = vector.broadcast %66 : vector<1x1024xf32> to vector<2x1024xf32>
    %70 = arith.addf %68, %69 : vector<2x1024xf32>
    %cst_19 = arith.constant 0.000000e+00 : f32
    %71 = vector.broadcast %cst_19 : f32 to vector<2x1024xf32>
    %72 = arith.maximumf %70, %71 : vector<2x1024xf32>
    %cst_20 = arith.constant 0.000000e+00 : f32
    %73 = vector.broadcast %cst_20 : f32 to vector<2x6x256xf32>
    %c0_21 = arith.constant 0 : index
    %c0_22 = arith.constant 0 : index
    %c0_23 = arith.constant 0 : index
    %74 = vector.load %arg18[%c0_21, %c0_22, %c0_23] : memref<2x6x256xf32, #tpu.memory_space<vmem>>, vector<2x6x256xf32>
    tpu.vector_store %arg18[%c0_21, %c0_22, %c0_23], %73 {strides = array<i32>} : memref<2x6x256xf32, #tpu.memory_space<vmem>>, vector<2x6x256xf32>,
    %75 = vector.extract_strided_slice %72 {offsets = [0, 0], sizes = [1, 256], strides = [1, 1]} : vector<2x1024xf32> to vector<1x256xf32>
    %c0_24 = arith.constant 0 : index
    %c1 = arith.constant 1 : index
    %c0_25 = arith.constant 0 : index
    %76 = vector.load %arg18[%c0_24, %c1, %c0_25] : memref<2x6x256xf32, #tpu.memory_space<vmem>>, vector<1x1x256xf32>
    %77 = vector.shape_cast %76 : vector<1x1x256xf32> to vector<1x256xf32>
    %78 = vector.shape_cast %75 : vector<1x256xf32> to vector<1x1x256xf32>
    tpu.vector_store %arg18[%c0_24, %c1, %c0_25], %78 {strides = array<i32>} : memref<2x6x256xf32, #tpu.memory_space<vmem>>, vector<1x1x256xf32>,
    %79 = vector.extract_strided_slice %72 {offsets = [0, 256], sizes = [1, 256], strides = [1, 1]} : vector<2x1024xf32> to vector<1x256xf32>
    %c0_26 = arith.constant 0 : index
    %c2 = arith.constant 2 : index
    %c0_27 = arith.constant 0 : index
    %80 = vector.load %arg18[%c0_26, %c2, %c0_27] : memref<2x6x256xf32, #tpu.memory_space<vmem>>, vector<1x1x256xf32>
    %81 = vector.shape_cast %80 : vector<1x1x256xf32> to vector<1x256xf32>
    %82 = vector.shape_cast %79 : vector<1x256xf32> to vector<1x1x256xf32>
    tpu.vector_store %arg18[%c0_26, %c2, %c0_27], %82 {strides = array<i32>} : memref<2x6x256xf32, #tpu.memory_space<vmem>>, vector<1x1x256xf32>,
    %83 = vector.extract_strided_slice %72 {offsets = [0, 512], sizes = [1, 256], strides = [1, 1]} : vector<2x1024xf32> to vector<1x256xf32>
    %c0_28 = arith.constant 0 : index
    %c3 = arith.constant 3 : index
    %c0_29 = arith.constant 0 : index
    %84 = vector.load %arg18[%c0_28, %c3, %c0_29] : memref<2x6x256xf32, #tpu.memory_space<vmem>>, vector<1x1x256xf32>
    %85 = vector.shape_cast %84 : vector<1x1x256xf32> to vector<1x256xf32>
    %86 = vector.shape_cast %83 : vector<1x256xf32> to vector<1x1x256xf32>
    tpu.vector_store %arg18[%c0_28, %c3, %c0_29], %86 {strides = array<i32>} : memref<2x6x256xf32, #tpu.memory_space<vmem>>, vector<1x1x256xf32>,
    %87 = vector.extract_strided_slice %72 {offsets = [0, 768], sizes = [1, 256], strides = [1, 1]} : vector<2x1024xf32> to vector<1x256xf32>
    %c0_30 = arith.constant 0 : index
    %c4 = arith.constant 4 : index
    %c0_31 = arith.constant 0 : index
    %88 = vector.load %arg18[%c0_30, %c4, %c0_31] : memref<2x6x256xf32, #tpu.memory_space<vmem>>, vector<1x1x256xf32>
    %89 = vector.shape_cast %88 : vector<1x1x256xf32> to vector<1x256xf32>
    %90 = vector.shape_cast %87 : vector<1x256xf32> to vector<1x1x256xf32>
    tpu.vector_store %arg18[%c0_30, %c4, %c0_31], %90 {strides = array<i32>} : memref<2x6x256xf32, #tpu.memory_space<vmem>>, vector<1x1x256xf32>,
    %91 = vector.extract_strided_slice %72 {offsets = [1, 0], sizes = [1, 256], strides = [1, 1]} : vector<2x1024xf32> to vector<1x256xf32>
    %c1_32 = arith.constant 1 : index
    %c1_33 = arith.constant 1 : index
    %c0_34 = arith.constant 0 : index
    %92 = vector.load %arg18[%c1_32, %c1_33, %c0_34] : memref<2x6x256xf32, #tpu.memory_space<vmem>>, vector<1x1x256xf32>
    %93 = vector.shape_cast %92 : vector<1x1x256xf32> to vector<1x256xf32>
    %94 = vector.shape_cast %91 : vector<1x256xf32> to vector<1x1x256xf32>
    tpu.vector_store %arg18[%c1_32, %c1_33, %c0_34], %94 {strides = array<i32>} : memref<2x6x256xf32, #tpu.memory_space<vmem>>, vector<1x1x256xf32>,
    %95 = vector.extract_strided_slice %72 {offsets = [1, 256], sizes = [1, 256], strides = [1, 1]} : vector<2x1024xf32> to vector<1x256xf32>
    %c1_35 = arith.constant 1 : index
    %c2_36 = arith.constant 2 : index
    %c0_37 = arith.constant 0 : index
    %96 = vector.load %arg18[%c1_35, %c2_36, %c0_37] : memref<2x6x256xf32, #tpu.memory_space<vmem>>, vector<1x1x256xf32>
    %97 = vector.shape_cast %96 : vector<1x1x256xf32> to vector<1x256xf32>
    %98 = vector.shape_cast %95 : vector<1x256xf32> to vector<1x1x256xf32>
    tpu.vector_store %arg18[%c1_35, %c2_36, %c0_37], %98 {strides = array<i32>} : memref<2x6x256xf32, #tpu.memory_space<vmem>>, vector<1x1x256xf32>,
    %99 = vector.extract_strided_slice %72 {offsets = [1, 512], sizes = [1, 256], strides = [1, 1]} : vector<2x1024xf32> to vector<1x256xf32>
    %c1_38 = arith.constant 1 : index
    %c3_39 = arith.constant 3 : index
    %c0_40 = arith.constant 0 : index
    %100 = vector.load %arg18[%c1_38, %c3_39, %c0_40] : memref<2x6x256xf32, #tpu.memory_space<vmem>>, vector<1x1x256xf32>
    %101 = vector.shape_cast %100 : vector<1x1x256xf32> to vector<1x256xf32>
    %102 = vector.shape_cast %99 : vector<1x256xf32> to vector<1x1x256xf32>
    tpu.vector_store %arg18[%c1_38, %c3_39, %c0_40], %102 {strides = array<i32>} : memref<2x6x256xf32, #tpu.memory_space<vmem>>, vector<1x1x256xf32>,
    %103 = vector.extract_strided_slice %72 {offsets = [1, 768], sizes = [1, 256], strides = [1, 1]} : vector<2x1024xf32> to vector<1x256xf32>
    %c1_41 = arith.constant 1 : index
    %c4_42 = arith.constant 4 : index
    %c0_43 = arith.constant 0 : index
    %104 = vector.load %arg18[%c1_41, %c4_42, %c0_43] : memref<2x6x256xf32, #tpu.memory_space<vmem>>, vector<1x1x256xf32>
    %105 = vector.shape_cast %104 : vector<1x1x256xf32> to vector<1x256xf32>
    %106 = vector.shape_cast %103 : vector<1x256xf32> to vector<1x1x256xf32>
    tpu.vector_store %arg18[%c1_41, %c4_42, %c0_43], %106 {strides = array<i32>} : memref<2x6x256xf32, #tpu.memory_space<vmem>>, vector<1x1x256xf32>,
    %c0_44 = arith.constant 0 : index
    %c0_45 = arith.constant 0 : index
    %c0_46 = arith.constant 0 : index
    %107 = vector.load %arg18[%c0_44, %c0_45, %c0_46] : memref<2x6x256xf32, #tpu.memory_space<vmem>>, vector<1x4x256xf32>
    %108 = vector.shape_cast %107 : vector<1x4x256xf32> to vector<4x256xf32>
    %c0_47 = arith.constant 0 : index
    %c1_48 = arith.constant 1 : index
    %c0_49 = arith.constant 0 : index
    %109 = vector.load %arg18[%c0_47, %c1_48, %c0_49] : memref<2x6x256xf32, #tpu.memory_space<vmem>>, vector<1x4x256xf32>
    %110 = vector.shape_cast %109 : vector<1x4x256xf32> to vector<4x256xf32>
    %c0_50 = arith.constant 0 : index
    %c2_51 = arith.constant 2 : index
    %c0_52 = arith.constant 0 : index
    %111 = vector.load %arg18[%c0_50, %c2_51, %c0_52] : memref<2x6x256xf32, #tpu.memory_space<vmem>>, vector<1x4x256xf32>
    %112 = vector.shape_cast %111 : vector<1x4x256xf32> to vector<4x256xf32>
    %113 = tpu.concatenate %108, %110, %112 in 1 : vector<4x256xf32>, vector<4x256xf32>, vector<4x256xf32> -> vector<4x768xf32>
    %114 = arith.truncf %113 : vector<4x768xf32> to vector<4x768xbf16>
    %c0_53 = arith.constant 0 : index
    %c0_54 = arith.constant 0 : index
    %115 = vector.load %arg7[%c0_53, %c0_54] : memref<768x512xbf16, #tpu.memory_space<vmem>>, vector<768x512xbf16>
    %cst_55 = arith.constant dense<0.000000e+00> : vector<4x512xf32>
    %116 = tpu.matmul %114, %115, %cst_55 {dimension_numbers = #tpu.dot_dimension_numbers<[1], [0], [0], [1], [0, 0, 1, 1], [], []>} : vector<4x768xbf16>, vector<768x512xbf16>, vector<4x512xf32> -> vector<4x512xf32>
    %c1_56 = arith.constant 1 : index
    %c0_57 = arith.constant 0 : index
    %c0_58 = arith.constant 0 : index
    %117 = vector.load %arg18[%c1_56, %c0_57, %c0_58] : memref<2x6x256xf32, #tpu.memory_space<vmem>>, vector<1x4x256xf32>
    %118 = vector.shape_cast %117 : vector<1x4x256xf32> to vector<4x256xf32>
    %c1_59 = arith.constant 1 : index
    %c1_60 = arith.constant 1 : index
    %c0_61 = arith.constant 0 : index
    %119 = vector.load %arg18[%c1_59, %c1_60, %c0_61] : memref<2x6x256xf32, #tpu.memory_space<vmem>>, vector<1x4x256xf32>
    %120 = vector.shape_cast %119 : vector<1x4x256xf32> to vector<4x256xf32>
    %c1_62 = arith.constant 1 : index
    %c2_63 = arith.constant 2 : index
    %c0_64 = arith.constant 0 : index
    %121 = vector.load %arg18[%c1_62, %c2_63, %c0_64] : memref<2x6x256xf32, #tpu.memory_space<vmem>>, vector<1x4x256xf32>
    %122 = vector.shape_cast %121 : vector<1x4x256xf32> to vector<4x256xf32>
    %123 = tpu.concatenate %118, %120, %122 in 1 : vector<4x256xf32>, vector<4x256xf32>, vector<4x256xf32> -> vector<4x768xf32>
    %124 = arith.truncf %123 : vector<4x768xf32> to vector<4x768xbf16>
    %c0_65 = arith.constant 0 : index
    %c0_66 = arith.constant 0 : index
    %125 = vector.load %arg7[%c0_65, %c0_66] : memref<768x512xbf16, #tpu.memory_space<vmem>>, vector<768x512xbf16>
    %cst_67 = arith.constant dense<0.000000e+00> : vector<4x512xf32>
    %126 = tpu.matmul %124, %125, %cst_67 {dimension_numbers = #tpu.dot_dimension_numbers<[1], [0], [0], [1], [0, 0, 1, 1], [], []>} : vector<4x768xbf16>, vector<768x512xbf16>, vector<4x512xf32> -> vector<4x512xf32>
    %cst_68 = arith.constant dense<0.000000e+00> : vector<512xf32>
    %127 = vector.multi_reduction <add>, %116, %cst_68 [0] : vector<4x512xf32> to vector<512xf32>
    %128 = vector.shape_cast %127 : vector<512xf32> to vector<1x512xf32>
    %cst_69 = arith.constant dense<0.000000e+00> : vector<512xf32>
    %129 = vector.multi_reduction <add>, %126, %cst_69 [0] : vector<4x512xf32> to vector<512xf32>
    %130 = vector.shape_cast %129 : vector<512xf32> to vector<1x512xf32>
    %131 = arith.addf %128, %130 : vector<1x512xf32>
    %132 = vector.extract_strided_slice %131 {offsets = [0, 0], sizes = [1, 256], strides = [1, 1]} : vector<1x512xf32> to vector<1x256xf32>
    %133 = vector.extract_strided_slice %131 {offsets = [0, 256], sizes = [1, 256], strides = [1, 1]} : vector<1x512xf32> to vector<1x256xf32>
    %134 = arith.addf %132, %133 : vector<1x256xf32>
    %135 = vector.extract_strided_slice %134 {offsets = [0, 0], sizes = [1, 128], strides = [1, 1]} : vector<1x256xf32> to vector<1x128xf32>
    %136 = vector.extract_strided_slice %134 {offsets = [0, 128], sizes = [1, 128], strides = [1, 1]} : vector<1x256xf32> to vector<1x128xf32>
    %137 = arith.addf %135, %136 : vector<1x128xf32>
    %138 = vector.extract_strided_slice %137 {offsets = [0, 0], sizes = [1, 64], strides = [1, 1]} : vector<1x128xf32> to vector<1x64xf32>
    %139 = vector.extract_strided_slice %137 {offsets = [0, 64], sizes = [1, 64], strides = [1, 1]} : vector<1x128xf32> to vector<1x64xf32>
    %140 = arith.addf %138, %139 : vector<1x64xf32>
    %141 = vector.extract_strided_slice %140 {offsets = [0, 0], sizes = [1, 32], strides = [1, 1]} : vector<1x64xf32> to vector<1x32xf32>
    %142 = vector.extract_strided_slice %140 {offsets = [0, 32], sizes = [1, 32], strides = [1, 1]} : vector<1x64xf32> to vector<1x32xf32>
    %143 = arith.addf %141, %142 : vector<1x32xf32>
    %cst_70 = arith.constant 7.812500e-03 : f32
    %144 = vector.broadcast %cst_70 : f32 to vector<1x32xf32>
    %145 = arith.mulf %143, %144 : vector<1x32xf32>
    %146 = tpu.concatenate %145, %145 in 1 : vector<1x32xf32>, vector<1x32xf32> -> vector<1x64xf32>
    %147 = tpu.concatenate %146, %146 in 1 : vector<1x64xf32>, vector<1x64xf32> -> vector<1x128xf32>
    %148 = tpu.concatenate %147, %147 in 1 : vector<1x128xf32>, vector<1x128xf32> -> vector<1x256xf32>
    %149 = tpu.concatenate %148, %148 in 1 : vector<1x256xf32>, vector<1x256xf32> -> vector<1x512xf32>
    %150 = vector.broadcast %149 : vector<1x512xf32> to vector<4x512xf32>
    %151 = arith.subf %116, %150 : vector<4x512xf32>
    %152 = arith.mulf %151, %151 : vector<4x512xf32>
    %cst_71 = arith.constant dense<0.000000e+00> : vector<512xf32>
    %153 = vector.multi_reduction <add>, %152, %cst_71 [0] : vector<4x512xf32> to vector<512xf32>
    %154 = vector.shape_cast %153 : vector<512xf32> to vector<1x512xf32>
    %155 = vector.broadcast %149 : vector<1x512xf32> to vector<4x512xf32>
    %156 = arith.subf %126, %155 : vector<4x512xf32>
    %157 = arith.mulf %156, %156 : vector<4x512xf32>
    %cst_72 = arith.constant dense<0.000000e+00> : vector<512xf32>
    %158 = vector.multi_reduction <add>, %157, %cst_72 [0] : vector<4x512xf32> to vector<512xf32>
    %159 = vector.shape_cast %158 : vector<512xf32> to vector<1x512xf32>
    %160 = arith.addf %154, %159 : vector<1x512xf32>
    %161 = vector.extract_strided_slice %160 {offsets = [0, 0], sizes = [1, 256], strides = [1, 1]} : vector<1x512xf32> to vector<1x256xf32>
    %162 = vector.extract_strided_slice %160 {offsets = [0, 256], sizes = [1, 256], strides = [1, 1]} : vector<1x512xf32> to vector<1x256xf32>
    %163 = arith.addf %161, %162 : vector<1x256xf32>
    %164 = vector.extract_strided_slice %163 {offsets = [0, 0], sizes = [1, 128], strides = [1, 1]} : vector<1x256xf32> to vector<1x128xf32>
    %165 = vector.extract_strided_slice %163 {offsets = [0, 128], sizes = [1, 128], strides = [1, 1]} : vector<1x256xf32> to vector<1x128xf32>
    %166 = arith.addf %164, %165 : vector<1x128xf32>
    %167 = vector.extract_strided_slice %166 {offsets = [0, 0], sizes = [1, 64], strides = [1, 1]} : vector<1x128xf32> to vector<1x64xf32>
    %168 = vector.extract_strided_slice %166 {offsets = [0, 64], sizes = [1, 64], strides = [1, 1]} : vector<1x128xf32> to vector<1x64xf32>
    %169 = arith.addf %167, %168 : vector<1x64xf32>
    %170 = vector.extract_strided_slice %169 {offsets = [0, 0], sizes = [1, 32], strides = [1, 1]} : vector<1x64xf32> to vector<1x32xf32>
    %171 = vector.extract_strided_slice %169 {offsets = [0, 32], sizes = [1, 32], strides = [1, 1]} : vector<1x64xf32> to vector<1x32xf32>
    %172 = arith.addf %170, %171 : vector<1x32xf32>
    %cst_73 = arith.constant 7.812500e-03 : f32
    %173 = vector.broadcast %cst_73 : f32 to vector<1x32xf32>
    %174 = arith.mulf %172, %173 : vector<1x32xf32>
    %c0_74 = arith.constant 0 : index
    %c0_75 = arith.constant 0 : index
    %175 = vector.load %arg8[%c0_74, %c0_75] : memref<1x32xf32, #tpu.memory_space<vmem>>, vector<1x32xf32>
    %cst_76 = arith.constant 9.99999974E-6 : f32
    %176 = vector.broadcast %cst_76 : f32 to vector<1x32xf32>
    %177 = arith.addf %174, %176 : vector<1x32xf32>
    %178 = math.rsqrt %177 : vector<1x32xf32>
    %179 = arith.mulf %175, %178 : vector<1x32xf32>
    %c0_77 = arith.constant 0 : index
    %c0_78 = arith.constant 0 : index
    %180 = vector.load %arg9[%c0_77, %c0_78] : memref<1x32xf32, #tpu.memory_space<vmem>>, vector<1x32xf32>
    %181 = arith.mulf %145, %179 : vector<1x32xf32>
    %182 = arith.subf %180, %181 : vector<1x32xf32>
    %183 = tpu.concatenate %179, %179 in 1 : vector<1x32xf32>, vector<1x32xf32> -> vector<1x64xf32>
    %184 = tpu.concatenate %183, %183 in 1 : vector<1x64xf32>, vector<1x64xf32> -> vector<1x128xf32>
    %185 = tpu.concatenate %184, %184 in 1 : vector<1x128xf32>, vector<1x128xf32> -> vector<1x256xf32>
    %186 = tpu.concatenate %185, %185 in 1 : vector<1x256xf32>, vector<1x256xf32> -> vector<1x512xf32>
    %187 = tpu.concatenate %182, %182 in 1 : vector<1x32xf32>, vector<1x32xf32> -> vector<1x64xf32>
    %188 = tpu.concatenate %187, %187 in 1 : vector<1x64xf32>, vector<1x64xf32> -> vector<1x128xf32>
    %189 = tpu.concatenate %188, %188 in 1 : vector<1x128xf32>, vector<1x128xf32> -> vector<1x256xf32>
    %190 = tpu.concatenate %189, %189 in 1 : vector<1x256xf32>, vector<1x256xf32> -> vector<1x512xf32>
    %191 = vector.broadcast %186 : vector<1x512xf32> to vector<4x512xf32>
    %192 = arith.mulf %116, %191 : vector<4x512xf32>
    %193 = vector.broadcast %190 : vector<1x512xf32> to vector<4x512xf32>
    %194 = arith.addf %192, %193 : vector<4x512xf32>
    %cst_79 = arith.constant 0.000000e+00 : f32
    %195 = vector.broadcast %cst_79 : f32 to vector<4x512xf32>
    %196 = arith.maximumf %194, %195 : vector<4x512xf32>
    %197 = vector.broadcast %186 : vector<1x512xf32> to vector<4x512xf32>
    %198 = arith.mulf %126, %197 : vector<4x512xf32>
    %199 = vector.broadcast %190 : vector<1x512xf32> to vector<4x512xf32>
    %200 = arith.addf %198, %199 : vector<4x512xf32>
    %cst_80 = arith.constant 0.000000e+00 : f32
    %201 = vector.broadcast %cst_80 : f32 to vector<4x512xf32>
    %202 = arith.maximumf %200, %201 : vector<4x512xf32>
    %cst_81 = arith.constant 0.000000e+00 : f32
    %203 = vector.broadcast %cst_81 : f32 to vector<2x10x256xf32>
    %c0_82 = arith.constant 0 : index
    %c0_83 = arith.constant 0 : index
    %c0_84 = arith.constant 0 : index
    %204 = vector.load %arg19[%c0_82, %c0_83, %c0_84] : memref<2x10x256xf32, #tpu.memory_space<vmem>>, vector<2x10x256xf32>
    tpu.vector_store %arg19[%c0_82, %c0_83, %c0_84], %203 {strides = array<i32>} : memref<2x10x256xf32, #tpu.memory_space<vmem>>, vector<2x10x256xf32>,
    %205 = vector.extract_strided_slice %196 {offsets = [0, 0], sizes = [1, 256], strides = [1, 1]} : vector<4x512xf32> to vector<1x256xf32>
    %c0_85 = arith.constant 0 : index
    %c1_86 = arith.constant 1 : index
    %c0_87 = arith.constant 0 : index
    %206 = vector.load %arg19[%c0_85, %c1_86, %c0_87] : memref<2x10x256xf32, #tpu.memory_space<vmem>>, vector<1x1x256xf32>
    %207 = vector.shape_cast %206 : vector<1x1x256xf32> to vector<1x256xf32>
    %208 = vector.shape_cast %205 : vector<1x256xf32> to vector<1x1x256xf32>
    tpu.vector_store %arg19[%c0_85, %c1_86, %c0_87], %208 {strides = array<i32>} : memref<2x10x256xf32, #tpu.memory_space<vmem>>, vector<1x1x256xf32>,
    %209 = vector.extract_strided_slice %196 {offsets = [0, 256], sizes = [1, 256], strides = [1, 1]} : vector<4x512xf32> to vector<1x256xf32>
    %c0_88 = arith.constant 0 : index
    %c2_89 = arith.constant 2 : index
    %c0_90 = arith.constant 0 : index
    %210 = vector.load %arg19[%c0_88, %c2_89, %c0_90] : memref<2x10x256xf32, #tpu.memory_space<vmem>>, vector<1x1x256xf32>
    %211 = vector.shape_cast %210 : vector<1x1x256xf32> to vector<1x256xf32>
    %212 = vector.shape_cast %209 : vector<1x256xf32> to vector<1x1x256xf32>
    tpu.vector_store %arg19[%c0_88, %c2_89, %c0_90], %212 {strides = array<i32>} : memref<2x10x256xf32, #tpu.memory_space<vmem>>, vector<1x1x256xf32>,
    %213 = vector.extract_strided_slice %196 {offsets = [1, 0], sizes = [1, 256], strides = [1, 1]} : vector<4x512xf32> to vector<1x256xf32>
    %c0_91 = arith.constant 0 : index
    %c3_92 = arith.constant 3 : index
    %c0_93 = arith.constant 0 : index
    %214 = vector.load %arg19[%c0_91, %c3_92, %c0_93] : memref<2x10x256xf32, #tpu.memory_space<vmem>>, vector<1x1x256xf32>
    %215 = vector.shape_cast %214 : vector<1x1x256xf32> to vector<1x256xf32>
    %216 = vector.shape_cast %213 : vector<1x256xf32> to vector<1x1x256xf32>
    tpu.vector_store %arg19[%c0_91, %c3_92, %c0_93], %216 {strides = array<i32>} : memref<2x10x256xf32, #tpu.memory_space<vmem>>, vector<1x1x256xf32>,
    %217 = vector.extract_strided_slice %196 {offsets = [1, 256], sizes = [1, 256], strides = [1, 1]} : vector<4x512xf32> to vector<1x256xf32>
    %c0_94 = arith.constant 0 : index
    %c4_95 = arith.constant 4 : index
    %c0_96 = arith.constant 0 : index
    %218 = vector.load %arg19[%c0_94, %c4_95, %c0_96] : memref<2x10x256xf32, #tpu.memory_space<vmem>>, vector<1x1x256xf32>
    %219 = vector.shape_cast %218 : vector<1x1x256xf32> to vector<1x256xf32>
    %220 = vector.shape_cast %217 : vector<1x256xf32> to vector<1x1x256xf32>
    tpu.vector_store %arg19[%c0_94, %c4_95, %c0_96], %220 {strides = array<i32>} : memref<2x10x256xf32, #tpu.memory_space<vmem>>, vector<1x1x256xf32>,
    %221 = vector.extract_strided_slice %196 {offsets = [2, 0], sizes = [1, 256], strides = [1, 1]} : vector<4x512xf32> to vector<1x256xf32>
    %c0_97 = arith.constant 0 : index
    %c5 = arith.constant 5 : index
    %c0_98 = arith.constant 0 : index
    %222 = vector.load %arg19[%c0_97, %c5, %c0_98] : memref<2x10x256xf32, #tpu.memory_space<vmem>>, vector<1x1x256xf32>
    %223 = vector.shape_cast %222 : vector<1x1x256xf32> to vector<1x256xf32>
    %224 = vector.shape_cast %221 : vector<1x256xf32> to vector<1x1x256xf32>
    tpu.vector_store %arg19[%c0_97, %c5, %c0_98], %224 {strides = array<i32>} : memref<2x10x256xf32, #tpu.memory_space<vmem>>, vector<1x1x256xf32>,
    %225 = vector.extract_strided_slice %196 {offsets = [2, 256], sizes = [1, 256], strides = [1, 1]} : vector<4x512xf32> to vector<1x256xf32>
    %c0_99 = arith.constant 0 : index
    %c6 = arith.constant 6 : index
    %c0_100 = arith.constant 0 : index
    %226 = vector.load %arg19[%c0_99, %c6, %c0_100] : memref<2x10x256xf32, #tpu.memory_space<vmem>>, vector<1x1x256xf32>
    %227 = vector.shape_cast %226 : vector<1x1x256xf32> to vector<1x256xf32>
    %228 = vector.shape_cast %225 : vector<1x256xf32> to vector<1x1x256xf32>
    tpu.vector_store %arg19[%c0_99, %c6, %c0_100], %228 {strides = array<i32>} : memref<2x10x256xf32, #tpu.memory_space<vmem>>, vector<1x1x256xf32>,
    %229 = vector.extract_strided_slice %196 {offsets = [3, 0], sizes = [1, 256], strides = [1, 1]} : vector<4x512xf32> to vector<1x256xf32>
    %c0_101 = arith.constant 0 : index
    %c7 = arith.constant 7 : index
    %c0_102 = arith.constant 0 : index
    %230 = vector.load %arg19[%c0_101, %c7, %c0_102] : memref<2x10x256xf32, #tpu.memory_space<vmem>>, vector<1x1x256xf32>
    %231 = vector.shape_cast %230 : vector<1x1x256xf32> to vector<1x256xf32>
    %232 = vector.shape_cast %229 : vector<1x256xf32> to vector<1x1x256xf32>
    tpu.vector_store %arg19[%c0_101, %c7, %c0_102], %232 {strides = array<i32>} : memref<2x10x256xf32, #tpu.memory_space<vmem>>, vector<1x1x256xf32>,
    %233 = vector.extract_strided_slice %196 {offsets = [3, 256], sizes = [1, 256], strides = [1, 1]} : vector<4x512xf32> to vector<1x256xf32>
    %c0_103 = arith.constant 0 : index
    %c8 = arith.constant 8 : index
    %c0_104 = arith.constant 0 : index
    %234 = vector.load %arg19[%c0_103, %c8, %c0_104] : memref<2x10x256xf32, #tpu.memory_space<vmem>>, vector<1x1x256xf32>
    %235 = vector.shape_cast %234 : vector<1x1x256xf32> to vector<1x256xf32>
    %236 = vector.shape_cast %233 : vector<1x256xf32> to vector<1x1x256xf32>
    tpu.vector_store %arg19[%c0_103, %c8, %c0_104], %236 {strides = array<i32>} : memref<2x10x256xf32, #tpu.memory_space<vmem>>, vector<1x1x256xf32>,
    %237 = vector.extract_strided_slice %202 {offsets = [0, 0], sizes = [1, 256], strides = [1, 1]} : vector<4x512xf32> to vector<1x256xf32>
    %c1_105 = arith.constant 1 : index
    %c1_106 = arith.constant 1 : index
    %c0_107 = arith.constant 0 : index
    %238 = vector.load %arg19[%c1_105, %c1_106, %c0_107] : memref<2x10x256xf32, #tpu.memory_space<vmem>>, vector<1x1x256xf32>
    %239 = vector.shape_cast %238 : vector<1x1x256xf32> to vector<1x256xf32>
    %240 = vector.shape_cast %237 : vector<1x256xf32> to vector<1x1x256xf32>
    tpu.vector_store %arg19[%c1_105, %c1_106, %c0_107], %240 {strides = array<i32>} : memref<2x10x256xf32, #tpu.memory_space<vmem>>, vector<1x1x256xf32>,
    %241 = vector.extract_strided_slice %202 {offsets = [0, 256], sizes = [1, 256], strides = [1, 1]} : vector<4x512xf32> to vector<1x256xf32>
    %c1_108 = arith.constant 1 : index
    %c2_109 = arith.constant 2 : index
    %c0_110 = arith.constant 0 : index
    %242 = vector.load %arg19[%c1_108, %c2_109, %c0_110] : memref<2x10x256xf32, #tpu.memory_space<vmem>>, vector<1x1x256xf32>
    %243 = vector.shape_cast %242 : vector<1x1x256xf32> to vector<1x256xf32>
    %244 = vector.shape_cast %241 : vector<1x256xf32> to vector<1x1x256xf32>
    tpu.vector_store %arg19[%c1_108, %c2_109, %c0_110], %244 {strides = array<i32>} : memref<2x10x256xf32, #tpu.memory_space<vmem>>, vector<1x1x256xf32>,
    %245 = vector.extract_strided_slice %202 {offsets = [1, 0], sizes = [1, 256], strides = [1, 1]} : vector<4x512xf32> to vector<1x256xf32>
    %c1_111 = arith.constant 1 : index
    %c3_112 = arith.constant 3 : index
    %c0_113 = arith.constant 0 : index
    %246 = vector.load %arg19[%c1_111, %c3_112, %c0_113] : memref<2x10x256xf32, #tpu.memory_space<vmem>>, vector<1x1x256xf32>
    %247 = vector.shape_cast %246 : vector<1x1x256xf32> to vector<1x256xf32>
    %248 = vector.shape_cast %245 : vector<1x256xf32> to vector<1x1x256xf32>
    tpu.vector_store %arg19[%c1_111, %c3_112, %c0_113], %248 {strides = array<i32>} : memref<2x10x256xf32, #tpu.memory_space<vmem>>, vector<1x1x256xf32>,
    %249 = vector.extract_strided_slice %202 {offsets = [1, 256], sizes = [1, 256], strides = [1, 1]} : vector<4x512xf32> to vector<1x256xf32>
    %c1_114 = arith.constant 1 : index
    %c4_115 = arith.constant 4 : index
    %c0_116 = arith.constant 0 : index
    %250 = vector.load %arg19[%c1_114, %c4_115, %c0_116] : memref<2x10x256xf32, #tpu.memory_space<vmem>>, vector<1x1x256xf32>
    %251 = vector.shape_cast %250 : vector<1x1x256xf32> to vector<1x256xf32>
    %252 = vector.shape_cast %249 : vector<1x256xf32> to vector<1x1x256xf32>
    tpu.vector_store %arg19[%c1_114, %c4_115, %c0_116], %252 {strides = array<i32>} : memref<2x10x256xf32, #tpu.memory_space<vmem>>, vector<1x1x256xf32>,
    %253 = vector.extract_strided_slice %202 {offsets = [2, 0], sizes = [1, 256], strides = [1, 1]} : vector<4x512xf32> to vector<1x256xf32>
    %c1_117 = arith.constant 1 : index
    %c5_118 = arith.constant 5 : index
    %c0_119 = arith.constant 0 : index
    %254 = vector.load %arg19[%c1_117, %c5_118, %c0_119] : memref<2x10x256xf32, #tpu.memory_space<vmem>>, vector<1x1x256xf32>
    %255 = vector.shape_cast %254 : vector<1x1x256xf32> to vector<1x256xf32>
    %256 = vector.shape_cast %253 : vector<1x256xf32> to vector<1x1x256xf32>
    tpu.vector_store %arg19[%c1_117, %c5_118, %c0_119], %256 {strides = array<i32>} : memref<2x10x256xf32, #tpu.memory_space<vmem>>, vector<1x1x256xf32>,
    %257 = vector.extract_strided_slice %202 {offsets = [2, 256], sizes = [1, 256], strides = [1, 1]} : vector<4x512xf32> to vector<1x256xf32>
    %c1_120 = arith.constant 1 : index
    %c6_121 = arith.constant 6 : index
    %c0_122 = arith.constant 0 : index
    %258 = vector.load %arg19[%c1_120, %c6_121, %c0_122] : memref<2x10x256xf32, #tpu.memory_space<vmem>>, vector<1x1x256xf32>
    %259 = vector.shape_cast %258 : vector<1x1x256xf32> to vector<1x256xf32>
    %260 = vector.shape_cast %257 : vector<1x256xf32> to vector<1x1x256xf32>
    tpu.vector_store %arg19[%c1_120, %c6_121, %c0_122], %260 {strides = array<i32>} : memref<2x10x256xf32, #tpu.memory_space<vmem>>, vector<1x1x256xf32>,
    %261 = vector.extract_strided_slice %202 {offsets = [3, 0], sizes = [1, 256], strides = [1, 1]} : vector<4x512xf32> to vector<1x256xf32>
    %c1_123 = arith.constant 1 : index
    %c7_124 = arith.constant 7 : index
    %c0_125 = arith.constant 0 : index
    %262 = vector.load %arg19[%c1_123, %c7_124, %c0_125] : memref<2x10x256xf32, #tpu.memory_space<vmem>>, vector<1x1x256xf32>
    %263 = vector.shape_cast %262 : vector<1x1x256xf32> to vector<1x256xf32>
    %264 = vector.shape_cast %261 : vector<1x256xf32> to vector<1x1x256xf32>
    tpu.vector_store %arg19[%c1_123, %c7_124, %c0_125], %264 {strides = array<i32>} : memref<2x10x256xf32, #tpu.memory_space<vmem>>, vector<1x1x256xf32>,
    %265 = vector.extract_strided_slice %202 {offsets = [3, 256], sizes = [1, 256], strides = [1, 1]} : vector<4x512xf32> to vector<1x256xf32>
    %c1_126 = arith.constant 1 : index
    %c8_127 = arith.constant 8 : index
    %c0_128 = arith.constant 0 : index
    %266 = vector.load %arg19[%c1_126, %c8_127, %c0_128] : memref<2x10x256xf32, #tpu.memory_space<vmem>>, vector<1x1x256xf32>
    %267 = vector.shape_cast %266 : vector<1x1x256xf32> to vector<1x256xf32>
    %268 = vector.shape_cast %265 : vector<1x256xf32> to vector<1x1x256xf32>
    tpu.vector_store %arg19[%c1_126, %c8_127, %c0_128], %268 {strides = array<i32>} : memref<2x10x256xf32, #tpu.memory_space<vmem>>, vector<1x1x256xf32>,
    %c0_129 = arith.constant 0 : index
    %c0_130 = arith.constant 0 : index
    %c0_131 = arith.constant 0 : index
    %269 = vector.load %arg19[%c0_129, %c0_130, %c0_131] : memref<2x10x256xf32, #tpu.memory_space<vmem>>, vector<1x8x256xf32>
    %270 = vector.shape_cast %269 : vector<1x8x256xf32> to vector<8x256xf32>
    %c0_132 = arith.constant 0 : index
    %c1_133 = arith.constant 1 : index
    %c0_134 = arith.constant 0 : index
    %271 = vector.load %arg19[%c0_132, %c1_133, %c0_134] : memref<2x10x256xf32, #tpu.memory_space<vmem>>, vector<1x8x256xf32>
    %272 = vector.shape_cast %271 : vector<1x8x256xf32> to vector<8x256xf32>
    %c0_135 = arith.constant 0 : index
    %c2_136 = arith.constant 2 : index
    %c0_137 = arith.constant 0 : index
    %273 = vector.load %arg19[%c0_135, %c2_136, %c0_137] : memref<2x10x256xf32, #tpu.memory_space<vmem>>, vector<1x8x256xf32>
    %274 = vector.shape_cast %273 : vector<1x8x256xf32> to vector<8x256xf32>
    %275 = tpu.concatenate %270, %272, %274 in 1 : vector<8x256xf32>, vector<8x256xf32>, vector<8x256xf32> -> vector<8x768xf32>
    %276 = arith.truncf %275 : vector<8x768xf32> to vector<8x768xbf16>
    %c0_138 = arith.constant 0 : index
    %c0_139 = arith.constant 0 : index
    %277 = vector.load %arg10[%c0_138, %c0_139] : memref<768x512xbf16, #tpu.memory_space<vmem>>, vector<768x512xbf16>
    %cst_140 = arith.constant dense<0.000000e+00> : vector<8x512xf32>
    %278 = tpu.matmul %276, %277, %cst_140 {dimension_numbers = #tpu.dot_dimension_numbers<[1], [0], [0], [1], [0, 0, 1, 1], [], []>} : vector<8x768xbf16>, vector<768x512xbf16>, vector<8x512xf32> -> vector<8x512xf32>
    %c1_141 = arith.constant 1 : index
    %c0_142 = arith.constant 0 : index
    %c0_143 = arith.constant 0 : index
    %279 = vector.load %arg19[%c1_141, %c0_142, %c0_143] : memref<2x10x256xf32, #tpu.memory_space<vmem>>, vector<1x8x256xf32>
    %280 = vector.shape_cast %279 : vector<1x8x256xf32> to vector<8x256xf32>
    %c1_144 = arith.constant 1 : index
    %c1_145 = arith.constant 1 : index
    %c0_146 = arith.constant 0 : index
    %281 = vector.load %arg19[%c1_144, %c1_145, %c0_146] : memref<2x10x256xf32, #tpu.memory_space<vmem>>, vector<1x8x256xf32>
    %282 = vector.shape_cast %281 : vector<1x8x256xf32> to vector<8x256xf32>
    %c1_147 = arith.constant 1 : index
    %c2_148 = arith.constant 2 : index
    %c0_149 = arith.constant 0 : index
    %283 = vector.load %arg19[%c1_147, %c2_148, %c0_149] : memref<2x10x256xf32, #tpu.memory_space<vmem>>, vector<1x8x256xf32>
    %284 = vector.shape_cast %283 : vector<1x8x256xf32> to vector<8x256xf32>
    %285 = tpu.concatenate %280, %282, %284 in 1 : vector<8x256xf32>, vector<8x256xf32>, vector<8x256xf32> -> vector<8x768xf32>
    %286 = arith.truncf %285 : vector<8x768xf32> to vector<8x768xbf16>
    %c0_150 = arith.constant 0 : index
    %c0_151 = arith.constant 0 : index
    %287 = vector.load %arg10[%c0_150, %c0_151] : memref<768x512xbf16, #tpu.memory_space<vmem>>, vector<768x512xbf16>
    %cst_152 = arith.constant dense<0.000000e+00> : vector<8x512xf32>
    %288 = tpu.matmul %286, %287, %cst_152 {dimension_numbers = #tpu.dot_dimension_numbers<[1], [0], [0], [1], [0, 0, 1, 1], [], []>} : vector<8x768xbf16>, vector<768x512xbf16>, vector<8x512xf32> -> vector<8x512xf32>
    %cst_153 = arith.constant dense<0.000000e+00> : vector<512xf32>
    %289 = vector.multi_reduction <add>, %278, %cst_153 [0] : vector<8x512xf32> to vector<512xf32>
    %290 = vector.shape_cast %289 : vector<512xf32> to vector<1x512xf32>
    %cst_154 = arith.constant dense<0.000000e+00> : vector<512xf32>
    %291 = vector.multi_reduction <add>, %288, %cst_154 [0] : vector<8x512xf32> to vector<512xf32>
    %292 = vector.shape_cast %291 : vector<512xf32> to vector<1x512xf32>
    %293 = arith.addf %290, %292 : vector<1x512xf32>
    %294 = vector.extract_strided_slice %293 {offsets = [0, 0], sizes = [1, 256], strides = [1, 1]} : vector<1x512xf32> to vector<1x256xf32>
    %295 = vector.extract_strided_slice %293 {offsets = [0, 256], sizes = [1, 256], strides = [1, 1]} : vector<1x512xf32> to vector<1x256xf32>
    %296 = arith.addf %294, %295 : vector<1x256xf32>
    %297 = vector.extract_strided_slice %296 {offsets = [0, 0], sizes = [1, 128], strides = [1, 1]} : vector<1x256xf32> to vector<1x128xf32>
    %298 = vector.extract_strided_slice %296 {offsets = [0, 128], sizes = [1, 128], strides = [1, 1]} : vector<1x256xf32> to vector<1x128xf32>
    %299 = arith.addf %297, %298 : vector<1x128xf32>
    %300 = vector.extract_strided_slice %299 {offsets = [0, 0], sizes = [1, 64], strides = [1, 1]} : vector<1x128xf32> to vector<1x64xf32>
    %301 = vector.extract_strided_slice %299 {offsets = [0, 64], sizes = [1, 64], strides = [1, 1]} : vector<1x128xf32> to vector<1x64xf32>
    %302 = arith.addf %300, %301 : vector<1x64xf32>
    %303 = vector.extract_strided_slice %302 {offsets = [0, 0], sizes = [1, 32], strides = [1, 1]} : vector<1x64xf32> to vector<1x32xf32>
    %304 = vector.extract_strided_slice %302 {offsets = [0, 32], sizes = [1, 32], strides = [1, 1]} : vector<1x64xf32> to vector<1x32xf32>
    %305 = arith.addf %303, %304 : vector<1x32xf32>
    %306 = vector.extract_strided_slice %305 {offsets = [0, 0], sizes = [1, 16], strides = [1, 1]} : vector<1x32xf32> to vector<1x16xf32>
    %307 = vector.extract_strided_slice %305 {offsets = [0, 16], sizes = [1, 16], strides = [1, 1]} : vector<1x32xf32> to vector<1x16xf32>
    %308 = arith.addf %306, %307 : vector<1x16xf32>
    %cst_155 = arith.constant 0.001953125 : f32
    %309 = vector.broadcast %cst_155 : f32 to vector<1x16xf32>
    %310 = arith.mulf %308, %309 : vector<1x16xf32>
    %311 = tpu.concatenate %310, %310 in 1 : vector<1x16xf32>, vector<1x16xf32> -> vector<1x32xf32>
    %312 = tpu.concatenate %311, %311 in 1 : vector<1x32xf32>, vector<1x32xf32> -> vector<1x64xf32>
    %313 = tpu.concatenate %312, %312 in 1 : vector<1x64xf32>, vector<1x64xf32> -> vector<1x128xf32>
    %314 = tpu.concatenate %313, %313 in 1 : vector<1x128xf32>, vector<1x128xf32> -> vector<1x256xf32>
    %315 = tpu.concatenate %314, %314 in 1 : vector<1x256xf32>, vector<1x256xf32> -> vector<1x512xf32>
    %316 = vector.broadcast %315 : vector<1x512xf32> to vector<8x512xf32>
    %317 = arith.subf %278, %316 : vector<8x512xf32>
    %318 = arith.mulf %317, %317 : vector<8x512xf32>
    %cst_156 = arith.constant dense<0.000000e+00> : vector<512xf32>
    %319 = vector.multi_reduction <add>, %318, %cst_156 [0] : vector<8x512xf32> to vector<512xf32>
    %320 = vector.shape_cast %319 : vector<512xf32> to vector<1x512xf32>
    %321 = vector.broadcast %315 : vector<1x512xf32> to vector<8x512xf32>
    %322 = arith.subf %288, %321 : vector<8x512xf32>
    %323 = arith.mulf %322, %322 : vector<8x512xf32>
    %cst_157 = arith.constant dense<0.000000e+00> : vector<512xf32>
    %324 = vector.multi_reduction <add>, %323, %cst_157 [0] : vector<8x512xf32> to vector<512xf32>
    %325 = vector.shape_cast %324 : vector<512xf32> to vector<1x512xf32>
    %326 = arith.addf %320, %325 : vector<1x512xf32>
    %327 = vector.extract_strided_slice %326 {offsets = [0, 0], sizes = [1, 256], strides = [1, 1]} : vector<1x512xf32> to vector<1x256xf32>
    %328 = vector.extract_strided_slice %326 {offsets = [0, 256], sizes = [1, 256], strides = [1, 1]} : vector<1x512xf32> to vector<1x256xf32>
    %329 = arith.addf %327, %328 : vector<1x256xf32>
    %330 = vector.extract_strided_slice %329 {offsets = [0, 0], sizes = [1, 128], strides = [1, 1]} : vector<1x256xf32> to vector<1x128xf32>
    %331 = vector.extract_strided_slice %329 {offsets = [0, 128], sizes = [1, 128], strides = [1, 1]} : vector<1x256xf32> to vector<1x128xf32>
    %332 = arith.addf %330, %331 : vector<1x128xf32>
    %333 = vector.extract_strided_slice %332 {offsets = [0, 0], sizes = [1, 64], strides = [1, 1]} : vector<1x128xf32> to vector<1x64xf32>
    %334 = vector.extract_strided_slice %332 {offsets = [0, 64], sizes = [1, 64], strides = [1, 1]} : vector<1x128xf32> to vector<1x64xf32>
    %335 = arith.addf %333, %334 : vector<1x64xf32>
    %336 = vector.extract_strided_slice %335 {offsets = [0, 0], sizes = [1, 32], strides = [1, 1]} : vector<1x64xf32> to vector<1x32xf32>
    %337 = vector.extract_strided_slice %335 {offsets = [0, 32], sizes = [1, 32], strides = [1, 1]} : vector<1x64xf32> to vector<1x32xf32>
    %338 = arith.addf %336, %337 : vector<1x32xf32>
    %339 = vector.extract_strided_slice %338 {offsets = [0, 0], sizes = [1, 16], strides = [1, 1]} : vector<1x32xf32> to vector<1x16xf32>
    %340 = vector.extract_strided_slice %338 {offsets = [0, 16], sizes = [1, 16], strides = [1, 1]} : vector<1x32xf32> to vector<1x16xf32>
    %341 = arith.addf %339, %340 : vector<1x16xf32>
    %cst_158 = arith.constant 0.001953125 : f32
    %342 = vector.broadcast %cst_158 : f32 to vector<1x16xf32>
    %343 = arith.mulf %341, %342 : vector<1x16xf32>
    %c0_159 = arith.constant 0 : index
    %c0_160 = arith.constant 0 : index
    %344 = vector.load %arg11[%c0_159, %c0_160] : memref<1x16xf32, #tpu.memory_space<vmem>>, vector<1x16xf32>
    %cst_161 = arith.constant 9.99999974E-6 : f32
    %345 = vector.broadcast %cst_161 : f32 to vector<1x16xf32>
    %346 = arith.addf %343, %345 : vector<1x16xf32>
    %347 = math.rsqrt %346 : vector<1x16xf32>
    %348 = arith.mulf %344, %347 : vector<1x16xf32>
    %c0_162 = arith.constant 0 : index
    %c0_163 = arith.constant 0 : index
    %349 = vector.load %arg12[%c0_162, %c0_163] : memref<1x16xf32, #tpu.memory_space<vmem>>, vector<1x16xf32>
    %350 = arith.mulf %310, %348 : vector<1x16xf32>
    %351 = arith.subf %349, %350 : vector<1x16xf32>
    %352 = tpu.concatenate %348, %348 in 1 : vector<1x16xf32>, vector<1x16xf32> -> vector<1x32xf32>
    %353 = tpu.concatenate %352, %352 in 1 : vector<1x32xf32>, vector<1x32xf32> -> vector<1x64xf32>
    %354 = tpu.concatenate %353, %353 in 1 : vector<1x64xf32>, vector<1x64xf32> -> vector<1x128xf32>
    %355 = tpu.concatenate %354, %354 in 1 : vector<1x128xf32>, vector<1x128xf32> -> vector<1x256xf32>
    %356 = tpu.concatenate %355, %355 in 1 : vector<1x256xf32>, vector<1x256xf32> -> vector<1x512xf32>
    %357 = tpu.concatenate %351, %351 in 1 : vector<1x16xf32>, vector<1x16xf32> -> vector<1x32xf32>
    %358 = tpu.concatenate %357, %357 in 1 : vector<1x32xf32>, vector<1x32xf32> -> vector<1x64xf32>
    %359 = tpu.concatenate %358, %358 in 1 : vector<1x64xf32>, vector<1x64xf32> -> vector<1x128xf32>
    %360 = tpu.concatenate %359, %359 in 1 : vector<1x128xf32>, vector<1x128xf32> -> vector<1x256xf32>
    %361 = tpu.concatenate %360, %360 in 1 : vector<1x256xf32>, vector<1x256xf32> -> vector<1x512xf32>
    %362 = vector.broadcast %356 : vector<1x512xf32> to vector<8x512xf32>
    %363 = arith.mulf %278, %362 : vector<8x512xf32>
    %364 = vector.broadcast %361 : vector<1x512xf32> to vector<8x512xf32>
    %365 = arith.addf %363, %364 : vector<8x512xf32>
    %cst_164 = arith.constant 0.000000e+00 : f32
    %366 = vector.broadcast %cst_164 : f32 to vector<8x512xf32>
    %367 = arith.maximumf %365, %366 : vector<8x512xf32>
    %368 = vector.broadcast %356 : vector<1x512xf32> to vector<8x512xf32>
    %369 = arith.mulf %288, %368 : vector<8x512xf32>
    %370 = vector.broadcast %361 : vector<1x512xf32> to vector<8x512xf32>
    %371 = arith.addf %369, %370 : vector<8x512xf32>
    %cst_165 = arith.constant 0.000000e+00 : f32
    %372 = vector.broadcast %cst_165 : f32 to vector<8x512xf32>
    %373 = arith.maximumf %371, %372 : vector<8x512xf32>
    %cst_166 = arith.constant 0.000000e+00 : f32
    %374 = vector.broadcast %cst_166 : f32 to vector<2x18x256xf32>
    %c0_167 = arith.constant 0 : index
    %c0_168 = arith.constant 0 : index
    %c0_169 = arith.constant 0 : index
    %375 = vector.load %arg20[%c0_167, %c0_168, %c0_169] : memref<2x18x256xf32, #tpu.memory_space<vmem>>, vector<2x18x256xf32>
    tpu.vector_store %arg20[%c0_167, %c0_168, %c0_169], %374 {strides = array<i32>} : memref<2x18x256xf32, #tpu.memory_space<vmem>>, vector<2x18x256xf32>,
    %376 = vector.extract_strided_slice %367 {offsets = [0, 0], sizes = [1, 256], strides = [1, 1]} : vector<8x512xf32> to vector<1x256xf32>
    %c0_170 = arith.constant 0 : index
    %c1_171 = arith.constant 1 : index
    %c0_172 = arith.constant 0 : index
    %377 = vector.load %arg20[%c0_170, %c1_171, %c0_172] : memref<2x18x256xf32, #tpu.memory_space<vmem>>, vector<1x1x256xf32>
    %378 = vector.shape_cast %377 : vector<1x1x256xf32> to vector<1x256xf32>
    %379 = vector.shape_cast %376 : vector<1x256xf32> to vector<1x1x256xf32>
    tpu.vector_store %arg20[%c0_170, %c1_171, %c0_172], %379 {strides = array<i32>} : memref<2x18x256xf32, #tpu.memory_space<vmem>>, vector<1x1x256xf32>,
    %380 = vector.extract_strided_slice %367 {offsets = [0, 256], sizes = [1, 256], strides = [1, 1]} : vector<8x512xf32> to vector<1x256xf32>
    %c0_173 = arith.constant 0 : index
    %c2_174 = arith.constant 2 : index
    %c0_175 = arith.constant 0 : index
    %381 = vector.load %arg20[%c0_173, %c2_174, %c0_175] : memref<2x18x256xf32, #tpu.memory_space<vmem>>, vector<1x1x256xf32>
    %382 = vector.shape_cast %381 : vector<1x1x256xf32> to vector<1x256xf32>
    %383 = vector.shape_cast %380 : vector<1x256xf32> to vector<1x1x256xf32>
    tpu.vector_store %arg20[%c0_173, %c2_174, %c0_175], %383 {strides = array<i32>} : memref<2x18x256xf32, #tpu.memory_space<vmem>>, vector<1x1x256xf32>,
    %384 = vector.extract_strided_slice %367 {offsets = [1, 0], sizes = [1, 256], strides = [1, 1]} : vector<8x512xf32> to vector<1x256xf32>
    %c0_176 = arith.constant 0 : index
    %c3_177 = arith.constant 3 : index
    %c0_178 = arith.constant 0 : index
    %385 = vector.load %arg20[%c0_176, %c3_177, %c0_178] : memref<2x18x256xf32, #tpu.memory_space<vmem>>, vector<1x1x256xf32>
    %386 = vector.shape_cast %385 : vector<1x1x256xf32> to vector<1x256xf32>
    %387 = vector.shape_cast %384 : vector<1x256xf32> to vector<1x1x256xf32>
    tpu.vector_store %arg20[%c0_176, %c3_177, %c0_178], %387 {strides = array<i32>} : memref<2x18x256xf32, #tpu.memory_space<vmem>>, vector<1x1x256xf32>,
    %388 = vector.extract_strided_slice %367 {offsets = [1, 256], sizes = [1, 256], strides = [1, 1]} : vector<8x512xf32> to vector<1x256xf32>
    %c0_179 = arith.constant 0 : index
    %c4_180 = arith.constant 4 : index
    %c0_181 = arith.constant 0 : index
    %389 = vector.load %arg20[%c0_179, %c4_180, %c0_181] : memref<2x18x256xf32, #tpu.memory_space<vmem>>, vector<1x1x256xf32>
    %390 = vector.shape_cast %389 : vector<1x1x256xf32> to vector<1x256xf32>
    %391 = vector.shape_cast %388 : vector<1x256xf32> to vector<1x1x256xf32>
    tpu.vector_store %arg20[%c0_179, %c4_180, %c0_181], %391 {strides = array<i32>} : memref<2x18x256xf32, #tpu.memory_space<vmem>>, vector<1x1x256xf32>,
    %392 = vector.extract_strided_slice %367 {offsets = [2, 0], sizes = [1, 256], strides = [1, 1]} : vector<8x512xf32> to vector<1x256xf32>
    %c0_182 = arith.constant 0 : index
    %c5_183 = arith.constant 5 : index
    %c0_184 = arith.constant 0 : index
    %393 = vector.load %arg20[%c0_182, %c5_183, %c0_184] : memref<2x18x256xf32, #tpu.memory_space<vmem>>, vector<1x1x256xf32>
    %394 = vector.shape_cast %393 : vector<1x1x256xf32> to vector<1x256xf32>
    %395 = vector.shape_cast %392 : vector<1x256xf32> to vector<1x1x256xf32>
    tpu.vector_store %arg20[%c0_182, %c5_183, %c0_184], %395 {strides = array<i32>} : memref<2x18x256xf32, #tpu.memory_space<vmem>>, vector<1x1x256xf32>,
    %396 = vector.extract_strided_slice %367 {offsets = [2, 256], sizes = [1, 256], strides = [1, 1]} : vector<8x512xf32> to vector<1x256xf32>
    %c0_185 = arith.constant 0 : index
    %c6_186 = arith.constant 6 : index
    %c0_187 = arith.constant 0 : index
    %397 = vector.load %arg20[%c0_185, %c6_186, %c0_187] : memref<2x18x256xf32, #tpu.memory_space<vmem>>, vector<1x1x256xf32>
    %398 = vector.shape_cast %397 : vector<1x1x256xf32> to vector<1x256xf32>
    %399 = vector.shape_cast %396 : vector<1x256xf32> to vector<1x1x256xf32>
    tpu.vector_store %arg20[%c0_185, %c6_186, %c0_187], %399 {strides = array<i32>} : memref<2x18x256xf32, #tpu.memory_space<vmem>>, vector<1x1x256xf32>,
    %400 = vector.extract_strided_slice %367 {offsets = [3, 0], sizes = [1, 256], strides = [1, 1]} : vector<8x512xf32> to vector<1x256xf32>
    %c0_188 = arith.constant 0 : index
    %c7_189 = arith.constant 7 : index
    %c0_190 = arith.constant 0 : index
    %401 = vector.load %arg20[%c0_188, %c7_189, %c0_190] : memref<2x18x256xf32, #tpu.memory_space<vmem>>, vector<1x1x256xf32>
    %402 = vector.shape_cast %401 : vector<1x1x256xf32> to vector<1x256xf32>
    %403 = vector.shape_cast %400 : vector<1x256xf32> to vector<1x1x256xf32>
    tpu.vector_store %arg20[%c0_188, %c7_189, %c0_190], %403 {strides = array<i32>} : memref<2x18x256xf32, #tpu.memory_space<vmem>>, vector<1x1x256xf32>,
    %404 = vector.extract_strided_slice %367 {offsets = [3, 256], sizes = [1, 256], strides = [1, 1]} : vector<8x512xf32> to vector<1x256xf32>
    %c0_191 = arith.constant 0 : index
    %c8_192 = arith.constant 8 : index
    %c0_193 = arith.constant 0 : index
    %405 = vector.load %arg20[%c0_191, %c8_192, %c0_193] : memref<2x18x256xf32, #tpu.memory_space<vmem>>, vector<1x1x256xf32>
    %406 = vector.shape_cast %405 : vector<1x1x256xf32> to vector<1x256xf32>
    %407 = vector.shape_cast %404 : vector<1x256xf32> to vector<1x1x256xf32>
    tpu.vector_store %arg20[%c0_191, %c8_192, %c0_193], %407 {strides = array<i32>} : memref<2x18x256xf32, #tpu.memory_space<vmem>>, vector<1x1x256xf32>,
    %408 = vector.extract_strided_slice %367 {offsets = [4, 0], sizes = [1, 256], strides = [1, 1]} : vector<8x512xf32> to vector<1x256xf32>
    %c0_194 = arith.constant 0 : index
    %c9 = arith.constant 9 : index
    %c0_195 = arith.constant 0 : index
    %409 = vector.load %arg20[%c0_194, %c9, %c0_195] : memref<2x18x256xf32, #tpu.memory_space<vmem>>, vector<1x1x256xf32>
    %410 = vector.shape_cast %409 : vector<1x1x256xf32> to vector<1x256xf32>
    %411 = vector.shape_cast %408 : vector<1x256xf32> to vector<1x1x256xf32>
    tpu.vector_store %arg20[%c0_194, %c9, %c0_195], %411 {strides = array<i32>} : memref<2x18x256xf32, #tpu.memory_space<vmem>>, vector<1x1x256xf32>,
    %412 = vector.extract_strided_slice %367 {offsets = [4, 256], sizes = [1, 256], strides = [1, 1]} : vector<8x512xf32> to vector<1x256xf32>
    %c0_196 = arith.constant 0 : index
    %c10 = arith.constant 10 : index
    %c0_197 = arith.constant 0 : index
    %413 = vector.load %arg20[%c0_196, %c10, %c0_197] : memref<2x18x256xf32, #tpu.memory_space<vmem>>, vector<1x1x256xf32>
    %414 = vector.shape_cast %413 : vector<1x1x256xf32> to vector<1x256xf32>
    %415 = vector.shape_cast %412 : vector<1x256xf32> to vector<1x1x256xf32>
    tpu.vector_store %arg20[%c0_196, %c10, %c0_197], %415 {strides = array<i32>} : memref<2x18x256xf32, #tpu.memory_space<vmem>>, vector<1x1x256xf32>,
    %416 = vector.extract_strided_slice %367 {offsets = [5, 0], sizes = [1, 256], strides = [1, 1]} : vector<8x512xf32> to vector<1x256xf32>
    %c0_198 = arith.constant 0 : index
    %c11 = arith.constant 11 : index
    %c0_199 = arith.constant 0 : index
    %417 = vector.load %arg20[%c0_198, %c11, %c0_199] : memref<2x18x256xf32, #tpu.memory_space<vmem>>, vector<1x1x256xf32>
    %418 = vector.shape_cast %417 : vector<1x1x256xf32> to vector<1x256xf32>
    %419 = vector.shape_cast %416 : vector<1x256xf32> to vector<1x1x256xf32>
    tpu.vector_store %arg20[%c0_198, %c11, %c0_199], %419 {strides = array<i32>} : memref<2x18x256xf32, #tpu.memory_space<vmem>>, vector<1x1x256xf32>,
    %420 = vector.extract_strided_slice %367 {offsets = [5, 256], sizes = [1, 256], strides = [1, 1]} : vector<8x512xf32> to vector<1x256xf32>
    %c0_200 = arith.constant 0 : index
    %c12 = arith.constant 12 : index
    %c0_201 = arith.constant 0 : index
    %421 = vector.load %arg20[%c0_200, %c12, %c0_201] : memref<2x18x256xf32, #tpu.memory_space<vmem>>, vector<1x1x256xf32>
    %422 = vector.shape_cast %421 : vector<1x1x256xf32> to vector<1x256xf32>
    %423 = vector.shape_cast %420 : vector<1x256xf32> to vector<1x1x256xf32>
    tpu.vector_store %arg20[%c0_200, %c12, %c0_201], %423 {strides = array<i32>} : memref<2x18x256xf32, #tpu.memory_space<vmem>>, vector<1x1x256xf32>,
    %424 = vector.extract_strided_slice %367 {offsets = [6, 0], sizes = [1, 256], strides = [1, 1]} : vector<8x512xf32> to vector<1x256xf32>
    %c0_202 = arith.constant 0 : index
    %c13 = arith.constant 13 : index
    %c0_203 = arith.constant 0 : index
    %425 = vector.load %arg20[%c0_202, %c13, %c0_203] : memref<2x18x256xf32, #tpu.memory_space<vmem>>, vector<1x1x256xf32>
    %426 = vector.shape_cast %425 : vector<1x1x256xf32> to vector<1x256xf32>
    %427 = vector.shape_cast %424 : vector<1x256xf32> to vector<1x1x256xf32>
    tpu.vector_store %arg20[%c0_202, %c13, %c0_203], %427 {strides = array<i32>} : memref<2x18x256xf32, #tpu.memory_space<vmem>>, vector<1x1x256xf32>,
    %428 = vector.extract_strided_slice %367 {offsets = [6, 256], sizes = [1, 256], strides = [1, 1]} : vector<8x512xf32> to vector<1x256xf32>
    %c0_204 = arith.constant 0 : index
    %c14 = arith.constant 14 : index
    %c0_205 = arith.constant 0 : index
    %429 = vector.load %arg20[%c0_204, %c14, %c0_205] : memref<2x18x256xf32, #tpu.memory_space<vmem>>, vector<1x1x256xf32>
    %430 = vector.shape_cast %429 : vector<1x1x256xf32> to vector<1x256xf32>
    %431 = vector.shape_cast %428 : vector<1x256xf32> to vector<1x1x256xf32>
    tpu.vector_store %arg20[%c0_204, %c14, %c0_205], %431 {strides = array<i32>} : memref<2x18x256xf32, #tpu.memory_space<vmem>>, vector<1x1x256xf32>,
    %432 = vector.extract_strided_slice %367 {offsets = [7, 0], sizes = [1, 256], strides = [1, 1]} : vector<8x512xf32> to vector<1x256xf32>
    %c0_206 = arith.constant 0 : index
    %c15 = arith.constant 15 : index
    %c0_207 = arith.constant 0 : index
    %433 = vector.load %arg20[%c0_206, %c15, %c0_207] : memref<2x18x256xf32, #tpu.memory_space<vmem>>, vector<1x1x256xf32>
    %434 = vector.shape_cast %433 : vector<1x1x256xf32> to vector<1x256xf32>
    %435 = vector.shape_cast %432 : vector<1x256xf32> to vector<1x1x256xf32>
    tpu.vector_store %arg20[%c0_206, %c15, %c0_207], %435 {strides = array<i32>} : memref<2x18x256xf32, #tpu.memory_space<vmem>>, vector<1x1x256xf32>,
    %436 = vector.extract_strided_slice %367 {offsets = [7, 256], sizes = [1, 256], strides = [1, 1]} : vector<8x512xf32> to vector<1x256xf32>
    %c0_208 = arith.constant 0 : index
    %c16 = arith.constant 16 : index
    %c0_209 = arith.constant 0 : index
    %437 = vector.load %arg20[%c0_208, %c16, %c0_209] : memref<2x18x256xf32, #tpu.memory_space<vmem>>, vector<1x1x256xf32>
    %438 = vector.shape_cast %437 : vector<1x1x256xf32> to vector<1x256xf32>
    %439 = vector.shape_cast %436 : vector<1x256xf32> to vector<1x1x256xf32>
    tpu.vector_store %arg20[%c0_208, %c16, %c0_209], %439 {strides = array<i32>} : memref<2x18x256xf32, #tpu.memory_space<vmem>>, vector<1x1x256xf32>,
    %440 = vector.extract_strided_slice %373 {offsets = [0, 0], sizes = [1, 256], strides = [1, 1]} : vector<8x512xf32> to vector<1x256xf32>
    %c1_210 = arith.constant 1 : index
    %c1_211 = arith.constant 1 : index
    %c0_212 = arith.constant 0 : index
    %441 = vector.load %arg20[%c1_210, %c1_211, %c0_212] : memref<2x18x256xf32, #tpu.memory_space<vmem>>, vector<1x1x256xf32>
    %442 = vector.shape_cast %441 : vector<1x1x256xf32> to vector<1x256xf32>
    %443 = vector.shape_cast %440 : vector<1x256xf32> to vector<1x1x256xf32>
    tpu.vector_store %arg20[%c1_210, %c1_211, %c0_212], %443 {strides = array<i32>} : memref<2x18x256xf32, #tpu.memory_space<vmem>>, vector<1x1x256xf32>,
    %444 = vector.extract_strided_slice %373 {offsets = [0, 256], sizes = [1, 256], strides = [1, 1]} : vector<8x512xf32> to vector<1x256xf32>
    %c1_213 = arith.constant 1 : index
    %c2_214 = arith.constant 2 : index
    %c0_215 = arith.constant 0 : index
    %445 = vector.load %arg20[%c1_213, %c2_214, %c0_215] : memref<2x18x256xf32, #tpu.memory_space<vmem>>, vector<1x1x256xf32>
    %446 = vector.shape_cast %445 : vector<1x1x256xf32> to vector<1x256xf32>
    %447 = vector.shape_cast %444 : vector<1x256xf32> to vector<1x1x256xf32>
    tpu.vector_store %arg20[%c1_213, %c2_214, %c0_215], %447 {strides = array<i32>} : memref<2x18x256xf32, #tpu.memory_space<vmem>>, vector<1x1x256xf32>,
    %448 = vector.extract_strided_slice %373 {offsets = [1, 0], sizes = [1, 256], strides = [1, 1]} : vector<8x512xf32> to vector<1x256xf32>
    %c1_216 = arith.constant 1 : index
    %c3_217 = arith.constant 3 : index
    %c0_218 = arith.constant 0 : index
    %449 = vector.load %arg20[%c1_216, %c3_217, %c0_218] : memref<2x18x256xf32, #tpu.memory_space<vmem>>, vector<1x1x256xf32>
    %450 = vector.shape_cast %449 : vector<1x1x256xf32> to vector<1x256xf32>
    %451 = vector.shape_cast %448 : vector<1x256xf32> to vector<1x1x256xf32>
    tpu.vector_store %arg20[%c1_216, %c3_217, %c0_218], %451 {strides = array<i32>} : memref<2x18x256xf32, #tpu.memory_space<vmem>>, vector<1x1x256xf32>,
    %452 = vector.extract_strided_slice %373 {offsets = [1, 256], sizes = [1, 256], strides = [1, 1]} : vector<8x512xf32> to vector<1x256xf32>
    %c1_219 = arith.constant 1 : index
    %c4_220 = arith.constant 4 : index
    %c0_221 = arith.constant 0 : index
    %453 = vector.load %arg20[%c1_219, %c4_220, %c0_221] : memref<2x18x256xf32, #tpu.memory_space<vmem>>, vector<1x1x256xf32>
    %454 = vector.shape_cast %453 : vector<1x1x256xf32> to vector<1x256xf32>
    %455 = vector.shape_cast %452 : vector<1x256xf32> to vector<1x1x256xf32>
    tpu.vector_store %arg20[%c1_219, %c4_220, %c0_221], %455 {strides = array<i32>} : memref<2x18x256xf32, #tpu.memory_space<vmem>>, vector<1x1x256xf32>,
    %456 = vector.extract_strided_slice %373 {offsets = [2, 0], sizes = [1, 256], strides = [1, 1]} : vector<8x512xf32> to vector<1x256xf32>
    %c1_222 = arith.constant 1 : index
    %c5_223 = arith.constant 5 : index
    %c0_224 = arith.constant 0 : index
    %457 = vector.load %arg20[%c1_222, %c5_223, %c0_224] : memref<2x18x256xf32, #tpu.memory_space<vmem>>, vector<1x1x256xf32>
    %458 = vector.shape_cast %457 : vector<1x1x256xf32> to vector<1x256xf32>
    %459 = vector.shape_cast %456 : vector<1x256xf32> to vector<1x1x256xf32>
    tpu.vector_store %arg20[%c1_222, %c5_223, %c0_224], %459 {strides = array<i32>} : memref<2x18x256xf32, #tpu.memory_space<vmem>>, vector<1x1x256xf32>,
    %460 = vector.extract_strided_slice %373 {offsets = [2, 256], sizes = [1, 256], strides = [1, 1]} : vector<8x512xf32> to vector<1x256xf32>
    %c1_225 = arith.constant 1 : index
    %c6_226 = arith.constant 6 : index
    %c0_227 = arith.constant 0 : index
    %461 = vector.load %arg20[%c1_225, %c6_226, %c0_227] : memref<2x18x256xf32, #tpu.memory_space<vmem>>, vector<1x1x256xf32>
    %462 = vector.shape_cast %461 : vector<1x1x256xf32> to vector<1x256xf32>
    %463 = vector.shape_cast %460 : vector<1x256xf32> to vector<1x1x256xf32>
    tpu.vector_store %arg20[%c1_225, %c6_226, %c0_227], %463 {strides = array<i32>} : memref<2x18x256xf32, #tpu.memory_space<vmem>>, vector<1x1x256xf32>,
    %464 = vector.extract_strided_slice %373 {offsets = [3, 0], sizes = [1, 256], strides = [1, 1]} : vector<8x512xf32> to vector<1x256xf32>
    %c1_228 = arith.constant 1 : index
    %c7_229 = arith.constant 7 : index
    %c0_230 = arith.constant 0 : index
    %465 = vector.load %arg20[%c1_228, %c7_229, %c0_230] : memref<2x18x256xf32, #tpu.memory_space<vmem>>, vector<1x1x256xf32>
    %466 = vector.shape_cast %465 : vector<1x1x256xf32> to vector<1x256xf32>
    %467 = vector.shape_cast %464 : vector<1x256xf32> to vector<1x1x256xf32>
    tpu.vector_store %arg20[%c1_228, %c7_229, %c0_230], %467 {strides = array<i32>} : memref<2x18x256xf32, #tpu.memory_space<vmem>>, vector<1x1x256xf32>,
    %468 = vector.extract_strided_slice %373 {offsets = [3, 256], sizes = [1, 256], strides = [1, 1]} : vector<8x512xf32> to vector<1x256xf32>
    %c1_231 = arith.constant 1 : index
    %c8_232 = arith.constant 8 : index
    %c0_233 = arith.constant 0 : index
    %469 = vector.load %arg20[%c1_231, %c8_232, %c0_233] : memref<2x18x256xf32, #tpu.memory_space<vmem>>, vector<1x1x256xf32>
    %470 = vector.shape_cast %469 : vector<1x1x256xf32> to vector<1x256xf32>
    %471 = vector.shape_cast %468 : vector<1x256xf32> to vector<1x1x256xf32>
    tpu.vector_store %arg20[%c1_231, %c8_232, %c0_233], %471 {strides = array<i32>} : memref<2x18x256xf32, #tpu.memory_space<vmem>>, vector<1x1x256xf32>,
    %472 = vector.extract_strided_slice %373 {offsets = [4, 0], sizes = [1, 256], strides = [1, 1]} : vector<8x512xf32> to vector<1x256xf32>
    %c1_234 = arith.constant 1 : index
    %c9_235 = arith.constant 9 : index
    %c0_236 = arith.constant 0 : index
    %473 = vector.load %arg20[%c1_234, %c9_235, %c0_236] : memref<2x18x256xf32, #tpu.memory_space<vmem>>, vector<1x1x256xf32>
    %474 = vector.shape_cast %473 : vector<1x1x256xf32> to vector<1x256xf32>
    %475 = vector.shape_cast %472 : vector<1x256xf32> to vector<1x1x256xf32>
    tpu.vector_store %arg20[%c1_234, %c9_235, %c0_236], %475 {strides = array<i32>} : memref<2x18x256xf32, #tpu.memory_space<vmem>>, vector<1x1x256xf32>,
    %476 = vector.extract_strided_slice %373 {offsets = [4, 256], sizes = [1, 256], strides = [1, 1]} : vector<8x512xf32> to vector<1x256xf32>
    %c1_237 = arith.constant 1 : index
    %c10_238 = arith.constant 10 : index
    %c0_239 = arith.constant 0 : index
    %477 = vector.load %arg20[%c1_237, %c10_238, %c0_239] : memref<2x18x256xf32, #tpu.memory_space<vmem>>, vector<1x1x256xf32>
    %478 = vector.shape_cast %477 : vector<1x1x256xf32> to vector<1x256xf32>
    %479 = vector.shape_cast %476 : vector<1x256xf32> to vector<1x1x256xf32>
    tpu.vector_store %arg20[%c1_237, %c10_238, %c0_239], %479 {strides = array<i32>} : memref<2x18x256xf32, #tpu.memory_space<vmem>>, vector<1x1x256xf32>,
    %480 = vector.extract_strided_slice %373 {offsets = [5, 0], sizes = [1, 256], strides = [1, 1]} : vector<8x512xf32> to vector<1x256xf32>
    %c1_240 = arith.constant 1 : index
    %c11_241 = arith.constant 11 : index
    %c0_242 = arith.constant 0 : index
    %481 = vector.load %arg20[%c1_240, %c11_241, %c0_242] : memref<2x18x256xf32, #tpu.memory_space<vmem>>, vector<1x1x256xf32>
    %482 = vector.shape_cast %481 : vector<1x1x256xf32> to vector<1x256xf32>
    %483 = vector.shape_cast %480 : vector<1x256xf32> to vector<1x1x256xf32>
    tpu.vector_store %arg20[%c1_240, %c11_241, %c0_242], %483 {strides = array<i32>} : memref<2x18x256xf32, #tpu.memory_space<vmem>>, vector<1x1x256xf32>,
    %484 = vector.extract_strided_slice %373 {offsets = [5, 256], sizes = [1, 256], strides = [1, 1]} : vector<8x512xf32> to vector<1x256xf32>
    %c1_243 = arith.constant 1 : index
    %c12_244 = arith.constant 12 : index
    %c0_245 = arith.constant 0 : index
    %485 = vector.load %arg20[%c1_243, %c12_244, %c0_245] : memref<2x18x256xf32, #tpu.memory_space<vmem>>, vector<1x1x256xf32>
    %486 = vector.shape_cast %485 : vector<1x1x256xf32> to vector<1x256xf32>
    %487 = vector.shape_cast %484 : vector<1x256xf32> to vector<1x1x256xf32>
    tpu.vector_store %arg20[%c1_243, %c12_244, %c0_245], %487 {strides = array<i32>} : memref<2x18x256xf32, #tpu.memory_space<vmem>>, vector<1x1x256xf32>,
    %488 = vector.extract_strided_slice %373 {offsets = [6, 0], sizes = [1, 256], strides = [1, 1]} : vector<8x512xf32> to vector<1x256xf32>
    %c1_246 = arith.constant 1 : index
    %c13_247 = arith.constant 13 : index
    %c0_248 = arith.constant 0 : index
    %489 = vector.load %arg20[%c1_246, %c13_247, %c0_248] : memref<2x18x256xf32, #tpu.memory_space<vmem>>, vector<1x1x256xf32>
    %490 = vector.shape_cast %489 : vector<1x1x256xf32> to vector<1x256xf32>
    %491 = vector.shape_cast %488 : vector<1x256xf32> to vector<1x1x256xf32>
    tpu.vector_store %arg20[%c1_246, %c13_247, %c0_248], %491 {strides = array<i32>} : memref<2x18x256xf32, #tpu.memory_space<vmem>>, vector<1x1x256xf32>,
    %492 = vector.extract_strided_slice %373 {offsets = [6, 256], sizes = [1, 256], strides = [1, 1]} : vector<8x512xf32> to vector<1x256xf32>
    %c1_249 = arith.constant 1 : index
    %c14_250 = arith.constant 14 : index
    %c0_251 = arith.constant 0 : index
    %493 = vector.load %arg20[%c1_249, %c14_250, %c0_251] : memref<2x18x256xf32, #tpu.memory_space<vmem>>, vector<1x1x256xf32>
    %494 = vector.shape_cast %493 : vector<1x1x256xf32> to vector<1x256xf32>
    %495 = vector.shape_cast %492 : vector<1x256xf32> to vector<1x1x256xf32>
    tpu.vector_store %arg20[%c1_249, %c14_250, %c0_251], %495 {strides = array<i32>} : memref<2x18x256xf32, #tpu.memory_space<vmem>>, vector<1x1x256xf32>,
    %496 = vector.extract_strided_slice %373 {offsets = [7, 0], sizes = [1, 256], strides = [1, 1]} : vector<8x512xf32> to vector<1x256xf32>
    %c1_252 = arith.constant 1 : index
    %c15_253 = arith.constant 15 : index
    %c0_254 = arith.constant 0 : index
    %497 = vector.load %arg20[%c1_252, %c15_253, %c0_254] : memref<2x18x256xf32, #tpu.memory_space<vmem>>, vector<1x1x256xf32>
    %498 = vector.shape_cast %497 : vector<1x1x256xf32> to vector<1x256xf32>
    %499 = vector.shape_cast %496 : vector<1x256xf32> to vector<1x1x256xf32>
    tpu.vector_store %arg20[%c1_252, %c15_253, %c0_254], %499 {strides = array<i32>} : memref<2x18x256xf32, #tpu.memory_space<vmem>>, vector<1x1x256xf32>,
    %500 = vector.extract_strided_slice %373 {offsets = [7, 256], sizes = [1, 256], strides = [1, 1]} : vector<8x512xf32> to vector<1x256xf32>
    %c1_255 = arith.constant 1 : index
    %c16_256 = arith.constant 16 : index
    %c0_257 = arith.constant 0 : index
    %501 = vector.load %arg20[%c1_255, %c16_256, %c0_257] : memref<2x18x256xf32, #tpu.memory_space<vmem>>, vector<1x1x256xf32>
    %502 = vector.shape_cast %501 : vector<1x1x256xf32> to vector<1x256xf32>
    %503 = vector.shape_cast %500 : vector<1x256xf32> to vector<1x1x256xf32>
    tpu.vector_store %arg20[%c1_255, %c16_256, %c0_257], %503 {strides = array<i32>} : memref<2x18x256xf32, #tpu.memory_space<vmem>>, vector<1x1x256xf32>,
    %c0_258 = arith.constant 0 : index
    %c0_259 = arith.constant 0 : index
    %c0_260 = arith.constant 0 : index
    %504 = vector.load %arg20[%c0_258, %c0_259, %c0_260] : memref<2x18x256xf32, #tpu.memory_space<vmem>>, vector<1x16x256xf32>
    %505 = vector.shape_cast %504 : vector<1x16x256xf32> to vector<16x256xf32>
    %c0_261 = arith.constant 0 : index
    %c1_262 = arith.constant 1 : index
    %c0_263 = arith.constant 0 : index
    %506 = vector.load %arg20[%c0_261, %c1_262, %c0_263] : memref<2x18x256xf32, #tpu.memory_space<vmem>>, vector<1x16x256xf32>
    %507 = vector.shape_cast %506 : vector<1x16x256xf32> to vector<16x256xf32>
    %c0_264 = arith.constant 0 : index
    %c2_265 = arith.constant 2 : index
    %c0_266 = arith.constant 0 : index
    %508 = vector.load %arg20[%c0_264, %c2_265, %c0_266] : memref<2x18x256xf32, #tpu.memory_space<vmem>>, vector<1x16x256xf32>
    %509 = vector.shape_cast %508 : vector<1x16x256xf32> to vector<16x256xf32>
    %510 = tpu.concatenate %505, %507, %509 in 1 : vector<16x256xf32>, vector<16x256xf32>, vector<16x256xf32> -> vector<16x768xf32>
    %511 = arith.truncf %510 : vector<16x768xf32> to vector<16x768xbf16>
    %c0_267 = arith.constant 0 : index
    %c0_268 = arith.constant 0 : index
    %512 = vector.load %arg13[%c0_267, %c0_268] : memref<768x512xbf16, #tpu.memory_space<vmem>>, vector<768x512xbf16>
    %cst_269 = arith.constant dense<0.000000e+00> : vector<16x512xf32>
    %513 = tpu.matmul %511, %512, %cst_269 {dimension_numbers = #tpu.dot_dimension_numbers<[1], [0], [0], [1], [0, 0, 1, 1], [], []>} : vector<16x768xbf16>, vector<768x512xbf16>, vector<16x512xf32> -> vector<16x512xf32>
    %c1_270 = arith.constant 1 : index
    %c0_271 = arith.constant 0 : index
    %c0_272 = arith.constant 0 : index
    %514 = vector.load %arg20[%c1_270, %c0_271, %c0_272] : memref<2x18x256xf32, #tpu.memory_space<vmem>>, vector<1x16x256xf32>
    %515 = vector.shape_cast %514 : vector<1x16x256xf32> to vector<16x256xf32>
    %c1_273 = arith.constant 1 : index
    %c1_274 = arith.constant 1 : index
    %c0_275 = arith.constant 0 : index
    %516 = vector.load %arg20[%c1_273, %c1_274, %c0_275] : memref<2x18x256xf32, #tpu.memory_space<vmem>>, vector<1x16x256xf32>
    %517 = vector.shape_cast %516 : vector<1x16x256xf32> to vector<16x256xf32>
    %c1_276 = arith.constant 1 : index
    %c2_277 = arith.constant 2 : index
    %c0_278 = arith.constant 0 : index
    %518 = vector.load %arg20[%c1_276, %c2_277, %c0_278] : memref<2x18x256xf32, #tpu.memory_space<vmem>>, vector<1x16x256xf32>
    %519 = vector.shape_cast %518 : vector<1x16x256xf32> to vector<16x256xf32>
    %520 = tpu.concatenate %515, %517, %519 in 1 : vector<16x256xf32>, vector<16x256xf32>, vector<16x256xf32> -> vector<16x768xf32>
    %521 = arith.truncf %520 : vector<16x768xf32> to vector<16x768xbf16>
    %c0_279 = arith.constant 0 : index
    %c0_280 = arith.constant 0 : index
    %522 = vector.load %arg13[%c0_279, %c0_280] : memref<768x512xbf16, #tpu.memory_space<vmem>>, vector<768x512xbf16>
    %cst_281 = arith.constant dense<0.000000e+00> : vector<16x512xf32>
    %523 = tpu.matmul %521, %522, %cst_281 {dimension_numbers = #tpu.dot_dimension_numbers<[1], [0], [0], [1], [0, 0, 1, 1], [], []>} : vector<16x768xbf16>, vector<768x512xbf16>, vector<16x512xf32> -> vector<16x512xf32>
    %cst_282 = arith.constant dense<0.000000e+00> : vector<512xf32>
    %524 = vector.multi_reduction <add>, %513, %cst_282 [0] : vector<16x512xf32> to vector<512xf32>
    %525 = vector.shape_cast %524 : vector<512xf32> to vector<1x512xf32>
    %cst_283 = arith.constant dense<0.000000e+00> : vector<512xf32>
    %526 = vector.multi_reduction <add>, %523, %cst_283 [0] : vector<16x512xf32> to vector<512xf32>
    %527 = vector.shape_cast %526 : vector<512xf32> to vector<1x512xf32>
    %528 = arith.addf %525, %527 : vector<1x512xf32>
    %529 = vector.extract_strided_slice %528 {offsets = [0, 0], sizes = [1, 256], strides = [1, 1]} : vector<1x512xf32> to vector<1x256xf32>
    %530 = vector.extract_strided_slice %528 {offsets = [0, 256], sizes = [1, 256], strides = [1, 1]} : vector<1x512xf32> to vector<1x256xf32>
    %531 = arith.addf %529, %530 : vector<1x256xf32>
    %532 = vector.extract_strided_slice %531 {offsets = [0, 0], sizes = [1, 128], strides = [1, 1]} : vector<1x256xf32> to vector<1x128xf32>
    %533 = vector.extract_strided_slice %531 {offsets = [0, 128], sizes = [1, 128], strides = [1, 1]} : vector<1x256xf32> to vector<1x128xf32>
    %534 = arith.addf %532, %533 : vector<1x128xf32>
    %535 = vector.extract_strided_slice %534 {offsets = [0, 0], sizes = [1, 64], strides = [1, 1]} : vector<1x128xf32> to vector<1x64xf32>
    %536 = vector.extract_strided_slice %534 {offsets = [0, 64], sizes = [1, 64], strides = [1, 1]} : vector<1x128xf32> to vector<1x64xf32>
    %537 = arith.addf %535, %536 : vector<1x64xf32>
    %538 = vector.extract_strided_slice %537 {offsets = [0, 0], sizes = [1, 32], strides = [1, 1]} : vector<1x64xf32> to vector<1x32xf32>
    %539 = vector.extract_strided_slice %537 {offsets = [0, 32], sizes = [1, 32], strides = [1, 1]} : vector<1x64xf32> to vector<1x32xf32>
    %540 = arith.addf %538, %539 : vector<1x32xf32>
    %541 = vector.extract_strided_slice %540 {offsets = [0, 0], sizes = [1, 16], strides = [1, 1]} : vector<1x32xf32> to vector<1x16xf32>
    %542 = vector.extract_strided_slice %540 {offsets = [0, 16], sizes = [1, 16], strides = [1, 1]} : vector<1x32xf32> to vector<1x16xf32>
    %543 = arith.addf %541, %542 : vector<1x16xf32>
    %544 = vector.extract_strided_slice %543 {offsets = [0, 0], sizes = [1, 8], strides = [1, 1]} : vector<1x16xf32> to vector<1x8xf32>
    %545 = vector.extract_strided_slice %543 {offsets = [0, 8], sizes = [1, 8], strides = [1, 1]} : vector<1x16xf32> to vector<1x8xf32>
    %546 = arith.addf %544, %545 : vector<1x8xf32>
    %cst_284 = arith.constant 4.8828125E-4 : f32
    %547 = vector.broadcast %cst_284 : f32 to vector<1x8xf32>
    %548 = arith.mulf %546, %547 : vector<1x8xf32>
    %549 = tpu.concatenate %548, %548 in 1 : vector<1x8xf32>, vector<1x8xf32> -> vector<1x16xf32>
    %550 = tpu.concatenate %549, %549 in 1 : vector<1x16xf32>, vector<1x16xf32> -> vector<1x32xf32>
    %551 = tpu.concatenate %550, %550 in 1 : vector<1x32xf32>, vector<1x32xf32> -> vector<1x64xf32>
    %552 = tpu.concatenate %551, %551 in 1 : vector<1x64xf32>, vector<1x64xf32> -> vector<1x128xf32>
    %553 = tpu.concatenate %552, %552 in 1 : vector<1x128xf32>, vector<1x128xf32> -> vector<1x256xf32>
    %554 = tpu.concatenate %553, %553 in 1 : vector<1x256xf32>, vector<1x256xf32> -> vector<1x512xf32>
    %555 = vector.broadcast %554 : vector<1x512xf32> to vector<16x512xf32>
    %556 = arith.subf %513, %555 : vector<16x512xf32>
    %557 = arith.mulf %556, %556 : vector<16x512xf32>
    %cst_285 = arith.constant dense<0.000000e+00> : vector<512xf32>
    %558 = vector.multi_reduction <add>, %557, %cst_285 [0] : vector<16x512xf32> to vector<512xf32>
    %559 = vector.shape_cast %558 : vector<512xf32> to vector<1x512xf32>
    %560 = vector.broadcast %554 : vector<1x512xf32> to vector<16x512xf32>
    %561 = arith.subf %523, %560 : vector<16x512xf32>
    %562 = arith.mulf %561, %561 : vector<16x512xf32>
    %cst_286 = arith.constant dense<0.000000e+00> : vector<512xf32>
    %563 = vector.multi_reduction <add>, %562, %cst_286 [0] : vector<16x512xf32> to vector<512xf32>
    %564 = vector.shape_cast %563 : vector<512xf32> to vector<1x512xf32>
    %565 = arith.addf %559, %564 : vector<1x512xf32>
    %566 = vector.extract_strided_slice %565 {offsets = [0, 0], sizes = [1, 256], strides = [1, 1]} : vector<1x512xf32> to vector<1x256xf32>
    %567 = vector.extract_strided_slice %565 {offsets = [0, 256], sizes = [1, 256], strides = [1, 1]} : vector<1x512xf32> to vector<1x256xf32>
    %568 = arith.addf %566, %567 : vector<1x256xf32>
    %569 = vector.extract_strided_slice %568 {offsets = [0, 0], sizes = [1, 128], strides = [1, 1]} : vector<1x256xf32> to vector<1x128xf32>
    %570 = vector.extract_strided_slice %568 {offsets = [0, 128], sizes = [1, 128], strides = [1, 1]} : vector<1x256xf32> to vector<1x128xf32>
    %571 = arith.addf %569, %570 : vector<1x128xf32>
    %572 = vector.extract_strided_slice %571 {offsets = [0, 0], sizes = [1, 64], strides = [1, 1]} : vector<1x128xf32> to vector<1x64xf32>
    %573 = vector.extract_strided_slice %571 {offsets = [0, 64], sizes = [1, 64], strides = [1, 1]} : vector<1x128xf32> to vector<1x64xf32>
    %574 = arith.addf %572, %573 : vector<1x64xf32>
    %575 = vector.extract_strided_slice %574 {offsets = [0, 0], sizes = [1, 32], strides = [1, 1]} : vector<1x64xf32> to vector<1x32xf32>
    %576 = vector.extract_strided_slice %574 {offsets = [0, 32], sizes = [1, 32], strides = [1, 1]} : vector<1x64xf32> to vector<1x32xf32>
    %577 = arith.addf %575, %576 : vector<1x32xf32>
    %578 = vector.extract_strided_slice %577 {offsets = [0, 0], sizes = [1, 16], strides = [1, 1]} : vector<1x32xf32> to vector<1x16xf32>
    %579 = vector.extract_strided_slice %577 {offsets = [0, 16], sizes = [1, 16], strides = [1, 1]} : vector<1x32xf32> to vector<1x16xf32>
    %580 = arith.addf %578, %579 : vector<1x16xf32>
    %581 = vector.extract_strided_slice %580 {offsets = [0, 0], sizes = [1, 8], strides = [1, 1]} : vector<1x16xf32> to vector<1x8xf32>
    %582 = vector.extract_strided_slice %580 {offsets = [0, 8], sizes = [1, 8], strides = [1, 1]} : vector<1x16xf32> to vector<1x8xf32>
    %583 = arith.addf %581, %582 : vector<1x8xf32>
    %cst_287 = arith.constant 4.8828125E-4 : f32
    %584 = vector.broadcast %cst_287 : f32 to vector<1x8xf32>
    %585 = arith.mulf %583, %584 : vector<1x8xf32>
    %c0_288 = arith.constant 0 : index
    %c0_289 = arith.constant 0 : index
    %586 = vector.load %arg14[%c0_288, %c0_289] : memref<1x8xf32, #tpu.memory_space<vmem>>, vector<1x8xf32>
    %cst_290 = arith.constant 9.99999974E-6 : f32
    %587 = vector.broadcast %cst_290 : f32 to vector<1x8xf32>
    %588 = arith.addf %585, %587 : vector<1x8xf32>
    %589 = math.rsqrt %588 : vector<1x8xf32>
    %590 = arith.mulf %586, %589 : vector<1x8xf32>
    %c0_291 = arith.constant 0 : index
    %c0_292 = arith.constant 0 : index
    %591 = vector.load %arg15[%c0_291, %c0_292] : memref<1x8xf32, #tpu.memory_space<vmem>>, vector<1x8xf32>
    %592 = arith.mulf %548, %590 : vector<1x8xf32>
    %593 = arith.subf %591, %592 : vector<1x8xf32>
    %594 = tpu.concatenate %590, %590 in 1 : vector<1x8xf32>, vector<1x8xf32> -> vector<1x16xf32>
    %595 = tpu.concatenate %594, %594 in 1 : vector<1x16xf32>, vector<1x16xf32> -> vector<1x32xf32>
    %596 = tpu.concatenate %595, %595 in 1 : vector<1x32xf32>, vector<1x32xf32> -> vector<1x64xf32>
    %597 = tpu.concatenate %596, %596 in 1 : vector<1x64xf32>, vector<1x64xf32> -> vector<1x128xf32>
    %598 = tpu.concatenate %597, %597 in 1 : vector<1x128xf32>, vector<1x128xf32> -> vector<1x256xf32>
    %599 = tpu.concatenate %598, %598 in 1 : vector<1x256xf32>, vector<1x256xf32> -> vector<1x512xf32>
    %600 = tpu.concatenate %593, %593 in 1 : vector<1x8xf32>, vector<1x8xf32> -> vector<1x16xf32>
    %601 = tpu.concatenate %600, %600 in 1 : vector<1x16xf32>, vector<1x16xf32> -> vector<1x32xf32>
    %602 = tpu.concatenate %601, %601 in 1 : vector<1x32xf32>, vector<1x32xf32> -> vector<1x64xf32>
    %603 = tpu.concatenate %602, %602 in 1 : vector<1x64xf32>, vector<1x64xf32> -> vector<1x128xf32>
    %604 = tpu.concatenate %603, %603 in 1 : vector<1x128xf32>, vector<1x128xf32> -> vector<1x256xf32>
    %605 = tpu.concatenate %604, %604 in 1 : vector<1x256xf32>, vector<1x256xf32> -> vector<1x512xf32>
    %606 = vector.broadcast %599 : vector<1x512xf32> to vector<16x512xf32>
    %607 = arith.mulf %513, %606 : vector<16x512xf32>
    %608 = vector.broadcast %605 : vector<1x512xf32> to vector<16x512xf32>
    %609 = arith.addf %607, %608 : vector<16x512xf32>
    %cst_293 = arith.constant 0.000000e+00 : f32
    %610 = vector.broadcast %cst_293 : f32 to vector<16x512xf32>
    %611 = arith.maximumf %609, %610 : vector<16x512xf32>
    %612 = vector.broadcast %599 : vector<1x512xf32> to vector<16x512xf32>
    %613 = arith.mulf %523, %612 : vector<16x512xf32>
    %614 = vector.broadcast %605 : vector<1x512xf32> to vector<16x512xf32>
    %615 = arith.addf %613, %614 : vector<16x512xf32>
    %cst_294 = arith.constant 0.000000e+00 : f32
    %616 = vector.broadcast %cst_294 : f32 to vector<16x512xf32>
    %617 = arith.maximumf %615, %616 : vector<16x512xf32>
    %cst_295 = arith.constant 0.000000e+00 : f32
    %618 = vector.broadcast %cst_295 : f32 to vector<2x34x256xf32>
    %c0_296 = arith.constant 0 : index
    %c0_297 = arith.constant 0 : index
    %c0_298 = arith.constant 0 : index
    %619 = vector.load %arg21[%c0_296, %c0_297, %c0_298] : memref<2x34x256xf32, #tpu.memory_space<vmem>>, vector<2x34x256xf32>
    tpu.vector_store %arg21[%c0_296, %c0_297, %c0_298], %618 {strides = array<i32>} : memref<2x34x256xf32, #tpu.memory_space<vmem>>, vector<2x34x256xf32>,
    %620 = vector.extract_strided_slice %611 {offsets = [0, 0], sizes = [1, 256], strides = [1, 1]} : vector<16x512xf32> to vector<1x256xf32>
    %c0_299 = arith.constant 0 : index
    %c1_300 = arith.constant 1 : index
    %c0_301 = arith.constant 0 : index
    %621 = vector.load %arg21[%c0_299, %c1_300, %c0_301] : memref<2x34x256xf32, #tpu.memory_space<vmem>>, vector<1x1x256xf32>
    %622 = vector.shape_cast %621 : vector<1x1x256xf32> to vector<1x256xf32>
    %623 = vector.shape_cast %620 : vector<1x256xf32> to vector<1x1x256xf32>
    tpu.vector_store %arg21[%c0_299, %c1_300, %c0_301], %623 {strides = array<i32>} : memref<2x34x256xf32, #tpu.memory_space<vmem>>, vector<1x1x256xf32>,
    %624 = vector.extract_strided_slice %611 {offsets = [0, 256], sizes = [1, 256], strides = [1, 1]} : vector<16x512xf32> to vector<1x256xf32>
    %c0_302 = arith.constant 0 : index
    %c2_303 = arith.constant 2 : index
    %c0_304 = arith.constant 0 : index
    %625 = vector.load %arg21[%c0_302, %c2_303, %c0_304] : memref<2x34x256xf32, #tpu.memory_space<vmem>>, vector<1x1x256xf32>
    %626 = vector.shape_cast %625 : vector<1x1x256xf32> to vector<1x256xf32>
    %627 = vector.shape_cast %624 : vector<1x256xf32> to vector<1x1x256xf32>
    tpu.vector_store %arg21[%c0_302, %c2_303, %c0_304], %627 {strides = array<i32>} : memref<2x34x256xf32, #tpu.memory_space<vmem>>, vector<1x1x256xf32>,
    %628 = vector.extract_strided_slice %611 {offsets = [1, 0], sizes = [1, 256], strides = [1, 1]} : vector<16x512xf32> to vector<1x256xf32>
    %c0_305 = arith.constant 0 : index
    %c3_306 = arith.constant 3 : index
    %c0_307 = arith.constant 0 : index
    %629 = vector.load %arg21[%c0_305, %c3_306, %c0_307] : memref<2x34x256xf32, #tpu.memory_space<vmem>>, vector<1x1x256xf32>
    %630 = vector.shape_cast %629 : vector<1x1x256xf32> to vector<1x256xf32>
    %631 = vector.shape_cast %628 : vector<1x256xf32> to vector<1x1x256xf32>
    tpu.vector_store %arg21[%c0_305, %c3_306, %c0_307], %631 {strides = array<i32>} : memref<2x34x256xf32, #tpu.memory_space<vmem>>, vector<1x1x256xf32>,
    %632 = vector.extract_strided_slice %611 {offsets = [1, 256], sizes = [1, 256], strides = [1, 1]} : vector<16x512xf32> to vector<1x256xf32>
    %c0_308 = arith.constant 0 : index
    %c4_309 = arith.constant 4 : index
    %c0_310 = arith.constant 0 : index
    %633 = vector.load %arg21[%c0_308, %c4_309, %c0_310] : memref<2x34x256xf32, #tpu.memory_space<vmem>>, vector<1x1x256xf32>
    %634 = vector.shape_cast %633 : vector<1x1x256xf32> to vector<1x256xf32>
    %635 = vector.shape_cast %632 : vector<1x256xf32> to vector<1x1x256xf32>
    tpu.vector_store %arg21[%c0_308, %c4_309, %c0_310], %635 {strides = array<i32>} : memref<2x34x256xf32, #tpu.memory_space<vmem>>, vector<1x1x256xf32>,
    %636 = vector.extract_strided_slice %611 {offsets = [2, 0], sizes = [1, 256], strides = [1, 1]} : vector<16x512xf32> to vector<1x256xf32>
    %c0_311 = arith.constant 0 : index
    %c5_312 = arith.constant 5 : index
    %c0_313 = arith.constant 0 : index
    %637 = vector.load %arg21[%c0_311, %c5_312, %c0_313] : memref<2x34x256xf32, #tpu.memory_space<vmem>>, vector<1x1x256xf32>
    %638 = vector.shape_cast %637 : vector<1x1x256xf32> to vector<1x256xf32>
    %639 = vector.shape_cast %636 : vector<1x256xf32> to vector<1x1x256xf32>
    tpu.vector_store %arg21[%c0_311, %c5_312, %c0_313], %639 {strides = array<i32>} : memref<2x34x256xf32, #tpu.memory_space<vmem>>, vector<1x1x256xf32>,
    %640 = vector.extract_strided_slice %611 {offsets = [2, 256], sizes = [1, 256], strides = [1, 1]} : vector<16x512xf32> to vector<1x256xf32>
    %c0_314 = arith.constant 0 : index
    %c6_315 = arith.constant 6 : index
    %c0_316 = arith.constant 0 : index
    %641 = vector.load %arg21[%c0_314, %c6_315, %c0_316] : memref<2x34x256xf32, #tpu.memory_space<vmem>>, vector<1x1x256xf32>
    %642 = vector.shape_cast %641 : vector<1x1x256xf32> to vector<1x256xf32>
    %643 = vector.shape_cast %640 : vector<1x256xf32> to vector<1x1x256xf32>
    tpu.vector_store %arg21[%c0_314, %c6_315, %c0_316], %643 {strides = array<i32>} : memref<2x34x256xf32, #tpu.memory_space<vmem>>, vector<1x1x256xf32>,
    %644 = vector.extract_strided_slice %611 {offsets = [3, 0], sizes = [1, 256], strides = [1, 1]} : vector<16x512xf32> to vector<1x256xf32>
    %c0_317 = arith.constant 0 : index
    %c7_318 = arith.constant 7 : index
    %c0_319 = arith.constant 0 : index
    %645 = vector.load %arg21[%c0_317, %c7_318, %c0_319] : memref<2x34x256xf32, #tpu.memory_space<vmem>>, vector<1x1x256xf32>
    %646 = vector.shape_cast %645 : vector<1x1x256xf32> to vector<1x256xf32>
    %647 = vector.shape_cast %644 : vector<1x256xf32> to vector<1x1x256xf32>
    tpu.vector_store %arg21[%c0_317, %c7_318, %c0_319], %647 {strides = array<i32>} : memref<2x34x256xf32, #tpu.memory_space<vmem>>, vector<1x1x256xf32>,
    %648 = vector.extract_strided_slice %611 {offsets = [3, 256], sizes = [1, 256], strides = [1, 1]} : vector<16x512xf32> to vector<1x256xf32>
    %c0_320 = arith.constant 0 : index
    %c8_321 = arith.constant 8 : index
    %c0_322 = arith.constant 0 : index
    %649 = vector.load %arg21[%c0_320, %c8_321, %c0_322] : memref<2x34x256xf32, #tpu.memory_space<vmem>>, vector<1x1x256xf32>
    %650 = vector.shape_cast %649 : vector<1x1x256xf32> to vector<1x256xf32>
    %651 = vector.shape_cast %648 : vector<1x256xf32> to vector<1x1x256xf32>
    tpu.vector_store %arg21[%c0_320, %c8_321, %c0_322], %651 {strides = array<i32>} : memref<2x34x256xf32, #tpu.memory_space<vmem>>, vector<1x1x256xf32>,
    %652 = vector.extract_strided_slice %611 {offsets = [4, 0], sizes = [1, 256], strides = [1, 1]} : vector<16x512xf32> to vector<1x256xf32>
    %c0_323 = arith.constant 0 : index
    %c9_324 = arith.constant 9 : index
    %c0_325 = arith.constant 0 : index
    %653 = vector.load %arg21[%c0_323, %c9_324, %c0_325] : memref<2x34x256xf32, #tpu.memory_space<vmem>>, vector<1x1x256xf32>
    %654 = vector.shape_cast %653 : vector<1x1x256xf32> to vector<1x256xf32>
    %655 = vector.shape_cast %652 : vector<1x256xf32> to vector<1x1x256xf32>
    tpu.vector_store %arg21[%c0_323, %c9_324, %c0_325], %655 {strides = array<i32>} : memref<2x34x256xf32, #tpu.memory_space<vmem>>, vector<1x1x256xf32>,
    %656 = vector.extract_strided_slice %611 {offsets = [4, 256], sizes = [1, 256], strides = [1, 1]} : vector<16x512xf32> to vector<1x256xf32>
    %c0_326 = arith.constant 0 : index
    %c10_327 = arith.constant 10 : index
    %c0_328 = arith.constant 0 : index
    %657 = vector.load %arg21[%c0_326, %c10_327, %c0_328] : memref<2x34x256xf32, #tpu.memory_space<vmem>>, vector<1x1x256xf32>
    %658 = vector.shape_cast %657 : vector<1x1x256xf32> to vector<1x256xf32>
    %659 = vector.shape_cast %656 : vector<1x256xf32> to vector<1x1x256xf32>
    tpu.vector_store %arg21[%c0_326, %c10_327, %c0_328], %659 {strides = array<i32>} : memref<2x34x256xf32, #tpu.memory_space<vmem>>, vector<1x1x256xf32>,
    %660 = vector.extract_strided_slice %611 {offsets = [5, 0], sizes = [1, 256], strides = [1, 1]} : vector<16x512xf32> to vector<1x256xf32>
    %c0_329 = arith.constant 0 : index
    %c11_330 = arith.constant 11 : index
    %c0_331 = arith.constant 0 : index
    %661 = vector.load %arg21[%c0_329, %c11_330, %c0_331] : memref<2x34x256xf32, #tpu.memory_space<vmem>>, vector<1x1x256xf32>
    %662 = vector.shape_cast %661 : vector<1x1x256xf32> to vector<1x256xf32>
    %663 = vector.shape_cast %660 : vector<1x256xf32> to vector<1x1x256xf32>
    tpu.vector_store %arg21[%c0_329, %c11_330, %c0_331], %663 {strides = array<i32>} : memref<2x34x256xf32, #tpu.memory_space<vmem>>, vector<1x1x256xf32>,
    %664 = vector.extract_strided_slice %611 {offsets = [5, 256], sizes = [1, 256], strides = [1, 1]} : vector<16x512xf32> to vector<1x256xf32>
    %c0_332 = arith.constant 0 : index
    %c12_333 = arith.constant 12 : index
    %c0_334 = arith.constant 0 : index
    %665 = vector.load %arg21[%c0_332, %c12_333, %c0_334] : memref<2x34x256xf32, #tpu.memory_space<vmem>>, vector<1x1x256xf32>
    %666 = vector.shape_cast %665 : vector<1x1x256xf32> to vector<1x256xf32>
    %667 = vector.shape_cast %664 : vector<1x256xf32> to vector<1x1x256xf32>
    tpu.vector_store %arg21[%c0_332, %c12_333, %c0_334], %667 {strides = array<i32>} : memref<2x34x256xf32, #tpu.memory_space<vmem>>, vector<1x1x256xf32>,
    %668 = vector.extract_strided_slice %611 {offsets = [6, 0], sizes = [1, 256], strides = [1, 1]} : vector<16x512xf32> to vector<1x256xf32>
    %c0_335 = arith.constant 0 : index
    %c13_336 = arith.constant 13 : index
    %c0_337 = arith.constant 0 : index
    %669 = vector.load %arg21[%c0_335, %c13_336, %c0_337] : memref<2x34x256xf32, #tpu.memory_space<vmem>>, vector<1x1x256xf32>
    %670 = vector.shape_cast %669 : vector<1x1x256xf32> to vector<1x256xf32>
    %671 = vector.shape_cast %668 : vector<1x256xf32> to vector<1x1x256xf32>
    tpu.vector_store %arg21[%c0_335, %c13_336, %c0_337], %671 {strides = array<i32>} : memref<2x34x256xf32, #tpu.memory_space<vmem>>, vector<1x1x256xf32>,
    %672 = vector.extract_strided_slice %611 {offsets = [6, 256], sizes = [1, 256], strides = [1, 1]} : vector<16x512xf32> to vector<1x256xf32>
    %c0_338 = arith.constant 0 : index
    %c14_339 = arith.constant 14 : index
    %c0_340 = arith.constant 0 : index
    %673 = vector.load %arg21[%c0_338, %c14_339, %c0_340] : memref<2x34x256xf32, #tpu.memory_space<vmem>>, vector<1x1x256xf32>
    %674 = vector.shape_cast %673 : vector<1x1x256xf32> to vector<1x256xf32>
    %675 = vector.shape_cast %672 : vector<1x256xf32> to vector<1x1x256xf32>
    tpu.vector_store %arg21[%c0_338, %c14_339, %c0_340], %675 {strides = array<i32>} : memref<2x34x256xf32, #tpu.memory_space<vmem>>, vector<1x1x256xf32>,
    %676 = vector.extract_strided_slice %611 {offsets = [7, 0], sizes = [1, 256], strides = [1, 1]} : vector<16x512xf32> to vector<1x256xf32>
    %c0_341 = arith.constant 0 : index
    %c15_342 = arith.constant 15 : index
    %c0_343 = arith.constant 0 : index
    %677 = vector.load %arg21[%c0_341, %c15_342, %c0_343] : memref<2x34x256xf32, #tpu.memory_space<vmem>>, vector<1x1x256xf32>
    %678 = vector.shape_cast %677 : vector<1x1x256xf32> to vector<1x256xf32>
    %679 = vector.shape_cast %676 : vector<1x256xf32> to vector<1x1x256xf32>
    tpu.vector_store %arg21[%c0_341, %c15_342, %c0_343], %679 {strides = array<i32>} : memref<2x34x256xf32, #tpu.memory_space<vmem>>, vector<1x1x256xf32>,
    %680 = vector.extract_strided_slice %611 {offsets = [7, 256], sizes = [1, 256], strides = [1, 1]} : vector<16x512xf32> to vector<1x256xf32>
    %c0_344 = arith.constant 0 : index
    %c16_345 = arith.constant 16 : index
    %c0_346 = arith.constant 0 : index
    %681 = vector.load %arg21[%c0_344, %c16_345, %c0_346] : memref<2x34x256xf32, #tpu.memory_space<vmem>>, vector<1x1x256xf32>
    %682 = vector.shape_cast %681 : vector<1x1x256xf32> to vector<1x256xf32>
    %683 = vector.shape_cast %680 : vector<1x256xf32> to vector<1x1x256xf32>
    tpu.vector_store %arg21[%c0_344, %c16_345, %c0_346], %683 {strides = array<i32>} : memref<2x34x256xf32, #tpu.memory_space<vmem>>, vector<1x1x256xf32>,
    %684 = vector.extract_strided_slice %611 {offsets = [8, 0], sizes = [1, 256], strides = [1, 1]} : vector<16x512xf32> to vector<1x256xf32>
    %c0_347 = arith.constant 0 : index
    %c17 = arith.constant 17 : index
    %c0_348 = arith.constant 0 : index
    %685 = vector.load %arg21[%c0_347, %c17, %c0_348] : memref<2x34x256xf32, #tpu.memory_space<vmem>>, vector<1x1x256xf32>
    %686 = vector.shape_cast %685 : vector<1x1x256xf32> to vector<1x256xf32>
    %687 = vector.shape_cast %684 : vector<1x256xf32> to vector<1x1x256xf32>
    tpu.vector_store %arg21[%c0_347, %c17, %c0_348], %687 {strides = array<i32>} : memref<2x34x256xf32, #tpu.memory_space<vmem>>, vector<1x1x256xf32>,
    %688 = vector.extract_strided_slice %611 {offsets = [8, 256], sizes = [1, 256], strides = [1, 1]} : vector<16x512xf32> to vector<1x256xf32>
    %c0_349 = arith.constant 0 : index
    %c18 = arith.constant 18 : index
    %c0_350 = arith.constant 0 : index
    %689 = vector.load %arg21[%c0_349, %c18, %c0_350] : memref<2x34x256xf32, #tpu.memory_space<vmem>>, vector<1x1x256xf32>
    %690 = vector.shape_cast %689 : vector<1x1x256xf32> to vector<1x256xf32>
    %691 = vector.shape_cast %688 : vector<1x256xf32> to vector<1x1x256xf32>
    tpu.vector_store %arg21[%c0_349, %c18, %c0_350], %691 {strides = array<i32>} : memref<2x34x256xf32, #tpu.memory_space<vmem>>, vector<1x1x256xf32>,
    %692 = vector.extract_strided_slice %611 {offsets = [9, 0], sizes = [1, 256], strides = [1, 1]} : vector<16x512xf32> to vector<1x256xf32>
    %c0_351 = arith.constant 0 : index
    %c19 = arith.constant 19 : index
    %c0_352 = arith.constant 0 : index
    %693 = vector.load %arg21[%c0_351, %c19, %c0_352] : memref<2x34x256xf32, #tpu.memory_space<vmem>>, vector<1x1x256xf32>
    %694 = vector.shape_cast %693 : vector<1x1x256xf32> to vector<1x256xf32>
    %695 = vector.shape_cast %692 : vector<1x256xf32> to vector<1x1x256xf32>
    tpu.vector_store %arg21[%c0_351, %c19, %c0_352], %695 {strides = array<i32>} : memref<2x34x256xf32, #tpu.memory_space<vmem>>, vector<1x1x256xf32>,
    %696 = vector.extract_strided_slice %611 {offsets = [9, 256], sizes = [1, 256], strides = [1, 1]} : vector<16x512xf32> to vector<1x256xf32>
    %c0_353 = arith.constant 0 : index
    %c20 = arith.constant 20 : index
    %c0_354 = arith.constant 0 : index
    %697 = vector.load %arg21[%c0_353, %c20, %c0_354] : memref<2x34x256xf32, #tpu.memory_space<vmem>>, vector<1x1x256xf32>
    %698 = vector.shape_cast %697 : vector<1x1x256xf32> to vector<1x256xf32>
    %699 = vector.shape_cast %696 : vector<1x256xf32> to vector<1x1x256xf32>
    tpu.vector_store %arg21[%c0_353, %c20, %c0_354], %699 {strides = array<i32>} : memref<2x34x256xf32, #tpu.memory_space<vmem>>, vector<1x1x256xf32>,
    %700 = vector.extract_strided_slice %611 {offsets = [10, 0], sizes = [1, 256], strides = [1, 1]} : vector<16x512xf32> to vector<1x256xf32>
    %c0_355 = arith.constant 0 : index
    %c21 = arith.constant 21 : index
    %c0_356 = arith.constant 0 : index
    %701 = vector.load %arg21[%c0_355, %c21, %c0_356] : memref<2x34x256xf32, #tpu.memory_space<vmem>>, vector<1x1x256xf32>
    %702 = vector.shape_cast %701 : vector<1x1x256xf32> to vector<1x256xf32>
    %703 = vector.shape_cast %700 : vector<1x256xf32> to vector<1x1x256xf32>
    tpu.vector_store %arg21[%c0_355, %c21, %c0_356], %703 {strides = array<i32>} : memref<2x34x256xf32, #tpu.memory_space<vmem>>, vector<1x1x256xf32>,
    %704 = vector.extract_strided_slice %611 {offsets = [10, 256], sizes = [1, 256], strides = [1, 1]} : vector<16x512xf32> to vector<1x256xf32>
    %c0_357 = arith.constant 0 : index
    %c22 = arith.constant 22 : index
    %c0_358 = arith.constant 0 : index
    %705 = vector.load %arg21[%c0_357, %c22, %c0_358] : memref<2x34x256xf32, #tpu.memory_space<vmem>>, vector<1x1x256xf32>
    %706 = vector.shape_cast %705 : vector<1x1x256xf32> to vector<1x256xf32>
    %707 = vector.shape_cast %704 : vector<1x256xf32> to vector<1x1x256xf32>
    tpu.vector_store %arg21[%c0_357, %c22, %c0_358], %707 {strides = array<i32>} : memref<2x34x256xf32, #tpu.memory_space<vmem>>, vector<1x1x256xf32>,
    %708 = vector.extract_strided_slice %611 {offsets = [11, 0], sizes = [1, 256], strides = [1, 1]} : vector<16x512xf32> to vector<1x256xf32>
    %c0_359 = arith.constant 0 : index
    %c23 = arith.constant 23 : index
    %c0_360 = arith.constant 0 : index
    %709 = vector.load %arg21[%c0_359, %c23, %c0_360] : memref<2x34x256xf32, #tpu.memory_space<vmem>>, vector<1x1x256xf32>
    %710 = vector.shape_cast %709 : vector<1x1x256xf32> to vector<1x256xf32>
    %711 = vector.shape_cast %708 : vector<1x256xf32> to vector<1x1x256xf32>
    tpu.vector_store %arg21[%c0_359, %c23, %c0_360], %711 {strides = array<i32>} : memref<2x34x256xf32, #tpu.memory_space<vmem>>, vector<1x1x256xf32>,
    %712 = vector.extract_strided_slice %611 {offsets = [11, 256], sizes = [1, 256], strides = [1, 1]} : vector<16x512xf32> to vector<1x256xf32>
    %c0_361 = arith.constant 0 : index
    %c24 = arith.constant 24 : index
    %c0_362 = arith.constant 0 : index
    %713 = vector.load %arg21[%c0_361, %c24, %c0_362] : memref<2x34x256xf32, #tpu.memory_space<vmem>>, vector<1x1x256xf32>
    %714 = vector.shape_cast %713 : vector<1x1x256xf32> to vector<1x256xf32>
    %715 = vector.shape_cast %712 : vector<1x256xf32> to vector<1x1x256xf32>
    tpu.vector_store %arg21[%c0_361, %c24, %c0_362], %715 {strides = array<i32>} : memref<2x34x256xf32, #tpu.memory_space<vmem>>, vector<1x1x256xf32>,
    %716 = vector.extract_strided_slice %611 {offsets = [12, 0], sizes = [1, 256], strides = [1, 1]} : vector<16x512xf32> to vector<1x256xf32>
    %c0_363 = arith.constant 0 : index
    %c25 = arith.constant 25 : index
    %c0_364 = arith.constant 0 : index
    %717 = vector.load %arg21[%c0_363, %c25, %c0_364] : memref<2x34x256xf32, #tpu.memory_space<vmem>>, vector<1x1x256xf32>
    %718 = vector.shape_cast %717 : vector<1x1x256xf32> to vector<1x256xf32>
    %719 = vector.shape_cast %716 : vector<1x256xf32> to vector<1x1x256xf32>
    tpu.vector_store %arg21[%c0_363, %c25, %c0_364], %719 {strides = array<i32>} : memref<2x34x256xf32, #tpu.memory_space<vmem>>, vector<1x1x256xf32>,
    %720 = vector.extract_strided_slice %611 {offsets = [12, 256], sizes = [1, 256], strides = [1, 1]} : vector<16x512xf32> to vector<1x256xf32>
    %c0_365 = arith.constant 0 : index
    %c26 = arith.constant 26 : index
    %c0_366 = arith.constant 0 : index
    %721 = vector.load %arg21[%c0_365, %c26, %c0_366] : memref<2x34x256xf32, #tpu.memory_space<vmem>>, vector<1x1x256xf32>
    %722 = vector.shape_cast %721 : vector<1x1x256xf32> to vector<1x256xf32>
    %723 = vector.shape_cast %720 : vector<1x256xf32> to vector<1x1x256xf32>
    tpu.vector_store %arg21[%c0_365, %c26, %c0_366], %723 {strides = array<i32>} : memref<2x34x256xf32, #tpu.memory_space<vmem>>, vector<1x1x256xf32>,
    %724 = vector.extract_strided_slice %611 {offsets = [13, 0], sizes = [1, 256], strides = [1, 1]} : vector<16x512xf32> to vector<1x256xf32>
    %c0_367 = arith.constant 0 : index
    %c27 = arith.constant 27 : index
    %c0_368 = arith.constant 0 : index
    %725 = vector.load %arg21[%c0_367, %c27, %c0_368] : memref<2x34x256xf32, #tpu.memory_space<vmem>>, vector<1x1x256xf32>
    %726 = vector.shape_cast %725 : vector<1x1x256xf32> to vector<1x256xf32>
    %727 = vector.shape_cast %724 : vector<1x256xf32> to vector<1x1x256xf32>
    tpu.vector_store %arg21[%c0_367, %c27, %c0_368], %727 {strides = array<i32>} : memref<2x34x256xf32, #tpu.memory_space<vmem>>, vector<1x1x256xf32>,
    %728 = vector.extract_strided_slice %611 {offsets = [13, 256], sizes = [1, 256], strides = [1, 1]} : vector<16x512xf32> to vector<1x256xf32>
    %c0_369 = arith.constant 0 : index
    %c28 = arith.constant 28 : index
    %c0_370 = arith.constant 0 : index
    %729 = vector.load %arg21[%c0_369, %c28, %c0_370] : memref<2x34x256xf32, #tpu.memory_space<vmem>>, vector<1x1x256xf32>
    %730 = vector.shape_cast %729 : vector<1x1x256xf32> to vector<1x256xf32>
    %731 = vector.shape_cast %728 : vector<1x256xf32> to vector<1x1x256xf32>
    tpu.vector_store %arg21[%c0_369, %c28, %c0_370], %731 {strides = array<i32>} : memref<2x34x256xf32, #tpu.memory_space<vmem>>, vector<1x1x256xf32>,
    %732 = vector.extract_strided_slice %611 {offsets = [14, 0], sizes = [1, 256], strides = [1, 1]} : vector<16x512xf32> to vector<1x256xf32>
    %c0_371 = arith.constant 0 : index
    %c29 = arith.constant 29 : index
    %c0_372 = arith.constant 0 : index
    %733 = vector.load %arg21[%c0_371, %c29, %c0_372] : memref<2x34x256xf32, #tpu.memory_space<vmem>>, vector<1x1x256xf32>
    %734 = vector.shape_cast %733 : vector<1x1x256xf32> to vector<1x256xf32>
    %735 = vector.shape_cast %732 : vector<1x256xf32> to vector<1x1x256xf32>
    tpu.vector_store %arg21[%c0_371, %c29, %c0_372], %735 {strides = array<i32>} : memref<2x34x256xf32, #tpu.memory_space<vmem>>, vector<1x1x256xf32>,
    %736 = vector.extract_strided_slice %611 {offsets = [14, 256], sizes = [1, 256], strides = [1, 1]} : vector<16x512xf32> to vector<1x256xf32>
    %c0_373 = arith.constant 0 : index
    %c30 = arith.constant 30 : index
    %c0_374 = arith.constant 0 : index
    %737 = vector.load %arg21[%c0_373, %c30, %c0_374] : memref<2x34x256xf32, #tpu.memory_space<vmem>>, vector<1x1x256xf32>
    %738 = vector.shape_cast %737 : vector<1x1x256xf32> to vector<1x256xf32>
    %739 = vector.shape_cast %736 : vector<1x256xf32> to vector<1x1x256xf32>
    tpu.vector_store %arg21[%c0_373, %c30, %c0_374], %739 {strides = array<i32>} : memref<2x34x256xf32, #tpu.memory_space<vmem>>, vector<1x1x256xf32>,
    %740 = vector.extract_strided_slice %611 {offsets = [15, 0], sizes = [1, 256], strides = [1, 1]} : vector<16x512xf32> to vector<1x256xf32>
    %c0_375 = arith.constant 0 : index
    %c31 = arith.constant 31 : index
    %c0_376 = arith.constant 0 : index
    %741 = vector.load %arg21[%c0_375, %c31, %c0_376] : memref<2x34x256xf32, #tpu.memory_space<vmem>>, vector<1x1x256xf32>
    %742 = vector.shape_cast %741 : vector<1x1x256xf32> to vector<1x256xf32>
    %743 = vector.shape_cast %740 : vector<1x256xf32> to vector<1x1x256xf32>
    tpu.vector_store %arg21[%c0_375, %c31, %c0_376], %743 {strides = array<i32>} : memref<2x34x256xf32, #tpu.memory_space<vmem>>, vector<1x1x256xf32>,
    %744 = vector.extract_strided_slice %611 {offsets = [15, 256], sizes = [1, 256], strides = [1, 1]} : vector<16x512xf32> to vector<1x256xf32>
    %c0_377 = arith.constant 0 : index
    %c32 = arith.constant 32 : index
    %c0_378 = arith.constant 0 : index
    %745 = vector.load %arg21[%c0_377, %c32, %c0_378] : memref<2x34x256xf32, #tpu.memory_space<vmem>>, vector<1x1x256xf32>
    %746 = vector.shape_cast %745 : vector<1x1x256xf32> to vector<1x256xf32>
    %747 = vector.shape_cast %744 : vector<1x256xf32> to vector<1x1x256xf32>
    tpu.vector_store %arg21[%c0_377, %c32, %c0_378], %747 {strides = array<i32>} : memref<2x34x256xf32, #tpu.memory_space<vmem>>, vector<1x1x256xf32>,
    %748 = vector.extract_strided_slice %617 {offsets = [0, 0], sizes = [1, 256], strides = [1, 1]} : vector<16x512xf32> to vector<1x256xf32>
    %c1_379 = arith.constant 1 : index
    %c1_380 = arith.constant 1 : index
    %c0_381 = arith.constant 0 : index
    %749 = vector.load %arg21[%c1_379, %c1_380, %c0_381] : memref<2x34x256xf32, #tpu.memory_space<vmem>>, vector<1x1x256xf32>
    %750 = vector.shape_cast %749 : vector<1x1x256xf32> to vector<1x256xf32>
    %751 = vector.shape_cast %748 : vector<1x256xf32> to vector<1x1x256xf32>
    tpu.vector_store %arg21[%c1_379, %c1_380, %c0_381], %751 {strides = array<i32>} : memref<2x34x256xf32, #tpu.memory_space<vmem>>, vector<1x1x256xf32>,
    %752 = vector.extract_strided_slice %617 {offsets = [0, 256], sizes = [1, 256], strides = [1, 1]} : vector<16x512xf32> to vector<1x256xf32>
    %c1_382 = arith.constant 1 : index
    %c2_383 = arith.constant 2 : index
    %c0_384 = arith.constant 0 : index
    %753 = vector.load %arg21[%c1_382, %c2_383, %c0_384] : memref<2x34x256xf32, #tpu.memory_space<vmem>>, vector<1x1x256xf32>
    %754 = vector.shape_cast %753 : vector<1x1x256xf32> to vector<1x256xf32>
    %755 = vector.shape_cast %752 : vector<1x256xf32> to vector<1x1x256xf32>
    tpu.vector_store %arg21[%c1_382, %c2_383, %c0_384], %755 {strides = array<i32>} : memref<2x34x256xf32, #tpu.memory_space<vmem>>, vector<1x1x256xf32>,
    %756 = vector.extract_strided_slice %617 {offsets = [1, 0], sizes = [1, 256], strides = [1, 1]} : vector<16x512xf32> to vector<1x256xf32>
    %c1_385 = arith.constant 1 : index
    %c3_386 = arith.constant 3 : index
    %c0_387 = arith.constant 0 : index
    %757 = vector.load %arg21[%c1_385, %c3_386, %c0_387] : memref<2x34x256xf32, #tpu.memory_space<vmem>>, vector<1x1x256xf32>
    %758 = vector.shape_cast %757 : vector<1x1x256xf32> to vector<1x256xf32>
    %759 = vector.shape_cast %756 : vector<1x256xf32> to vector<1x1x256xf32>
    tpu.vector_store %arg21[%c1_385, %c3_386, %c0_387], %759 {strides = array<i32>} : memref<2x34x256xf32, #tpu.memory_space<vmem>>, vector<1x1x256xf32>,
    %760 = vector.extract_strided_slice %617 {offsets = [1, 256], sizes = [1, 256], strides = [1, 1]} : vector<16x512xf32> to vector<1x256xf32>
    %c1_388 = arith.constant 1 : index
    %c4_389 = arith.constant 4 : index
    %c0_390 = arith.constant 0 : index
    %761 = vector.load %arg21[%c1_388, %c4_389, %c0_390] : memref<2x34x256xf32, #tpu.memory_space<vmem>>, vector<1x1x256xf32>
    %762 = vector.shape_cast %761 : vector<1x1x256xf32> to vector<1x256xf32>
    %763 = vector.shape_cast %760 : vector<1x256xf32> to vector<1x1x256xf32>
    tpu.vector_store %arg21[%c1_388, %c4_389, %c0_390], %763 {strides = array<i32>} : memref<2x34x256xf32, #tpu.memory_space<vmem>>, vector<1x1x256xf32>,
    %764 = vector.extract_strided_slice %617 {offsets = [2, 0], sizes = [1, 256], strides = [1, 1]} : vector<16x512xf32> to vector<1x256xf32>
    %c1_391 = arith.constant 1 : index
    %c5_392 = arith.constant 5 : index
    %c0_393 = arith.constant 0 : index
    %765 = vector.load %arg21[%c1_391, %c5_392, %c0_393] : memref<2x34x256xf32, #tpu.memory_space<vmem>>, vector<1x1x256xf32>
    %766 = vector.shape_cast %765 : vector<1x1x256xf32> to vector<1x256xf32>
    %767 = vector.shape_cast %764 : vector<1x256xf32> to vector<1x1x256xf32>
    tpu.vector_store %arg21[%c1_391, %c5_392, %c0_393], %767 {strides = array<i32>} : memref<2x34x256xf32, #tpu.memory_space<vmem>>, vector<1x1x256xf32>,
    %768 = vector.extract_strided_slice %617 {offsets = [2, 256], sizes = [1, 256], strides = [1, 1]} : vector<16x512xf32> to vector<1x256xf32>
    %c1_394 = arith.constant 1 : index
    %c6_395 = arith.constant 6 : index
    %c0_396 = arith.constant 0 : index
    %769 = vector.load %arg21[%c1_394, %c6_395, %c0_396] : memref<2x34x256xf32, #tpu.memory_space<vmem>>, vector<1x1x256xf32>
    %770 = vector.shape_cast %769 : vector<1x1x256xf32> to vector<1x256xf32>
    %771 = vector.shape_cast %768 : vector<1x256xf32> to vector<1x1x256xf32>
    tpu.vector_store %arg21[%c1_394, %c6_395, %c0_396], %771 {strides = array<i32>} : memref<2x34x256xf32, #tpu.memory_space<vmem>>, vector<1x1x256xf32>,
    %772 = vector.extract_strided_slice %617 {offsets = [3, 0], sizes = [1, 256], strides = [1, 1]} : vector<16x512xf32> to vector<1x256xf32>
    %c1_397 = arith.constant 1 : index
    %c7_398 = arith.constant 7 : index
    %c0_399 = arith.constant 0 : index
    %773 = vector.load %arg21[%c1_397, %c7_398, %c0_399] : memref<2x34x256xf32, #tpu.memory_space<vmem>>, vector<1x1x256xf32>
    %774 = vector.shape_cast %773 : vector<1x1x256xf32> to vector<1x256xf32>
    %775 = vector.shape_cast %772 : vector<1x256xf32> to vector<1x1x256xf32>
    tpu.vector_store %arg21[%c1_397, %c7_398, %c0_399], %775 {strides = array<i32>} : memref<2x34x256xf32, #tpu.memory_space<vmem>>, vector<1x1x256xf32>,
    %776 = vector.extract_strided_slice %617 {offsets = [3, 256], sizes = [1, 256], strides = [1, 1]} : vector<16x512xf32> to vector<1x256xf32>
    %c1_400 = arith.constant 1 : index
    %c8_401 = arith.constant 8 : index
    %c0_402 = arith.constant 0 : index
    %777 = vector.load %arg21[%c1_400, %c8_401, %c0_402] : memref<2x34x256xf32, #tpu.memory_space<vmem>>, vector<1x1x256xf32>
    %778 = vector.shape_cast %777 : vector<1x1x256xf32> to vector<1x256xf32>
    %779 = vector.shape_cast %776 : vector<1x256xf32> to vector<1x1x256xf32>
    tpu.vector_store %arg21[%c1_400, %c8_401, %c0_402], %779 {strides = array<i32>} : memref<2x34x256xf32, #tpu.memory_space<vmem>>, vector<1x1x256xf32>,
    %780 = vector.extract_strided_slice %617 {offsets = [4, 0], sizes = [1, 256], strides = [1, 1]} : vector<16x512xf32> to vector<1x256xf32>
    %c1_403 = arith.constant 1 : index
    %c9_404 = arith.constant 9 : index
    %c0_405 = arith.constant 0 : index
    %781 = vector.load %arg21[%c1_403, %c9_404, %c0_405] : memref<2x34x256xf32, #tpu.memory_space<vmem>>, vector<1x1x256xf32>
    %782 = vector.shape_cast %781 : vector<1x1x256xf32> to vector<1x256xf32>
    %783 = vector.shape_cast %780 : vector<1x256xf32> to vector<1x1x256xf32>
    tpu.vector_store %arg21[%c1_403, %c9_404, %c0_405], %783 {strides = array<i32>} : memref<2x34x256xf32, #tpu.memory_space<vmem>>, vector<1x1x256xf32>,
    %784 = vector.extract_strided_slice %617 {offsets = [4, 256], sizes = [1, 256], strides = [1, 1]} : vector<16x512xf32> to vector<1x256xf32>
    %c1_406 = arith.constant 1 : index
    %c10_407 = arith.constant 10 : index
    %c0_408 = arith.constant 0 : index
    %785 = vector.load %arg21[%c1_406, %c10_407, %c0_408] : memref<2x34x256xf32, #tpu.memory_space<vmem>>, vector<1x1x256xf32>
    %786 = vector.shape_cast %785 : vector<1x1x256xf32> to vector<1x256xf32>
    %787 = vector.shape_cast %784 : vector<1x256xf32> to vector<1x1x256xf32>
    tpu.vector_store %arg21[%c1_406, %c10_407, %c0_408], %787 {strides = array<i32>} : memref<2x34x256xf32, #tpu.memory_space<vmem>>, vector<1x1x256xf32>,
    %788 = vector.extract_strided_slice %617 {offsets = [5, 0], sizes = [1, 256], strides = [1, 1]} : vector<16x512xf32> to vector<1x256xf32>
    %c1_409 = arith.constant 1 : index
    %c11_410 = arith.constant 11 : index
    %c0_411 = arith.constant 0 : index
    %789 = vector.load %arg21[%c1_409, %c11_410, %c0_411] : memref<2x34x256xf32, #tpu.memory_space<vmem>>, vector<1x1x256xf32>
    %790 = vector.shape_cast %789 : vector<1x1x256xf32> to vector<1x256xf32>
    %791 = vector.shape_cast %788 : vector<1x256xf32> to vector<1x1x256xf32>
    tpu.vector_store %arg21[%c1_409, %c11_410, %c0_411], %791 {strides = array<i32>} : memref<2x34x256xf32, #tpu.memory_space<vmem>>, vector<1x1x256xf32>,
    %792 = vector.extract_strided_slice %617 {offsets = [5, 256], sizes = [1, 256], strides = [1, 1]} : vector<16x512xf32> to vector<1x256xf32>
    %c1_412 = arith.constant 1 : index
    %c12_413 = arith.constant 12 : index
    %c0_414 = arith.constant 0 : index
    %793 = vector.load %arg21[%c1_412, %c12_413, %c0_414] : memref<2x34x256xf32, #tpu.memory_space<vmem>>, vector<1x1x256xf32>
    %794 = vector.shape_cast %793 : vector<1x1x256xf32> to vector<1x256xf32>
    %795 = vector.shape_cast %792 : vector<1x256xf32> to vector<1x1x256xf32>
    tpu.vector_store %arg21[%c1_412, %c12_413, %c0_414], %795 {strides = array<i32>} : memref<2x34x256xf32, #tpu.memory_space<vmem>>, vector<1x1x256xf32>,
    %796 = vector.extract_strided_slice %617 {offsets = [6, 0], sizes = [1, 256], strides = [1, 1]} : vector<16x512xf32> to vector<1x256xf32>
    %c1_415 = arith.constant 1 : index
    %c13_416 = arith.constant 13 : index
    %c0_417 = arith.constant 0 : index
    %797 = vector.load %arg21[%c1_415, %c13_416, %c0_417] : memref<2x34x256xf32, #tpu.memory_space<vmem>>, vector<1x1x256xf32>
    %798 = vector.shape_cast %797 : vector<1x1x256xf32> to vector<1x256xf32>
    %799 = vector.shape_cast %796 : vector<1x256xf32> to vector<1x1x256xf32>
    tpu.vector_store %arg21[%c1_415, %c13_416, %c0_417], %799 {strides = array<i32>} : memref<2x34x256xf32, #tpu.memory_space<vmem>>, vector<1x1x256xf32>,
    %800 = vector.extract_strided_slice %617 {offsets = [6, 256], sizes = [1, 256], strides = [1, 1]} : vector<16x512xf32> to vector<1x256xf32>
    %c1_418 = arith.constant 1 : index
    %c14_419 = arith.constant 14 : index
    %c0_420 = arith.constant 0 : index
    %801 = vector.load %arg21[%c1_418, %c14_419, %c0_420] : memref<2x34x256xf32, #tpu.memory_space<vmem>>, vector<1x1x256xf32>
    %802 = vector.shape_cast %801 : vector<1x1x256xf32> to vector<1x256xf32>
    %803 = vector.shape_cast %800 : vector<1x256xf32> to vector<1x1x256xf32>
    tpu.vector_store %arg21[%c1_418, %c14_419, %c0_420], %803 {strides = array<i32>} : memref<2x34x256xf32, #tpu.memory_space<vmem>>, vector<1x1x256xf32>,
    %804 = vector.extract_strided_slice %617 {offsets = [7, 0], sizes = [1, 256], strides = [1, 1]} : vector<16x512xf32> to vector<1x256xf32>
    %c1_421 = arith.constant 1 : index
    %c15_422 = arith.constant 15 : index
    %c0_423 = arith.constant 0 : index
    %805 = vector.load %arg21[%c1_421, %c15_422, %c0_423] : memref<2x34x256xf32, #tpu.memory_space<vmem>>, vector<1x1x256xf32>
    %806 = vector.shape_cast %805 : vector<1x1x256xf32> to vector<1x256xf32>
    %807 = vector.shape_cast %804 : vector<1x256xf32> to vector<1x1x256xf32>
    tpu.vector_store %arg21[%c1_421, %c15_422, %c0_423], %807 {strides = array<i32>} : memref<2x34x256xf32, #tpu.memory_space<vmem>>, vector<1x1x256xf32>,
    %808 = vector.extract_strided_slice %617 {offsets = [7, 256], sizes = [1, 256], strides = [1, 1]} : vector<16x512xf32> to vector<1x256xf32>
    %c1_424 = arith.constant 1 : index
    %c16_425 = arith.constant 16 : index
    %c0_426 = arith.constant 0 : index
    %809 = vector.load %arg21[%c1_424, %c16_425, %c0_426] : memref<2x34x256xf32, #tpu.memory_space<vmem>>, vector<1x1x256xf32>
    %810 = vector.shape_cast %809 : vector<1x1x256xf32> to vector<1x256xf32>
    %811 = vector.shape_cast %808 : vector<1x256xf32> to vector<1x1x256xf32>
    tpu.vector_store %arg21[%c1_424, %c16_425, %c0_426], %811 {strides = array<i32>} : memref<2x34x256xf32, #tpu.memory_space<vmem>>, vector<1x1x256xf32>,
    %812 = vector.extract_strided_slice %617 {offsets = [8, 0], sizes = [1, 256], strides = [1, 1]} : vector<16x512xf32> to vector<1x256xf32>
    %c1_427 = arith.constant 1 : index
    %c17_428 = arith.constant 17 : index
    %c0_429 = arith.constant 0 : index
    %813 = vector.load %arg21[%c1_427, %c17_428, %c0_429] : memref<2x34x256xf32, #tpu.memory_space<vmem>>, vector<1x1x256xf32>
    %814 = vector.shape_cast %813 : vector<1x1x256xf32> to vector<1x256xf32>
    %815 = vector.shape_cast %812 : vector<1x256xf32> to vector<1x1x256xf32>
    tpu.vector_store %arg21[%c1_427, %c17_428, %c0_429], %815 {strides = array<i32>} : memref<2x34x256xf32, #tpu.memory_space<vmem>>, vector<1x1x256xf32>,
    %816 = vector.extract_strided_slice %617 {offsets = [8, 256], sizes = [1, 256], strides = [1, 1]} : vector<16x512xf32> to vector<1x256xf32>
    %c1_430 = arith.constant 1 : index
    %c18_431 = arith.constant 18 : index
    %c0_432 = arith.constant 0 : index
    %817 = vector.load %arg21[%c1_430, %c18_431, %c0_432] : memref<2x34x256xf32, #tpu.memory_space<vmem>>, vector<1x1x256xf32>
    %818 = vector.shape_cast %817 : vector<1x1x256xf32> to vector<1x256xf32>
    %819 = vector.shape_cast %816 : vector<1x256xf32> to vector<1x1x256xf32>
    tpu.vector_store %arg21[%c1_430, %c18_431, %c0_432], %819 {strides = array<i32>} : memref<2x34x256xf32, #tpu.memory_space<vmem>>, vector<1x1x256xf32>,
    %820 = vector.extract_strided_slice %617 {offsets = [9, 0], sizes = [1, 256], strides = [1, 1]} : vector<16x512xf32> to vector<1x256xf32>
    %c1_433 = arith.constant 1 : index
    %c19_434 = arith.constant 19 : index
    %c0_435 = arith.constant 0 : index
    %821 = vector.load %arg21[%c1_433, %c19_434, %c0_435] : memref<2x34x256xf32, #tpu.memory_space<vmem>>, vector<1x1x256xf32>
    %822 = vector.shape_cast %821 : vector<1x1x256xf32> to vector<1x256xf32>
    %823 = vector.shape_cast %820 : vector<1x256xf32> to vector<1x1x256xf32>
    tpu.vector_store %arg21[%c1_433, %c19_434, %c0_435], %823 {strides = array<i32>} : memref<2x34x256xf32, #tpu.memory_space<vmem>>, vector<1x1x256xf32>,
    %824 = vector.extract_strided_slice %617 {offsets = [9, 256], sizes = [1, 256], strides = [1, 1]} : vector<16x512xf32> to vector<1x256xf32>
    %c1_436 = arith.constant 1 : index
    %c20_437 = arith.constant 20 : index
    %c0_438 = arith.constant 0 : index
    %825 = vector.load %arg21[%c1_436, %c20_437, %c0_438] : memref<2x34x256xf32, #tpu.memory_space<vmem>>, vector<1x1x256xf32>
    %826 = vector.shape_cast %825 : vector<1x1x256xf32> to vector<1x256xf32>
    %827 = vector.shape_cast %824 : vector<1x256xf32> to vector<1x1x256xf32>
    tpu.vector_store %arg21[%c1_436, %c20_437, %c0_438], %827 {strides = array<i32>} : memref<2x34x256xf32, #tpu.memory_space<vmem>>, vector<1x1x256xf32>,
    %828 = vector.extract_strided_slice %617 {offsets = [10, 0], sizes = [1, 256], strides = [1, 1]} : vector<16x512xf32> to vector<1x256xf32>
    %c1_439 = arith.constant 1 : index
    %c21_440 = arith.constant 21 : index
    %c0_441 = arith.constant 0 : index
    %829 = vector.load %arg21[%c1_439, %c21_440, %c0_441] : memref<2x34x256xf32, #tpu.memory_space<vmem>>, vector<1x1x256xf32>
    %830 = vector.shape_cast %829 : vector<1x1x256xf32> to vector<1x256xf32>
    %831 = vector.shape_cast %828 : vector<1x256xf32> to vector<1x1x256xf32>
    tpu.vector_store %arg21[%c1_439, %c21_440, %c0_441], %831 {strides = array<i32>} : memref<2x34x256xf32, #tpu.memory_space<vmem>>, vector<1x1x256xf32>,
    %832 = vector.extract_strided_slice %617 {offsets = [10, 256], sizes = [1, 256], strides = [1, 1]} : vector<16x512xf32> to vector<1x256xf32>
    %c1_442 = arith.constant 1 : index
    %c22_443 = arith.constant 22 : index
    %c0_444 = arith.constant 0 : index
    %833 = vector.load %arg21[%c1_442, %c22_443, %c0_444] : memref<2x34x256xf32, #tpu.memory_space<vmem>>, vector<1x1x256xf32>
    %834 = vector.shape_cast %833 : vector<1x1x256xf32> to vector<1x256xf32>
    %835 = vector.shape_cast %832 : vector<1x256xf32> to vector<1x1x256xf32>
    tpu.vector_store %arg21[%c1_442, %c22_443, %c0_444], %835 {strides = array<i32>} : memref<2x34x256xf32, #tpu.memory_space<vmem>>, vector<1x1x256xf32>,
    %836 = vector.extract_strided_slice %617 {offsets = [11, 0], sizes = [1, 256], strides = [1, 1]} : vector<16x512xf32> to vector<1x256xf32>
    %c1_445 = arith.constant 1 : index
    %c23_446 = arith.constant 23 : index
    %c0_447 = arith.constant 0 : index
    %837 = vector.load %arg21[%c1_445, %c23_446, %c0_447] : memref<2x34x256xf32, #tpu.memory_space<vmem>>, vector<1x1x256xf32>
    %838 = vector.shape_cast %837 : vector<1x1x256xf32> to vector<1x256xf32>
    %839 = vector.shape_cast %836 : vector<1x256xf32> to vector<1x1x256xf32>
    tpu.vector_store %arg21[%c1_445, %c23_446, %c0_447], %839 {strides = array<i32>} : memref<2x34x256xf32, #tpu.memory_space<vmem>>, vector<1x1x256xf32>,
    %840 = vector.extract_strided_slice %617 {offsets = [11, 256], sizes = [1, 256], strides = [1, 1]} : vector<16x512xf32> to vector<1x256xf32>
    %c1_448 = arith.constant 1 : index
    %c24_449 = arith.constant 24 : index
    %c0_450 = arith.constant 0 : index
    %841 = vector.load %arg21[%c1_448, %c24_449, %c0_450] : memref<2x34x256xf32, #tpu.memory_space<vmem>>, vector<1x1x256xf32>
    %842 = vector.shape_cast %841 : vector<1x1x256xf32> to vector<1x256xf32>
    %843 = vector.shape_cast %840 : vector<1x256xf32> to vector<1x1x256xf32>
    tpu.vector_store %arg21[%c1_448, %c24_449, %c0_450], %843 {strides = array<i32>} : memref<2x34x256xf32, #tpu.memory_space<vmem>>, vector<1x1x256xf32>,
    %844 = vector.extract_strided_slice %617 {offsets = [12, 0], sizes = [1, 256], strides = [1, 1]} : vector<16x512xf32> to vector<1x256xf32>
    %c1_451 = arith.constant 1 : index
    %c25_452 = arith.constant 25 : index
    %c0_453 = arith.constant 0 : index
    %845 = vector.load %arg21[%c1_451, %c25_452, %c0_453] : memref<2x34x256xf32, #tpu.memory_space<vmem>>, vector<1x1x256xf32>
    %846 = vector.shape_cast %845 : vector<1x1x256xf32> to vector<1x256xf32>
    %847 = vector.shape_cast %844 : vector<1x256xf32> to vector<1x1x256xf32>
    tpu.vector_store %arg21[%c1_451, %c25_452, %c0_453], %847 {strides = array<i32>} : memref<2x34x256xf32, #tpu.memory_space<vmem>>, vector<1x1x256xf32>,
    %848 = vector.extract_strided_slice %617 {offsets = [12, 256], sizes = [1, 256], strides = [1, 1]} : vector<16x512xf32> to vector<1x256xf32>
    %c1_454 = arith.constant 1 : index
    %c26_455 = arith.constant 26 : index
    %c0_456 = arith.constant 0 : index
    %849 = vector.load %arg21[%c1_454, %c26_455, %c0_456] : memref<2x34x256xf32, #tpu.memory_space<vmem>>, vector<1x1x256xf32>
    %850 = vector.shape_cast %849 : vector<1x1x256xf32> to vector<1x256xf32>
    %851 = vector.shape_cast %848 : vector<1x256xf32> to vector<1x1x256xf32>
    tpu.vector_store %arg21[%c1_454, %c26_455, %c0_456], %851 {strides = array<i32>} : memref<2x34x256xf32, #tpu.memory_space<vmem>>, vector<1x1x256xf32>,
    %852 = vector.extract_strided_slice %617 {offsets = [13, 0], sizes = [1, 256], strides = [1, 1]} : vector<16x512xf32> to vector<1x256xf32>
    %c1_457 = arith.constant 1 : index
    %c27_458 = arith.constant 27 : index
    %c0_459 = arith.constant 0 : index
    %853 = vector.load %arg21[%c1_457, %c27_458, %c0_459] : memref<2x34x256xf32, #tpu.memory_space<vmem>>, vector<1x1x256xf32>
    %854 = vector.shape_cast %853 : vector<1x1x256xf32> to vector<1x256xf32>
    %855 = vector.shape_cast %852 : vector<1x256xf32> to vector<1x1x256xf32>
    tpu.vector_store %arg21[%c1_457, %c27_458, %c0_459], %855 {strides = array<i32>} : memref<2x34x256xf32, #tpu.memory_space<vmem>>, vector<1x1x256xf32>,
    %856 = vector.extract_strided_slice %617 {offsets = [13, 256], sizes = [1, 256], strides = [1, 1]} : vector<16x512xf32> to vector<1x256xf32>
    %c1_460 = arith.constant 1 : index
    %c28_461 = arith.constant 28 : index
    %c0_462 = arith.constant 0 : index
    %857 = vector.load %arg21[%c1_460, %c28_461, %c0_462] : memref<2x34x256xf32, #tpu.memory_space<vmem>>, vector<1x1x256xf32>
    %858 = vector.shape_cast %857 : vector<1x1x256xf32> to vector<1x256xf32>
    %859 = vector.shape_cast %856 : vector<1x256xf32> to vector<1x1x256xf32>
    tpu.vector_store %arg21[%c1_460, %c28_461, %c0_462], %859 {strides = array<i32>} : memref<2x34x256xf32, #tpu.memory_space<vmem>>, vector<1x1x256xf32>,
    %860 = vector.extract_strided_slice %617 {offsets = [14, 0], sizes = [1, 256], strides = [1, 1]} : vector<16x512xf32> to vector<1x256xf32>
    %c1_463 = arith.constant 1 : index
    %c29_464 = arith.constant 29 : index
    %c0_465 = arith.constant 0 : index
    %861 = vector.load %arg21[%c1_463, %c29_464, %c0_465] : memref<2x34x256xf32, #tpu.memory_space<vmem>>, vector<1x1x256xf32>
    %862 = vector.shape_cast %861 : vector<1x1x256xf32> to vector<1x256xf32>
    %863 = vector.shape_cast %860 : vector<1x256xf32> to vector<1x1x256xf32>
    tpu.vector_store %arg21[%c1_463, %c29_464, %c0_465], %863 {strides = array<i32>} : memref<2x34x256xf32, #tpu.memory_space<vmem>>, vector<1x1x256xf32>,
    %864 = vector.extract_strided_slice %617 {offsets = [14, 256], sizes = [1, 256], strides = [1, 1]} : vector<16x512xf32> to vector<1x256xf32>
    %c1_466 = arith.constant 1 : index
    %c30_467 = arith.constant 30 : index
    %c0_468 = arith.constant 0 : index
    %865 = vector.load %arg21[%c1_466, %c30_467, %c0_468] : memref<2x34x256xf32, #tpu.memory_space<vmem>>, vector<1x1x256xf32>
    %866 = vector.shape_cast %865 : vector<1x1x256xf32> to vector<1x256xf32>
    %867 = vector.shape_cast %864 : vector<1x256xf32> to vector<1x1x256xf32>
    tpu.vector_store %arg21[%c1_466, %c30_467, %c0_468], %867 {strides = array<i32>} : memref<2x34x256xf32, #tpu.memory_space<vmem>>, vector<1x1x256xf32>,
    %868 = vector.extract_strided_slice %617 {offsets = [15, 0], sizes = [1, 256], strides = [1, 1]} : vector<16x512xf32> to vector<1x256xf32>
    %c1_469 = arith.constant 1 : index
    %c31_470 = arith.constant 31 : index
    %c0_471 = arith.constant 0 : index
    %869 = vector.load %arg21[%c1_469, %c31_470, %c0_471] : memref<2x34x256xf32, #tpu.memory_space<vmem>>, vector<1x1x256xf32>
    %870 = vector.shape_cast %869 : vector<1x1x256xf32> to vector<1x256xf32>
    %871 = vector.shape_cast %868 : vector<1x256xf32> to vector<1x1x256xf32>
    tpu.vector_store %arg21[%c1_469, %c31_470, %c0_471], %871 {strides = array<i32>} : memref<2x34x256xf32, #tpu.memory_space<vmem>>, vector<1x1x256xf32>,
    %872 = vector.extract_strided_slice %617 {offsets = [15, 256], sizes = [1, 256], strides = [1, 1]} : vector<16x512xf32> to vector<1x256xf32>
    %c1_472 = arith.constant 1 : index
    %c32_473 = arith.constant 32 : index
    %c0_474 = arith.constant 0 : index
    %873 = vector.load %arg21[%c1_472, %c32_473, %c0_474] : memref<2x34x256xf32, #tpu.memory_space<vmem>>, vector<1x1x256xf32>
    %874 = vector.shape_cast %873 : vector<1x1x256xf32> to vector<1x256xf32>
    %875 = vector.shape_cast %872 : vector<1x256xf32> to vector<1x1x256xf32>
    tpu.vector_store %arg21[%c1_472, %c32_473, %c0_474], %875 {strides = array<i32>} : memref<2x34x256xf32, #tpu.memory_space<vmem>>, vector<1x1x256xf32>,
    %c0_475 = arith.constant 0 : index
    %c0_476 = arith.constant 0 : index
    %c0_477 = arith.constant 0 : index
    %876 = vector.load %arg21[%c0_475, %c0_476, %c0_477] : memref<2x34x256xf32, #tpu.memory_space<vmem>>, vector<1x32x256xf32>
    %877 = vector.shape_cast %876 : vector<1x32x256xf32> to vector<32x256xf32>
    %c0_478 = arith.constant 0 : index
    %c1_479 = arith.constant 1 : index
    %c0_480 = arith.constant 0 : index
    %878 = vector.load %arg21[%c0_478, %c1_479, %c0_480] : memref<2x34x256xf32, #tpu.memory_space<vmem>>, vector<1x32x256xf32>
    %879 = vector.shape_cast %878 : vector<1x32x256xf32> to vector<32x256xf32>
    %c0_481 = arith.constant 0 : index
    %c2_482 = arith.constant 2 : index
    %c0_483 = arith.constant 0 : index
    %880 = vector.load %arg21[%c0_481, %c2_482, %c0_483] : memref<2x34x256xf32, #tpu.memory_space<vmem>>, vector<1x32x256xf32>
    %881 = vector.shape_cast %880 : vector<1x32x256xf32> to vector<32x256xf32>
    %882 = tpu.concatenate %877, %879, %881 in 1 : vector<32x256xf32>, vector<32x256xf32>, vector<32x256xf32> -> vector<32x768xf32>
    %883 = arith.truncf %882 : vector<32x768xf32> to vector<32x768xbf16>
    %c0_484 = arith.constant 0 : index
    %c0_485 = arith.constant 0 : index
    %884 = vector.load %arg16[%c0_484, %c0_485] : memref<768x384xbf16, #tpu.memory_space<vmem>>, vector<768x384xbf16>
    %cst_486 = arith.constant dense<0.000000e+00> : vector<32x384xf32>
    %885 = tpu.matmul %883, %884, %cst_486 {dimension_numbers = #tpu.dot_dimension_numbers<[1], [0], [0], [1], [0, 0, 1, 1], [], []>} : vector<32x768xbf16>, vector<768x384xbf16>, vector<32x384xf32> -> vector<32x384xf32>
    %c1_487 = arith.constant 1 : index
    %c0_488 = arith.constant 0 : index
    %c0_489 = arith.constant 0 : index
    %886 = vector.load %arg21[%c1_487, %c0_488, %c0_489] : memref<2x34x256xf32, #tpu.memory_space<vmem>>, vector<1x32x256xf32>
    %887 = vector.shape_cast %886 : vector<1x32x256xf32> to vector<32x256xf32>
    %c1_490 = arith.constant 1 : index
    %c1_491 = arith.constant 1 : index
    %c0_492 = arith.constant 0 : index
    %888 = vector.load %arg21[%c1_490, %c1_491, %c0_492] : memref<2x34x256xf32, #tpu.memory_space<vmem>>, vector<1x32x256xf32>
    %889 = vector.shape_cast %888 : vector<1x32x256xf32> to vector<32x256xf32>
    %c1_493 = arith.constant 1 : index
    %c2_494 = arith.constant 2 : index
    %c0_495 = arith.constant 0 : index
    %890 = vector.load %arg21[%c1_493, %c2_494, %c0_495] : memref<2x34x256xf32, #tpu.memory_space<vmem>>, vector<1x32x256xf32>
    %891 = vector.shape_cast %890 : vector<1x32x256xf32> to vector<32x256xf32>
    %892 = tpu.concatenate %887, %889, %891 in 1 : vector<32x256xf32>, vector<32x256xf32>, vector<32x256xf32> -> vector<32x768xf32>
    %893 = arith.truncf %892 : vector<32x768xf32> to vector<32x768xbf16>
    %c0_496 = arith.constant 0 : index
    %c0_497 = arith.constant 0 : index
    %894 = vector.load %arg16[%c0_496, %c0_497] : memref<768x384xbf16, #tpu.memory_space<vmem>>, vector<768x384xbf16>
    %cst_498 = arith.constant dense<0.000000e+00> : vector<32x384xf32>
    %895 = tpu.matmul %893, %894, %cst_498 {dimension_numbers = #tpu.dot_dimension_numbers<[1], [0], [0], [1], [0, 0, 1, 1], [], []>} : vector<32x768xbf16>, vector<768x384xbf16>, vector<32x384xf32> -> vector<32x384xf32>
    %896 = math.tanh %885 : vector<32x384xf32>
    %c0_499 = arith.constant 0 : index
    %c0_500 = arith.constant 0 : index
    %c0_501 = arith.constant 0 : index
    %897 = vector.load %arg17[%c0_499, %c0_500, %c0_501] : memref<2x32x384xf32, #tpu.memory_space<vmem>>, vector<1x32x384xf32>
    %898 = vector.shape_cast %897 : vector<1x32x384xf32> to vector<32x384xf32>
    %899 = vector.shape_cast %896 : vector<32x384xf32> to vector<1x32x384xf32>
    tpu.vector_store %arg17[%c0_499, %c0_500, %c0_501], %899 {strides = array<i32>} : memref<2x32x384xf32, #tpu.memory_space<vmem>>, vector<1x32x384xf32>,
    %900 = math.tanh %895 : vector<32x384xf32>
    %c1_502 = arith.constant 1 : index
    %c0_503 = arith.constant 0 : index
    %c0_504 = arith.constant 0 : index
    %901 = vector.load %arg17[%c1_502, %c0_503, %c0_504] : memref<2x32x384xf32, #tpu.memory_space<vmem>>, vector<1x32x384xf32>
    %902 = vector.shape_cast %901 : vector<1x32x384xf32> to vector<32x384xf32>
    %903 = vector.shape_cast %900 : vector<32x384xf32> to vector<1x32x384xf32>
    tpu.vector_store %arg17[%c1_502, %c0_503, %c0_504], %903 {strides = array<i32>} : memref<2x32x384xf32, #tpu.memory_space<vmem>>, vector<1x32x384xf32>,
    return
  }
}

</mosaic_0001>

<llo_original>
// kernel: generator_forward.1
$region0: #{generator_forward.1}
  #allocation0 [shape = 'u32[]', space=smem, size = 0x4, offset = 0x4, fixed_abs, tag = 'smem constant byte address 0x4 - core index']
  #allocation1 [shape = 'u32[144,128]{1,0:T(1,128)}', space=vmem, size = 0x12000, scoped, tag = 'internal scratch']
  #allocation2 [shape = 'f32[2,6,256]{2,1,0:T(8,128)}', space=vmem, size = 0x4000, scoped, tag = 'scratch operand']
  #allocation3 [shape = 'f32[2,10,256]{2,1,0:T(8,128)}', space=vmem, size = 0x8000, scoped, tag = 'scratch operand']
  #allocation4 [shape = 'f32[2,18,256]{2,1,0:T(8,128)}', space=vmem, size = 0xc000, scoped, tag = 'scratch operand']
  #allocation5 [shape = 'f32[2,34,256]{2,1,0:T(8,128)}', space=vmem, size = 0x14000, scoped, tag = 'scratch operand']
  %s0 = inlined_call_operand.vmem [shape: f32[2,16], index: 0, kind: input, shape index: {}]
  %s1 = inlined_call_operand.vmem [shape: f32[2,10], index: 1, kind: input, shape index: {}]
  %s2 = inlined_call_operand.vmem [shape: bf16[10,16], index: 2, kind: input, shape index: {}]
  %s3 = inlined_call_operand.hbm [shape: f32[1,16], index: 3, kind: input, shape index: {}]
  %s4 = inlined_call_operand.hbm [shape: bf16[32,1024], index: 4, kind: input, shape index: {}]
  %s5 = inlined_call_operand.hbm [shape: f32[1,64], index: 5, kind: input, shape index: {}]
  %s6 = inlined_call_operand.hbm [shape: f32[1,64], index: 6, kind: input, shape index: {}]
  %s7 = inlined_call_operand.hbm [shape: bf16[768,512], index: 7, kind: input, shape index: {}]
  %s8 = inlined_call_operand.vmem [shape: f32[1,32], index: 8, kind: input, shape index: {}]
  %s9 = inlined_call_operand.hbm [shape: f32[1,32], index: 9, kind: input, shape index: {}]
  %s10 = inlined_call_operand.hbm [shape: bf16[768,512], index: 10, kind: input, shape index: {}]
  %s11 = inlined_call_operand.vmem [shape: f32[1,16], index: 11, kind: input, shape index: {}]
  %s12 = inlined_call_operand.hbm [shape: f32[1,16], index: 12, kind: input, shape index: {}]
  %s13 = inlined_call_operand.hbm [shape: bf16[768,512], index: 13, kind: input, shape index: {}]
  %s14 = inlined_call_operand.vmem [shape: f32[1,8], index: 14, kind: input, shape index: {}]
  %s15 = inlined_call_operand.hbm [shape: f32[1,8], index: 15, kind: input, shape index: {}]
  %s16 = inlined_call_operand.hbm [shape: bf16[768,384], index: 16, kind: input, shape index: {}]
  %s17 = inlined_call_operand.vmem [shape: f32[2,32,384], index: 17, kind: output, shape index: {}]
  %s18 = sld [smem:[#allocation0]]
  $region122: #{generator_forward.1} parent=0
    _
  %s20 = ssub.s32 1, %s18
  %s21 = scalar_select 0, %s20, %s18
  $region1: #{generator_forward.1} parent=0
    #allocation6 [shape = 'u8[512]{0}', space=vmem, size = 0x400, scoped, tag = 'input window, operand 3, single buffered']
    #allocation7 [shape = 's32[1]{0}', space=sflag, size = 0x4, scoped, tag = 'scoped memory for generator_forward.1']
    #allocation8 [shape = 'u8[65536]{0}', space=vmem, size = 0x10000, scoped, tag = 'input window, operand 4, single buffered']
    #allocation9 [shape = 's32[1]{0}', space=sflag, size = 0x4, scoped, tag = 'scoped memory for generator_forward.1']
    #allocation10 [shape = 'u8[512]{0}', space=vmem, size = 0x400, scoped, tag = 'input window, operand 5, single buffered']
    #allocation11 [shape = 'u8[512]{0}', space=vmem, size = 0x400, scoped, tag = 'input window, operand 6, single buffered']
    #allocation12 [shape = 's32[1]{0}', space=sflag, size = 0x4, scoped, tag = 'scoped memory for generator_forward.1']
    #allocation13 [shape = 'u8[786432]{0}', space=vmem, size = 0xc0000, scoped, tag = 'input window, operand 7, single buffered']
    #allocation14 [shape = 'u8[512]{0}', space=vmem, size = 0x400, scoped, tag = 'input window, operand 9, single buffered']
    #allocation15 [shape = 's32[1]{0}', space=sflag, size = 0x4, scoped, tag = 'scoped memory for generator_forward.1']
    #allocation16 [shape = 'u8[786432]{0}', space=vmem, size = 0xc0000, scoped, tag = 'input window, operand 10, single buffered']
    #allocation17 [shape = 'u8[512]{0}', space=vmem, size = 0x400, scoped, tag = 'input window, operand 12, single buffered']
    #allocation18 [shape = 's32[1]{0}', space=sflag, size = 0x4, scoped, tag = 'scoped memory for generator_forward.1']
    #allocation19 [shape = 'u8[786432]{0}', space=vmem, size = 0xc0000, scoped, tag = 'input window, operand 13, single buffered']
    #allocation20 [shape = 'u8[512]{0}', space=vmem, size = 0x400, scoped, tag = 'input window, operand 15, single buffered']
    #allocation21 [shape = 's32[1]{0}', space=sflag, size = 0x4, scoped, tag = 'scoped memory for generator_forward.1']
    #allocation22 [shape = 'u8[589824]{0}', space=vmem, size = 0x90000, scoped, tag = 'input window, operand 16, single buffered']
    %22 = vsyncpa [#allocation7], 0
    %23 = vsyncpa [#allocation9], 0
    %24 = vsyncpa [#allocation12], 0
    %25 = vsyncpa [#allocation15], 0
    %26 = vsyncpa [#allocation18], 0
    %27 = vsyncpa [#allocation21], 0
    // Predicated region
    $region2: #{generator_forward.1} parent=1 // pred_check
      _
    $region3: #{generator_forward.1} parent=1 // pred_check_branch
      %29 = sbr.rel (0) target = $region5
    $region4: #{generator_forward.1} parent=1 // pred_region
      _
    $region5: #{generator_forward.1} parent=1 // pred_fallthru
      _
    // Predicated region
    $region6: #{generator_forward.1} parent=1 // pred_check
      _
    $region7: #{generator_forward.1} parent=1 // pred_check_branch
      %31 = sbr.rel (0) target = $region9
    $region8: #{generator_forward.1} parent=1 // pred_region
      _
    $region9: #{generator_forward.1} parent=1 // pred_fallthru
      _
    // Predicated region
    $region10: #{generator_forward.1} parent=1 // pred_check
      _
    $region11: #{generator_forward.1} parent=1 // pred_check_branch
      %33 = sbr.rel (0) target = $region13
    $region12: #{generator_forward.1} parent=1 // pred_region
      _
    $region13: #{generator_forward.1} parent=1 // pred_fallthru
      _
    // Predicated region
    $region14: #{generator_forward.1} parent=1 // pred_check
      _
    $region15: #{generator_forward.1} parent=1 // pred_check_branch
      %35 = sbr.rel (0) target = $region17
    $region16: #{generator_forward.1} parent=1 // pred_region
      %s37 = ssub.s32 16, 16
      %38 = vsyncadd [#allocation7], %s37
      %s40 = sshll.u32 [#allocation6], 4
      %s41 = int_to_ptr.vmem [resolvable:$true] %s40
      %43 = dma.hbm_to_vmem [thread:$0]  %s3, 16, %s41, [#allocation7]
    $region17: #{generator_forward.1} parent=1 // pred_fallthru
      _
    // Predicated region
    $region18: #{generator_forward.1} parent=1 // pred_check
      _
    $region19: #{generator_forward.1} parent=1 // pred_check_branch
      %45 = sbr.rel (0) target = $region21
    $region20: #{generator_forward.1} parent=1 // pred_region
      %s47 = ssub.s32 2048, 2048
      %48 = vsyncadd [#allocation9], %s47
      %s49 = sshll.u32 [#allocation8], 4
      %s50 = int_to_ptr.vmem [resolvable:$true] %s49
      %55 = dma.hbm_to_vmem [thread:$0]  %s4, 2048, %s50, [#allocation9], 512, 512, 32
    $region21: #{generator_forward.1} parent=1 // pred_fallthru
      _
    // Predicated region
    $region22: #{generator_forward.1} parent=1 // pred_check
      _
    $region23: #{generator_forward.1} parent=1 // pred_check_branch
      %57 = sbr.rel (0) target = $region25
    $region24: #{generator_forward.1} parent=1 // pred_region
      %s59 = ssub.s32 16, 16
      %60 = vsyncadd [#allocation9], %s59
      %s62 = sshll.u32 [#allocation10], 4
      %s63 = int_to_ptr.vmem [resolvable:$true] %s62
      %65 = dma.hbm_to_vmem [thread:$0]  %s5, 16, %s63, [#allocation9]
    $region25: #{generator_forward.1} parent=1 // pred_fallthru
      _
    // Predicated region
    $region26: #{generator_forward.1} parent=1 // pred_check
      _
    $region27: #{generator_forward.1} parent=1 // pred_check_branch
      %67 = sbr.rel (0) target = $region29
    $region28: #{generator_forward.1} parent=1 // pred_region
      %s69 = ssub.s32 16, 16
      %70 = vsyncadd [#allocation12], %s69
      %s72 = sshll.u32 [#allocation11], 4
      %s73 = int_to_ptr.vmem [resolvable:$true] %s72
      %75 = dma.hbm_to_vmem [thread:$0]  %s6, 16, %s73, [#allocation12]
    $region29: #{generator_forward.1} parent=1 // pred_fallthru
      _
    // Predicated region
    $region30: #{generator_forward.1} parent=1 // pred_check
      _
    $region31: #{generator_forward.1} parent=1 // pred_check_branch
      %77 = sbr.rel (0) target = $region33
    $region32: #{generator_forward.1} parent=1 // pred_region
      %s79 = ssub.s32 24576, 24576
      %80 = vsyncadd [#allocation12], %s79
      %s81 = sshll.u32 [#allocation13], 4
      %s82 = int_to_ptr.vmem [resolvable:$true] %s81
      %87 = dma.hbm_to_vmem [thread:$0]  %s7, 24576, %s82, [#allocation12], 256, 256, 16
    $region33: #{generator_forward.1} parent=1 // pred_fallthru
      _
    // Predicated region
    $region34: #{generator_forward.1} parent=1 // pred_check
      _
    $region35: #{generator_forward.1} parent=1 // pred_check_branch
      %89 = sbr.rel (0) target = $region37
    $region36: #{generator_forward.1} parent=1 // pred_region
      _
    $region37: #{generator_forward.1} parent=1 // pred_fallthru
      _
    // Predicated region
    $region38: #{generator_forward.1} parent=1 // pred_check
      _
    $region39: #{generator_forward.1} parent=1 // pred_check_branch
      %91 = sbr.rel (0) target = $region41
    $region40: #{generator_forward.1} parent=1 // pred_region
      %s93 = ssub.s32 16, 16
      %94 = vsyncadd [#allocation15], %s93
      %s96 = sshll.u32 [#allocation14], 4
      %s97 = int_to_ptr.vmem [resolvable:$true] %s96
      %99 = dma.hbm_to_vmem [thread:$0]  %s9, 16, %s97, [#allocation15]
    $region41: #{generator_forward.1} parent=1 // pred_fallthru
      _
    // Predicated region
    $region42: #{generator_forward.1} parent=1 // pred_check
      _
    $region43: #{generator_forward.1} parent=1 // pred_check_branch
      %101 = sbr.rel (0) target = $region45
    $region44: #{generator_forward.1} parent=1 // pred_region
      %s103 = ssub.s32 24576, 24576
      %104 = vsyncadd [#allocation15], %s103
      %s105 = sshll.u32 [#allocation16], 4
      %s106 = int_to_ptr.vmem [resolvable:$true] %s105
      %111 = dma.hbm_to_vmem [thread:$0]  %s10, 24576, %s106, [#allocation15], 256, 256, 16
    $region45: #{generator_forward.1} parent=1 // pred_fallthru
      _
    // Predicated region
    $region46: #{generator_forward.1} parent=1 // pred_check
      _
    $region47: #{generator_forward.1} parent=1 // pred_check_branch
      %113 = sbr.rel (0) target = $region49
    $region48: #{generator_forward.1} parent=1 // pred_region
      _
    $region49: #{generator_forward.1} parent=1 // pred_fallthru
      _
    // Predicated region
    $region50: #{generator_forward.1} parent=1 // pred_check
      _
    $region51: #{generator_forward.1} parent=1 // pred_check_branch
      %115 = sbr.rel (0) target = $region53
    $region52: #{generator_forward.1} parent=1 // pred_region
      %s117 = ssub.s32 16, 16
      %118 = vsyncadd [#allocation18], %s117
      %s120 = sshll.u32 [#allocation17], 4
      %s121 = int_to_ptr.vmem [resolvable:$true] %s120
      %123 = dma.hbm_to_vmem [thread:$0]  %s12, 16, %s121, [#allocation18]
    $region53: #{generator_forward.1} parent=1 // pred_fallthru
      _
    // Predicated region
    $region54: #{generator_forward.1} parent=1 // pred_check
      _
    $region55: #{generator_forward.1} parent=1 // pred_check_branch
      %125 = sbr.rel (0) target = $region57
    $region56: #{generator_forward.1} parent=1 // pred_region
      %s127 = ssub.s32 24576, 24576
      %128 = vsyncadd [#allocation18], %s127
      %s129 = sshll.u32 [#allocation19], 4
      %s130 = int_to_ptr.vmem [resolvable:$true] %s129
      %135 = dma.hbm_to_vmem [thread:$0]  %s13, 24576, %s130, [#allocation18], 256, 256, 16
    $region57: #{generator_forward.1} parent=1 // pred_fallthru
      _
    // Predicated region
    $region58: #{generator_forward.1} parent=1 // pred_check
      _
    $region59: #{generator_forward.1} parent=1 // pred_check_branch
      %137 = sbr.rel (0) target = $region61
    $region60: #{generator_forward.1} parent=1 // pred_region
      _
    $region61: #{generator_forward.1} parent=1 // pred_fallthru
      _
    // Predicated region
    $region62: #{generator_forward.1} parent=1 // pred_check
      _
    $region63: #{generator_forward.1} parent=1 // pred_check_branch
      %139 = sbr.rel (0) target = $region65
    $region64: #{generator_forward.1} parent=1 // pred_region
      %s141 = ssub.s32 16, 16
      %142 = vsyncadd [#allocation21], %s141
      %s144 = sshll.u32 [#allocation20], 4
      %s145 = int_to_ptr.vmem [resolvable:$true] %s144
      %147 = dma.hbm_to_vmem [thread:$0]  %s15, 16, %s145, [#allocation21]
    $region65: #{generator_forward.1} parent=1 // pred_fallthru
      _
    // Predicated region
    $region66: #{generator_forward.1} parent=1 // pred_check
      _
    $region67: #{generator_forward.1} parent=1 // pred_check_branch
      %149 = sbr.rel (0) target = $region69
    $region68: #{generator_forward.1} parent=1 // pred_region
      %s151 = ssub.s32 18432, 18432
      %152 = vsyncadd [#allocation21], %s151
      %s153 = sshll.u32 [#allocation22], 4
      %s154 = int_to_ptr.vmem [resolvable:$true] %s153
      %159 = dma.hbm_to_vmem [thread:$0]  %s16, 18432, %s154, [#allocation21], 192, 192, 12
    $region69: #{generator_forward.1} parent=1 // pred_fallthru
      _
    // Predicated region
    $region70: #{generator_forward.1} parent=1 // pred_check
      _
    $region71: #{generator_forward.1} parent=1 // pred_check_branch
      %161 = sbr.rel (0) target = $region73
    $region72: #{generator_forward.1} parent=1 // pred_region
      %162 = dma.done [#allocation7], 16
    $region73: #{generator_forward.1} parent=1 // pred_fallthru
      _
    // Predicated region
    $region74: #{generator_forward.1} parent=1 // pred_check
      _
    $region75: #{generator_forward.1} parent=1 // pred_check_branch
      %164 = sbr.rel (0) target = $region77
    $region76: #{generator_forward.1} parent=1 // pred_region
      %165 = dma.done [#allocation9], 2048
    $region77: #{generator_forward.1} parent=1 // pred_fallthru
      _
    // Predicated region
    $region78: #{generator_forward.1} parent=1 // pred_check
      _
    $region79: #{generator_forward.1} parent=1 // pred_check_branch
      %167 = sbr.rel (0) target = $region81
    $region80: #{generator_forward.1} parent=1 // pred_region
      %168 = dma.done [#allocation9], 16
    $region81: #{generator_forward.1} parent=1 // pred_fallthru
      _
    // Predicated region
    $region82: #{generator_forward.1} parent=1 // pred_check
      _
    $region83: #{generator_forward.1} parent=1 // pred_check_branch
      %170 = sbr.rel (0) target = $region85
    $region84: #{generator_forward.1} parent=1 // pred_region
      %171 = dma.done [#allocation12], 16
    $region85: #{generator_forward.1} parent=1 // pred_fallthru
      _
    // Predicated region
    $region86: #{generator_forward.1} parent=1 // pred_check
      _
    $region87: #{generator_forward.1} parent=1 // pred_check_branch
      %173 = sbr.rel (0) target = $region89
    $region88: #{generator_forward.1} parent=1 // pred_region
      %174 = dma.done [#allocation12], 24576
    $region89: #{generator_forward.1} parent=1 // pred_fallthru
      _
    // Predicated region
    $region90: #{generator_forward.1} parent=1 // pred_check
      _
    $region91: #{generator_forward.1} parent=1 // pred_check_branch
      %176 = sbr.rel (0) target = $region93
    $region92: #{generator_forward.1} parent=1 // pred_region
      %177 = dma.done [#allocation15], 16
    $region93: #{generator_forward.1} parent=1 // pred_fallthru
      _
    // Predicated region
    $region94: #{generator_forward.1} parent=1 // pred_check
      _
    $region95: #{generator_forward.1} parent=1 // pred_check_branch
      %179 = sbr.rel (0) target = $region97
    $region96: #{generator_forward.1} parent=1 // pred_region
      %180 = dma.done [#allocation15], 24576
    $region97: #{generator_forward.1} parent=1 // pred_fallthru
      _
    // Predicated region
    $region98: #{generator_forward.1} parent=1 // pred_check
      _
    $region99: #{generator_forward.1} parent=1 // pred_check_branch
      %182 = sbr.rel (0) target = $region101
    $region100: #{generator_forward.1} parent=1 // pred_region
      %183 = dma.done [#allocation18], 16
    $region101: #{generator_forward.1} parent=1 // pred_fallthru
      _
    // Predicated region
    $region102: #{generator_forward.1} parent=1 // pred_check
      _
    $region103: #{generator_forward.1} parent=1 // pred_check_branch
      %185 = sbr.rel (0) target = $region105
    $region104: #{generator_forward.1} parent=1 // pred_region
      %186 = dma.done [#allocation18], 24576
    $region105: #{generator_forward.1} parent=1 // pred_fallthru
      _
    // Predicated region
    $region106: #{generator_forward.1} parent=1 // pred_check
      _
    $region107: #{generator_forward.1} parent=1 // pred_check_branch
      %188 = sbr.rel (0) target = $region109
    $region108: #{generator_forward.1} parent=1 // pred_region
      %189 = dma.done [#allocation21], 16
    $region109: #{generator_forward.1} parent=1 // pred_fallthru
      _
    // Predicated region
    $region110: #{generator_forward.1} parent=1 // pred_check
      _
    $region111: #{generator_forward.1} parent=1 // pred_check_branch
      %191 = sbr.rel (0) target = $region113
    $region112: #{generator_forward.1} parent=1 // pred_region
      %192 = dma.done [#allocation21], 18432
    $region113: #{generator_forward.1} parent=1 // pred_fallthru
      _
    %v194 = vld [vmem:[%s1] sm:$0x3]
    %v195 = vpack.c.bf16 %v194, %v194
    %v196 = vld [vmem:[%s2] sm:$0xf]
    %v197 = vld [vmem:[%s2 + $0x4] sm:$0x1]
    %v198 = vld [vmem:[#allocation6] sm:$0x1]
    %v200 = vlaneseq
    %v201 = vshrl.u32 %v200, 7
    %v202 = vsub.s32 0, %v201
    %v203 = vrot.slane %v198, %v202
    %v207 = vunpack.c.l.b16 %v196
    %v208 = vunpack.c.l.b16 %v197
    %v209 = vpack.c.b16 %v208, %v207
    %vm210 = vcmask 80896
    %v212 = vsel %vm210, %v195, 0
    %vm214 = vcmask 1044480
    %v216 = vsel %vm214, %v209, 0
    %218 = vmatprep.subr.bf16.mxu0 0
    %219 = vmatpush1.bf16.msra.mxu0 0
    %220 = vmatprep.subr.bf16.mxu0 0
    %221 = vmatpush1.bf16.msra.mxu0 0
    %222 = vmatprep.subr.bf16.mxu0 0
    %223 = vmatpush1.bf16.msra.mxu0 0
    %224 = vmatprep.subr.bf16.mxu0 0
    %225 = vmatpush1.bf16.msra.mxu0 0
    %226 = vmatprep.subr.bf16.mxu0 0
    %227 = vmatpush1.bf16.msra.mxu0 0
    %228 = vmatprep.subr.bf16.mxu0 0
    %229 = vmatpush1.bf16.msra.mxu0 0
    %230 = vmatprep.subr.bf16.mxu0 0
    %231 = vmatpush1.bf16.msra.mxu0 0
    %232 = vmatprep.subr.bf16.mxu0 0
    %233 = vmatpush1.bf16.msra.mxu0 %v216
    %234 = vmatprep.subr.bf16.mxu0 0
    %235 = vmatpush2.bf16.msra.mxu0 0
    %236 = vmatprep.subr.bf16.mxu0 0
    %237 = vmatpush2.bf16.msra.mxu0 0
    %238 = vmatprep.subr.bf16.mxu0 0
    %239 = vmatpush2.bf16.msra.mxu0 0
    %240 = vmatprep.subr.bf16.mxu0 0
    %241 = vmatpush2.bf16.msra.mxu0 0
    %242 = vmatprep.subr.bf16.mxu0 0
    %243 = vmatpush2.bf16.msra.mxu0 0
    %244 = vmatprep.subr.bf16.mxu0 0
    %245 = vmatpush2.bf16.msra.mxu0 0
    %246 = vmatprep.subr.bf16.mxu0 0
    %247 = vmatpush2.bf16.msra.mxu0 0
    %248 = vmatprep.subr.bf16.mxu0 0
    %249 = vmatpush2.bf16.msra.mxu0 0
    %250 = vmatprep.mubr.bf16.mxu0 0
    %251 = vmatmul.mubr.bf16.gmra.mxu0 %v212
    %v252 = vpop.f32.mrf.mxu0
    %v253 = vadd.f32 %v203, %v252
    %v254 = vpop.f32.mrf.mxu0
    %v255 = vpop.f32.mrf.mxu0
    %v256 = vpop.f32.mrf.mxu0
    %257 = vdwg.mxu0
    %v258 = vld [vmem:[%s0] sm:$0x3]
    %260 = vrot.lane.b32.xlu0 %v253, 16
    %v261 = vpop.permute.xlu0 %260
    %vm263 = vcmask 130048
    %v264 = vsel %vm263, %v258, %v261
    %v265 = vpack.c.bf16 %v264, %v264
    %v266 = vld [vmem:[#allocation8] sm:$0xff]
    %v267 = vld [vmem:[#allocation8 + $0x8] sm:$0xff]
    %v268 = vld [vmem:[#allocation8 + $0x10] sm:$0xff]
    %v269 = vld [vmem:[#allocation8 + $0x18] sm:$0xff]
    %v270 = vld [vmem:[#allocation8 + $0x20] sm:$0xff]
    %v271 = vld [vmem:[#allocation8 + $0x28] sm:$0xff]
    %v272 = vld [vmem:[#allocation8 + $0x30] sm:$0xff]
    %v273 = vld [vmem:[#allocation8 + $0x38] sm:$0xff]
    %v274 = vld [vmem:[#allocation8 + $0x40] sm:$0xff]
    %v275 = vld [vmem:[#allocation8 + $0x48] sm:$0xff]
    %v276 = vld [vmem:[#allocation8 + $0x50] sm:$0xff]
    %v277 = vld [vmem:[#allocation8 + $0x58] sm:$0xff]
    %v278 = vld [vmem:[#allocation8 + $0x60] sm:$0xff]
    %v279 = vld [vmem:[#allocation8 + $0x68] sm:$0xff]
    %v280 = vld [vmem:[#allocation8 + $0x70] sm:$0xff]
    %v281 = vld [vmem:[#allocation8 + $0x78] sm:$0xff]
    %v298 = vunpack.c.l.b16 %v266
    %v299 = vunpack.c.h.b16 %v266
    %v300 = vunpack.c.l.b16 %v267
    %v301 = vunpack.c.h.b16 %v267
    %v302 = vunpack.c.l.b16 %v268
    %v303 = vunpack.c.h.b16 %v268
    %v304 = vunpack.c.l.b16 %v269
    %v305 = vunpack.c.h.b16 %v269
    %v306 = vunpack.c.l.b16 %v270
    %v307 = vunpack.c.h.b16 %v270
    %v308 = vunpack.c.l.b16 %v271
    %v309 = vunpack.c.h.b16 %v271
    %v310 = vunpack.c.l.b16 %v272
    %v311 = vunpack.c.h.b16 %v272
    %v312 = vunpack.c.l.b16 %v273
    %v313 = vunpack.c.h.b16 %v273
    %v314 = vunpack.c.l.b16 %v274
    %v315 = vunpack.c.h.b16 %v274
    %v316 = vunpack.c.l.b16 %v275
    %v317 = vunpack.c.h.b16 %v275
    %v318 = vunpack.c.l.b16 %v276
    %v319 = vunpack.c.h.b16 %v276
    %v320 = vunpack.c.l.b16 %v277
    %v321 = vunpack.c.h.b16 %v277
    %v322 = vunpack.c.l.b16 %v278
    %v323 = vunpack.c.h.b16 %v278
    %v324 = vunpack.c.l.b16 %v279
    %v325 = vunpack.c.h.b16 %v279
    %v326 = vunpack.c.l.b16 %v280
    %v327 = vunpack.c.h.b16 %v280
    %v328 = vunpack.c.l.b16 %v281
    %v329 = vunpack.c.h.b16 %v281
    %v330 = vpack.c.b16 %v306, %v298
    %v331 = vpack.c.b16 %v307, %v299
    %v332 = vpack.c.b16 %v308, %v300
    %v333 = vpack.c.b16 %v309, %v301
    %v334 = vpack.c.b16 %v310, %v302
    %v335 = vpack.c.b16 %v311, %v303
    %v336 = vpack.c.b16 %v312, %v304
    %v337 = vpack.c.b16 %v313, %v305
    %v338 = vpack.c.b16 %v322, %v314
    %v339 = vpack.c.b16 %v323, %v315
    %v340 = vpack.c.b16 %v324, %v316
    %v341 = vpack.c.b16 %v325, %v317
    %v342 = vpack.c.b16 %v326, %v318
    %v343 = vpack.c.b16 %v327, %v319
    %v344 = vpack.c.b16 %v328, %v320
    %v345 = vpack.c.b16 %v329, %v321
    %vm362 = vcmask 261120
    %v364 = vsel %vm362, %v265, 0
    %366 = vmatprep.subr.bf16.mxu0 0
    %367 = vmatpush1.bf16.msra.mxu0 0
    %368 = vmatprep.subr.bf16.mxu0 0
    %369 = vmatpush1.bf16.msra.mxu0 0
    %370 = vmatprep.subr.bf16.mxu0 0
    %371 = vmatpush1.bf16.msra.mxu0 0
    %372 = vmatprep.subr.bf16.mxu0 0
    %373 = vmatpush1.bf16.msra.mxu0 0
    %374 = vmatprep.subr.bf16.mxu0 0
    %375 = vmatpush1.bf16.msra.mxu0 0
    %376 = vmatprep.subr.bf16.mxu0 0
    %377 = vmatpush1.bf16.msra.mxu0 0
    %378 = vmatprep.subr.bf16.mxu0 %v339
    %379 = vmatpush1.bf16.msra.mxu0 %v338
    %380 = vmatprep.subr.bf16.mxu0 %v331
    %381 = vmatpush1.bf16.msra.mxu0 %v330
    %382 = vmatprep.subr.bf16.mxu0 0
    %383 = vmatpush2.bf16.msra.mxu0 0
    %384 = vmatprep.subr.bf16.mxu0 0
    %385 = vmatpush2.bf16.msra.mxu0 0
    %386 = vmatprep.subr.bf16.mxu0 0
    %387 = vmatpush2.bf16.msra.mxu0 0
    %388 = vmatprep.subr.bf16.mxu0 0
    %389 = vmatpush2.bf16.msra.mxu0 0
    %390 = vmatprep.subr.bf16.mxu0 0
    %391 = vmatpush2.bf16.msra.mxu0 0
    %392 = vmatprep.subr.bf16.mxu0 0
    %393 = vmatpush2.bf16.msra.mxu0 0
    %394 = vmatprep.subr.bf16.mxu0 0
    %395 = vmatpush2.bf16.msra.mxu0 0
    %396 = vmatprep.subr.bf16.mxu0 0
    %397 = vmatpush2.bf16.msra.mxu0 0
    %398 = vmatprep.mubr.bf16.mxu0 0
    %399 = vmatmul.mubr.bf16.gmra.mxu0 %v364
    %v400 = vpop.f32.mrf.mxu0
    %v401 = vadd.f32 0.0, %v400
    %v402 = vpop.f32.mrf.mxu0
    %v403 = vadd.f32 0.0, %v402
    %v404 = vpop.f32.mrf.mxu0
    %v405 = vpop.f32.mrf.mxu0
    %406 = vdwg.mxu0
    %407 = vmatprep.subr.bf16.mxu0 0
    %408 = vmatpush1.bf16.msra.mxu0 0
    %409 = vmatprep.subr.bf16.mxu0 0
    %410 = vmatpush1.bf16.msra.mxu0 0
    %411 = vmatprep.subr.bf16.mxu0 0
    %412 = vmatpush1.bf16.msra.mxu0 0
    %413 = vmatprep.subr.bf16.mxu0 0
    %414 = vmatpush1.bf16.msra.mxu0 0
    %415 = vmatprep.subr.bf16.mxu0 0
    %416 = vmatpush1.bf16.msra.mxu0 0
    %417 = vmatprep.subr.bf16.mxu0 0
    %418 = vmatpush1.bf16.msra.mxu0 0
    %419 = vmatprep.subr.bf16.mxu0 %v341
    %420 = vmatpush1.bf16.msra.mxu0 %v340
    %421 = vmatprep.subr.bf16.mxu0 %v333
    %422 = vmatpush1.bf16.msra.mxu0 %v332
    %423 = vmatprep.subr.bf16.mxu0 0
    %424 = vmatpush2.bf16.msra.mxu0 0
    %425 = vmatprep.subr.bf16.mxu0 0
    %426 = vmatpush2.bf16.msra.mxu0 0
    %427 = vmatprep.subr.bf16.mxu0 0
    %428 = vmatpush2.bf16.msra.mxu0 0
    %429 = vmatprep.subr.bf16.mxu0 0
    %430 = vmatpush2.bf16.msra.mxu0 0
    %431 = vmatprep.subr.bf16.mxu0 0
    %432 = vmatpush2.bf16.msra.mxu0 0
    %433 = vmatprep.subr.bf16.mxu0 0
    %434 = vmatpush2.bf16.msra.mxu0 0
    %435 = vmatprep.subr.bf16.mxu0 0
    %436 = vmatpush2.bf16.msra.mxu0 0
    %437 = vmatprep.subr.bf16.mxu0 0
    %438 = vmatpush2.bf16.msra.mxu0 0
    %439 = vmatprep.mubr.bf16.mxu0 0
    %440 = vmatmul.mubr.bf16.gmra.mxu0 %v364
    %v441 = vpop.f32.mrf.mxu0
    %v442 = vadd.f32 0.0, %v441
    %v443 = vpop.f32.mrf.mxu0
    %v444 = vadd.f32 0.0, %v443
    %v445 = vpop.f32.mrf.mxu0
    %v446 = vpop.f32.mrf.mxu0
    %447 = vdwg.mxu0
    %448 = vmatprep.subr.bf16.mxu0 0
    %449 = vmatpush1.bf16.msra.mxu0 0
    %450 = vmatprep.subr.bf16.mxu0 0
    %451 = vmatpush1.bf16.msra.mxu0 0
    %452 = vmatprep.subr.bf16.mxu0 0
    %453 = vmatpush1.bf16.msra.mxu0 0
    %454 = vmatprep.subr.bf16.mxu0 0
    %455 = vmatpush1.bf16.msra.mxu0 0
    %456 = vmatprep.subr.bf16.mxu0 0
    %457 = vmatpush1.bf16.msra.mxu0 0
    %458 = vmatprep.subr.bf16.mxu0 0
    %459 = vmatpush1.bf16.msra.mxu0 0
    %460 = vmatprep.subr.bf16.mxu0 %v343
    %461 = vmatpush1.bf16.msra.mxu0 %v342
    %462 = vmatprep.subr.bf16.mxu0 %v335
    %463 = vmatpush1.bf16.msra.mxu0 %v334
    %464 = vmatprep.subr.bf16.mxu0 0
    %465 = vmatpush2.bf16.msra.mxu0 0
    %466 = vmatprep.subr.bf16.mxu0 0
    %467 = vmatpush2.bf16.msra.mxu0 0
    %468 = vmatprep.subr.bf16.mxu0 0
    %469 = vmatpush2.bf16.msra.mxu0 0
    %470 = vmatprep.subr.bf16.mxu0 0
    %471 = vmatpush2.bf16.msra.mxu0 0
    %472 = vmatprep.subr.bf16.mxu0 0
    %473 = vmatpush2.bf16.msra.mxu0 0
    %474 = vmatprep.subr.bf16.mxu0 0
    %475 = vmatpush2.bf16.msra.mxu0 0
    %476 = vmatprep.subr.bf16.mxu0 0
    %477 = vmatpush2.bf16.msra.mxu0 0
    %478 = vmatprep.subr.bf16.mxu0 0
    %479 = vmatpush2.bf16.msra.mxu0 0
    %480 = vmatprep.mubr.bf16.mxu0 0
    %481 = vmatmul.mubr.bf16.gmra.mxu0 %v364
    %v482 = vpop.f32.mrf.mxu0
    %v483 = vadd.f32 0.0, %v482
    %v484 = vpop.f32.mrf.mxu0
    %v485 = vadd.f32 0.0, %v484
    %v486 = vpop.f32.mrf.mxu0
    %v487 = vpop.f32.mrf.mxu0
    %488 = vdwg.mxu0
    %489 = vmatprep.subr.bf16.mxu0 0
    %490 = vmatpush1.bf16.msra.mxu0 0
    %491 = vmatprep.subr.bf16.mxu0 0
    %492 = vmatpush1.bf16.msra.mxu0 0
    %493 = vmatprep.subr.bf16.mxu0 0
    %494 = vmatpush1.bf16.msra.mxu0 0
    %495 = vmatprep.subr.bf16.mxu0 0
    %496 = vmatpush1.bf16.msra.mxu0 0
    %497 = vmatprep.subr.bf16.mxu0 0
    %498 = vmatpush1.bf16.msra.mxu0 0
    %499 = vmatprep.subr.bf16.mxu0 0
    %500 = vmatpush1.bf16.msra.mxu0 0
    %501 = vmatprep.subr.bf16.mxu0 %v345
    %502 = vmatpush1.bf16.msra.mxu0 %v344
    %503 = vmatprep.subr.bf16.mxu0 %v337
    %504 = vmatpush1.bf16.msra.mxu0 %v336
    %505 = vmatprep.subr.bf16.mxu0 0
    %506 = vmatpush2.bf16.msra.mxu0 0
    %507 = vmatprep.subr.bf16.mxu0 0
    %508 = vmatpush2.bf16.msra.mxu0 0
    %509 = vmatprep.subr.bf16.mxu0 0
    %510 = vmatpush2.bf16.msra.mxu0 0
    %511 = vmatprep.subr.bf16.mxu0 0
    %512 = vmatpush2.bf16.msra.mxu0 0
    %513 = vmatprep.subr.bf16.mxu0 0
    %514 = vmatpush2.bf16.msra.mxu0 0
    %515 = vmatprep.subr.bf16.mxu0 0
    %516 = vmatpush2.bf16.msra.mxu0 0
    %517 = vmatprep.subr.bf16.mxu0 0
    %518 = vmatpush2.bf16.msra.mxu0 0
    %519 = vmatprep.subr.bf16.mxu0 0
    %520 = vmatpush2.bf16.msra.mxu0 0
    %521 = vmatprep.mubr.bf16.mxu0 0
    %522 = vmatmul.mubr.bf16.gmra.mxu0 %v364
    %v523 = vpop.f32.mrf.mxu0
    %v524 = vadd.f32 0.0, %v523
    %v525 = vpop.f32.mrf.mxu0
    %v526 = vadd.f32 0.0, %v525
    %v527 = vpop.f32.mrf.mxu0
    %v528 = vpop.f32.mrf.mxu0
    %529 = vdwg.mxu0
    %vm530 = vcmask 1041408
    %v531 = vsel %vm530, %v401, 0.0
    %v532 = vrot.slane %v531, 4
    %v533 = vadd.f32 %v531, %v532
    %v534 = vrot.slane %v533, 2
    %v535 = vadd.f32 %v533, %v534
    %v536 = vrot.slane %v535, 1
    %v537 = vadd.f32 %v535, %v536
    %v538 = vsel %vm530, %v403, 0.0
    %v539 = vrot.slane %v538, 4
    %v540 = vadd.f32 %v538, %v539
    %v541 = vrot.slane %v540, 2
    %v542 = vadd.f32 %v540, %v541
    %v543 = vrot.slane %v542, 1
    %v544 = vadd.f32 %v542, %v543
    %v545 = vsel %vm530, %v442, 0.0
    %v546 = vrot.slane %v545, 4
    %v547 = vadd.f32 %v545, %v546
    %v548 = vrot.slane %v547, 2
    %v549 = vadd.f32 %v547, %v548
    %v550 = vrot.slane %v549, 1
    %v551 = vadd.f32 %v549, %v550
    %v552 = vsel %vm530, %v444, 0.0
    %v553 = vrot.slane %v552, 4
    %v554 = vadd.f32 %v552, %v553
    %v555 = vrot.slane %v554, 2
    %v556 = vadd.f32 %v554, %v555
    %v557 = vrot.slane %v556, 1
    %v558 = vadd.f32 %v556, %v557
    %v559 = vsel %vm530, %v483, 0.0
    %v560 = vrot.slane %v559, 4
    %v561 = vadd.f32 %v559, %v560
    %v562 = vrot.slane %v561, 2
    %v563 = vadd.f32 %v561, %v562
    %v564 = vrot.slane %v563, 1
    %v565 = vadd.f32 %v563, %v564
    %v566 = vsel %vm530, %v485, 0.0
    %v567 = vrot.slane %v566, 4
    %v568 = vadd.f32 %v566, %v567
    %v569 = vrot.slane %v568, 2
    %v570 = vadd.f32 %v568, %v569
    %v571 = vrot.slane %v570, 1
    %v572 = vadd.f32 %v570, %v571
    %v573 = vsel %vm530, %v524, 0.0
    %v574 = vrot.slane %v573, 4
    %v575 = vadd.f32 %v573, %v574
    %v576 = vrot.slane %v575, 2
    %v577 = vadd.f32 %v575, %v576
    %v578 = vrot.slane %v577, 1
    %v579 = vadd.f32 %v577, %v578
    %v580 = vsel %vm530, %v526, 0.0
    %v581 = vrot.slane %v580, 4
    %v582 = vadd.f32 %v580, %v581
    %v583 = vrot.slane %v582, 2
    %v584 = vadd.f32 %v582, %v583
    %v585 = vrot.slane %v584, 1
    %v586 = vadd.f32 %v584, %v585
    %v587 = vadd.f32 %v537, %v565
    %v588 = vadd.f32 %v544, %v572
    %v589 = vadd.f32 %v551, %v579
    %v590 = vadd.f32 %v558, %v586
    %v591 = vadd.f32 %v587, %v589
    %v592 = vadd.f32 %v588, %v590
    %v593 = vadd.f32 %v591, %v592
    %595 = vrot.lane.b32.xlu0 %v593, 64
    %v596 = vpop.permute.xlu0 %595
    %v598 = vadd.f32 %v593, %v596
    %v599 = vmul.f32 %v598, 0.03125
    %601 = vrot.lane.b32.xlu0 %v599, 64
    %v602 = vpop.permute.xlu0 %601
    %vm604 = vcmask 523264
    %v605 = vsel %vm604, %v599, %v602
    %v606 = vlaneseq
    %v607 = vshrl.u32 %v606, 7
    %v608 = vsub.s32 0, %v607
    %v609 = vrot.slane %v605, %v608
    %v610 = vsub.f32 %v401, %v609
    %v611 = vsub.f32 %v403, %v609
    %v612 = vsub.f32 %v442, %v609
    %v613 = vsub.f32 %v444, %v609
    %v614 = vsub.f32 %v483, %v609
    %v615 = vsub.f32 %v485, %v609
    %v616 = vsub.f32 %v524, %v609
    %v617 = vsub.f32 %v526, %v609
    %v618 = vmul.f32 %v610, %v610
    %v619 = vmul.f32 %v611, %v611
    %v620 = vmul.f32 %v612, %v612
    %v621 = vmul.f32 %v613, %v613
    %v622 = vmul.f32 %v614, %v614
    %v623 = vmul.f32 %v615, %v615
    %v624 = vmul.f32 %v616, %v616
    %v625 = vmul.f32 %v617, %v617
    %v626 = vsel %vm530, %v618, 0.0
    %v627 = vrot.slane %v626, 4
    %v628 = vadd.f32 %v626, %v627
    %v629 = vrot.slane %v628, 2
    %v630 = vadd.f32 %v628, %v629
    %v631 = vrot.slane %v630, 1
    %v632 = vadd.f32 %v630, %v631
    %v633 = vsel %vm530, %v619, 0.0
    %v634 = vrot.slane %v633, 4
    %v635 = vadd.f32 %v633, %v634
    %v636 = vrot.slane %v635, 2
    %v637 = vadd.f32 %v635, %v636
    %v638 = vrot.slane %v637, 1
    %v639 = vadd.f32 %v637, %v638
    %v640 = vsel %vm530, %v620, 0.0
    %v641 = vrot.slane %v640, 4
    %v642 = vadd.f32 %v640, %v641
    %v643 = vrot.slane %v642, 2
    %v644 = vadd.f32 %v642, %v643
    %v645 = vrot.slane %v644, 1
    %v646 = vadd.f32 %v644, %v645
    %v647 = vsel %vm530, %v621, 0.0
    %v648 = vrot.slane %v647, 4
    %v649 = vadd.f32 %v647, %v648
    %v650 = vrot.slane %v649, 2
    %v651 = vadd.f32 %v649, %v650
    %v652 = vrot.slane %v651, 1
    %v653 = vadd.f32 %v651, %v652
    %v654 = vsel %vm530, %v622, 0.0
    %v655 = vrot.slane %v654, 4
    %v656 = vadd.f32 %v654, %v655
    %v657 = vrot.slane %v656, 2
    %v658 = vadd.f32 %v656, %v657
    %v659 = vrot.slane %v658, 1
    %v660 = vadd.f32 %v658, %v659
    %v661 = vsel %vm530, %v623, 0.0
    %v662 = vrot.slane %v661, 4
    %v663 = vadd.f32 %v661, %v662
    %v664 = vrot.slane %v663, 2
    %v665 = vadd.f32 %v663, %v664
    %v666 = vrot.slane %v665, 1
    %v667 = vadd.f32 %v665, %v666
    %v668 = vsel %vm530, %v624, 0.0
    %v669 = vrot.slane %v668, 4
    %v670 = vadd.f32 %v668, %v669
    %v671 = vrot.slane %v670, 2
    %v672 = vadd.f32 %v670, %v671
    %v673 = vrot.slane %v672, 1
    %v674 = vadd.f32 %v672, %v673
    %v675 = vsel %vm530, %v625, 0.0
    %v676 = vrot.slane %v675, 4
    %v677 = vadd.f32 %v675, %v676
    %v678 = vrot.slane %v677, 2
    %v679 = vadd.f32 %v677, %v678
    %v680 = vrot.slane %v679, 1
    %v681 = vadd.f32 %v679, %v680
    %v682 = vadd.f32 %v632, %v660
    %v683 = vadd.f32 %v639, %v667
    %v684 = vadd.f32 %v646, %v674
    %v685 = vadd.f32 %v653, %v681
    %v686 = vadd.f32 %v682, %v684
    %v687 = vadd.f32 %v683, %v685
    %v688 = vadd.f32 %v686, %v687
    %690 = vrot.lane.b32.xlu0 %v688, 64
    %v691 = vpop.permute.xlu0 %690
    %v693 = vadd.f32 %v688, %v691
    %v694 = vmul.f32 %v693, 0.03125
    %v695 = vld [vmem:[#allocation10] sm:$0x1]
    %v696 = vadd.f32 %v694, 1e-05
    %v697 = vrsqrt.pop %v696
    %v698 = vmul.f32 %v695, %v697
    %v699 = vld [vmem:[#allocation11] sm:$0x1]
    %v700 = vmul.f32 %v599, %v698
    %v701 = vsub.f32 %v699, %v700
    %v703 = vlaneseq
    %v704 = vshrl.u32 %v703, 7
    %v705 = vsub.s32 0, %v704
    %v706 = vrot.slane %v698, %v705
    %707 = vrot.lane.b32.xlu0 %v706, 64
    %v708 = vpop.permute.xlu0 %707
    %v710 = vsel %vm604, %v698, %v708
    %v712 = vlaneseq
    %v713 = vshrl.u32 %v712, 7
    %v714 = vsub.s32 0, %v713
    %v715 = vrot.slane %v701, %v714
    %716 = vrot.lane.b32.xlu0 %v715, 64
    %v717 = vpop.permute.xlu0 %716
    %v719 = vsel %vm604, %v701, %v717
    %v720 = vlaneseq
    %v721 = vshrl.u32 %v720, 7
    %v722 = vsub.s32 0, %v721
    %v723 = vrot.slane %v710, %v722
    %v724 = vmul.f32 %v401, %v723
    %v725 = vmul.f32 %v403, %v723
    %v726 = vmul.f32 %v442, %v723
    %v727 = vmul.f32 %v444, %v723
    %v728 = vmul.f32 %v483, %v723
    %v729 = vmul.f32 %v485, %v723
    %v730 = vmul.f32 %v524, %v723
    %v731 = vmul.f32 %v526, %v723
    %v732 = vlaneseq
    %v733 = vshrl.u32 %v732, 7
    %v734 = vsub.s32 0, %v733
    %v735 = vrot.slane %v719, %v734
    %v736 = vadd.f32 %v724, %v735
    %v737 = vadd.f32 %v725, %v735
    %v738 = vadd.f32 %v726, %v735
    %v739 = vadd.f32 %v727, %v735
    %v740 = vadd.f32 %v728, %v735
    %v741 = vadd.f32 %v729, %v735
    %v742 = vadd.f32 %v730, %v735
    %v743 = vadd.f32 %v731, %v735
    %v744 = vmax.f32 %v736, 0.0
    %v745 = vmax.f32 %v737, 0.0
    %v746 = vmax.f32 %v738, 0.0
    %v747 = vmax.f32 %v739, 0.0
    %v748 = vmax.f32 %v740, 0.0
    %v749 = vmax.f32 %v741, 0.0
    %v750 = vmax.f32 %v742, 0.0
    %v751 = vmax.f32 %v743, 0.0
    %752 = vst [vmem:[#allocation2] sm:$0x3f] 0.0
    %753 = vst [vmem:[#allocation2 + $0x8] sm:$0x3f] 0.0
    %754 = vst [vmem:[#allocation2 + $0x10] sm:$0x3f] 0.0
    %755 = vst [vmem:[#allocation2 + $0x18] sm:$0x3f] 0.0
    %v758 = vcombine.low %v744, %v745
    %v760 = vunpack.c.l.s4 1966171168
    %v761 = vunpack.c.0.s8 %v760
    %v762 = vlaneseq
    %v763 = vshrl.u32 %v762, 7
    %v764 = vsub.s32 %v761, %v763
    %v765 = vrot.slane %v758, %v764
    %v767 = vunpack.c.l.s4 1966171168
    %v768 = vunpack.c.0.s8 %v767
    %v769 = vlaneseq
    %v770 = vshrl.u32 %v769, 7
    %v771 = vsub.s32 %v768, %v770
    %v772 = vrot.slane %v765, %v771
    %v774 = vlaneseq
    %vm775 = vcmp.ge.s32.totalorder %v774, 0
    %vm776 = vcmp.lt.s32.totalorder %v774, 256
    %vm777 = vmand %vm775, %vm776
    %s778 = scalar_lea.vmem [#allocation2], 1
    %779 = vst.msk [vmem:[%s778] ss:$8 sm:$0x3] %vm777, %v772
    %780 = vst.msk [vmem:[%s778] ss:$8 sm:$0x0] %vm777, %v772
    %v783 = vcombine.low %v746, %v747
    %v785 = vunpack.c.l.s4 1966171168
    %v786 = vunpack.c.0.s8 %v785
    %v787 = vlaneseq
    %v788 = vshrl.u32 %v787, 7
    %v789 = vsub.s32 %v786, %v788
    %v790 = vrot.slane %v783, %v789
    %v792 = vunpack.c.l.s4 1966171168
    %v793 = vunpack.c.0.s8 %v792
    %v794 = vlaneseq
    %v795 = vshrl.u32 %v794, 7
    %v796 = vsub.s32 %v793, %v795
    %v797 = vrot.slane %v790, %v796
    %s799 = scalar_lea.vmem [#allocation2], 2
    %800 = vst.msk [vmem:[%s799] ss:$8 sm:$0x3] %vm777, %v797
    %801 = vst.msk [vmem:[%s799] ss:$8 sm:$0x0] %vm777, %v797
    %v804 = vcombine.low %v748, %v749
    %v806 = vunpack.c.l.s4 1966171168
    %v807 = vunpack.c.0.s8 %v806
    %v808 = vlaneseq
    %v809 = vshrl.u32 %v808, 7
    %v810 = vsub.s32 %v807, %v809
    %v811 = vrot.slane %v804, %v810
    %v813 = vunpack.c.l.s4 1966171168
    %v814 = vunpack.c.0.s8 %v813
    %v815 = vlaneseq
    %v816 = vshrl.u32 %v815, 7
    %v817 = vsub.s32 %v814, %v816
    %v818 = vrot.slane %v811, %v817
    %s820 = scalar_lea.vmem [#allocation2], 3
    %821 = vst.msk [vmem:[%s820] ss:$8 sm:$0x3] %vm777, %v818
    %822 = vst.msk [vmem:[%s820] ss:$8 sm:$0x0] %vm777, %v818
    %v825 = vcombine.low %v750, %v751
    %v827 = vunpack.c.l.s4 1966171168
    %v828 = vunpack.c.0.s8 %v827
    %v829 = vlaneseq
    %v830 = vshrl.u32 %v829, 7
    %v831 = vsub.s32 %v828, %v830
    %v832 = vrot.slane %v825, %v831
    %v834 = vunpack.c.l.s4 1966171168
    %v835 = vunpack.c.0.s8 %v834
    %v836 = vlaneseq
    %v837 = vshrl.u32 %v836, 7
    %v838 = vsub.s32 %v835, %v837
    %v839 = vrot.slane %v832, %v838
    %s841 = scalar_lea.vmem [#allocation2], 4
    %842 = vst.msk [vmem:[%s841] ss:$8 sm:$0x3] %vm777, %v839
    %843 = vst.msk [vmem:[%s841] ss:$8 sm:$0x0] %vm777, %v839
    %v844 = vcombine.high %v765, %v765
    %v846 = vunpack.c.l.s4 1966171168
    %v847 = vunpack.c.0.s8 %v846
    %v848 = vlaneseq
    %v849 = vshrl.u32 %v848, 7
    %v850 = vsub.s32 %v847, %v849
    %v851 = vrot.slane %v844, %v850
    %s853 = scalar_lea.vmem [#allocation2], 16
    %s854 = scalar_lea.vmem %s853, 1 [#allocation2]
    %855 = vst.msk [vmem:[%s854] ss:$8 sm:$0x3] %vm777, %v851
    %856 = vst.msk [vmem:[%s854] ss:$8 sm:$0x0] %vm777, %v851
    %v857 = vcombine.high %v790, %v790
    %v859 = vunpack.c.l.s4 1966171168
    %v860 = vunpack.c.0.s8 %v859
    %v861 = vlaneseq
    %v862 = vshrl.u32 %v861, 7
    %v863 = vsub.s32 %v860, %v862
    %v864 = vrot.slane %v857, %v863
    %s866 = scalar_lea.vmem %s853, 2 [#allocation2]
    %867 = vst.msk [vmem:[%s866] ss:$8 sm:$0x3] %vm777, %v864
    %868 = vst.msk [vmem:[%s866] ss:$8 sm:$0x0] %vm777, %v864
    %v869 = vcombine.high %v811, %v811
    %v871 = vunpack.c.l.s4 1966171168
    %v872 = vunpack.c.0.s8 %v871
    %v873 = vlaneseq
    %v874 = vshrl.u32 %v873, 7
    %v875 = vsub.s32 %v872, %v874
    %v876 = vrot.slane %v869, %v875
    %s878 = scalar_lea.vmem %s853, 3 [#allocation2]
    %879 = vst.msk [vmem:[%s878] ss:$8 sm:$0x3] %vm777, %v876
    %880 = vst.msk [vmem:[%s878] ss:$8 sm:$0x0] %vm777, %v876
    %v881 = vcombine.high %v832, %v832
    %v883 = vunpack.c.l.s4 1966171168
    %v884 = vunpack.c.0.s8 %v883
    %v885 = vlaneseq
    %v886 = vshrl.u32 %v885, 7
    %v887 = vsub.s32 %v884, %v886
    %v888 = vrot.slane %v881, %v887
    %s890 = scalar_lea.vmem %s853, 4 [#allocation2]
    %891 = vst.msk [vmem:[%s890] ss:$8 sm:$0x3] %vm777, %v888
    %892 = vst.msk [vmem:[%s890] ss:$8 sm:$0x0] %vm777, %v888
    %v893 = vld [vmem:[#allocation2] sm:$0xf]
    %v894 = vld [vmem:[#allocation2 + $0x8] sm:$0xf]
    %v895 = vld [vmem:[#allocation2] sm:$0x1e]
    %v896 = vld [vmem:[#allocation2 + $0x8] sm:$0x1e]
    %v897 = vld [vmem:[#allocation2] sm:$0x3c]
    %v898 = vld [vmem:[#allocation2 + $0x8] sm:$0x3c]
    %v901 = vrot.slane %v895, 1
    %v902 = vrot.slane %v896, 1
    %v907 = vrot.slane %v897, 2
    %v908 = vrot.slane %v898, 2
    %v911 = vpack.c.bf16 %v893, %v893
    %v912 = vpack.c.bf16 %v894, %v894
    %v913 = vpack.c.bf16 %v901, %v901
    %v914 = vpack.c.bf16 %v902, %v902
    %v915 = vpack.c.bf16 %v907, %v907
    %v916 = vpack.c.bf16 %v908, %v908
    %v917 = vld [vmem:[#allocation13] sm:$0xff]
    %v918 = vld [vmem:[#allocation13 + $0x8] sm:$0xff]
    %v919 = vld [vmem:[#allocation13 + $0x10] sm:$0xff]
    %v920 = vld [vmem:[#allocation13 + $0x18] sm:$0xff]
    %v921 = vld [vmem:[#allocation13 + $0x20] sm:$0xff]
    %v922 = vld [vmem:[#allocation13 + $0x28] sm:$0xff]
    %v923 = vld [vmem:[#allocation13 + $0x30] sm:$0xff]
    %v924 = vld [vmem:[#allocation13 + $0x38] sm:$0xff]
    %v925 = vld [vmem:[#allocation13 + $0x40] sm:$0xff]
    %v926 = vld [vmem:[#allocation13 + $0x48] sm:$0xff]
    %v927 = vld [vmem:[#allocation13 + $0x50] sm:$0xff]
    %v928 = vld [vmem:[#allocation13 + $0x58] sm:$0xff]
    %v929 = vld [vmem:[#allocation13 + $0x60] sm:$0xff]
    %v930 = vld [vmem:[#allocation13 + $0x68] sm:$0xff]
    %v931 = vld [vmem:[#allocation13 + $0x70] sm:$0xff]
    %v932 = vld [vmem:[#allocation13 + $0x78] sm:$0xff]
    %v933 = vld [vmem:[#allocation13 + $0x80] sm:$0xff]
    %v934 = vld [vmem:[#allocation13 + $0x88] sm:$0xff]
    %v935 = vld [vmem:[#allocation13 + $0x90] sm:$0xff]
    %v936 = vld [vmem:[#allocation13 + $0x98] sm:$0xff]
    %v937 = vld [vmem:[#allocation13 + $0xa0] sm:$0xff]
    %v938 = vld [vmem:[#allocation13 + $0xa8] sm:$0xff]
    %v939 = vld [vmem:[#allocation13 + $0xb0] sm:$0xff]
    %v940 = vld [vmem:[#allocation13 + $0xb8] sm:$0xff]
    %v941 = vld [vmem:[#allocation13 + $0xc0] sm:$0xff]
    %v942 = vld [vmem:[#allocation13 + $0xc8] sm:$0xff]
    %v943 = vld [vmem:[#allocation13 + $0xd0] sm:$0xff]
    %v944 = vld [vmem:[#allocation13 + $0xd8] sm:$0xff]
    %v945 = vld [vmem:[#allocation13 + $0xe0] sm:$0xff]
    %v946 = vld [vmem:[#allocation13 + $0xe8] sm:$0xff]
    %v947 = vld [vmem:[#allocation13 + $0xf0] sm:$0xff]
    %v948 = vld [vmem:[#allocation13 + $0xf8] sm:$0xff]
    %v949 = vld [vmem:[#allocation13 + $0x100] sm:$0xff]
    %v950 = vld [vmem:[#allocation13 + $0x108] sm:$0xff]
    %v951 = vld [vmem:[#allocation13 + $0x110] sm:$0xff]
    %v952 = vld [vmem:[#allocation13 + $0x118] sm:$0xff]
    %v953 = vld [vmem:[#allocation13 + $0x120] sm:$0xff]
    %v954 = vld [vmem:[#allocation13 + $0x128] sm:$0xff]
    %v955 = vld [vmem:[#allocation13 + $0x130] sm:$0xff]
    %v956 = vld [vmem:[#allocation13 + $0x138] sm:$0xff]
    %v957 = vld [vmem:[#allocation13 + $0x140] sm:$0xff]
    %v958 = vld [vmem:[#allocation13 + $0x148] sm:$0xff]
    %v959 = vld [vmem:[#allocation13 + $0x150] sm:$0xff]
    %v960 = vld [vmem:[#allocation13 + $0x158] sm:$0xff]
    %v961 = vld [vmem:[#allocation13 + $0x160] sm:$0xff]
    %v962 = vld [vmem:[#allocation13 + $0x168] sm:$0xff]
    %v963 = vld [vmem:[#allocation13 + $0x170] sm:$0xff]
    %v964 = vld [vmem:[#allocation13 + $0x178] sm:$0xff]
    %v965 = vld [vmem:[#allocation13 + $0x180] sm:$0xff]
    %v966 = vld [vmem:[#allocation13 + $0x188] sm:$0xff]
    %v967 = vld [vmem:[#allocation13 + $0x190] sm:$0xff]
    %v968 = vld [vmem:[#allocation13 + $0x198] sm:$0xff]
    %v969 = vld [vmem:[#allocation13 + $0x1a0] sm:$0xff]
    %v970 = vld [vmem:[#allocation13 + $0x1a8] sm:$0xff]
    %v971 = vld [vmem:[#allocation13 + $0x1b0] sm:$0xff]
    %v972 = vld [vmem:[#allocation13 + $0x1b8] sm:$0xff]
    %v973 = vld [vmem:[#allocation13 + $0x1c0] sm:$0xff]
    %v974 = vld [vmem:[#allocation13 + $0x1c8] sm:$0xff]
    %v975 = vld [vmem:[#allocation13 + $0x1d0] sm:$0xff]
    %v976 = vld [vmem:[#allocation13 + $0x1d8] sm:$0xff]
    %v977 = vld [vmem:[#allocation13 + $0x1e0] sm:$0xff]
    %v978 = vld [vmem:[#allocation13 + $0x1e8] sm:$0xff]
    %v979 = vld [vmem:[#allocation13 + $0x1f0] sm:$0xff]
    %v980 = vld [vmem:[#allocation13 + $0x1f8] sm:$0xff]
    %v981 = vld [vmem:[#allocation13 + $0x200] sm:$0xff]
    %v982 = vld [vmem:[#allocation13 + $0x208] sm:$0xff]
    %v983 = vld [vmem:[#allocation13 + $0x210] sm:$0xff]
    %v984 = vld [vmem:[#allocation13 + $0x218] sm:$0xff]
    %v985 = vld [vmem:[#allocation13 + $0x220] sm:$0xff]
    %v986 = vld [vmem:[#allocation13 + $0x228] sm:$0xff]
    %v987 = vld [vmem:[#allocation13 + $0x230] sm:$0xff]
    %v988 = vld [vmem:[#allocation13 + $0x238] sm:$0xff]
    %v989 = vld [vmem:[#allocation13 + $0x240] sm:$0xff]
    %v990 = vld [vmem:[#allocation13 + $0x248] sm:$0xff]
    %v991 = vld [vmem:[#allocation13 + $0x250] sm:$0xff]
    %v992 = vld [vmem:[#allocation13 + $0x258] sm:$0xff]
    %v993 = vld [vmem:[#allocation13 + $0x260] sm:$0xff]
    %v994 = vld [vmem:[#allocation13 + $0x268] sm:$0xff]
    %v995 = vld [vmem:[#allocation13 + $0x270] sm:$0xff]
    %v996 = vld [vmem:[#allocation13 + $0x278] sm:$0xff]
    %v997 = vld [vmem:[#allocation13 + $0x280] sm:$0xff]
    %v998 = vld [vmem:[#allocation13 + $0x288] sm:$0xff]
    %v999 = vld [vmem:[#allocation13 + $0x290] sm:$0xff]
    %v1000 = vld [vmem:[#allocation13 + $0x298] sm:$0xff]
    %v1001 = vld [vmem:[#allocation13 + $0x2a0] sm:$0xff]
    %v1002 = vld [vmem:[#allocation13 + $0x2a8] sm:$0xff]
    %v1003 = vld [vmem:[#allocation13 + $0x2b0] sm:$0xff]
    %v1004 = vld [vmem:[#allocation13 + $0x2b8] sm:$0xff]
    %v1005 = vld [vmem:[#allocation13 + $0x2c0] sm:$0xff]
    %v1006 = vld [vmem:[#allocation13 + $0x2c8] sm:$0xff]
    %v1007 = vld [vmem:[#allocation13 + $0x2d0] sm:$0xff]
    %v1008 = vld [vmem:[#allocation13 + $0x2d8] sm:$0xff]
    %v1009 = vld [vmem:[#allocation13 + $0x2e0] sm:$0xff]
    %v1010 = vld [vmem:[#allocation13 + $0x2e8] sm:$0xff]
    %v1011 = vld [vmem:[#allocation13 + $0x2f0] sm:$0xff]
    %v1012 = vld [vmem:[#allocation13 + $0x2f8] sm:$0xff]
    %v1013 = vld [vmem:[#allocation13 + $0x300] sm:$0xff]
    %v1014 = vld [vmem:[#allocation13 + $0x308] sm:$0xff]
    %v1015 = vld [vmem:[#allocation13 + $0x310] sm:$0xff]
    %v1016 = vld [vmem:[#allocation13 + $0x318] sm:$0xff]
    %v1017 = vld [vmem:[#allocation13 + $0x320] sm:$0xff]
    %v1018 = vld [vmem:[#allocation13 + $0x328] sm:$0xff]
    %v1019 = vld [vmem:[#allocation13 + $0x330] sm:$0xff]
    %v1020 = vld [vmem:[#allocation13 + $0x338] sm:$0xff]
    %v1021 = vld [vmem:[#allocation13 + $0x340] sm:$0xff]
    %v1022 = vld [vmem:[#allocation13 + $0x348] sm:$0xff]
    %v1023 = vld [vmem:[#allocation13 + $0x350] sm:$0xff]
    %v1024 = vld [vmem:[#allocation13 + $0x358] sm:$0xff]
    %v1025 = vld [vmem:[#allocation13 + $0x360] sm:$0xff]
    %v1026 = vld [vmem:[#allocation13 + $0x368] sm:$0xff]
    %v1027 = vld [vmem:[#allocation13 + $0x370] sm:$0xff]
    %v1028 = vld [vmem:[#allocation13 + $0x378] sm:$0xff]
    %v1029 = vld [vmem:[#allocation13 + $0x380] sm:$0xff]
    %v1030 = vld [vmem:[#allocation13 + $0x388] sm:$0xff]
    %v1031 = vld [vmem:[#allocation13 + $0x390] sm:$0xff]
    %v1032 = vld [vmem:[#allocation13 + $0x398] sm:$0xff]
    %v1033 = vld [vmem:[#allocation13 + $0x3a0] sm:$0xff]
    %v1034 = vld [vmem:[#allocation13 + $0x3a8] sm:$0xff]
    %v1035 = vld [vmem:[#allocation13 + $0x3b0] sm:$0xff]
    %v1036 = vld [vmem:[#allocation13 + $0x3b8] sm:$0xff]
    %v1037 = vld [vmem:[#allocation13 + $0x3c0] sm:$0xff]
    %v1038 = vld [vmem:[#allocation13 + $0x3c8] sm:$0xff]
    %v1039 = vld [vmem:[#allocation13 + $0x3d0] sm:$0xff]
    %v1040 = vld [vmem:[#allocation13 + $0x3d8] sm:$0xff]
    %v1041 = vld [vmem:[#allocation13 + $0x3e0] sm:$0xff]
    %v1042 = vld [vmem:[#allocation13 + $0x3e8] sm:$0xff]
    %v1043 = vld [vmem:[#allocation13 + $0x3f0] sm:$0xff]
    %v1044 = vld [vmem:[#allocation13 + $0x3f8] sm:$0xff]
    %v1045 = vld [vmem:[#allocation13 + $0x400] sm:$0xff]
    %v1046 = vld [vmem:[#allocation13 + $0x408] sm:$0xff]
    %v1047 = vld [vmem:[#allocation13 + $0x410] sm:$0xff]
    %v1048 = vld [vmem:[#allocation13 + $0x418] sm:$0xff]
    %v1049 = vld [vmem:[#allocation13 + $0x420] sm:$0xff]
    %v1050 = vld [vmem:[#allocation13 + $0x428] sm:$0xff]
    %v1051 = vld [vmem:[#allocation13 + $0x430] sm:$0xff]
    %v1052 = vld [vmem:[#allocation13 + $0x438] sm:$0xff]
    %v1053 = vld [vmem:[#allocation13 + $0x440] sm:$0xff]
    %v1054 = vld [vmem:[#allocation13 + $0x448] sm:$0xff]
    %v1055 = vld [vmem:[#allocation13 + $0x450] sm:$0xff]
    %v1056 = vld [vmem:[#allocation13 + $0x458] sm:$0xff]
    %v1057 = vld [vmem:[#allocation13 + $0x460] sm:$0xff]
    %v1058 = vld [vmem:[#allocation13 + $0x468] sm:$0xff]
    %v1059 = vld [vmem:[#allocation13 + $0x470] sm:$0xff]
    %v1060 = vld [vmem:[#allocation13 + $0x478] sm:$0xff]
    %v1061 = vld [vmem:[#allocation13 + $0x480] sm:$0xff]
    %v1062 = vld [vmem:[#allocation13 + $0x488] sm:$0xff]
    %v1063 = vld [vmem:[#allocation13 + $0x490] sm:$0xff]
    %v1064 = vld [vmem:[#allocation13 + $0x498] sm:$0xff]
    %v1065 = vld [vmem:[#allocation13 + $0x4a0] sm:$0xff]
    %v1066 = vld [vmem:[#allocation13 + $0x4a8] sm:$0xff]
    %v1067 = vld [vmem:[#allocation13 + $0x4b0] sm:$0xff]
    %v1068 = vld [vmem:[#allocation13 + $0x4b8] sm:$0xff]
    %v1069 = vld [vmem:[#allocation13 + $0x4c0] sm:$0xff]
    %v1070 = vld [vmem:[#allocation13 + $0x4c8] sm:$0xff]
    %v1071 = vld [vmem:[#allocation13 + $0x4d0] sm:$0xff]
    %v1072 = vld [vmem:[#allocation13 + $0x4d8] sm:$0xff]
    %v1073 = vld [vmem:[#allocation13 + $0x4e0] sm:$0xff]
    %v1074 = vld [vmem:[#allocation13 + $0x4e8] sm:$0xff]
    %v1075 = vld [vmem:[#allocation13 + $0x4f0] sm:$0xff]
    %v1076 = vld [vmem:[#allocation13 + $0x4f8] sm:$0xff]
    %v1077 = vld [vmem:[#allocation13 + $0x500] sm:$0xff]
    %v1078 = vld [vmem:[#allocation13 + $0x508] sm:$0xff]
    %v1079 = vld [vmem:[#allocation13 + $0x510] sm:$0xff]
    %v1080 = vld [vmem:[#allocation13 + $0x518] sm:$0xff]
    %v1081 = vld [vmem:[#allocation13 + $0x520] sm:$0xff]
    %v1082 = vld [vmem:[#allocation13 + $0x528] sm:$0xff]
    %v1083 = vld [vmem:[#allocation13 + $0x530] sm:$0xff]
    %v1084 = vld [vmem:[#allocation13 + $0x538] sm:$0xff]
    %v1085 = vld [vmem:[#allocation13 + $0x540] sm:$0xff]
    %v1086 = vld [vmem:[#allocation13 + $0x548] sm:$0xff]
    %v1087 = vld [vmem:[#allocation13 + $0x550] sm:$0xff]
    %v1088 = vld [vmem:[#allocation13 + $0x558] sm:$0xff]
    %v1089 = vld [vmem:[#allocation13 + $0x560] sm:$0xff]
    %v1090 = vld [vmem:[#allocation13 + $0x568] sm:$0xff]
    %v1091 = vld [vmem:[#allocation13 + $0x570] sm:$0xff]
    %v1092 = vld [vmem:[#allocation13 + $0x578] sm:$0xff]
    %v1093 = vld [vmem:[#allocation13 + $0x580] sm:$0xff]
    %v1094 = vld [vmem:[#allocation13 + $0x588] sm:$0xff]
    %v1095 = vld [vmem:[#allocation13 + $0x590] sm:$0xff]
    %v1096 = vld [vmem:[#allocation13 + $0x598] sm:$0xff]
    %v1097 = vld [vmem:[#allocation13 + $0x5a0] sm:$0xff]
    %v1098 = vld [vmem:[#allocation13 + $0x5a8] sm:$0xff]
    %v1099 = vld [vmem:[#allocation13 + $0x5b0] sm:$0xff]
    %v1100 = vld [vmem:[#allocation13 + $0x5b8] sm:$0xff]
    %v1101 = vld [vmem:[#allocation13 + $0x5c0] sm:$0xff]
    %v1102 = vld [vmem:[#allocation13 + $0x5c8] sm:$0xff]
    %v1103 = vld [vmem:[#allocation13 + $0x5d0] sm:$0xff]
    %v1104 = vld [vmem:[#allocation13 + $0x5d8] sm:$0xff]
    %v1105 = vld [vmem:[#allocation13 + $0x5e0] sm:$0xff]
    %v1106 = vld [vmem:[#allocation13 + $0x5e8] sm:$0xff]
    %v1107 = vld [vmem:[#allocation13 + $0x5f0] sm:$0xff]
    %v1108 = vld [vmem:[#allocation13 + $0x5f8] sm:$0xff]
    %v1301 = vunpack.c.l.b16 %v917
    %v1302 = vunpack.c.h.b16 %v917
    %v1303 = vunpack.c.l.b16 %v918
    %v1304 = vunpack.c.h.b16 %v918
    %v1305 = vunpack.c.l.b16 %v919
    %v1306 = vunpack.c.h.b16 %v919
    %v1307 = vunpack.c.l.b16 %v920
    %v1308 = vunpack.c.h.b16 %v920
    %v1309 = vunpack.c.l.b16 %v921
    %v1310 = vunpack.c.h.b16 %v921
    %v1311 = vunpack.c.l.b16 %v922
    %v1312 = vunpack.c.h.b16 %v922
    %v1313 = vunpack.c.l.b16 %v923
    %v1314 = vunpack.c.h.b16 %v923
    %v1315 = vunpack.c.l.b16 %v924
    %v1316 = vunpack.c.h.b16 %v924
    %v1317 = vunpack.c.l.b16 %v925
    %v1318 = vunpack.c.h.b16 %v925
    %v1319 = vunpack.c.l.b16 %v926
    %v1320 = vunpack.c.h.b16 %v926
    %v1321 = vunpack.c.l.b16 %v927
    %v1322 = vunpack.c.h.b16 %v927
    %v1323 = vunpack.c.l.b16 %v928
    %v1324 = vunpack.c.h.b16 %v928
    %v1325 = vunpack.c.l.b16 %v929
    %v1326 = vunpack.c.h.b16 %v929
    %v1327 = vunpack.c.l.b16 %v930
    %v1328 = vunpack.c.h.b16 %v930
    %v1329 = vunpack.c.l.b16 %v931
    %v1330 = vunpack.c.h.b16 %v931
    %v1331 = vunpack.c.l.b16 %v932
    %v1332 = vunpack.c.h.b16 %v932
    %v1333 = vunpack.c.l.b16 %v933
    %v1334 = vunpack.c.h.b16 %v933
    %v1335 = vunpack.c.l.b16 %v934
    %v1336 = vunpack.c.h.b16 %v934
    %v1337 = vunpack.c.l.b16 %v935
    %v1338 = vunpack.c.h.b16 %v935
    %v1339 = vunpack.c.l.b16 %v936
    %v1340 = vunpack.c.h.b16 %v936
    %v1341 = vunpack.c.l.b16 %v937
    %v1342 = vunpack.c.h.b16 %v937
    %v1343 = vunpack.c.l.b16 %v938
    %v1344 = vunpack.c.h.b16 %v938
    %v1345 = vunpack.c.l.b16 %v939
    %v1346 = vunpack.c.h.b16 %v939
    %v1347 = vunpack.c.l.b16 %v940
    %v1348 = vunpack.c.h.b16 %v940
    %v1349 = vunpack.c.l.b16 %v941
    %v1350 = vunpack.c.h.b16 %v941
    %v1351 = vunpack.c.l.b16 %v942
    %v1352 = vunpack.c.h.b16 %v942
    %v1353 = vunpack.c.l.b16 %v943
    %v1354 = vunpack.c.h.b16 %v943
    %v1355 = vunpack.c.l.b16 %v944
    %v1356 = vunpack.c.h.b16 %v944
    %v1357 = vunpack.c.l.b16 %v945
    %v1358 = vunpack.c.h.b16 %v945
    %v1359 = vunpack.c.l.b16 %v946
    %v1360 = vunpack.c.h.b16 %v946
    %v1361 = vunpack.c.l.b16 %v947
    %v1362 = vunpack.c.h.b16 %v947
    %v1363 = vunpack.c.l.b16 %v948
    %v1364 = vunpack.c.h.b16 %v948
    %v1365 = vunpack.c.l.b16 %v949
    %v1366 = vunpack.c.h.b16 %v949
    %v1367 = vunpack.c.l.b16 %v950
    %v1368 = vunpack.c.h.b16 %v950
    %v1369 = vunpack.c.l.b16 %v951
    %v1370 = vunpack.c.h.b16 %v951
    %v1371 = vunpack.c.l.b16 %v952
    %v1372 = vunpack.c.h.b16 %v952
    %v1373 = vunpack.c.l.b16 %v953
    %v1374 = vunpack.c.h.b16 %v953
    %v1375 = vunpack.c.l.b16 %v954
    %v1376 = vunpack.c.h.b16 %v954
    %v1377 = vunpack.c.l.b16 %v955
    %v1378 = vunpack.c.h.b16 %v955
    %v1379 = vunpack.c.l.b16 %v956
    %v1380 = vunpack.c.h.b16 %v956
    %v1381 = vunpack.c.l.b16 %v957
    %v1382 = vunpack.c.h.b16 %v957
    %v1383 = vunpack.c.l.b16 %v958
    %v1384 = vunpack.c.h.b16 %v958
    %v1385 = vunpack.c.l.b16 %v959
    %v1386 = vunpack.c.h.b16 %v959
    %v1387 = vunpack.c.l.b16 %v960
    %v1388 = vunpack.c.h.b16 %v960
    %v1389 = vunpack.c.l.b16 %v961
    %v1390 = vunpack.c.h.b16 %v961
    %v1391 = vunpack.c.l.b16 %v962
    %v1392 = vunpack.c.h.b16 %v962
    %v1393 = vunpack.c.l.b16 %v963
    %v1394 = vunpack.c.h.b16 %v963
    %v1395 = vunpack.c.l.b16 %v964
    %v1396 = vunpack.c.h.b16 %v964
    %v1397 = vunpack.c.l.b16 %v965
    %v1398 = vunpack.c.h.b16 %v965
    %v1399 = vunpack.c.l.b16 %v966
    %v1400 = vunpack.c.h.b16 %v966
    %v1401 = vunpack.c.l.b16 %v967
    %v1402 = vunpack.c.h.b16 %v967
    %v1403 = vunpack.c.l.b16 %v968
    %v1404 = vunpack.c.h.b16 %v968
    %v1405 = vunpack.c.l.b16 %v969
    %v1406 = vunpack.c.h.b16 %v969
    %v1407 = vunpack.c.l.b16 %v970
    %v1408 = vunpack.c.h.b16 %v970
    %v1409 = vunpack.c.l.b16 %v971
    %v1410 = vunpack.c.h.b16 %v971
    %v1411 = vunpack.c.l.b16 %v972
    %v1412 = vunpack.c.h.b16 %v972
    %v1413 = vunpack.c.l.b16 %v973
    %v1414 = vunpack.c.h.b16 %v973
    %v1415 = vunpack.c.l.b16 %v974
    %v1416 = vunpack.c.h.b16 %v974
    %v1417 = vunpack.c.l.b16 %v975
    %v1418 = vunpack.c.h.b16 %v975
    %v1419 = vunpack.c.l.b16 %v976
    %v1420 = vunpack.c.h.b16 %v976
    %v1421 = vunpack.c.l.b16 %v977
    %v1422 = vunpack.c.h.b16 %v977
    %v1423 = vunpack.c.l.b16 %v978
    %v1424 = vunpack.c.h.b16 %v978
    %v1425 = vunpack.c.l.b16 %v979
    %v1426 = vunpack.c.h.b16 %v979
    %v1427 = vunpack.c.l.b16 %v980
    %v1428 = vunpack.c.h.b16 %v980
    %v1429 = vunpack.c.l.b16 %v981
    %v1430 = vunpack.c.h.b16 %v981
    %v1431 = vunpack.c.l.b16 %v982
    %v1432 = vunpack.c.h.b16 %v982
    %v1433 = vunpack.c.l.b16 %v983
    %v1434 = vunpack.c.h.b16 %v983
    %v1435 = vunpack.c.l.b16 %v984
    %v1436 = vunpack.c.h.b16 %v984
    %v1437 = vunpack.c.l.b16 %v985
    %v1438 = vunpack.c.h.b16 %v985
    %v1439 = vunpack.c.l.b16 %v986
    %v1440 = vunpack.c.h.b16 %v986
    %v1441 = vunpack.c.l.b16 %v987
    %v1442 = vunpack.c.h.b16 %v987
    %v1443 = vunpack.c.l.b16 %v988
    %v1444 = vunpack.c.h.b16 %v988
    %v1445 = vunpack.c.l.b16 %v989
    %v1446 = vunpack.c.h.b16 %v989
    %v1447 = vunpack.c.l.b16 %v990
    %v1448 = vunpack.c.h.b16 %v990
    %v1449 = vunpack.c.l.b16 %v991
    %v1450 = vunpack.c.h.b16 %v991
    %v1451 = vunpack.c.l.b16 %v992
    %v1452 = vunpack.c.h.b16 %v992
    %v1453 = vunpack.c.l.b16 %v993
    %v1454 = vunpack.c.h.b16 %v993
    %v1455 = vunpack.c.l.b16 %v994
    %v1456 = vunpack.c.h.b16 %v994
    %v1457 = vunpack.c.l.b16 %v995
    %v1458 = vunpack.c.h.b16 %v995
    %v1459 = vunpack.c.l.b16 %v996
    %v1460 = vunpack.c.h.b16 %v996
    %v1461 = vunpack.c.l.b16 %v997
    %v1462 = vunpack.c.h.b16 %v997
    %v1463 = vunpack.c.l.b16 %v998
    %v1464 = vunpack.c.h.b16 %v998
    %v1465 = vunpack.c.l.b16 %v999
    %v1466 = vunpack.c.h.b16 %v999
    %v1467 = vunpack.c.l.b16 %v1000
    %v1468 = vunpack.c.h.b16 %v1000
    %v1469 = vunpack.c.l.b16 %v1001
    %v1470 = vunpack.c.h.b16 %v1001
    %v1471 = vunpack.c.l.b16 %v1002
    %v1472 = vunpack.c.h.b16 %v1002
    %v1473 = vunpack.c.l.b16 %v1003
    %v1474 = vunpack.c.h.b16 %v1003
    %v1475 = vunpack.c.l.b16 %v1004
    %v1476 = vunpack.c.h.b16 %v1004
    %v1477 = vunpack.c.l.b16 %v1005
    %v1478 = vunpack.c.h.b16 %v1005
    %v1479 = vunpack.c.l.b16 %v1006
    %v1480 = vunpack.c.h.b16 %v1006
    %v1481 = vunpack.c.l.b16 %v1007
    %v1482 = vunpack.c.h.b16 %v1007
    %v1483 = vunpack.c.l.b16 %v1008
    %v1484 = vunpack.c.h.b16 %v1008
    %v1485 = vunpack.c.l.b16 %v1009
    %v1486 = vunpack.c.h.b16 %v1009
    %v1487 = vunpack.c.l.b16 %v1010
    %v1488 = vunpack.c.h.b16 %v1010
    %v1489 = vunpack.c.l.b16 %v1011
    %v1490 = vunpack.c.h.b16 %v1011
    %v1491 = vunpack.c.l.b16 %v1012
    %v1492 = vunpack.c.h.b16 %v1012
    %v1493 = vunpack.c.l.b16 %v1013
    %v1494 = vunpack.c.h.b16 %v1013
    %v1495 = vunpack.c.l.b16 %v1014
    %v1496 = vunpack.c.h.b16 %v1014
    %v1497 = vunpack.c.l.b16 %v1015
    %v1498 = vunpack.c.h.b16 %v1015
    %v1499 = vunpack.c.l.b16 %v1016
    %v1500 = vunpack.c.h.b16 %v1016
    %v1501 = vunpack.c.l.b16 %v1017
    %v1502 = vunpack.c.h.b16 %v1017
    %v1503 = vunpack.c.l.b16 %v1018
    %v1504 = vunpack.c.h.b16 %v1018
    %v1505 = vunpack.c.l.b16 %v1019
    %v1506 = vunpack.c.h.b16 %v1019
    %v1507 = vunpack.c.l.b16 %v1020
    %v1508 = vunpack.c.h.b16 %v1020
    %v1509 = vunpack.c.l.b16 %v1021
    %v1510 = vunpack.c.h.b16 %v1021
    %v1511 = vunpack.c.l.b16 %v1022
    %v1512 = vunpack.c.h.b16 %v1022
    %v1513 = vunpack.c.l.b16 %v1023
    %v1514 = vunpack.c.h.b16 %v1023
    %v1515 = vunpack.c.l.b16 %v1024
    %v1516 = vunpack.c.h.b16 %v1024
    %v1517 = vunpack.c.l.b16 %v1025
    %v1518 = vunpack.c.h.b16 %v1025
    %v1519 = vunpack.c.l.b16 %v1026
    %v1520 = vunpack.c.h.b16 %v1026
    %v1521 = vunpack.c.l.b16 %v1027
    %v1522 = vunpack.c.h.b16 %v1027
    %v1523 = vunpack.c.l.b16 %v1028
    %v1524 = vunpack.c.h.b16 %v1028
    %v1525 = vunpack.c.l.b16 %v1029
    %v1526 = vunpack.c.h.b16 %v1029
    %v1527 = vunpack.c.l.b16 %v1030
    %v1528 = vunpack.c.h.b16 %v1030
    %v1529 = vunpack.c.l.b16 %v1031
    %v1530 = vunpack.c.h.b16 %v1031
    %v1531 = vunpack.c.l.b16 %v1032
    %v1532 = vunpack.c.h.b16 %v1032
    %v1533 = vunpack.c.l.b16 %v1033
    %v1534 = vunpack.c.h.b16 %v1033
    %v1535 = vunpack.c.l.b16 %v1034
    %v1536 = vunpack.c.h.b16 %v1034
    %v1537 = vunpack.c.l.b16 %v1035
    %v1538 = vunpack.c.h.b16 %v1035
    %v1539 = vunpack.c.l.b16 %v1036
    %v1540 = vunpack.c.h.b16 %v1036
    %v1541 = vunpack.c.l.b16 %v1037
    %v1542 = vunpack.c.h.b16 %v1037
    %v1543 = vunpack.c.l.b16 %v1038
    %v1544 = vunpack.c.h.b16 %v1038
    %v1545 = vunpack.c.l.b16 %v1039
    %v1546 = vunpack.c.h.b16 %v1039
    %v1547 = vunpack.c.l.b16 %v1040
    %v1548 = vunpack.c.h.b16 %v1040
    %v1549 = vunpack.c.l.b16 %v1041
    %v1550 = vunpack.c.h.b16 %v1041
    %v1551 = vunpack.c.l.b16 %v1042
    %v1552 = vunpack.c.h.b16 %v1042
    %v1553 = vunpack.c.l.b16 %v1043
    %v1554 = vunpack.c.h.b16 %v1043
    %v1555 = vunpack.c.l.b16 %v1044
    %v1556 = vunpack.c.h.b16 %v1044
    %v1557 = vunpack.c.l.b16 %v1045
    %v1558 = vunpack.c.h.b16 %v1045
    %v1559 = vunpack.c.l.b16 %v1046
    %v1560 = vunpack.c.h.b16 %v1046
    %v1561 = vunpack.c.l.b16 %v1047
    %v1562 = vunpack.c.h.b16 %v1047
    %v1563 = vunpack.c.l.b16 %v1048
    %v1564 = vunpack.c.h.b16 %v1048
    %v1565 = vunpack.c.l.b16 %v1049
    %v1566 = vunpack.c.h.b16 %v1049
    %v1567 = vunpack.c.l.b16 %v1050
    %v1568 = vunpack.c.h.b16 %v1050
    %v1569 = vunpack.c.l.b16 %v1051
    %v1570 = vunpack.c.h.b16 %v1051
    %v1571 = vunpack.c.l.b16 %v1052
    %v1572 = vunpack.c.h.b16 %v1052
    %v1573 = vunpack.c.l.b16 %v1053
    %v1574 = vunpack.c.h.b16 %v1053
    %v1575 = vunpack.c.l.b16 %v1054
    %v1576 = vunpack.c.h.b16 %v1054
    %v1577 = vunpack.c.l.b16 %v1055
    %v1578 = vunpack.c.h.b16 %v1055
    %v1579 = vunpack.c.l.b16 %v1056
    %v1580 = vunpack.c.h.b16 %v1056
    %v1581 = vunpack.c.l.b16 %v1057
    %v1582 = vunpack.c.h.b16 %v1057
    %v1583 = vunpack.c.l.b16 %v1058
    %v1584 = vunpack.c.h.b16 %v1058
    %v1585 = vunpack.c.l.b16 %v1059
    %v1586 = vunpack.c.h.b16 %v1059
    %v1587 = vunpack.c.l.b16 %v1060
    %v1588 = vunpack.c.h.b16 %v1060
    %v1589 = vunpack.c.l.b16 %v1061
    %v1590 = vunpack.c.h.b16 %v1061
    %v1591 = vunpack.c.l.b16 %v1062
    %v1592 = vunpack.c.h.b16 %v1062
    %v1593 = vunpack.c.l.b16 %v1063
    %v1594 = vunpack.c.h.b16 %v1063
    %v1595 = vunpack.c.l.b16 %v1064
    %v1596 = vunpack.c.h.b16 %v1064
    %v1597 = vunpack.c.l.b16 %v1065
    %v1598 = vunpack.c.h.b16 %v1065
    %v1599 = vunpack.c.l.b16 %v1066
    %v1600 = vunpack.c.h.b16 %v1066
    %v1601 = vunpack.c.l.b16 %v1067
    %v1602 = vunpack.c.h.b16 %v1067
    %v1603 = vunpack.c.l.b16 %v1068
    %v1604 = vunpack.c.h.b16 %v1068
    %v1605 = vunpack.c.l.b16 %v1069
    %v1606 = vunpack.c.h.b16 %v1069
    %v1607 = vunpack.c.l.b16 %v1070
    %v1608 = vunpack.c.h.b16 %v1070
    %v1609 = vunpack.c.l.b16 %v1071
    %v1610 = vunpack.c.h.b16 %v1071
    %v1611 = vunpack.c.l.b16 %v1072
    %v1612 = vunpack.c.h.b16 %v1072
    %v1613 = vunpack.c.l.b16 %v1073
    %v1614 = vunpack.c.h.b16 %v1073
    %v1615 = vunpack.c.l.b16 %v1074
    %v1616 = vunpack.c.h.b16 %v1074
    %v1617 = vunpack.c.l.b16 %v1075
    %v1618 = vunpack.c.h.b16 %v1075
    %v1619 = vunpack.c.l.b16 %v1076
    %v1620 = vunpack.c.h.b16 %v1076
    %v1621 = vunpack.c.l.b16 %v1077
    %v1622 = vunpack.c.h.b16 %v1077
    %v1623 = vunpack.c.l.b16 %v1078
    %v1624 = vunpack.c.h.b16 %v1078
    %v1625 = vunpack.c.l.b16 %v1079
    %v1626 = vunpack.c.h.b16 %v1079
    %v1627 = vunpack.c.l.b16 %v1080
    %v1628 = vunpack.c.h.b16 %v1080
    %v1629 = vunpack.c.l.b16 %v1081
    %v1630 = vunpack.c.h.b16 %v1081
    %v1631 = vunpack.c.l.b16 %v1082
    %v1632 = vunpack.c.h.b16 %v1082
    %v1633 = vunpack.c.l.b16 %v1083
    %v1634 = vunpack.c.h.b16 %v1083
    %v1635 = vunpack.c.l.b16 %v1084
    %v1636 = vunpack.c.h.b16 %v1084
    %v1637 = vunpack.c.l.b16 %v1085
    %v1638 = vunpack.c.h.b16 %v1085
    %v1639 = vunpack.c.l.b16 %v1086
    %v1640 = vunpack.c.h.b16 %v1086
    %v1641 = vunpack.c.l.b16 %v1087
    %v1642 = vunpack.c.h.b16 %v1087
    %v1643 = vunpack.c.l.b16 %v1088
    %v1644 = vunpack.c.h.b16 %v1088
    %v1645 = vunpack.c.l.b16 %v1089
    %v1646 = vunpack.c.h.b16 %v1089
    %v1647 = vunpack.c.l.b16 %v1090
    %v1648 = vunpack.c.h.b16 %v1090
    %v1649 = vunpack.c.l.b16 %v1091
    %v1650 = vunpack.c.h.b16 %v1091
    %v1651 = vunpack.c.l.b16 %v1092
    %v1652 = vunpack.c.h.b16 %v1092
    %v1653 = vunpack.c.l.b16 %v1093
    %v1654 = vunpack.c.h.b16 %v1093
    %v1655 = vunpack.c.l.b16 %v1094
    %v1656 = vunpack.c.h.b16 %v1094
    %v1657 = vunpack.c.l.b16 %v1095
    %v1658 = vunpack.c.h.b16 %v1095
    %v1659 = vunpack.c.l.b16 %v1096
    %v1660 = vunpack.c.h.b16 %v1096
    %v1661 = vunpack.c.l.b16 %v1097
    %v1662 = vunpack.c.h.b16 %v1097
    %v1663 = vunpack.c.l.b16 %v1098
    %v1664 = vunpack.c.h.b16 %v1098
    %v1665 = vunpack.c.l.b16 %v1099
    %v1666 = vunpack.c.h.b16 %v1099
    %v1667 = vunpack.c.l.b16 %v1100
    %v1668 = vunpack.c.h.b16 %v1100
    %v1669 = vunpack.c.l.b16 %v1101
    %v1670 = vunpack.c.h.b16 %v1101
    %v1671 = vunpack.c.l.b16 %v1102
    %v1672 = vunpack.c.h.b16 %v1102
    %v1673 = vunpack.c.l.b16 %v1103
    %v1674 = vunpack.c.h.b16 %v1103
    %v1675 = vunpack.c.l.b16 %v1104
    %v1676 = vunpack.c.h.b16 %v1104
    %v1677 = vunpack.c.l.b16 %v1105
    %v1678 = vunpack.c.h.b16 %v1105
    %v1679 = vunpack.c.l.b16 %v1106
    %v1680 = vunpack.c.h.b16 %v1106
    %v1681 = vunpack.c.l.b16 %v1107
    %v1682 = vunpack.c.h.b16 %v1107
    %v1683 = vunpack.c.l.b16 %v1108
    %v1684 = vunpack.c.h.b16 %v1108
    %v1685 = vpack.c.b16 %v1305, %v1301
    %v1686 = vpack.c.b16 %v1306, %v1302
    %v1687 = vpack.c.b16 %v1307, %v1303
    %v1688 = vpack.c.b16 %v1308, %v1304
    %v1689 = vpack.c.b16 %v1313, %v1309
    %v1690 = vpack.c.b16 %v1314, %v1310
    %v1691 = vpack.c.b16 %v1315, %v1311
    %v1692 = vpack.c.b16 %v1316, %v1312
    %v1693 = vpack.c.b16 %v1321, %v1317
    %v1694 = vpack.c.b16 %v1322, %v1318
    %v1695 = vpack.c.b16 %v1323, %v1319
    %v1696 = vpack.c.b16 %v1324, %v1320
    %v1697 = vpack.c.b16 %v1329, %v1325
    %v1698 = vpack.c.b16 %v1330, %v1326
    %v1699 = vpack.c.b16 %v1331, %v1327
    %v1700 = vpack.c.b16 %v1332, %v1328
    %v1701 = vpack.c.b16 %v1337, %v1333
    %v1702 = vpack.c.b16 %v1338, %v1334
    %v1703 = vpack.c.b16 %v1339, %v1335
    %v1704 = vpack.c.b16 %v1340, %v1336
    %v1705 = vpack.c.b16 %v1345, %v1341
    %v1706 = vpack.c.b16 %v1346, %v1342
    %v1707 = vpack.c.b16 %v1347, %v1343
    %v1708 = vpack.c.b16 %v1348, %v1344
    %v1709 = vpack.c.b16 %v1353, %v1349
    %v1710 = vpack.c.b16 %v1354, %v1350
    %v1711 = vpack.c.b16 %v1355, %v1351
    %v1712 = vpack.c.b16 %v1356, %v1352
    %v1713 = vpack.c.b16 %v1361, %v1357
    %v1714 = vpack.c.b16 %v1362, %v1358
    %v1715 = vpack.c.b16 %v1363, %v1359
    %v1716 = vpack.c.b16 %v1364, %v1360
    %v1717 = vpack.c.b16 %v1369, %v1365
    %v1718 = vpack.c.b16 %v1370, %v1366
    %v1719 = vpack.c.b16 %v1371, %v1367
    %v1720 = vpack.c.b16 %v1372, %v1368
    %v1721 = vpack.c.b16 %v1377, %v1373
    %v1722 = vpack.c.b16 %v1378, %v1374
    %v1723 = vpack.c.b16 %v1379, %v1375
    %v1724 = vpack.c.b16 %v1380, %v1376
    %v1725 = vpack.c.b16 %v1385, %v1381
    %v1726 = vpack.c.b16 %v1386, %v1382
    %v1727 = vpack.c.b16 %v1387, %v1383
    %v1728 = vpack.c.b16 %v1388, %v1384
    %v1729 = vpack.c.b16 %v1393, %v1389
    %v1730 = vpack.c.b16 %v1394, %v1390
    %v1731 = vpack.c.b16 %v1395, %v1391
    %v1732 = vpack.c.b16 %v1396, %v1392
    %v1733 = vpack.c.b16 %v1401, %v1397
    %v1734 = vpack.c.b16 %v1402, %v1398
    %v1735 = vpack.c.b16 %v1403, %v1399
    %v1736 = vpack.c.b16 %v1404, %v1400
    %v1737 = vpack.c.b16 %v1409, %v1405
    %v1738 = vpack.c.b16 %v1410, %v1406
    %v1739 = vpack.c.b16 %v1411, %v1407
    %v1740 = vpack.c.b16 %v1412, %v1408
    %v1741 = vpack.c.b16 %v1417, %v1413
    %v1742 = vpack.c.b16 %v1418, %v1414
    %v1743 = vpack.c.b16 %v1419, %v1415
    %v1744 = vpack.c.b16 %v1420, %v1416
    %v1745 = vpack.c.b16 %v1425, %v1421
    %v1746 = vpack.c.b16 %v1426, %v1422
    %v1747 = vpack.c.b16 %v1427, %v1423
    %v1748 = vpack.c.b16 %v1428, %v1424
    %v1749 = vpack.c.b16 %v1433, %v1429
    %v1750 = vpack.c.b16 %v1434, %v1430
    %v1751 = vpack.c.b16 %v1435, %v1431
    %v1752 = vpack.c.b16 %v1436, %v1432
    %v1753 = vpack.c.b16 %v1441, %v1437
    %v1754 = vpack.c.b16 %v1442, %v1438
    %v1755 = vpack.c.b16 %v1443, %v1439
    %v1756 = vpack.c.b16 %v1444, %v1440
    %v1757 = vpack.c.b16 %v1449, %v1445
    %v1758 = vpack.c.b16 %v1450, %v1446
    %v1759 = vpack.c.b16 %v1451, %v1447
    %v1760 = vpack.c.b16 %v1452, %v1448
    %v1761 = vpack.c.b16 %v1457, %v1453
    %v1762 = vpack.c.b16 %v1458, %v1454
    %v1763 = vpack.c.b16 %v1459, %v1455
    %v1764 = vpack.c.b16 %v1460, %v1456
    %v1765 = vpack.c.b16 %v1465, %v1461
    %v1766 = vpack.c.b16 %v1466, %v1462
    %v1767 = vpack.c.b16 %v1467, %v1463
    %v1768 = vpack.c.b16 %v1468, %v1464
    %v1769 = vpack.c.b16 %v1473, %v1469
    %v1770 = vpack.c.b16 %v1474, %v1470
    %v1771 = vpack.c.b16 %v1475, %v1471
    %v1772 = vpack.c.b16 %v1476, %v1472
    %v1773 = vpack.c.b16 %v1481, %v1477
    %v1774 = vpack.c.b16 %v1482, %v1478
    %v1775 = vpack.c.b16 %v1483, %v1479
    %v1776 = vpack.c.b16 %v1484, %v1480
    %v1777 = vpack.c.b16 %v1489, %v1485
    %v1778 = vpack.c.b16 %v1490, %v1486
    %v1779 = vpack.c.b16 %v1491, %v1487
    %v1780 = vpack.c.b16 %v1492, %v1488
    %v1781 = vpack.c.b16 %v1497, %v1493
    %v1782 = vpack.c.b16 %v1498, %v1494
    %v1783 = vpack.c.b16 %v1499, %v1495
    %v1784 = vpack.c.b16 %v1500, %v1496
    %v1785 = vpack.c.b16 %v1505, %v1501
    %v1786 = vpack.c.b16 %v1506, %v1502
    %v1787 = vpack.c.b16 %v1507, %v1503
    %v1788 = vpack.c.b16 %v1508, %v1504
    %v1789 = vpack.c.b16 %v1513, %v1509
    %v1790 = vpack.c.b16 %v1514, %v1510
    %v1791 = vpack.c.b16 %v1515, %v1511
    %v1792 = vpack.c.b16 %v1516, %v1512
    %v1793 = vpack.c.b16 %v1521, %v1517
    %v1794 = vpack.c.b16 %v1522, %v1518
    %v1795 = vpack.c.b16 %v1523, %v1519
    %v1796 = vpack.c.b16 %v1524, %v1520
    %v1797 = vpack.c.b16 %v1529, %v1525
    %v1798 = vpack.c.b16 %v1530, %v1526
    %v1799 = vpack.c.b16 %v1531, %v1527
    %v1800 = vpack.c.b16 %v1532, %v1528
    %v1801 = vpack.c.b16 %v1537, %v1533
    %v1802 = vpack.c.b16 %v1538, %v1534
    %v1803 = vpack.c.b16 %v1539, %v1535
    %v1804 = vpack.c.b16 %v1540, %v1536
    %v1805 = vpack.c.b16 %v1545, %v1541
    %v1806 = vpack.c.b16 %v1546, %v1542
    %v1807 = vpack.c.b16 %v1547, %v1543
    %v1808 = vpack.c.b16 %v1548, %v1544
    %v1809 = vpack.c.b16 %v1553, %v1549
    %v1810 = vpack.c.b16 %v1554, %v1550
    %v1811 = vpack.c.b16 %v1555, %v1551
    %v1812 = vpack.c.b16 %v1556, %v1552
    %v1813 = vpack.c.b16 %v1561, %v1557
    %v1814 = vpack.c.b16 %v1562, %v1558
    %v1815 = vpack.c.b16 %v1563, %v1559
    %v1816 = vpack.c.b16 %v1564, %v1560
    %v1817 = vpack.c.b16 %v1569, %v1565
    %v1818 = vpack.c.b16 %v1570, %v1566
    %v1819 = vpack.c.b16 %v1571, %v1567
    %v1820 = vpack.c.b16 %v1572, %v1568
    %v1821 = vpack.c.b16 %v1577, %v1573
    %v1822 = vpack.c.b16 %v1578, %v1574
    %v1823 = vpack.c.b16 %v1579, %v1575
    %v1824 = vpack.c.b16 %v1580, %v1576
    %v1825 = vpack.c.b16 %v1585, %v1581
    %v1826 = vpack.c.b16 %v1586, %v1582
    %v1827 = vpack.c.b16 %v1587, %v1583
    %v1828 = vpack.c.b16 %v1588, %v1584
    %v1829 = vpack.c.b16 %v1593, %v1589
    %v1830 = vpack.c.b16 %v1594, %v1590
    %v1831 = vpack.c.b16 %v1595, %v1591
    %v1832 = vpack.c.b16 %v1596, %v1592
    %v1833 = vpack.c.b16 %v1601, %v1597
    %v1834 = vpack.c.b16 %v1602, %v1598
    %v1835 = vpack.c.b16 %v1603, %v1599
    %v1836 = vpack.c.b16 %v1604, %v1600
    %v1837 = vpack.c.b16 %v1609, %v1605
    %v1838 = vpack.c.b16 %v1610, %v1606
    %v1839 = vpack.c.b16 %v1611, %v1607
    %v1840 = vpack.c.b16 %v1612, %v1608
    %v1841 = vpack.c.b16 %v1617, %v1613
    %v1842 = vpack.c.b16 %v1618, %v1614
    %v1843 = vpack.c.b16 %v1619, %v1615
    %v1844 = vpack.c.b16 %v1620, %v1616
    %v1845 = vpack.c.b16 %v1625, %v1621
    %v1846 = vpack.c.b16 %v1626, %v1622
    %v1847 = vpack.c.b16 %v1627, %v1623
    %v1848 = vpack.c.b16 %v1628, %v1624
    %v1849 = vpack.c.b16 %v1633, %v1629
    %v1850 = vpack.c.b16 %v1634, %v1630
    %v1851 = vpack.c.b16 %v1635, %v1631
    %v1852 = vpack.c.b16 %v1636, %v1632
    %v1853 = vpack.c.b16 %v1641, %v1637
    %v1854 = vpack.c.b16 %v1642, %v1638
    %v1855 = vpack.c.b16 %v1643, %v1639
    %v1856 = vpack.c.b16 %v1644, %v1640
    %v1857 = vpack.c.b16 %v1649, %v1645
    %v1858 = vpack.c.b16 %v1650, %v1646
    %v1859 = vpack.c.b16 %v1651, %v1647
    %v1860 = vpack.c.b16 %v1652, %v1648
    %v1861 = vpack.c.b16 %v1657, %v1653
    %v1862 = vpack.c.b16 %v1658, %v1654
    %v1863 = vpack.c.b16 %v1659, %v1655
    %v1864 = vpack.c.b16 %v1660, %v1656
    %v1865 = vpack.c.b16 %v1665, %v1661
    %v1866 = vpack.c.b16 %v1666, %v1662
    %v1867 = vpack.c.b16 %v1667, %v1663
    %v1868 = vpack.c.b16 %v1668, %v1664
    %v1869 = vpack.c.b16 %v1673, %v1669
    %v1870 = vpack.c.b16 %v1674, %v1670
    %v1871 = vpack.c.b16 %v1675, %v1671
    %v1872 = vpack.c.b16 %v1676, %v1672
    %v1873 = vpack.c.b16 %v1681, %v1677
    %v1874 = vpack.c.b16 %v1682, %v1678
    %v1875 = vpack.c.b16 %v1683, %v1679
    %v1876 = vpack.c.b16 %v1684, %v1680
    %2069 = vmatprep.subr.bf16.mxu0 %v1714
    %2070 = vmatpush1.bf16.msra.mxu0 %v1713
    %2071 = vmatprep.subr.bf16.mxu0 %v1710
    %2072 = vmatpush1.bf16.msra.mxu0 %v1709
    %2073 = vmatprep.subr.bf16.mxu0 %v1706
    %2074 = vmatpush1.bf16.msra.mxu0 %v1705
    %2075 = vmatprep.subr.bf16.mxu0 %v1702
    %2076 = vmatpush1.bf16.msra.mxu0 %v1701
    %2077 = vmatprep.subr.bf16.mxu0 %v1698
    %2078 = vmatpush1.bf16.msra.mxu0 %v1697
    %2079 = vmatprep.subr.bf16.mxu0 %v1694
    %2080 = vmatpush1.bf16.msra.mxu0 %v1693
    %2081 = vmatprep.subr.bf16.mxu0 %v1690
    %2082 = vmatpush1.bf16.msra.mxu0 %v1689
    %2083 = vmatprep.subr.bf16.mxu0 %v1686
    %2084 = vmatpush1.bf16.msra.mxu0 %v1685
    %2085 = vmatprep.subr.bf16.mxu0 %v1746
    %2086 = vmatpush2.bf16.msra.mxu0 %v1745
    %2087 = vmatprep.subr.bf16.mxu0 %v1742
    %2088 = vmatpush2.bf16.msra.mxu0 %v1741
    %2089 = vmatprep.subr.bf16.mxu0 %v1738
    %2090 = vmatpush2.bf16.msra.mxu0 %v1737
    %2091 = vmatprep.subr.bf16.mxu0 %v1734
    %2092 = vmatpush2.bf16.msra.mxu0 %v1733
    %2093 = vmatprep.subr.bf16.mxu0 %v1730
    %2094 = vmatpush2.bf16.msra.mxu0 %v1729
    %2095 = vmatprep.subr.bf16.mxu0 %v1726
    %2096 = vmatpush2.bf16.msra.mxu0 %v1725
    %2097 = vmatprep.subr.bf16.mxu0 %v1722
    %2098 = vmatpush2.bf16.msra.mxu0 %v1721
    %2099 = vmatprep.subr.bf16.mxu0 %v1718
    %2100 = vmatpush2.bf16.msra.mxu0 %v1717
    %2101 = vmatprep.mubr.bf16.mxu0 %v912
    %2102 = vmatmul.mubr.bf16.gmra.mxu0 %v911
    %v2103 = vpop.f32.mrf.mxu0
    %v2104 = vadd.f32 0.0, %v2103
    %v2105 = vpop.f32.mrf.mxu0
    %v2106 = vadd.f32 0.0, %v2105
    %v2107 = vpop.f32.mrf.mxu0
    %v2108 = vpop.f32.mrf.mxu0
    %2109 = vdwg.mxu0
    %2110 = vmatprep.subr.bf16.mxu0 %v1778
    %2111 = vmatpush1.bf16.msra.mxu0 %v1777
    %2112 = vmatprep.subr.bf16.mxu0 %v1774
    %2113 = vmatpush1.bf16.msra.mxu0 %v1773
    %2114 = vmatprep.subr.bf16.mxu0 %v1770
    %2115 = vmatpush1.bf16.msra.mxu0 %v1769
    %2116 = vmatprep.subr.bf16.mxu0 %v1766
    %2117 = vmatpush1.bf16.msra.mxu0 %v1765
    %2118 = vmatprep.subr.bf16.mxu0 %v1762
    %2119 = vmatpush1.bf16.msra.mxu0 %v1761
    %2120 = vmatprep.subr.bf16.mxu0 %v1758
    %2121 = vmatpush1.bf16.msra.mxu0 %v1757
    %2122 = vmatprep.subr.bf16.mxu0 %v1754
    %2123 = vmatpush1.bf16.msra.mxu0 %v1753
    %2124 = vmatprep.subr.bf16.mxu0 %v1750
    %2125 = vmatpush1.bf16.msra.mxu0 %v1749
    %2126 = vmatprep.subr.bf16.mxu0 %v1810
    %2127 = vmatpush2.bf16.msra.mxu0 %v1809
    %2128 = vmatprep.subr.bf16.mxu0 %v1806
    %2129 = vmatpush2.bf16.msra.mxu0 %v1805
    %2130 = vmatprep.subr.bf16.mxu0 %v1802
    %2131 = vmatpush2.bf16.msra.mxu0 %v1801
    %2132 = vmatprep.subr.bf16.mxu0 %v1798
    %2133 = vmatpush2.bf16.msra.mxu0 %v1797
    %2134 = vmatprep.subr.bf16.mxu0 %v1794
    %2135 = vmatpush2.bf16.msra.mxu0 %v1793
    %2136 = vmatprep.subr.bf16.mxu0 %v1790
    %2137 = vmatpush2.bf16.msra.mxu0 %v1789
    %2138 = vmatprep.subr.bf16.mxu0 %v1786
    %2139 = vmatpush2.bf16.msra.mxu0 %v1785
    %2140 = vmatprep.subr.bf16.mxu0 %v1782
    %2141 = vmatpush2.bf16.msra.mxu0 %v1781
    %2142 = vmatprep.mubr.bf16.mxu0 %v914
    %2143 = vmatmul.mubr.bf16.gmra.mxu0 %v913
    %v2144 = vpop.f32.mrf.mxu0
    %v2145 = vadd.f32 %v2104, %v2144
    %v2146 = vpop.f32.mrf.mxu0
    %v2147 = vadd.f32 %v2106, %v2146
    %v2148 = vpop.f32.mrf.mxu0
    %v2149 = vpop.f32.mrf.mxu0
    %2150 = vdwg.mxu0
    %2151 = vmatprep.subr.bf16.mxu0 %v1842
    %2152 = vmatpush1.bf16.msra.mxu0 %v1841
    %2153 = vmatprep.subr.bf16.mxu0 %v1838
    %2154 = vmatpush1.bf16.msra.mxu0 %v1837
    %2155 = vmatprep.subr.bf16.mxu0 %v1834
    %2156 = vmatpush1.bf16.msra.mxu0 %v1833
    %2157 = vmatprep.subr.bf16.mxu0 %v1830
    %2158 = vmatpush1.bf16.msra.mxu0 %v1829
    %2159 = vmatprep.subr.bf16.mxu0 %v1826
    %2160 = vmatpush1.bf16.msra.mxu0 %v1825
    %2161 = vmatprep.subr.bf16.mxu0 %v1822
    %2162 = vmatpush1.bf16.msra.mxu0 %v1821
    %2163 = vmatprep.subr.bf16.mxu0 %v1818
    %2164 = vmatpush1.bf16.msra.mxu0 %v1817
    %2165 = vmatprep.subr.bf16.mxu0 %v1814
    %2166 = vmatpush1.bf16.msra.mxu0 %v1813
    %2167 = vmatprep.subr.bf16.mxu0 %v1874
    %2168 = vmatpush2.bf16.msra.mxu0 %v1873
    %2169 = vmatprep.subr.bf16.mxu0 %v1870
    %2170 = vmatpush2.bf16.msra.mxu0 %v1869
    %2171 = vmatprep.subr.bf16.mxu0 %v1866
    %2172 = vmatpush2.bf16.msra.mxu0 %v1865
    %2173 = vmatprep.subr.bf16.mxu0 %v1862
    %2174 = vmatpush2.bf16.msra.mxu0 %v1861
    %2175 = vmatprep.subr.bf16.mxu0 %v1858
    %2176 = vmatpush2.bf16.msra.mxu0 %v1857
    %2177 = vmatprep.subr.bf16.mxu0 %v1854
    %2178 = vmatpush2.bf16.msra.mxu0 %v1853
    %2179 = vmatprep.subr.bf16.mxu0 %v1850
    %2180 = vmatpush2.bf16.msra.mxu0 %v1849
    %2181 = vmatprep.subr.bf16.mxu0 %v1846
    %2182 = vmatpush2.bf16.msra.mxu0 %v1845
    %2183 = vmatprep.mubr.bf16.mxu0 %v916
    %2184 = vmatmul.mubr.bf16.gmra.mxu0 %v915
    %v2185 = vpop.f32.mrf.mxu0
    %v2186 = vadd.f32 %v2145, %v2185
    %v2187 = vpop.f32.mrf.mxu0
    %v2188 = vadd.f32 %v2147, %v2187
    %v2189 = vpop.f32.mrf.mxu0
    %v2190 = vpop.f32.mrf.mxu0
    %2191 = vdwg.mxu0
    %2192 = vmatprep.subr.bf16.mxu0 %v1716
    %2193 = vmatpush1.bf16.msra.mxu0 %v1715
    %2194 = vmatprep.subr.bf16.mxu0 %v1712
    %2195 = vmatpush1.bf16.msra.mxu0 %v1711
    %2196 = vmatprep.subr.bf16.mxu0 %v1708
    %2197 = vmatpush1.bf16.msra.mxu0 %v1707
    %2198 = vmatprep.subr.bf16.mxu0 %v1704
    %2199 = vmatpush1.bf16.msra.mxu0 %v1703
    %2200 = vmatprep.subr.bf16.mxu0 %v1700
    %2201 = vmatpush1.bf16.msra.mxu0 %v1699
    %2202 = vmatprep.subr.bf16.mxu0 %v1696
    %2203 = vmatpush1.bf16.msra.mxu0 %v1695
    %2204 = vmatprep.subr.bf16.mxu0 %v1692
    %2205 = vmatpush1.bf16.msra.mxu0 %v1691
    %2206 = vmatprep.subr.bf16.mxu0 %v1688
    %2207 = vmatpush1.bf16.msra.mxu0 %v1687
    %2208 = vmatprep.subr.bf16.mxu0 %v1748
    %2209 = vmatpush2.bf16.msra.mxu0 %v1747
    %2210 = vmatprep.subr.bf16.mxu0 %v1744
    %2211 = vmatpush2.bf16.msra.mxu0 %v1743
    %2212 = vmatprep.subr.bf16.mxu0 %v1740
    %2213 = vmatpush2.bf16.msra.mxu0 %v1739
    %2214 = vmatprep.subr.bf16.mxu0 %v1736
    %2215 = vmatpush2.bf16.msra.mxu0 %v1735
    %2216 = vmatprep.subr.bf16.mxu0 %v1732
    %2217 = vmatpush2.bf16.msra.mxu0 %v1731
    %2218 = vmatprep.subr.bf16.mxu0 %v1728
    %2219 = vmatpush2.bf16.msra.mxu0 %v1727
    %2220 = vmatprep.subr.bf16.mxu0 %v1724
    %2221 = vmatpush2.bf16.msra.mxu0 %v1723
    %2222 = vmatprep.subr.bf16.mxu0 %v1720
    %2223 = vmatpush2.bf16.msra.mxu0 %v1719
    %2224 = vmatprep.mubr.bf16.mxu0 %v912
    %2225 = vmatmul.mubr.bf16.gmra.mxu0 %v911
    %v2226 = vpop.f32.mrf.mxu0
    %v2227 = vadd.f32 0.0, %v2226
    %v2228 = vpop.f32.mrf.mxu0
    %v2229 = vadd.f32 0.0, %v2228
    %v2230 = vpop.f32.mrf.mxu0
    %v2231 = vpop.f32.mrf.mxu0
    %2232 = vdwg.mxu0
    %2233 = vmatprep.subr.bf16.mxu0 %v1780
    %2234 = vmatpush1.bf16.msra.mxu0 %v1779
    %2235 = vmatprep.subr.bf16.mxu0 %v1776
    %2236 = vmatpush1.bf16.msra.mxu0 %v1775
    %2237 = vmatprep.subr.bf16.mxu0 %v1772
    %2238 = vmatpush1.bf16.msra.mxu0 %v1771
    %2239 = vmatprep.subr.bf16.mxu0 %v1768
    %2240 = vmatpush1.bf16.msra.mxu0 %v1767
    %2241 = vmatprep.subr.bf16.mxu0 %v1764
    %2242 = vmatpush1.bf16.msra.mxu0 %v1763
    %2243 = vmatprep.subr.bf16.mxu0 %v1760
    %2244 = vmatpush1.bf16.msra.mxu0 %v1759
    %2245 = vmatprep.subr.bf16.mxu0 %v1756
    %2246 = vmatpush1.bf16.msra.mxu0 %v1755
    %2247 = vmatprep.subr.bf16.mxu0 %v1752
    %2248 = vmatpush1.bf16.msra.mxu0 %v1751
    %2249 = vmatprep.subr.bf16.mxu0 %v1812
    %2250 = vmatpush2.bf16.msra.mxu0 %v1811
    %2251 = vmatprep.subr.bf16.mxu0 %v1808
    %2252 = vmatpush2.bf16.msra.mxu0 %v1807
    %2253 = vmatprep.subr.bf16.mxu0 %v1804
    %2254 = vmatpush2.bf16.msra.mxu0 %v1803
    %2255 = vmatprep.subr.bf16.mxu0 %v1800
    %2256 = vmatpush2.bf16.msra.mxu0 %v1799
    %2257 = vmatprep.subr.bf16.mxu0 %v1796
    %2258 = vmatpush2.bf16.msra.mxu0 %v1795
    %2259 = vmatprep.subr.bf16.mxu0 %v1792
    %2260 = vmatpush2.bf16.msra.mxu0 %v1791
    %2261 = vmatprep.subr.bf16.mxu0 %v1788
    %2262 = vmatpush2.bf16.msra.mxu0 %v1787
    %2263 = vmatprep.subr.bf16.mxu0 %v1784
    %2264 = vmatpush2.bf16.msra.mxu0 %v1783
    %2265 = vmatprep.mubr.bf16.mxu0 %v914
    %2266 = vmatmul.mubr.bf16.gmra.mxu0 %v913
    %v2267 = vpop.f32.mrf.mxu0
    %v2268 = vadd.f32 %v2227, %v2267
    %v2269 = vpop.f32.mrf.mxu0
    %v2270 = vadd.f32 %v2229, %v2269
    %v2271 = vpop.f32.mrf.mxu0
    %v2272 = vpop.f32.mrf.mxu0
    %2273 = vdwg.mxu0
    %2274 = vmatprep.subr.bf16.mxu0 %v1844
    %2275 = vmatpush1.bf16.msra.mxu0 %v1843
    %2276 = vmatprep.subr.bf16.mxu0 %v1840
    %2277 = vmatpush1.bf16.msra.mxu0 %v1839
    %2278 = vmatprep.subr.bf16.mxu0 %v1836
    %2279 = vmatpush1.bf16.msra.mxu0 %v1835
    %2280 = vmatprep.subr.bf16.mxu0 %v1832
    %2281 = vmatpush1.bf16.msra.mxu0 %v1831
    %2282 = vmatprep.subr.bf16.mxu0 %v1828
    %2283 = vmatpush1.bf16.msra.mxu0 %v1827
    %2284 = vmatprep.subr.bf16.mxu0 %v1824
    %2285 = vmatpush1.bf16.msra.mxu0 %v1823
    %2286 = vmatprep.subr.bf16.mxu0 %v1820
    %2287 = vmatpush1.bf16.msra.mxu0 %v1819
    %2288 = vmatprep.subr.bf16.mxu0 %v1816
    %2289 = vmatpush1.bf16.msra.mxu0 %v1815
    %2290 = vmatprep.subr.bf16.mxu0 %v1876
    %2291 = vmatpush2.bf16.msra.mxu0 %v1875
    %2292 = vmatprep.subr.bf16.mxu0 %v1872
    %2293 = vmatpush2.bf16.msra.mxu0 %v1871
    %2294 = vmatprep.subr.bf16.mxu0 %v1868
    %2295 = vmatpush2.bf16.msra.mxu0 %v1867
    %2296 = vmatprep.subr.bf16.mxu0 %v1864
    %2297 = vmatpush2.bf16.msra.mxu0 %v1863
    %2298 = vmatprep.subr.bf16.mxu0 %v1860
    %2299 = vmatpush2.bf16.msra.mxu0 %v1859
    %2300 = vmatprep.subr.bf16.mxu0 %v1856
    %2301 = vmatpush2.bf16.msra.mxu0 %v1855
    %2302 = vmatprep.subr.bf16.mxu0 %v1852
    %2303 = vmatpush2.bf16.msra.mxu0 %v1851
    %2304 = vmatprep.subr.bf16.mxu0 %v1848
    %2305 = vmatpush2.bf16.msra.mxu0 %v1847
    %2306 = vmatprep.mubr.bf16.mxu0 %v916
    %2307 = vmatmul.mubr.bf16.gmra.mxu0 %v915
    %v2308 = vpop.f32.mrf.mxu0
    %v2309 = vadd.f32 %v2268, %v2308
    %v2310 = vpop.f32.mrf.mxu0
    %v2311 = vadd.f32 %v2270, %v2310
    %v2312 = vpop.f32.mrf.mxu0
    %v2313 = vpop.f32.mrf.mxu0
    %2314 = vdwg.mxu0
    %v2315 = vld [vmem:[%s853] sm:$0xf]
    %v2316 = vld [vmem:[%s853 + $0x8] sm:$0xf]
    %v2317 = vld [vmem:[%s853] sm:$0x1e]
    %v2318 = vld [vmem:[%s853 + $0x8] sm:$0x1e]
    %v2319 = vld [vmem:[%s853] sm:$0x3c]
    %v2320 = vld [vmem:[%s853 + $0x8] sm:$0x3c]
    %v2323 = vrot.slane %v2317, 1
    %v2324 = vrot.slane %v2318, 1
    %v2329 = vrot.slane %v2319, 2
    %v2330 = vrot.slane %v2320, 2
    %v2333 = vpack.c.bf16 %v2315, %v2315
    %v2334 = vpack.c.bf16 %v2316, %v2316
    %v2335 = vpack.c.bf16 %v2323, %v2323
    %v2336 = vpack.c.bf16 %v2324, %v2324
    %v2337 = vpack.c.bf16 %v2329, %v2329
    %v2338 = vpack.c.bf16 %v2330, %v2330
    %2339 = vmatprep.subr.bf16.mxu0 %v1714
    %2340 = vmatpush1.bf16.msra.mxu0 %v1713
    %2341 = vmatprep.subr.bf16.mxu0 %v1710
    %2342 = vmatpush1.bf16.msra.mxu0 %v1709
    %2343 = vmatprep.subr.bf16.mxu0 %v1706
    %2344 = vmatpush1.bf16.msra.mxu0 %v1705
    %2345 = vmatprep.subr.bf16.mxu0 %v1702
    %2346 = vmatpush1.bf16.msra.mxu0 %v1701
    %2347 = vmatprep.subr.bf16.mxu0 %v1698
    %2348 = vmatpush1.bf16.msra.mxu0 %v1697
    %2349 = vmatprep.subr.bf16.mxu0 %v1694
    %2350 = vmatpush1.bf16.msra.mxu0 %v1693
    %2351 = vmatprep.subr.bf16.mxu0 %v1690
    %2352 = vmatpush1.bf16.msra.mxu0 %v1689
    %2353 = vmatprep.subr.bf16.mxu0 %v1686
    %2354 = vmatpush1.bf16.msra.mxu0 %v1685
    %2355 = vmatprep.subr.bf16.mxu0 %v1746
    %2356 = vmatpush2.bf16.msra.mxu0 %v1745
    %2357 = vmatprep.subr.bf16.mxu0 %v1742
    %2358 = vmatpush2.bf16.msra.mxu0 %v1741
    %2359 = vmatprep.subr.bf16.mxu0 %v1738
    %2360 = vmatpush2.bf16.msra.mxu0 %v1737
    %2361 = vmatprep.subr.bf16.mxu0 %v1734
    %2362 = vmatpush2.bf16.msra.mxu0 %v1733
    %2363 = vmatprep.subr.bf16.mxu0 %v1730
    %2364 = vmatpush2.bf16.msra.mxu0 %v1729
    %2365 = vmatprep.subr.bf16.mxu0 %v1726
    %2366 = vmatpush2.bf16.msra.mxu0 %v1725
    %2367 = vmatprep.subr.bf16.mxu0 %v1722
    %2368 = vmatpush2.bf16.msra.mxu0 %v1721
    %2369 = vmatprep.subr.bf16.mxu0 %v1718
    %2370 = vmatpush2.bf16.msra.mxu0 %v1717
    %2371 = vmatprep.mubr.bf16.mxu0 %v2334
    %2372 = vmatmul.mubr.bf16.gmra.mxu0 %v2333
    %v2373 = vpop.f32.mrf.mxu0
    %v2374 = vadd.f32 0.0, %v2373
    %v2375 = vpop.f32.mrf.mxu0
    %v2376 = vadd.f32 0.0, %v2375
    %v2377 = vpop.f32.mrf.mxu0
    %v2378 = vpop.f32.mrf.mxu0
    %2379 = vdwg.mxu0
    %2380 = vmatprep.subr.bf16.mxu0 %v1778
    %2381 = vmatpush1.bf16.msra.mxu0 %v1777
    %2382 = vmatprep.subr.bf16.mxu0 %v1774
    %2383 = vmatpush1.bf16.msra.mxu0 %v1773
    %2384 = vmatprep.subr.bf16.mxu0 %v1770
    %2385 = vmatpush1.bf16.msra.mxu0 %v1769
    %2386 = vmatprep.subr.bf16.mxu0 %v1766
    %2387 = vmatpush1.bf16.msra.mxu0 %v1765
    %2388 = vmatprep.subr.bf16.mxu0 %v1762
    %2389 = vmatpush1.bf16.msra.mxu0 %v1761
    %2390 = vmatprep.subr.bf16.mxu0 %v1758
    %2391 = vmatpush1.bf16.msra.mxu0 %v1757
    %2392 = vmatprep.subr.bf16.mxu0 %v1754
    %2393 = vmatpush1.bf16.msra.mxu0 %v1753
    %2394 = vmatprep.subr.bf16.mxu0 %v1750
    %2395 = vmatpush1.bf16.msra.mxu0 %v1749
    %2396 = vmatprep.subr.bf16.mxu0 %v1810
    %2397 = vmatpush2.bf16.msra.mxu0 %v1809
    %2398 = vmatprep.subr.bf16.mxu0 %v1806
    %2399 = vmatpush2.bf16.msra.mxu0 %v1805
    %2400 = vmatprep.subr.bf16.mxu0 %v1802
    %2401 = vmatpush2.bf16.msra.mxu0 %v1801
    %2402 = vmatprep.subr.bf16.mxu0 %v1798
    %2403 = vmatpush2.bf16.msra.mxu0 %v1797
    %2404 = vmatprep.subr.bf16.mxu0 %v1794
    %2405 = vmatpush2.bf16.msra.mxu0 %v1793
    %2406 = vmatprep.subr.bf16.mxu0 %v1790
    %2407 = vmatpush2.bf16.msra.mxu0 %v1789
    %2408 = vmatprep.subr.bf16.mxu0 %v1786
    %2409 = vmatpush2.bf16.msra.mxu0 %v1785
    %2410 = vmatprep.subr.bf16.mxu0 %v1782
    %2411 = vmatpush2.bf16.msra.mxu0 %v1781
    %2412 = vmatprep.mubr.bf16.mxu0 %v2336
    %2413 = vmatmul.mubr.bf16.gmra.mxu0 %v2335
    %v2414 = vpop.f32.mrf.mxu0
    %v2415 = vadd.f32 %v2374, %v2414
    %v2416 = vpop.f32.mrf.mxu0
    %v2417 = vadd.f32 %v2376, %v2416
    %v2418 = vpop.f32.mrf.mxu0
    %v2419 = vpop.f32.mrf.mxu0
    %2420 = vdwg.mxu0
    %2421 = vmatprep.subr.bf16.mxu0 %v1842
    %2422 = vmatpush1.bf16.msra.mxu0 %v1841
    %2423 = vmatprep.subr.bf16.mxu0 %v1838
    %2424 = vmatpush1.bf16.msra.mxu0 %v1837
    %2425 = vmatprep.subr.bf16.mxu0 %v1834
    %2426 = vmatpush1.bf16.msra.mxu0 %v1833
    %2427 = vmatprep.subr.bf16.mxu0 %v1830
    %2428 = vmatpush1.bf16.msra.mxu0 %v1829
    %2429 = vmatprep.subr.bf16.mxu0 %v1826
    %2430 = vmatpush1.bf16.msra.mxu0 %v1825
    %2431 = vmatprep.subr.bf16.mxu0 %v1822
    %2432 = vmatpush1.bf16.msra.mxu0 %v1821
    %2433 = vmatprep.subr.bf16.mxu0 %v1818
    %2434 = vmatpush1.bf16.msra.mxu0 %v1817
    %2435 = vmatprep.subr.bf16.mxu0 %v1814
    %2436 = vmatpush1.bf16.msra.mxu0 %v1813
    %2437 = vmatprep.subr.bf16.mxu0 %v1874
    %2438 = vmatpush2.bf16.msra.mxu0 %v1873
    %2439 = vmatprep.subr.bf16.mxu0 %v1870
    %2440 = vmatpush2.bf16.msra.mxu0 %v1869
    %2441 = vmatprep.subr.bf16.mxu0 %v1866
    %2442 = vmatpush2.bf16.msra.mxu0 %v1865
    %2443 = vmatprep.subr.bf16.mxu0 %v1862
    %2444 = vmatpush2.bf16.msra.mxu0 %v1861
    %2445 = vmatprep.subr.bf16.mxu0 %v1858
    %2446 = vmatpush2.bf16.msra.mxu0 %v1857
    %2447 = vmatprep.subr.bf16.mxu0 %v1854
    %2448 = vmatpush2.bf16.msra.mxu0 %v1853
    %2449 = vmatprep.subr.bf16.mxu0 %v1850
    %2450 = vmatpush2.bf16.msra.mxu0 %v1849
    %2451 = vmatprep.subr.bf16.mxu0 %v1846
    %2452 = vmatpush2.bf16.msra.mxu0 %v1845
    %2453 = vmatprep.mubr.bf16.mxu0 %v2338
    %2454 = vmatmul.mubr.bf16.gmra.mxu0 %v2337
    %v2455 = vpop.f32.mrf.mxu0
    %v2456 = vadd.f32 %v2415, %v2455
    %v2457 = vpop.f32.mrf.mxu0
    %v2458 = vadd.f32 %v2417, %v2457
    %v2459 = vpop.f32.mrf.mxu0
    %v2460 = vpop.f32.mrf.mxu0
    %2461 = vdwg.mxu0
    %2462 = vmatprep.subr.bf16.mxu0 %v1716
    %2463 = vmatpush1.bf16.msra.mxu0 %v1715
    %2464 = vmatprep.subr.bf16.mxu0 %v1712
    %2465 = vmatpush1.bf16.msra.mxu0 %v1711
    %2466 = vmatprep.subr.bf16.mxu0 %v1708
    %2467 = vmatpush1.bf16.msra.mxu0 %v1707
    %2468 = vmatprep.subr.bf16.mxu0 %v1704
    %2469 = vmatpush1.bf16.msra.mxu0 %v1703
    %2470 = vmatprep.subr.bf16.mxu0 %v1700
    %2471 = vmatpush1.bf16.msra.mxu0 %v1699
    %2472 = vmatprep.subr.bf16.mxu0 %v1696
    %2473 = vmatpush1.bf16.msra.mxu0 %v1695
    %2474 = vmatprep.subr.bf16.mxu0 %v1692
    %2475 = vmatpush1.bf16.msra.mxu0 %v1691
    %2476 = vmatprep.subr.bf16.mxu0 %v1688
    %2477 = vmatpush1.bf16.msra.mxu0 %v1687
    %2478 = vmatprep.subr.bf16.mxu0 %v1748
    %2479 = vmatpush2.bf16.msra.mxu0 %v1747
    %2480 = vmatprep.subr.bf16.mxu0 %v1744
    %2481 = vmatpush2.bf16.msra.mxu0 %v1743
    %2482 = vmatprep.subr.bf16.mxu0 %v1740
    %2483 = vmatpush2.bf16.msra.mxu0 %v1739
    %2484 = vmatprep.subr.bf16.mxu0 %v1736
    %2485 = vmatpush2.bf16.msra.mxu0 %v1735
    %2486 = vmatprep.subr.bf16.mxu0 %v1732
    %2487 = vmatpush2.bf16.msra.mxu0 %v1731
    %2488 = vmatprep.subr.bf16.mxu0 %v1728
    %2489 = vmatpush2.bf16.msra.mxu0 %v1727
    %2490 = vmatprep.subr.bf16.mxu0 %v1724
    %2491 = vmatpush2.bf16.msra.mxu0 %v1723
    %2492 = vmatprep.subr.bf16.mxu0 %v1720
    %2493 = vmatpush2.bf16.msra.mxu0 %v1719
    %2494 = vmatprep.mubr.bf16.mxu0 %v2334
    %2495 = vmatmul.mubr.bf16.gmra.mxu0 %v2333
    %v2496 = vpop.f32.mrf.mxu0
    %v2497 = vadd.f32 0.0, %v2496
    %v2498 = vpop.f32.mrf.mxu0
    %v2499 = vadd.f32 0.0, %v2498
    %v2500 = vpop.f32.mrf.mxu0
    %v2501 = vpop.f32.mrf.mxu0
    %2502 = vdwg.mxu0
    %2503 = vmatprep.subr.bf16.mxu0 %v1780
    %2504 = vmatpush1.bf16.msra.mxu0 %v1779
    %2505 = vmatprep.subr.bf16.mxu0 %v1776
    %2506 = vmatpush1.bf16.msra.mxu0 %v1775
    %2507 = vmatprep.subr.bf16.mxu0 %v1772
    %2508 = vmatpush1.bf16.msra.mxu0 %v1771
    %2509 = vmatprep.subr.bf16.mxu0 %v1768
    %2510 = vmatpush1.bf16.msra.mxu0 %v1767
    %2511 = vmatprep.subr.bf16.mxu0 %v1764
    %2512 = vmatpush1.bf16.msra.mxu0 %v1763
    %2513 = vmatprep.subr.bf16.mxu0 %v1760
    %2514 = vmatpush1.bf16.msra.mxu0 %v1759
    %2515 = vmatprep.subr.bf16.mxu0 %v1756
    %2516 = vmatpush1.bf16.msra.mxu0 %v1755
    %2517 = vmatprep.subr.bf16.mxu0 %v1752
    %2518 = vmatpush1.bf16.msra.mxu0 %v1751
    %2519 = vmatprep.subr.bf16.mxu0 %v1812
    %2520 = vmatpush2.bf16.msra.mxu0 %v1811
    %2521 = vmatprep.subr.bf16.mxu0 %v1808
    %2522 = vmatpush2.bf16.msra.mxu0 %v1807
    %2523 = vmatprep.subr.bf16.mxu0 %v1804
    %2524 = vmatpush2.bf16.msra.mxu0 %v1803
    %2525 = vmatprep.subr.bf16.mxu0 %v1800
    %2526 = vmatpush2.bf16.msra.mxu0 %v1799
    %2527 = vmatprep.subr.bf16.mxu0 %v1796
    %2528 = vmatpush2.bf16.msra.mxu0 %v1795
    %2529 = vmatprep.subr.bf16.mxu0 %v1792
    %2530 = vmatpush2.bf16.msra.mxu0 %v1791
    %2531 = vmatprep.subr.bf16.mxu0 %v1788
    %2532 = vmatpush2.bf16.msra.mxu0 %v1787
    %2533 = vmatprep.subr.bf16.mxu0 %v1784
    %2534 = vmatpush2.bf16.msra.mxu0 %v1783
    %2535 = vmatprep.mubr.bf16.mxu0 %v2336
    %2536 = vmatmul.mubr.bf16.gmra.mxu0 %v2335
    %v2537 = vpop.f32.mrf.mxu0
    %v2538 = vadd.f32 %v2497, %v2537
    %v2539 = vpop.f32.mrf.mxu0
    %v2540 = vadd.f32 %v2499, %v2539
    %v2541 = vpop.f32.mrf.mxu0
    %v2542 = vpop.f32.mrf.mxu0
    %2543 = vdwg.mxu0
    %2544 = vmatprep.subr.bf16.mxu0 %v1844
    %2545 = vmatpush1.bf16.msra.mxu0 %v1843
    %2546 = vmatprep.subr.bf16.mxu0 %v1840
    %2547 = vmatpush1.bf16.msra.mxu0 %v1839
    %2548 = vmatprep.subr.bf16.mxu0 %v1836
    %2549 = vmatpush1.bf16.msra.mxu0 %v1835
    %2550 = vmatprep.subr.bf16.mxu0 %v1832
    %2551 = vmatpush1.bf16.msra.mxu0 %v1831
    %2552 = vmatprep.subr.bf16.mxu0 %v1828
    %2553 = vmatpush1.bf16.msra.mxu0 %v1827
    %2554 = vmatprep.subr.bf16.mxu0 %v1824
    %2555 = vmatpush1.bf16.msra.mxu0 %v1823
    %2556 = vmatprep.subr.bf16.mxu0 %v1820
    %2557 = vmatpush1.bf16.msra.mxu0 %v1819
    %2558 = vmatprep.subr.bf16.mxu0 %v1816
    %2559 = vmatpush1.bf16.msra.mxu0 %v1815
    %2560 = vmatprep.subr.bf16.mxu0 %v1876
    %2561 = vmatpush2.bf16.msra.mxu0 %v1875
    %2562 = vmatprep.subr.bf16.mxu0 %v1872
    %2563 = vmatpush2.bf16.msra.mxu0 %v1871
    %2564 = vmatprep.subr.bf16.mxu0 %v1868
    %2565 = vmatpush2.bf16.msra.mxu0 %v1867
    %2566 = vmatprep.subr.bf16.mxu0 %v1864
    %2567 = vmatpush2.bf16.msra.mxu0 %v1863
    %2568 = vmatprep.subr.bf16.mxu0 %v1860
    %2569 = vmatpush2.bf16.msra.mxu0 %v1859
    %2570 = vmatprep.subr.bf16.mxu0 %v1856
    %2571 = vmatpush2.bf16.msra.mxu0 %v1855
    %2572 = vmatprep.subr.bf16.mxu0 %v1852
    %2573 = vmatpush2.bf16.msra.mxu0 %v1851
    %2574 = vmatprep.subr.bf16.mxu0 %v1848
    %2575 = vmatpush2.bf16.msra.mxu0 %v1847
    %2576 = vmatprep.mubr.bf16.mxu0 %v2338
    %2577 = vmatmul.mubr.bf16.gmra.mxu0 %v2337
    %v2578 = vpop.f32.mrf.mxu0
    %v2579 = vadd.f32 %v2538, %v2578
    %v2580 = vpop.f32.mrf.mxu0
    %v2581 = vadd.f32 %v2540, %v2580
    %v2582 = vpop.f32.mrf.mxu0
    %v2583 = vpop.f32.mrf.mxu0
    %2584 = vdwg.mxu0
    %vm2585 = vcmask 1043456
    %v2586 = vsel %vm2585, %v2186, 0.0
    %v2587 = vrot.slane %v2586, 4
    %v2588 = vadd.f32 %v2586, %v2587
    %v2589 = vrot.slane %v2588, 2
    %v2590 = vadd.f32 %v2588, %v2589
    %v2591 = vrot.slane %v2590, 1
    %v2592 = vadd.f32 %v2590, %v2591
    %v2593 = vsel %vm2585, %v2188, 0.0
    %v2594 = vrot.slane %v2593, 4
    %v2595 = vadd.f32 %v2593, %v2594
    %v2596 = vrot.slane %v2595, 2
    %v2597 = vadd.f32 %v2595, %v2596
    %v2598 = vrot.slane %v2597, 1
    %v2599 = vadd.f32 %v2597, %v2598
    %v2600 = vsel %vm2585, %v2309, 0.0
    %v2601 = vrot.slane %v2600, 4
    %v2602 = vadd.f32 %v2600, %v2601
    %v2603 = vrot.slane %v2602, 2
    %v2604 = vadd.f32 %v2602, %v2603
    %v2605 = vrot.slane %v2604, 1
    %v2606 = vadd.f32 %v2604, %v2605
    %v2607 = vsel %vm2585, %v2311, 0.0
    %v2608 = vrot.slane %v2607, 4
    %v2609 = vadd.f32 %v2607, %v2608
    %v2610 = vrot.slane %v2609, 2
    %v2611 = vadd.f32 %v2609, %v2610
    %v2612 = vrot.slane %v2611, 1
    %v2613 = vadd.f32 %v2611, %v2612
    %v2614 = vsel %vm2585, %v2456, 0.0
    %v2615 = vrot.slane %v2614, 4
    %v2616 = vadd.f32 %v2614, %v2615
    %v2617 = vrot.slane %v2616, 2
    %v2618 = vadd.f32 %v2616, %v2617
    %v2619 = vrot.slane %v2618, 1
    %v2620 = vadd.f32 %v2618, %v2619
    %v2621 = vsel %vm2585, %v2458, 0.0
    %v2622 = vrot.slane %v2621, 4
    %v2623 = vadd.f32 %v2621, %v2622
    %v2624 = vrot.slane %v2623, 2
    %v2625 = vadd.f32 %v2623, %v2624
    %v2626 = vrot.slane %v2625, 1
    %v2627 = vadd.f32 %v2625, %v2626
    %v2628 = vsel %vm2585, %v2579, 0.0
    %v2629 = vrot.slane %v2628, 4
    %v2630 = vadd.f32 %v2628, %v2629
    %v2631 = vrot.slane %v2630, 2
    %v2632 = vadd.f32 %v2630, %v2631
    %v2633 = vrot.slane %v2632, 1
    %v2634 = vadd.f32 %v2632, %v2633
    %v2635 = vsel %vm2585, %v2581, 0.0
    %v2636 = vrot.slane %v2635, 4
    %v2637 = vadd.f32 %v2635, %v2636
    %v2638 = vrot.slane %v2637, 2
    %v2639 = vadd.f32 %v2637, %v2638
    %v2640 = vrot.slane %v2639, 1
    %v2641 = vadd.f32 %v2639, %v2640
    %v2642 = vadd.f32 %v2592, %v2620
    %v2643 = vadd.f32 %v2599, %v2627
    %v2644 = vadd.f32 %v2606, %v2634
    %v2645 = vadd.f32 %v2613, %v2641
    %v2646 = vadd.f32 %v2642, %v2644
    %v2647 = vadd.f32 %v2643, %v2645
    %v2648 = vadd.f32 %v2646, %v2647
    %2650 = vrot.lane.b32.xlu0 %v2648, 64
    %v2651 = vpop.permute.xlu0 %2650
    %v2653 = vadd.f32 %v2648, %v2651
    %2655 = vrot.lane.b32.xlu0 %v2653, 96
    %v2656 = vpop.permute.xlu0 %2655
    %v2658 = vadd.f32 %v2653, %v2656
    %v2659 = vmul.f32 %v2658, 0.0078125
    %2661 = vrot.lane.b32.xlu0 %v2659, 32
    %v2662 = vpop.permute.xlu0 %2661
    %v2664 = vsel %vm362, %v2659, %v2662
    %2666 = vrot.lane.b32.xlu0 %v2664, 64
    %v2667 = vpop.permute.xlu0 %2666
    %v2669 = vsel %vm604, %v2664, %v2667
    %v2670 = vlaneseq
    %v2671 = vshrl.u32 %v2670, 7
    %v2672 = vsub.s32 0, %v2671
    %v2673 = vrot.slane %v2669, %v2672
    %v2674 = vsub.f32 %v2186, %v2673
    %v2675 = vsub.f32 %v2188, %v2673
    %v2676 = vsub.f32 %v2309, %v2673
    %v2677 = vsub.f32 %v2311, %v2673
    %v2678 = vmul.f32 %v2674, %v2674
    %v2679 = vmul.f32 %v2675, %v2675
    %v2680 = vmul.f32 %v2676, %v2676
    %v2681 = vmul.f32 %v2677, %v2677
    %v2682 = vsel %vm2585, %v2678, 0.0
    %v2683 = vrot.slane %v2682, 4
    %v2684 = vadd.f32 %v2682, %v2683
    %v2685 = vrot.slane %v2684, 2
    %v2686 = vadd.f32 %v2684, %v2685
    %v2687 = vrot.slane %v2686, 1
    %v2688 = vadd.f32 %v2686, %v2687
    %v2689 = vsel %vm2585, %v2679, 0.0
    %v2690 = vrot.slane %v2689, 4
    %v2691 = vadd.f32 %v2689, %v2690
    %v2692 = vrot.slane %v2691, 2
    %v2693 = vadd.f32 %v2691, %v2692
    %v2694 = vrot.slane %v2693, 1
    %v2695 = vadd.f32 %v2693, %v2694
    %v2696 = vsel %vm2585, %v2680, 0.0
    %v2697 = vrot.slane %v2696, 4
    %v2698 = vadd.f32 %v2696, %v2697
    %v2699 = vrot.slane %v2698, 2
    %v2700 = vadd.f32 %v2698, %v2699
    %v2701 = vrot.slane %v2700, 1
    %v2702 = vadd.f32 %v2700, %v2701
    %v2703 = vsel %vm2585, %v2681, 0.0
    %v2704 = vrot.slane %v2703, 4
    %v2705 = vadd.f32 %v2703, %v2704
    %v2706 = vrot.slane %v2705, 2
    %v2707 = vadd.f32 %v2705, %v2706
    %v2708 = vrot.slane %v2707, 1
    %v2709 = vadd.f32 %v2707, %v2708
    %v2710 = vsub.f32 %v2456, %v2673
    %v2711 = vsub.f32 %v2458, %v2673
    %v2712 = vsub.f32 %v2579, %v2673
    %v2713 = vsub.f32 %v2581, %v2673
    %v2714 = vmul.f32 %v2710, %v2710
    %v2715 = vmul.f32 %v2711, %v2711
    %v2716 = vmul.f32 %v2712, %v2712
    %v2717 = vmul.f32 %v2713, %v2713
    %v2718 = vsel %vm2585, %v2714, 0.0
    %v2719 = vrot.slane %v2718, 4
    %v2720 = vadd.f32 %v2718, %v2719
    %v2721 = vrot.slane %v2720, 2
    %v2722 = vadd.f32 %v2720, %v2721
    %v2723 = vrot.slane %v2722, 1
    %v2724 = vadd.f32 %v2722, %v2723
    %v2725 = vsel %vm2585, %v2715, 0.0
    %v2726 = vrot.slane %v2725, 4
    %v2727 = vadd.f32 %v2725, %v2726
    %v2728 = vrot.slane %v2727, 2
    %v2729 = vadd.f32 %v2727, %v2728
    %v2730 = vrot.slane %v2729, 1
    %v2731 = vadd.f32 %v2729, %v2730
    %v2732 = vsel %vm2585, %v2716, 0.0
    %v2733 = vrot.slane %v2732, 4
    %v2734 = vadd.f32 %v2732, %v2733
    %v2735 = vrot.slane %v2734, 2
    %v2736 = vadd.f32 %v2734, %v2735
    %v2737 = vrot.slane %v2736, 1
    %v2738 = vadd.f32 %v2736, %v2737
    %v2739 = vsel %vm2585, %v2717, 0.0
    %v2740 = vrot.slane %v2739, 4
    %v2741 = vadd.f32 %v2739, %v2740
    %v2742 = vrot.slane %v2741, 2
    %v2743 = vadd.f32 %v2741, %v2742
    %v2744 = vrot.slane %v2743, 1
    %v2745 = vadd.f32 %v2743, %v2744
    %v2746 = vadd.f32 %v2688, %v2724
    %v2747 = vadd.f32 %v2695, %v2731
    %v2748 = vadd.f32 %v2702, %v2738
    %v2749 = vadd.f32 %v2709, %v2745
    %v2750 = vadd.f32 %v2746, %v2748
    %v2751 = vadd.f32 %v2747, %v2749
    %v2752 = vadd.f32 %v2750, %v2751
    %2754 = vrot.lane.b32.xlu0 %v2752, 64
    %v2755 = vpop.permute.xlu0 %2754
    %v2757 = vadd.f32 %v2752, %v2755
    %2759 = vrot.lane.b32.xlu0 %v2757, 96
    %v2760 = vpop.permute.xlu0 %2759
    %v2762 = vadd.f32 %v2757, %v2760
    %v2763 = vmul.f32 %v2762, 0.0078125
    %v2764 = vld [vmem:[%s8] sm:$0x1]
    %v2765 = vadd.f32 %v2763, 1e-05
    %v2766 = vrsqrt.pop %v2765
    %v2767 = vmul.f32 %v2764, %v2766
    %v2768 = vld [vmem:[#allocation14] sm:$0x1]
    %v2769 = vmul.f32 %v2659, %v2767
    %v2770 = vsub.f32 %v2768, %v2769
    %v2772 = vlaneseq
    %v2773 = vshrl.u32 %v2772, 7
    %v2774 = vsub.s32 0, %v2773
    %v2775 = vrot.slane %v2767, %v2774
    %2776 = vrot.lane.b32.xlu0 %v2775, 32
    %v2777 = vpop.permute.xlu0 %2776
    %v2779 = vsel %vm362, %v2767, %v2777
    %2781 = vrot.lane.b32.xlu0 %v2779, 64
    %v2782 = vpop.permute.xlu0 %2781
    %v2784 = vsel %vm604, %v2779, %v2782
    %v2786 = vlaneseq
    %v2787 = vshrl.u32 %v2786, 7
    %v2788 = vsub.s32 0, %v2787
    %v2789 = vrot.slane %v2770, %v2788
    %2790 = vrot.lane.b32.xlu0 %v2789, 32
    %v2791 = vpop.permute.xlu0 %2790
    %v2793 = vsel %vm362, %v2770, %v2791
    %2795 = vrot.lane.b32.xlu0 %v2793, 64
    %v2796 = vpop.permute.xlu0 %2795
    %v2798 = vsel %vm604, %v2793, %v2796
    %v2799 = vlaneseq
    %v2800 = vshrl.u32 %v2799, 7
    %v2801 = vsub.s32 0, %v2800
    %v2802 = vrot.slane %v2784, %v2801
    %v2803 = vmul.f32 %v2186, %v2802
    %v2804 = vmul.f32 %v2188, %v2802
    %v2805 = vmul.f32 %v2309, %v2802
    %v2806 = vmul.f32 %v2311, %v2802
    %v2807 = vlaneseq
    %v2808 = vshrl.u32 %v2807, 7
    %v2809 = vsub.s32 0, %v2808
    %v2810 = vrot.slane %v2798, %v2809
    %v2811 = vadd.f32 %v2803, %v2810
    %v2812 = vadd.f32 %v2804, %v2810
    %v2813 = vadd.f32 %v2805, %v2810
    %v2814 = vadd.f32 %v2806, %v2810
    %v2815 = vmax.f32 %v2811, 0.0
    %v2816 = vmax.f32 %v2812, 0.0
    %v2817 = vmax.f32 %v2813, 0.0
    %v2818 = vmax.f32 %v2814, 0.0
    %v2819 = vmul.f32 %v2456, %v2802
    %v2820 = vmul.f32 %v2458, %v2802
    %v2821 = vmul.f32 %v2579, %v2802
    %v2822 = vmul.f32 %v2581, %v2802
    %v2823 = vadd.f32 %v2819, %v2810
    %v2824 = vadd.f32 %v2820, %v2810
    %v2825 = vadd.f32 %v2821, %v2810
    %v2826 = vadd.f32 %v2822, %v2810
    %v2827 = vmax.f32 %v2823, 0.0
    %v2828 = vmax.f32 %v2824, 0.0
    %v2829 = vmax.f32 %v2825, 0.0
    %v2830 = vmax.f32 %v2826, 0.0
    %2831 = vst [vmem:[#allocation3] sm:$0xff] 0.0
    %2832 = vst [vmem:[#allocation3 + $0x8] sm:$0xff] 0.0
    %2833 = vst [vmem:[#allocation3 + $0x10] sm:$0x3] 0.0
    %2834 = vst [vmem:[#allocation3 + $0x18] sm:$0x3] 0.0
    %2835 = vst [vmem:[#allocation3 + $0x20] sm:$0xff] 0.0
    %2836 = vst [vmem:[#allocation3 + $0x28] sm:$0xff] 0.0
    %2837 = vst [vmem:[#allocation3 + $0x30] sm:$0x3] 0.0
    %2838 = vst [vmem:[#allocation3 + $0x38] sm:$0x3] 0.0
    %v2841 = vcombine.low %v2815, %v2816
    %v2843 = vunpack.c.l.s4 1966171168
    %v2844 = vunpack.c.0.s8 %v2843
    %v2845 = vlaneseq
    %v2846 = vshrl.u32 %v2845, 7
    %v2847 = vsub.s32 %v2844, %v2846
    %v2848 = vrot.slane %v2841, %v2847
    %v2850 = vunpack.c.l.s4 1966171168
    %v2851 = vunpack.c.0.s8 %v2850
    %v2852 = vlaneseq
    %v2853 = vshrl.u32 %v2852, 7
    %v2854 = vsub.s32 %v2851, %v2853
    %v2855 = vrot.slane %v2848, %v2854
    %s2857 = scalar_lea.vmem [#allocation3], 1
    %2858 = vst.msk [vmem:[%s2857] ss:$8 sm:$0x3] %vm777, %v2855
    %2859 = vst.msk [vmem:[%s2857] ss:$8 sm:$0x0] %vm777, %v2855
    %v2862 = vcombine.low %v2817, %v2818
    %v2864 = vunpack.c.l.s4 1966171168
    %v2865 = vunpack.c.0.s8 %v2864
    %v2866 = vlaneseq
    %v2867 = vshrl.u32 %v2866, 7
    %v2868 = vsub.s32 %v2865, %v2867
    %v2869 = vrot.slane %v2862, %v2868
    %v2871 = vunpack.c.l.s4 1966171168
    %v2872 = vunpack.c.0.s8 %v2871
    %v2873 = vlaneseq
    %v2874 = vshrl.u32 %v2873, 7
    %v2875 = vsub.s32 %v2872, %v2874
    %v2876 = vrot.slane %v2869, %v2875
    %s2878 = scalar_lea.vmem [#allocation3], 2
    %2879 = vst.msk [vmem:[%s2878] ss:$8 sm:$0x3] %vm777, %v2876
    %2880 = vst.msk [vmem:[%s2878] ss:$8 sm:$0x0] %vm777, %v2876
    %v2881 = vcombine.high %v2848, %v2848
    %v2883 = vunpack.c.l.s4 1966171168
    %v2884 = vunpack.c.0.s8 %v2883
    %v2885 = vlaneseq
    %v2886 = vshrl.u32 %v2885, 7
    %v2887 = vsub.s32 %v2884, %v2886
    %v2888 = vrot.slane %v2881, %v2887
    %s2890 = scalar_lea.vmem [#allocation3], 3
    %2891 = vst.msk [vmem:[%s2890] ss:$8 sm:$0x3] %vm777, %v2888
    %2892 = vst.msk [vmem:[%s2890] ss:$8 sm:$0x0] %vm777, %v2888
    %v2893 = vcombine.high %v2869, %v2869
    %v2895 = vunpack.c.l.s4 1966171168
    %v2896 = vunpack.c.0.s8 %v2895
    %v2897 = vlaneseq
    %v2898 = vshrl.u32 %v2897, 7
    %v2899 = vsub.s32 %v2896, %v2898
    %v2900 = vrot.slane %v2893, %v2899
    %s2902 = scalar_lea.vmem [#allocation3], 4
    %2903 = vst.msk [vmem:[%s2902] ss:$8 sm:$0x3] %vm777, %v2900
    %2904 = vst.msk [vmem:[%s2902] ss:$8 sm:$0x0] %vm777, %v2900
    %v2905 = vcombine.high %v2855, %v2855
    %s2907 = scalar_lea.vmem [#allocation3], 5
    %2908 = vst.msk [vmem:[%s2907] ss:$8 sm:$0x3] %vm777, %v2905
    %2909 = vst.msk [vmem:[%s2907] ss:$8 sm:$0x0] %vm777, %v2905
    %v2910 = vcombine.high %v2876, %v2876
    %s2912 = scalar_lea.vmem [#allocation3], 6
    %2913 = vst.msk [vmem:[%s2912] ss:$8 sm:$0x3] %vm777, %v2910
    %2914 = vst.msk [vmem:[%s2912] ss:$8 sm:$0x0] %vm777, %v2910
    %v2915 = vcombine.high %v2888, %v2888
    %s2917 = scalar_lea.vmem [#allocation3], 7
    %2918 = vst.msk [vmem:[%s2917] ss:$8 sm:$0x3] %vm777, %v2915
    %2919 = vst.msk [vmem:[%s2917] ss:$8 sm:$0x0] %vm777, %v2915
    %v2920 = vcombine.high %v2900, %v2900
    %s2922 = scalar_lea.vmem [#allocation3], 16
    %2923 = vst.msk [vmem:[%s2922] ss:$8 sm:$0x3] %vm777, %v2920
    %2924 = vst.msk [vmem:[%s2922] ss:$8 sm:$0x0] %vm777, %v2920
    %v2927 = vcombine.low %v2827, %v2828
    %v2929 = vunpack.c.l.s4 1966171168
    %v2930 = vunpack.c.0.s8 %v2929
    %v2931 = vlaneseq
    %v2932 = vshrl.u32 %v2931, 7
    %v2933 = vsub.s32 %v2930, %v2932
    %v2934 = vrot.slane %v2927, %v2933
    %v2936 = vunpack.c.l.s4 1966171168
    %v2937 = vunpack.c.0.s8 %v2936
    %v2938 = vlaneseq
    %v2939 = vshrl.u32 %v2938, 7
    %v2940 = vsub.s32 %v2937, %v2939
    %v2941 = vrot.slane %v2934, %v2940
    %s2943 = scalar_lea.vmem [#allocation3], 32
    %s2944 = scalar_lea.vmem %s2943, 1 [#allocation3]
    %2945 = vst.msk [vmem:[%s2944] ss:$8 sm:$0x3] %vm777, %v2941
    %2946 = vst.msk [vmem:[%s2944] ss:$8 sm:$0x0] %vm777, %v2941
    %v2949 = vcombine.low %v2829, %v2830
    %v2951 = vunpack.c.l.s4 1966171168
    %v2952 = vunpack.c.0.s8 %v2951
    %v2953 = vlaneseq
    %v2954 = vshrl.u32 %v2953, 7
    %v2955 = vsub.s32 %v2952, %v2954
    %v2956 = vrot.slane %v2949, %v2955
    %v2958 = vunpack.c.l.s4 1966171168
    %v2959 = vunpack.c.0.s8 %v2958
    %v2960 = vlaneseq
    %v2961 = vshrl.u32 %v2960, 7
    %v2962 = vsub.s32 %v2959, %v2961
    %v2963 = vrot.slane %v2956, %v2962
    %s2965 = scalar_lea.vmem %s2943, 2 [#allocation3]
    %2966 = vst.msk [vmem:[%s2965] ss:$8 sm:$0x3] %vm777, %v2963
    %2967 = vst.msk [vmem:[%s2965] ss:$8 sm:$0x0] %vm777, %v2963
    %v2968 = vcombine.high %v2934, %v2934
    %v2970 = vunpack.c.l.s4 1966171168
    %v2971 = vunpack.c.0.s8 %v2970
    %v2972 = vlaneseq
    %v2973 = vshrl.u32 %v2972, 7
    %v2974 = vsub.s32 %v2971, %v2973
    %v2975 = vrot.slane %v2968, %v2974
    %s2977 = scalar_lea.vmem %s2943, 3 [#allocation3]
    %2978 = vst.msk [vmem:[%s2977] ss:$8 sm:$0x3] %vm777, %v2975
    %2979 = vst.msk [vmem:[%s2977] ss:$8 sm:$0x0] %vm777, %v2975
    %v2980 = vcombine.high %v2956, %v2956
    %v2982 = vunpack.c.l.s4 1966171168
    %v2983 = vunpack.c.0.s8 %v2982
    %v2984 = vlaneseq
    %v2985 = vshrl.u32 %v2984, 7
    %v2986 = vsub.s32 %v2983, %v2985
    %v2987 = vrot.slane %v2980, %v2986
    %s2989 = scalar_lea.vmem %s2943, 4 [#allocation3]
    %2990 = vst.msk [vmem:[%s2989] ss:$8 sm:$0x3] %vm777, %v2987
    %2991 = vst.msk [vmem:[%s2989] ss:$8 sm:$0x0] %vm777, %v2987
    %v2992 = vcombine.high %v2941, %v2941
    %s2994 = scalar_lea.vmem %s2943, 5 [#allocation3]
    %2995 = vst.msk [vmem:[%s2994] ss:$8 sm:$0x3] %vm777, %v2992
    %2996 = vst.msk [vmem:[%s2994] ss:$8 sm:$0x0] %vm777, %v2992
    %v2997 = vcombine.high %v2963, %v2963
    %s2999 = scalar_lea.vmem %s2943, 6 [#allocation3]
    %3000 = vst.msk [vmem:[%s2999] ss:$8 sm:$0x3] %vm777, %v2997
    %3001 = vst.msk [vmem:[%s2999] ss:$8 sm:$0x0] %vm777, %v2997
    %v3002 = vcombine.high %v2975, %v2975
    %s3004 = scalar_lea.vmem %s2943, 7 [#allocation3]
    %3005 = vst.msk [vmem:[%s3004] ss:$8 sm:$0x3] %vm777, %v3002
    %3006 = vst.msk [vmem:[%s3004] ss:$8 sm:$0x0] %vm777, %v3002
    %v3007 = vcombine.high %v2987, %v2987
    %s3009 = scalar_lea.vmem %s2943, 16 [#allocation3]
    %3010 = vst.msk [vmem:[%s3009] ss:$8 sm:$0x3] %vm777, %v3007
    %3011 = vst.msk [vmem:[%s3009] ss:$8 sm:$0x0] %vm777, %v3007
    %v3012 = vld [vmem:[#allocation3] sm:$0xff]
    %v3013 = vld [vmem:[#allocation3 + $0x8] sm:$0xff]
    %v3014 = vld [vmem:[#allocation3] sm:$0xfe]
    %v3015 = vld [vmem:[#allocation3 + $0x8] sm:$0xfe]
    %v3016 = vld [vmem:[#allocation3 + $0x10] sm:$0x1]
    %v3017 = vld [vmem:[#allocation3 + $0x18] sm:$0x1]
    %v3018 = vld [vmem:[#allocation3] sm:$0xfc]
    %v3019 = vld [vmem:[#allocation3 + $0x8] sm:$0xfc]
    %v3020 = vld [vmem:[#allocation3 + $0x10] sm:$0x3]
    %v3021 = vld [vmem:[#allocation3 + $0x18] sm:$0x3]
    %vm3026 = vcmask 1046528
    %v3027 = vrot.slane %v3014, 1
    %v3028 = vrot.slane %v3016, 1
    %v3029 = vsel %vm3026, %v3027, %v3028
    %v3030 = vrot.slane %v3015, 1
    %v3031 = vrot.slane %v3017, 1
    %v3032 = vsel %vm3026, %v3030, %v3031
    %vm3039 = vcmask 1045504
    %v3040 = vrot.slane %v3018, 2
    %v3041 = vrot.slane %v3020, 2
    %v3042 = vsel %vm3039, %v3040, %v3041
    %v3043 = vrot.slane %v3019, 2
    %v3044 = vrot.slane %v3021, 2
    %v3045 = vsel %vm3039, %v3043, %v3044
    %v3048 = vpack.c.bf16 %v3012, %v3012
    %v3049 = vpack.c.bf16 %v3013, %v3013
    %v3050 = vpack.c.bf16 %v3029, %v3029
    %v3051 = vpack.c.bf16 %v3032, %v3032
    %v3052 = vpack.c.bf16 %v3042, %v3042
    %v3053 = vpack.c.bf16 %v3045, %v3045
    %v3054 = vld [vmem:[#allocation16] sm:$0xff]
    %v3055 = vld [vmem:[#allocation16 + $0x8] sm:$0xff]
    %v3056 = vld [vmem:[#allocation16 + $0x10] sm:$0xff]
    %v3057 = vld [vmem:[#allocation16 + $0x18] sm:$0xff]
    %v3058 = vld [vmem:[#allocation16 + $0x20] sm:$0xff]
    %v3059 = vld [vmem:[#allocation16 + $0x28] sm:$0xff]
    %v3060 = vld [vmem:[#allocation16 + $0x30] sm:$0xff]
    %v3061 = vld [vmem:[#allocation16 + $0x38] sm:$0xff]
    %v3062 = vld [vmem:[#allocation16 + $0x40] sm:$0xff]
    %v3063 = vld [vmem:[#allocation16 + $0x48] sm:$0xff]
    %v3064 = vld [vmem:[#allocation16 + $0x50] sm:$0xff]
    %v3065 = vld [vmem:[#allocation16 + $0x58] sm:$0xff]
    %v3066 = vld [vmem:[#allocation16 + $0x60] sm:$0xff]
    %v3067 = vld [vmem:[#allocation16 + $0x68] sm:$0xff]
    %v3068 = vld [vmem:[#allocation16 + $0x70] sm:$0xff]
    %v3069 = vld [vmem:[#allocation16 + $0x78] sm:$0xff]
    %v3070 = vld [vmem:[#allocation16 + $0x80] sm:$0xff]
    %v3071 = vld [vmem:[#allocation16 + $0x88] sm:$0xff]
    %v3072 = vld [vmem:[#allocation16 + $0x90] sm:$0xff]
    %v3073 = vld [vmem:[#allocation16 + $0x98] sm:$0xff]
    %v3074 = vld [vmem:[#allocation16 + $0xa0] sm:$0xff]
    %v3075 = vld [vmem:[#allocation16 + $0xa8] sm:$0xff]
    %v3076 = vld [vmem:[#allocation16 + $0xb0] sm:$0xff]
    %v3077 = vld [vmem:[#allocation16 + $0xb8] sm:$0xff]
    %v3078 = vld [vmem:[#allocation16 + $0xc0] sm:$0xff]
    %v3079 = vld [vmem:[#allocation16 + $0xc8] sm:$0xff]
    %v3080 = vld [vmem:[#allocation16 + $0xd0] sm:$0xff]
    %v3081 = vld [vmem:[#allocation16 + $0xd8] sm:$0xff]
    %v3082 = vld [vmem:[#allocation16 + $0xe0] sm:$0xff]
    %v3083 = vld [vmem:[#allocation16 + $0xe8] sm:$0xff]
    %v3084 = vld [vmem:[#allocation16 + $0xf0] sm:$0xff]
    %v3085 = vld [vmem:[#allocation16 + $0xf8] sm:$0xff]
    %v3086 = vld [vmem:[#allocation16 + $0x100] sm:$0xff]
    %v3087 = vld [vmem:[#allocation16 + $0x108] sm:$0xff]
    %v3088 = vld [vmem:[#allocation16 + $0x110] sm:$0xff]
    %v3089 = vld [vmem:[#allocation16 + $0x118] sm:$0xff]
    %v3090 = vld [vmem:[#allocation16 + $0x120] sm:$0xff]
    %v3091 = vld [vmem:[#allocation16 + $0x128] sm:$0xff]
    %v3092 = vld [vmem:[#allocation16 + $0x130] sm:$0xff]
    %v3093 = vld [vmem:[#allocation16 + $0x138] sm:$0xff]
    %v3094 = vld [vmem:[#allocation16 + $0x140] sm:$0xff]
    %v3095 = vld [vmem:[#allocation16 + $0x148] sm:$0xff]
    %v3096 = vld [vmem:[#allocation16 + $0x150] sm:$0xff]
    %v3097 = vld [vmem:[#allocation16 + $0x158] sm:$0xff]
    %v3098 = vld [vmem:[#allocation16 + $0x160] sm:$0xff]
    %v3099 = vld [vmem:[#allocation16 + $0x168] sm:$0xff]
    %v3100 = vld [vmem:[#allocation16 + $0x170] sm:$0xff]
    %v3101 = vld [vmem:[#allocation16 + $0x178] sm:$0xff]
    %v3102 = vld [vmem:[#allocation16 + $0x180] sm:$0xff]
    %v3103 = vld [vmem:[#allocation16 + $0x188] sm:$0xff]
    %v3104 = vld [vmem:[#allocation16 + $0x190] sm:$0xff]
    %v3105 = vld [vmem:[#allocation16 + $0x198] sm:$0xff]
    %v3106 = vld [vmem:[#allocation16 + $0x1a0] sm:$0xff]
    %v3107 = vld [vmem:[#allocation16 + $0x1a8] sm:$0xff]
    %v3108 = vld [vmem:[#allocation16 + $0x1b0] sm:$0xff]
    %v3109 = vld [vmem:[#allocation16 + $0x1b8] sm:$0xff]
    %v3110 = vld [vmem:[#allocation16 + $0x1c0] sm:$0xff]
    %v3111 = vld [vmem:[#allocation16 + $0x1c8] sm:$0xff]
    %v3112 = vld [vmem:[#allocation16 + $0x1d0] sm:$0xff]
    %v3113 = vld [vmem:[#allocation16 + $0x1d8] sm:$0xff]
    %v3114 = vld [vmem:[#allocation16 + $0x1e0] sm:$0xff]
    %v3115 = vld [vmem:[#allocation16 + $0x1e8] sm:$0xff]
    %v3116 = vld [vmem:[#allocation16 + $0x1f0] sm:$0xff]
    %v3117 = vld [vmem:[#allocation16 + $0x1f8] sm:$0xff]
    %v3118 = vld [vmem:[#allocation16 + $0x200] sm:$0xff]
    %v3119 = vld [vmem:[#allocation16 + $0x208] sm:$0xff]
    %v3120 = vld [vmem:[#allocation16 + $0x210] sm:$0xff]
    %v3121 = vld [vmem:[#allocation16 + $0x218] sm:$0xff]
    %v3122 = vld [vmem:[#allocation16 + $0x220] sm:$0xff]
    %v3123 = vld [vmem:[#allocation16 + $0x228] sm:$0xff]
    %v3124 = vld [vmem:[#allocation16 + $0x230] sm:$0xff]
    %v3125 = vld [vmem:[#allocation16 + $0x238] sm:$0xff]
    %v3126 = vld [vmem:[#allocation16 + $0x240] sm:$0xff]
    %v3127 = vld [vmem:[#allocation16 + $0x248] sm:$0xff]
    %v3128 = vld [vmem:[#allocation16 + $0x250] sm:$0xff]
    %v3129 = vld [vmem:[#allocation16 + $0x258] sm:$0xff]
    %v3130 = vld [vmem:[#allocation16 + $0x260] sm:$0xff]
    %v3131 = vld [vmem:[#allocation16 + $0x268] sm:$0xff]
    %v3132 = vld [vmem:[#allocation16 + $0x270] sm:$0xff]
    %v3133 = vld [vmem:[#allocation16 + $0x278] sm:$0xff]
    %v3134 = vld [vmem:[#allocation16 + $0x280] sm:$0xff]
    %v3135 = vld [vmem:[#allocation16 + $0x288] sm:$0xff]
    %v3136 = vld [vmem:[#allocation16 + $0x290] sm:$0xff]
    %v3137 = vld [vmem:[#allocation16 + $0x298] sm:$0xff]
    %v3138 = vld [vmem:[#allocation16 + $0x2a0] sm:$0xff]
    %v3139 = vld [vmem:[#allocation16 + $0x2a8] sm:$0xff]
    %v3140 = vld [vmem:[#allocation16 + $0x2b0] sm:$0xff]
    %v3141 = vld [vmem:[#allocation16 + $0x2b8] sm:$0xff]
    %v3142 = vld [vmem:[#allocation16 + $0x2c0] sm:$0xff]
    %v3143 = vld [vmem:[#allocation16 + $0x2c8] sm:$0xff]
    %v3144 = vld [vmem:[#allocation16 + $0x2d0] sm:$0xff]
    %v3145 = vld [vmem:[#allocation16 + $0x2d8] sm:$0xff]
    %v3146 = vld [vmem:[#allocation16 + $0x2e0] sm:$0xff]
    %v3147 = vld [vmem:[#allocation16 + $0x2e8] sm:$0xff]
    %v3148 = vld [vmem:[#allocation16 + $0x2f0] sm:$0xff]
    %v3149 = vld [vmem:[#allocation16 + $0x2f8] sm:$0xff]
    %v3150 = vld [vmem:[#allocation16 + $0x300] sm:$0xff]
    %v3151 = vld [vmem:[#allocation16 + $0x308] sm:$0xff]
    %v3152 = vld [vmem:[#allocation16 + $0x310] sm:$0xff]
    %v3153 = vld [vmem:[#allocation16 + $0x318] sm:$0xff]
    %v3154 = vld [vmem:[#allocation16 + $0x320] sm:$0xff]
    %v3155 = vld [vmem:[#allocation16 + $0x328] sm:$0xff]
    %v3156 = vld [vmem:[#allocation16 + $0x330] sm:$0xff]
    %v3157 = vld [vmem:[#allocation16 + $0x338] sm:$0xff]
    %v3158 = vld [vmem:[#allocation16 + $0x340] sm:$0xff]
    %v3159 = vld [vmem:[#allocation16 + $0x348] sm:$0xff]
    %v3160 = vld [vmem:[#allocation16 + $0x350] sm:$0xff]
    %v3161 = vld [vmem:[#allocation16 + $0x358] sm:$0xff]
    %v3162 = vld [vmem:[#allocation16 + $0x360] sm:$0xff]
    %v3163 = vld [vmem:[#allocation16 + $0x368] sm:$0xff]
    %v3164 = vld [vmem:[#allocation16 + $0x370] sm:$0xff]
    %v3165 = vld [vmem:[#allocation16 + $0x378] sm:$0xff]
    %v3166 = vld [vmem:[#allocation16 + $0x380] sm:$0xff]
    %v3167 = vld [vmem:[#allocation16 + $0x388] sm:$0xff]
    %v3168 = vld [vmem:[#allocation16 + $0x390] sm:$0xff]
    %v3169 = vld [vmem:[#allocation16 + $0x398] sm:$0xff]
    %v3170 = vld [vmem:[#allocation16 + $0x3a0] sm:$0xff]
    %v3171 = vld [vmem:[#allocation16 + $0x3a8] sm:$0xff]
    %v3172 = vld [vmem:[#allocation16 + $0x3b0] sm:$0xff]
    %v3173 = vld [vmem:[#allocation16 + $0x3b8] sm:$0xff]
    %v3174 = vld [vmem:[#allocation16 + $0x3c0] sm:$0xff]
    %v3175 = vld [vmem:[#allocation16 + $0x3c8] sm:$0xff]
    %v3176 = vld [vmem:[#allocation16 + $0x3d0] sm:$0xff]
    %v3177 = vld [vmem:[#allocation16 + $0x3d8] sm:$0xff]
    %v3178 = vld [vmem:[#allocation16 + $0x3e0] sm:$0xff]
    %v3179 = vld [vmem:[#allocation16 + $0x3e8] sm:$0xff]
    %v3180 = vld [vmem:[#allocation16 + $0x3f0] sm:$0xff]
    %v3181 = vld [vmem:[#allocation16 + $0x3f8] sm:$0xff]
    %v3182 = vld [vmem:[#allocation16 + $0x400] sm:$0xff]
    %v3183 = vld [vmem:[#allocation16 + $0x408] sm:$0xff]
    %v3184 = vld [vmem:[#allocation16 + $0x410] sm:$0xff]
    %v3185 = vld [vmem:[#allocation16 + $0x418] sm:$0xff]
    %v3186 = vld [vmem:[#allocation16 + $0x420] sm:$0xff]
    %v3187 = vld [vmem:[#allocation16 + $0x428] sm:$0xff]
    %v3188 = vld [vmem:[#allocation16 + $0x430] sm:$0xff]
    %v3189 = vld [vmem:[#allocation16 + $0x438] sm:$0xff]
    %v3190 = vld [vmem:[#allocation16 + $0x440] sm:$0xff]
    %v3191 = vld [vmem:[#allocation16 + $0x448] sm:$0xff]
    %v3192 = vld [vmem:[#allocation16 + $0x450] sm:$0xff]
    %v3193 = vld [vmem:[#allocation16 + $0x458] sm:$0xff]
    %v3194 = vld [vmem:[#allocation16 + $0x460] sm:$0xff]
    %v3195 = vld [vmem:[#allocation16 + $0x468] sm:$0xff]
    %v3196 = vld [vmem:[#allocation16 + $0x470] sm:$0xff]
    %v3197 = vld [vmem:[#allocation16 + $0x478] sm:$0xff]
    %v3198 = vld [vmem:[#allocation16 + $0x480] sm:$0xff]
    %v3199 = vld [vmem:[#allocation16 + $0x488] sm:$0xff]
    %v3200 = vld [vmem:[#allocation16 + $0x490] sm:$0xff]
    %v3201 = vld [vmem:[#allocation16 + $0x498] sm:$0xff]
    %v3202 = vld [vmem:[#allocation16 + $0x4a0] sm:$0xff]
    %v3203 = vld [vmem:[#allocation16 + $0x4a8] sm:$0xff]
    %v3204 = vld [vmem:[#allocation16 + $0x4b0] sm:$0xff]
    %v3205 = vld [vmem:[#allocation16 + $0x4b8] sm:$0xff]
    %v3206 = vld [vmem:[#allocation16 + $0x4c0] sm:$0xff]
    %v3207 = vld [vmem:[#allocation16 + $0x4c8] sm:$0xff]
    %v3208 = vld [vmem:[#allocation16 + $0x4d0] sm:$0xff]
    %v3209 = vld [vmem:[#allocation16 + $0x4d8] sm:$0xff]
    %v3210 = vld [vmem:[#allocation16 + $0x4e0] sm:$0xff]
    %v3211 = vld [vmem:[#allocation16 + $0x4e8] sm:$0xff]
    %v3212 = vld [vmem:[#allocation16 + $0x4f0] sm:$0xff]
    %v3213 = vld [vmem:[#allocation16 + $0x4f8] sm:$0xff]
    %v3214 = vld [vmem:[#allocation16 + $0x500] sm:$0xff]
    %v3215 = vld [vmem:[#allocation16 + $0x508] sm:$0xff]
    %v3216 = vld [vmem:[#allocation16 + $0x510] sm:$0xff]
    %v3217 = vld [vmem:[#allocation16 + $0x518] sm:$0xff]
    %v3218 = vld [vmem:[#allocation16 + $0x520] sm:$0xff]
    %v3219 = vld [vmem:[#allocation16 + $0x528] sm:$0xff]
    %v3220 = vld [vmem:[#allocation16 + $0x530] sm:$0xff]
    %v3221 = vld [vmem:[#allocation16 + $0x538] sm:$0xff]
    %v3222 = vld [vmem:[#allocation16 + $0x540] sm:$0xff]
    %v3223 = vld [vmem:[#allocation16 + $0x548] sm:$0xff]
    %v3224 = vld [vmem:[#allocation16 + $0x550] sm:$0xff]
    %v3225 = vld [vmem:[#allocation16 + $0x558] sm:$0xff]
    %v3226 = vld [vmem:[#allocation16 + $0x560] sm:$0xff]
    %v3227 = vld [vmem:[#allocation16 + $0x568] sm:$0xff]
    %v3228 = vld [vmem:[#allocation16 + $0x570] sm:$0xff]
    %v3229 = vld [vmem:[#allocation16 + $0x578] sm:$0xff]
    %v3230 = vld [vmem:[#allocation16 + $0x580] sm:$0xff]
    %v3231 = vld [vmem:[#allocation16 + $0x588] sm:$0xff]
    %v3232 = vld [vmem:[#allocation16 + $0x590] sm:$0xff]
    %v3233 = vld [vmem:[#allocation16 + $0x598] sm:$0xff]
    %v3234 = vld [vmem:[#allocation16 + $0x5a0] sm:$0xff]
    %v3235 = vld [vmem:[#allocation16 + $0x5a8] sm:$0xff]
    %v3236 = vld [vmem:[#allocation16 + $0x5b0] sm:$0xff]
    %v3237 = vld [vmem:[#allocation16 + $0x5b8] sm:$0xff]
    %v3238 = vld [vmem:[#allocation16 + $0x5c0] sm:$0xff]
    %v3239 = vld [vmem:[#allocation16 + $0x5c8] sm:$0xff]
    %v3240 = vld [vmem:[#allocation16 + $0x5d0] sm:$0xff]
    %v3241 = vld [vmem:[#allocation16 + $0x5d8] sm:$0xff]
    %v3242 = vld [vmem:[#allocation16 + $0x5e0] sm:$0xff]
    %v3243 = vld [vmem:[#allocation16 + $0x5e8] sm:$0xff]
    %v3244 = vld [vmem:[#allocation16 + $0x5f0] sm:$0xff]
    %v3245 = vld [vmem:[#allocation16 + $0x5f8] sm:$0xff]
    %v3438 = vunpack.c.l.b16 %v3054
    %v3439 = vunpack.c.h.b16 %v3054
    %v3440 = vunpack.c.l.b16 %v3055
    %v3441 = vunpack.c.h.b16 %v3055
    %v3442 = vunpack.c.l.b16 %v3056
    %v3443 = vunpack.c.h.b16 %v3056
    %v3444 = vunpack.c.l.b16 %v3057
    %v3445 = vunpack.c.h.b16 %v3057
    %v3446 = vunpack.c.l.b16 %v3058
    %v3447 = vunpack.c.h.b16 %v3058
    %v3448 = vunpack.c.l.b16 %v3059
    %v3449 = vunpack.c.h.b16 %v3059
    %v3450 = vunpack.c.l.b16 %v3060
    %v3451 = vunpack.c.h.b16 %v3060
    %v3452 = vunpack.c.l.b16 %v3061
    %v3453 = vunpack.c.h.b16 %v3061
    %v3454 = vunpack.c.l.b16 %v3062
    %v3455 = vunpack.c.h.b16 %v3062
    %v3456 = vunpack.c.l.b16 %v3063
    %v3457 = vunpack.c.h.b16 %v3063
    %v3458 = vunpack.c.l.b16 %v3064
    %v3459 = vunpack.c.h.b16 %v3064
    %v3460 = vunpack.c.l.b16 %v3065
    %v3461 = vunpack.c.h.b16 %v3065
    %v3462 = vunpack.c.l.b16 %v3066
    %v3463 = vunpack.c.h.b16 %v3066
    %v3464 = vunpack.c.l.b16 %v3067
    %v3465 = vunpack.c.h.b16 %v3067
    %v3466 = vunpack.c.l.b16 %v3068
    %v3467 = vunpack.c.h.b16 %v3068
    %v3468 = vunpack.c.l.b16 %v3069
    %v3469 = vunpack.c.h.b16 %v3069
    %v3470 = vunpack.c.l.b16 %v3070
    %v3471 = vunpack.c.h.b16 %v3070
    %v3472 = vunpack.c.l.b16 %v3071
    %v3473 = vunpack.c.h.b16 %v3071
    %v3474 = vunpack.c.l.b16 %v3072
    %v3475 = vunpack.c.h.b16 %v3072
    %v3476 = vunpack.c.l.b16 %v3073
    %v3477 = vunpack.c.h.b16 %v3073
    %v3478 = vunpack.c.l.b16 %v3074
    %v3479 = vunpack.c.h.b16 %v3074
    %v3480 = vunpack.c.l.b16 %v3075
    %v3481 = vunpack.c.h.b16 %v3075
    %v3482 = vunpack.c.l.b16 %v3076
    %v3483 = vunpack.c.h.b16 %v3076
    %v3484 = vunpack.c.l.b16 %v3077
    %v3485 = vunpack.c.h.b16 %v3077
    %v3486 = vunpack.c.l.b16 %v3078
    %v3487 = vunpack.c.h.b16 %v3078
    %v3488 = vunpack.c.l.b16 %v3079
    %v3489 = vunpack.c.h.b16 %v3079
    %v3490 = vunpack.c.l.b16 %v3080
    %v3491 = vunpack.c.h.b16 %v3080
    %v3492 = vunpack.c.l.b16 %v3081
    %v3493 = vunpack.c.h.b16 %v3081
    %v3494 = vunpack.c.l.b16 %v3082
    %v3495 = vunpack.c.h.b16 %v3082
    %v3496 = vunpack.c.l.b16 %v3083
    %v3497 = vunpack.c.h.b16 %v3083
    %v3498 = vunpack.c.l.b16 %v3084
    %v3499 = vunpack.c.h.b16 %v3084
    %v3500 = vunpack.c.l.b16 %v3085
    %v3501 = vunpack.c.h.b16 %v3085
    %v3502 = vunpack.c.l.b16 %v3086
    %v3503 = vunpack.c.h.b16 %v3086
    %v3504 = vunpack.c.l.b16 %v3087
    %v3505 = vunpack.c.h.b16 %v3087
    %v3506 = vunpack.c.l.b16 %v3088
    %v3507 = vunpack.c.h.b16 %v3088
    %v3508 = vunpack.c.l.b16 %v3089
    %v3509 = vunpack.c.h.b16 %v3089
    %v3510 = vunpack.c.l.b16 %v3090
    %v3511 = vunpack.c.h.b16 %v3090
    %v3512 = vunpack.c.l.b16 %v3091
    %v3513 = vunpack.c.h.b16 %v3091
    %v3514 = vunpack.c.l.b16 %v3092
    %v3515 = vunpack.c.h.b16 %v3092
    %v3516 = vunpack.c.l.b16 %v3093
    %v3517 = vunpack.c.h.b16 %v3093
    %v3518 = vunpack.c.l.b16 %v3094
    %v3519 = vunpack.c.h.b16 %v3094
    %v3520 = vunpack.c.l.b16 %v3095
    %v3521 = vunpack.c.h.b16 %v3095
    %v3522 = vunpack.c.l.b16 %v3096
    %v3523 = vunpack.c.h.b16 %v3096
    %v3524 = vunpack.c.l.b16 %v3097
    %v3525 = vunpack.c.h.b16 %v3097
    %v3526 = vunpack.c.l.b16 %v3098
    %v3527 = vunpack.c.h.b16 %v3098
    %v3528 = vunpack.c.l.b16 %v3099
    %v3529 = vunpack.c.h.b16 %v3099
    %v3530 = vunpack.c.l.b16 %v3100
    %v3531 = vunpack.c.h.b16 %v3100
    %v3532 = vunpack.c.l.b16 %v3101
    %v3533 = vunpack.c.h.b16 %v3101
    %v3534 = vunpack.c.l.b16 %v3102
    %v3535 = vunpack.c.h.b16 %v3102
    %v3536 = vunpack.c.l.b16 %v3103
    %v3537 = vunpack.c.h.b16 %v3103
    %v3538 = vunpack.c.l.b16 %v3104
    %v3539 = vunpack.c.h.b16 %v3104
    %v3540 = vunpack.c.l.b16 %v3105
    %v3541 = vunpack.c.h.b16 %v3105
    %v3542 = vunpack.c.l.b16 %v3106
    %v3543 = vunpack.c.h.b16 %v3106
    %v3544 = vunpack.c.l.b16 %v3107
    %v3545 = vunpack.c.h.b16 %v3107
    %v3546 = vunpack.c.l.b16 %v3108
    %v3547 = vunpack.c.h.b16 %v3108
    %v3548 = vunpack.c.l.b16 %v3109
    %v3549 = vunpack.c.h.b16 %v3109
    %v3550 = vunpack.c.l.b16 %v3110
    %v3551 = vunpack.c.h.b16 %v3110
    %v3552 = vunpack.c.l.b16 %v3111
    %v3553 = vunpack.c.h.b16 %v3111
    %v3554 = vunpack.c.l.b16 %v3112
    %v3555 = vunpack.c.h.b16 %v3112
    %v3556 = vunpack.c.l.b16 %v3113
    %v3557 = vunpack.c.h.b16 %v3113
    %v3558 = vunpack.c.l.b16 %v3114
    %v3559 = vunpack.c.h.b16 %v3114
    %v3560 = vunpack.c.l.b16 %v3115
    %v3561 = vunpack.c.h.b16 %v3115
    %v3562 = vunpack.c.l.b16 %v3116
    %v3563 = vunpack.c.h.b16 %v3116
    %v3564 = vunpack.c.l.b16 %v3117
    %v3565 = vunpack.c.h.b16 %v3117
    %v3566 = vunpack.c.l.b16 %v3118
    %v3567 = vunpack.c.h.b16 %v3118
    %v3568 = vunpack.c.l.b16 %v3119
    %v3569 = vunpack.c.h.b16 %v3119
    %v3570 = vunpack.c.l.b16 %v3120
    %v3571 = vunpack.c.h.b16 %v3120
    %v3572 = vunpack.c.l.b16 %v3121
    %v3573 = vunpack.c.h.b16 %v3121
    %v3574 = vunpack.c.l.b16 %v3122
    %v3575 = vunpack.c.h.b16 %v3122
    %v3576 = vunpack.c.l.b16 %v3123
    %v3577 = vunpack.c.h.b16 %v3123
    %v3578 = vunpack.c.l.b16 %v3124
    %v3579 = vunpack.c.h.b16 %v3124
    %v3580 = vunpack.c.l.b16 %v3125
    %v3581 = vunpack.c.h.b16 %v3125
    %v3582 = vunpack.c.l.b16 %v3126
    %v3583 = vunpack.c.h.b16 %v3126
    %v3584 = vunpack.c.l.b16 %v3127
    %v3585 = vunpack.c.h.b16 %v3127
    %v3586 = vunpack.c.l.b16 %v3128
    %v3587 = vunpack.c.h.b16 %v3128
    %v3588 = vunpack.c.l.b16 %v3129
    %v3589 = vunpack.c.h.b16 %v3129
    %v3590 = vunpack.c.l.b16 %v3130
    %v3591 = vunpack.c.h.b16 %v3130
    %v3592 = vunpack.c.l.b16 %v3131
    %v3593 = vunpack.c.h.b16 %v3131
    %v3594 = vunpack.c.l.b16 %v3132
    %v3595 = vunpack.c.h.b16 %v3132
    %v3596 = vunpack.c.l.b16 %v3133
    %v3597 = vunpack.c.h.b16 %v3133
    %v3598 = vunpack.c.l.b16 %v3134
    %v3599 = vunpack.c.h.b16 %v3134
    %v3600 = vunpack.c.l.b16 %v3135
    %v3601 = vunpack.c.h.b16 %v3135
    %v3602 = vunpack.c.l.b16 %v3136
    %v3603 = vunpack.c.h.b16 %v3136
    %v3604 = vunpack.c.l.b16 %v3137
    %v3605 = vunpack.c.h.b16 %v3137
    %v3606 = vunpack.c.l.b16 %v3138
    %v3607 = vunpack.c.h.b16 %v3138
    %v3608 = vunpack.c.l.b16 %v3139
    %v3609 = vunpack.c.h.b16 %v3139
    %v3610 = vunpack.c.l.b16 %v3140
    %v3611 = vunpack.c.h.b16 %v3140
    %v3612 = vunpack.c.l.b16 %v3141
    %v3613 = vunpack.c.h.b16 %v3141
    %v3614 = vunpack.c.l.b16 %v3142
    %v3615 = vunpack.c.h.b16 %v3142
    %v3616 = vunpack.c.l.b16 %v3143
    %v3617 = vunpack.c.h.b16 %v3143
    %v3618 = vunpack.c.l.b16 %v3144
    %v3619 = vunpack.c.h.b16 %v3144
    %v3620 = vunpack.c.l.b16 %v3145
    %v3621 = vunpack.c.h.b16 %v3145
    %v3622 = vunpack.c.l.b16 %v3146
    %v3623 = vunpack.c.h.b16 %v3146
    %v3624 = vunpack.c.l.b16 %v3147
    %v3625 = vunpack.c.h.b16 %v3147
    %v3626 = vunpack.c.l.b16 %v3148
    %v3627 = vunpack.c.h.b16 %v3148
    %v3628 = vunpack.c.l.b16 %v3149
    %v3629 = vunpack.c.h.b16 %v3149
    %v3630 = vunpack.c.l.b16 %v3150
    %v3631 = vunpack.c.h.b16 %v3150
    %v3632 = vunpack.c.l.b16 %v3151
    %v3633 = vunpack.c.h.b16 %v3151
    %v3634 = vunpack.c.l.b16 %v3152
    %v3635 = vunpack.c.h.b16 %v3152
    %v3636 = vunpack.c.l.b16 %v3153
    %v3637 = vunpack.c.h.b16 %v3153
    %v3638 = vunpack.c.l.b16 %v3154
    %v3639 = vunpack.c.h.b16 %v3154
    %v3640 = vunpack.c.l.b16 %v3155
    %v3641 = vunpack.c.h.b16 %v3155
    %v3642 = vunpack.c.l.b16 %v3156
    %v3643 = vunpack.c.h.b16 %v3156
    %v3644 = vunpack.c.l.b16 %v3157
    %v3645 = vunpack.c.h.b16 %v3157
    %v3646 = vunpack.c.l.b16 %v3158
    %v3647 = vunpack.c.h.b16 %v3158
    %v3648 = vunpack.c.l.b16 %v3159
    %v3649 = vunpack.c.h.b16 %v3159
    %v3650 = vunpack.c.l.b16 %v3160
    %v3651 = vunpack.c.h.b16 %v3160
    %v3652 = vunpack.c.l.b16 %v3161
    %v3653 = vunpack.c.h.b16 %v3161
    %v3654 = vunpack.c.l.b16 %v3162
    %v3655 = vunpack.c.h.b16 %v3162
    %v3656 = vunpack.c.l.b16 %v3163
    %v3657 = vunpack.c.h.b16 %v3163
    %v3658 = vunpack.c.l.b16 %v3164
    %v3659 = vunpack.c.h.b16 %v3164
    %v3660 = vunpack.c.l.b16 %v3165
    %v3661 = vunpack.c.h.b16 %v3165
    %v3662 = vunpack.c.l.b16 %v3166
    %v3663 = vunpack.c.h.b16 %v3166
    %v3664 = vunpack.c.l.b16 %v3167
    %v3665 = vunpack.c.h.b16 %v3167
    %v3666 = vunpack.c.l.b16 %v3168
    %v3667 = vunpack.c.h.b16 %v3168
    %v3668 = vunpack.c.l.b16 %v3169
    %v3669 = vunpack.c.h.b16 %v3169
    %v3670 = vunpack.c.l.b16 %v3170
    %v3671 = vunpack.c.h.b16 %v3170
    %v3672 = vunpack.c.l.b16 %v3171
    %v3673 = vunpack.c.h.b16 %v3171
    %v3674 = vunpack.c.l.b16 %v3172
    %v3675 = vunpack.c.h.b16 %v3172
    %v3676 = vunpack.c.l.b16 %v3173
    %v3677 = vunpack.c.h.b16 %v3173
    %v3678 = vunpack.c.l.b16 %v3174
    %v3679 = vunpack.c.h.b16 %v3174
    %v3680 = vunpack.c.l.b16 %v3175
    %v3681 = vunpack.c.h.b16 %v3175
    %v3682 = vunpack.c.l.b16 %v3176
    %v3683 = vunpack.c.h.b16 %v3176
    %v3684 = vunpack.c.l.b16 %v3177
    %v3685 = vunpack.c.h.b16 %v3177
    %v3686 = vunpack.c.l.b16 %v3178
    %v3687 = vunpack.c.h.b16 %v3178
    %v3688 = vunpack.c.l.b16 %v3179
    %v3689 = vunpack.c.h.b16 %v3179
    %v3690 = vunpack.c.l.b16 %v3180
    %v3691 = vunpack.c.h.b16 %v3180
    %v3692 = vunpack.c.l.b16 %v3181
    %v3693 = vunpack.c.h.b16 %v3181
    %v3694 = vunpack.c.l.b16 %v3182
    %v3695 = vunpack.c.h.b16 %v3182
    %v3696 = vunpack.c.l.b16 %v3183
    %v3697 = vunpack.c.h.b16 %v3183
    %v3698 = vunpack.c.l.b16 %v3184
    %v3699 = vunpack.c.h.b16 %v3184
    %v3700 = vunpack.c.l.b16 %v3185
    %v3701 = vunpack.c.h.b16 %v3185
    %v3702 = vunpack.c.l.b16 %v3186
    %v3703 = vunpack.c.h.b16 %v3186
    %v3704 = vunpack.c.l.b16 %v3187
    %v3705 = vunpack.c.h.b16 %v3187
    %v3706 = vunpack.c.l.b16 %v3188
    %v3707 = vunpack.c.h.b16 %v3188
    %v3708 = vunpack.c.l.b16 %v3189
    %v3709 = vunpack.c.h.b16 %v3189
    %v3710 = vunpack.c.l.b16 %v3190
    %v3711 = vunpack.c.h.b16 %v3190
    %v3712 = vunpack.c.l.b16 %v3191
    %v3713 = vunpack.c.h.b16 %v3191
    %v3714 = vunpack.c.l.b16 %v3192
    %v3715 = vunpack.c.h.b16 %v3192
    %v3716 = vunpack.c.l.b16 %v3193
    %v3717 = vunpack.c.h.b16 %v3193
    %v3718 = vunpack.c.l.b16 %v3194
    %v3719 = vunpack.c.h.b16 %v3194
    %v3720 = vunpack.c.l.b16 %v3195
    %v3721 = vunpack.c.h.b16 %v3195
    %v3722 = vunpack.c.l.b16 %v3196
    %v3723 = vunpack.c.h.b16 %v3196
    %v3724 = vunpack.c.l.b16 %v3197
    %v3725 = vunpack.c.h.b16 %v3197
    %v3726 = vunpack.c.l.b16 %v3198
    %v3727 = vunpack.c.h.b16 %v3198
    %v3728 = vunpack.c.l.b16 %v3199
    %v3729 = vunpack.c.h.b16 %v3199
    %v3730 = vunpack.c.l.b16 %v3200
    %v3731 = vunpack.c.h.b16 %v3200
    %v3732 = vunpack.c.l.b16 %v3201
    %v3733 = vunpack.c.h.b16 %v3201
    %v3734 = vunpack.c.l.b16 %v3202
    %v3735 = vunpack.c.h.b16 %v3202
    %v3736 = vunpack.c.l.b16 %v3203
    %v3737 = vunpack.c.h.b16 %v3203
    %v3738 = vunpack.c.l.b16 %v3204
    %v3739 = vunpack.c.h.b16 %v3204
    %v3740 = vunpack.c.l.b16 %v3205
    %v3741 = vunpack.c.h.b16 %v3205
    %v3742 = vunpack.c.l.b16 %v3206
    %v3743 = vunpack.c.h.b16 %v3206
    %v3744 = vunpack.c.l.b16 %v3207
    %v3745 = vunpack.c.h.b16 %v3207
    %v3746 = vunpack.c.l.b16 %v3208
    %v3747 = vunpack.c.h.b16 %v3208
    %v3748 = vunpack.c.l.b16 %v3209
    %v3749 = vunpack.c.h.b16 %v3209
    %v3750 = vunpack.c.l.b16 %v3210
    %v3751 = vunpack.c.h.b16 %v3210
    %v3752 = vunpack.c.l.b16 %v3211
    %v3753 = vunpack.c.h.b16 %v3211
    %v3754 = vunpack.c.l.b16 %v3212
    %v3755 = vunpack.c.h.b16 %v3212
    %v3756 = vunpack.c.l.b16 %v3213
    %v3757 = vunpack.c.h.b16 %v3213
    %v3758 = vunpack.c.l.b16 %v3214
    %v3759 = vunpack.c.h.b16 %v3214
    %v3760 = vunpack.c.l.b16 %v3215
    %v3761 = vunpack.c.h.b16 %v3215
    %v3762 = vunpack.c.l.b16 %v3216
    %v3763 = vunpack.c.h.b16 %v3216
    %v3764 = vunpack.c.l.b16 %v3217
    %v3765 = vunpack.c.h.b16 %v3217
    %v3766 = vunpack.c.l.b16 %v3218
    %v3767 = vunpack.c.h.b16 %v3218
    %v3768 = vunpack.c.l.b16 %v3219
    %v3769 = vunpack.c.h.b16 %v3219
    %v3770 = vunpack.c.l.b16 %v3220
    %v3771 = vunpack.c.h.b16 %v3220
    %v3772 = vunpack.c.l.b16 %v3221
    %v3773 = vunpack.c.h.b16 %v3221
    %v3774 = vunpack.c.l.b16 %v3222
    %v3775 = vunpack.c.h.b16 %v3222
    %v3776 = vunpack.c.l.b16 %v3223
    %v3777 = vunpack.c.h.b16 %v3223
    %v3778 = vunpack.c.l.b16 %v3224
    %v3779 = vunpack.c.h.b16 %v3224
    %v3780 = vunpack.c.l.b16 %v3225
    %v3781 = vunpack.c.h.b16 %v3225
    %v3782 = vunpack.c.l.b16 %v3226
    %v3783 = vunpack.c.h.b16 %v3226
    %v3784 = vunpack.c.l.b16 %v3227
    %v3785 = vunpack.c.h.b16 %v3227
    %v3786 = vunpack.c.l.b16 %v3228
    %v3787 = vunpack.c.h.b16 %v3228
    %v3788 = vunpack.c.l.b16 %v3229
    %v3789 = vunpack.c.h.b16 %v3229
    %v3790 = vunpack.c.l.b16 %v3230
    %v3791 = vunpack.c.h.b16 %v3230
    %v3792 = vunpack.c.l.b16 %v3231
    %v3793 = vunpack.c.h.b16 %v3231
    %v3794 = vunpack.c.l.b16 %v3232
    %v3795 = vunpack.c.h.b16 %v3232
    %v3796 = vunpack.c.l.b16 %v3233
    %v3797 = vunpack.c.h.b16 %v3233
    %v3798 = vunpack.c.l.b16 %v3234
    %v3799 = vunpack.c.h.b16 %v3234
    %v3800 = vunpack.c.l.b16 %v3235
    %v3801 = vunpack.c.h.b16 %v3235
    %v3802 = vunpack.c.l.b16 %v3236
    %v3803 = vunpack.c.h.b16 %v3236
    %v3804 = vunpack.c.l.b16 %v3237
    %v3805 = vunpack.c.h.b16 %v3237
    %v3806 = vunpack.c.l.b16 %v3238
    %v3807 = vunpack.c.h.b16 %v3238
    %v3808 = vunpack.c.l.b16 %v3239
    %v3809 = vunpack.c.h.b16 %v3239
    %v3810 = vunpack.c.l.b16 %v3240
    %v3811 = vunpack.c.h.b16 %v3240
    %v3812 = vunpack.c.l.b16 %v3241
    %v3813 = vunpack.c.h.b16 %v3241
    %v3814 = vunpack.c.l.b16 %v3242
    %v3815 = vunpack.c.h.b16 %v3242
    %v3816 = vunpack.c.l.b16 %v3243
    %v3817 = vunpack.c.h.b16 %v3243
    %v3818 = vunpack.c.l.b16 %v3244
    %v3819 = vunpack.c.h.b16 %v3244
    %v3820 = vunpack.c.l.b16 %v3245
    %v3821 = vunpack.c.h.b16 %v3245
    %v3822 = vpack.c.b16 %v3442, %v3438
    %v3823 = vpack.c.b16 %v3443, %v3439
    %v3824 = vpack.c.b16 %v3444, %v3440
    %v3825 = vpack.c.b16 %v3445, %v3441
    %v3826 = vpack.c.b16 %v3450, %v3446
    %v3827 = vpack.c.b16 %v3451, %v3447
    %v3828 = vpack.c.b16 %v3452, %v3448
    %v3829 = vpack.c.b16 %v3453, %v3449
    %v3830 = vpack.c.b16 %v3458, %v3454
    %v3831 = vpack.c.b16 %v3459, %v3455
    %v3832 = vpack.c.b16 %v3460, %v3456
    %v3833 = vpack.c.b16 %v3461, %v3457
    %v3834 = vpack.c.b16 %v3466, %v3462
    %v3835 = vpack.c.b16 %v3467, %v3463
    %v3836 = vpack.c.b16 %v3468, %v3464
    %v3837 = vpack.c.b16 %v3469, %v3465
    %v3838 = vpack.c.b16 %v3474, %v3470
    %v3839 = vpack.c.b16 %v3475, %v3471
    %v3840 = vpack.c.b16 %v3476, %v3472
    %v3841 = vpack.c.b16 %v3477, %v3473
    %v3842 = vpack.c.b16 %v3482, %v3478
    %v3843 = vpack.c.b16 %v3483, %v3479
    %v3844 = vpack.c.b16 %v3484, %v3480
    %v3845 = vpack.c.b16 %v3485, %v3481
    %v3846 = vpack.c.b16 %v3490, %v3486
    %v3847 = vpack.c.b16 %v3491, %v3487
    %v3848 = vpack.c.b16 %v3492, %v3488
    %v3849 = vpack.c.b16 %v3493, %v3489
    %v3850 = vpack.c.b16 %v3498, %v3494
    %v3851 = vpack.c.b16 %v3499, %v3495
    %v3852 = vpack.c.b16 %v3500, %v3496
    %v3853 = vpack.c.b16 %v3501, %v3497
    %v3854 = vpack.c.b16 %v3506, %v3502
    %v3855 = vpack.c.b16 %v3507, %v3503
    %v3856 = vpack.c.b16 %v3508, %v3504
    %v3857 = vpack.c.b16 %v3509, %v3505
    %v3858 = vpack.c.b16 %v3514, %v3510
    %v3859 = vpack.c.b16 %v3515, %v3511
    %v3860 = vpack.c.b16 %v3516, %v3512
    %v3861 = vpack.c.b16 %v3517, %v3513
    %v3862 = vpack.c.b16 %v3522, %v3518
    %v3863 = vpack.c.b16 %v3523, %v3519
    %v3864 = vpack.c.b16 %v3524, %v3520
    %v3865 = vpack.c.b16 %v3525, %v3521
    %v3866 = vpack.c.b16 %v3530, %v3526
    %v3867 = vpack.c.b16 %v3531, %v3527
    %v3868 = vpack.c.b16 %v3532, %v3528
    %v3869 = vpack.c.b16 %v3533, %v3529
    %v3870 = vpack.c.b16 %v3538, %v3534
    %v3871 = vpack.c.b16 %v3539, %v3535
    %v3872 = vpack.c.b16 %v3540, %v3536
    %v3873 = vpack.c.b16 %v3541, %v3537
    %v3874 = vpack.c.b16 %v3546, %v3542
    %v3875 = vpack.c.b16 %v3547, %v3543
    %v3876 = vpack.c.b16 %v3548, %v3544
    %v3877 = vpack.c.b16 %v3549, %v3545
    %v3878 = vpack.c.b16 %v3554, %v3550
    %v3879 = vpack.c.b16 %v3555, %v3551
    %v3880 = vpack.c.b16 %v3556, %v3552
    %v3881 = vpack.c.b16 %v3557, %v3553
    %v3882 = vpack.c.b16 %v3562, %v3558
    %v3883 = vpack.c.b16 %v3563, %v3559
    %v3884 = vpack.c.b16 %v3564, %v3560
    %v3885 = vpack.c.b16 %v3565, %v3561
    %v3886 = vpack.c.b16 %v3570, %v3566
    %v3887 = vpack.c.b16 %v3571, %v3567
    %v3888 = vpack.c.b16 %v3572, %v3568
    %v3889 = vpack.c.b16 %v3573, %v3569
    %v3890 = vpack.c.b16 %v3578, %v3574
    %v3891 = vpack.c.b16 %v3579, %v3575
    %v3892 = vpack.c.b16 %v3580, %v3576
    %v3893 = vpack.c.b16 %v3581, %v3577
    %v3894 = vpack.c.b16 %v3586, %v3582
    %v3895 = vpack.c.b16 %v3587, %v3583
    %v3896 = vpack.c.b16 %v3588, %v3584
    %v3897 = vpack.c.b16 %v3589, %v3585
    %v3898 = vpack.c.b16 %v3594, %v3590
    %v3899 = vpack.c.b16 %v3595, %v3591
    %v3900 = vpack.c.b16 %v3596, %v3592
    %v3901 = vpack.c.b16 %v3597, %v3593
    %v3902 = vpack.c.b16 %v3602, %v3598
    %v3903 = vpack.c.b16 %v3603, %v3599
    %v3904 = vpack.c.b16 %v3604, %v3600
    %v3905 = vpack.c.b16 %v3605, %v3601
    %v3906 = vpack.c.b16 %v3610, %v3606
    %v3907 = vpack.c.b16 %v3611, %v3607
    %v3908 = vpack.c.b16 %v3612, %v3608
    %v3909 = vpack.c.b16 %v3613, %v3609
    %v3910 = vpack.c.b16 %v3618, %v3614
    %v3911 = vpack.c.b16 %v3619, %v3615
    %v3912 = vpack.c.b16 %v3620, %v3616
    %v3913 = vpack.c.b16 %v3621, %v3617
    %v3914 = vpack.c.b16 %v3626, %v3622
    %v3915 = vpack.c.b16 %v3627, %v3623
    %v3916 = vpack.c.b16 %v3628, %v3624
    %v3917 = vpack.c.b16 %v3629, %v3625
    %v3918 = vpack.c.b16 %v3634, %v3630
    %v3919 = vpack.c.b16 %v3635, %v3631
    %v3920 = vpack.c.b16 %v3636, %v3632
    %v3921 = vpack.c.b16 %v3637, %v3633
    %v3922 = vpack.c.b16 %v3642, %v3638
    %v3923 = vpack.c.b16 %v3643, %v3639
    %v3924 = vpack.c.b16 %v3644, %v3640
    %v3925 = vpack.c.b16 %v3645, %v3641
    %v3926 = vpack.c.b16 %v3650, %v3646
    %v3927 = vpack.c.b16 %v3651, %v3647
    %v3928 = vpack.c.b16 %v3652, %v3648
    %v3929 = vpack.c.b16 %v3653, %v3649
    %v3930 = vpack.c.b16 %v3658, %v3654
    %v3931 = vpack.c.b16 %v3659, %v3655
    %v3932 = vpack.c.b16 %v3660, %v3656
    %v3933 = vpack.c.b16 %v3661, %v3657
    %v3934 = vpack.c.b16 %v3666, %v3662
    %v3935 = vpack.c.b16 %v3667, %v3663
    %v3936 = vpack.c.b16 %v3668, %v3664
    %v3937 = vpack.c.b16 %v3669, %v3665
    %v3938 = vpack.c.b16 %v3674, %v3670
    %v3939 = vpack.c.b16 %v3675, %v3671
    %v3940 = vpack.c.b16 %v3676, %v3672
    %v3941 = vpack.c.b16 %v3677, %v3673
    %v3942 = vpack.c.b16 %v3682, %v3678
    %v3943 = vpack.c.b16 %v3683, %v3679
    %v3944 = vpack.c.b16 %v3684, %v3680
    %v3945 = vpack.c.b16 %v3685, %v3681
    %v3946 = vpack.c.b16 %v3690, %v3686
    %v3947 = vpack.c.b16 %v3691, %v3687
    %v3948 = vpack.c.b16 %v3692, %v3688
    %v3949 = vpack.c.b16 %v3693, %v3689
    %v3950 = vpack.c.b16 %v3698, %v3694
    %v3951 = vpack.c.b16 %v3699, %v3695
    %v3952 = vpack.c.b16 %v3700, %v3696
    %v3953 = vpack.c.b16 %v3701, %v3697
    %v3954 = vpack.c.b16 %v3706, %v3702
    %v3955 = vpack.c.b16 %v3707, %v3703
    %v3956 = vpack.c.b16 %v3708, %v3704
    %v3957 = vpack.c.b16 %v3709, %v3705
    %v3958 = vpack.c.b16 %v3714, %v3710
    %v3959 = vpack.c.b16 %v3715, %v3711
    %v3960 = vpack.c.b16 %v3716, %v3712
    %v3961 = vpack.c.b16 %v3717, %v3713
    %v3962 = vpack.c.b16 %v3722, %v3718
    %v3963 = vpack.c.b16 %v3723, %v3719
    %v3964 = vpack.c.b16 %v3724, %v3720
    %v3965 = vpack.c.b16 %v3725, %v3721
    %v3966 = vpack.c.b16 %v3730, %v3726
    %v3967 = vpack.c.b16 %v3731, %v3727
    %v3968 = vpack.c.b16 %v3732, %v3728
    %v3969 = vpack.c.b16 %v3733, %v3729
    %v3970 = vpack.c.b16 %v3738, %v3734
    %v3971 = vpack.c.b16 %v3739, %v3735
    %v3972 = vpack.c.b16 %v3740, %v3736
    %v3973 = vpack.c.b16 %v3741, %v3737
    %v3974 = vpack.c.b16 %v3746, %v3742
    %v3975 = vpack.c.b16 %v3747, %v3743
    %v3976 = vpack.c.b16 %v3748, %v3744
    %v3977 = vpack.c.b16 %v3749, %v3745
    %v3978 = vpack.c.b16 %v3754, %v3750
    %v3979 = vpack.c.b16 %v3755, %v3751
    %v3980 = vpack.c.b16 %v3756, %v3752
    %v3981 = vpack.c.b16 %v3757, %v3753
    %v3982 = vpack.c.b16 %v3762, %v3758
    %v3983 = vpack.c.b16 %v3763, %v3759
    %v3984 = vpack.c.b16 %v3764, %v3760
    %v3985 = vpack.c.b16 %v3765, %v3761
    %v3986 = vpack.c.b16 %v3770, %v3766
    %v3987 = vpack.c.b16 %v3771, %v3767
    %v3988 = vpack.c.b16 %v3772, %v3768
    %v3989 = vpack.c.b16 %v3773, %v3769
    %v3990 = vpack.c.b16 %v3778, %v3774
    %v3991 = vpack.c.b16 %v3779, %v3775
    %v3992 = vpack.c.b16 %v3780, %v3776
    %v3993 = vpack.c.b16 %v3781, %v3777
    %v3994 = vpack.c.b16 %v3786, %v3782
    %v3995 = vpack.c.b16 %v3787, %v3783
    %v3996 = vpack.c.b16 %v3788, %v3784
    %v3997 = vpack.c.b16 %v3789, %v3785
    %v3998 = vpack.c.b16 %v3794, %v3790
    %v3999 = vpack.c.b16 %v3795, %v3791
    %v4000 = vpack.c.b16 %v3796, %v3792
    %v4001 = vpack.c.b16 %v3797, %v3793
    %v4002 = vpack.c.b16 %v3802, %v3798
    %v4003 = vpack.c.b16 %v3803, %v3799
    %v4004 = vpack.c.b16 %v3804, %v3800
    %v4005 = vpack.c.b16 %v3805, %v3801
    %v4006 = vpack.c.b16 %v3810, %v3806
    %v4007 = vpack.c.b16 %v3811, %v3807
    %v4008 = vpack.c.b16 %v3812, %v3808
    %v4009 = vpack.c.b16 %v3813, %v3809
    %v4010 = vpack.c.b16 %v3818, %v3814
    %v4011 = vpack.c.b16 %v3819, %v3815
    %v4012 = vpack.c.b16 %v3820, %v3816
    %v4013 = vpack.c.b16 %v3821, %v3817
    %4206 = vmatprep.subr.bf16.mxu0 %v3851
    %4207 = vmatpush1.bf16.msra.mxu0 %v3850
    %4208 = vmatprep.subr.bf16.mxu0 %v3847
    %4209 = vmatpush1.bf16.msra.mxu0 %v3846
    %4210 = vmatprep.subr.bf16.mxu0 %v3843
    %4211 = vmatpush1.bf16.msra.mxu0 %v3842
    %4212 = vmatprep.subr.bf16.mxu0 %v3839
    %4213 = vmatpush1.bf16.msra.mxu0 %v3838
    %4214 = vmatprep.subr.bf16.mxu0 %v3835
    %4215 = vmatpush1.bf16.msra.mxu0 %v3834
    %4216 = vmatprep.subr.bf16.mxu0 %v3831
    %4217 = vmatpush1.bf16.msra.mxu0 %v3830
    %4218 = vmatprep.subr.bf16.mxu0 %v3827
    %4219 = vmatpush1.bf16.msra.mxu0 %v3826
    %4220 = vmatprep.subr.bf16.mxu0 %v3823
    %4221 = vmatpush1.bf16.msra.mxu0 %v3822
    %4222 = vmatprep.subr.bf16.mxu0 %v3883
    %4223 = vmatpush2.bf16.msra.mxu0 %v3882
    %4224 = vmatprep.subr.bf16.mxu0 %v3879
    %4225 = vmatpush2.bf16.msra.mxu0 %v3878
    %4226 = vmatprep.subr.bf16.mxu0 %v3875
    %4227 = vmatpush2.bf16.msra.mxu0 %v3874
    %4228 = vmatprep.subr.bf16.mxu0 %v3871
    %4229 = vmatpush2.bf16.msra.mxu0 %v3870
    %4230 = vmatprep.subr.bf16.mxu0 %v3867
    %4231 = vmatpush2.bf16.msra.mxu0 %v3866
    %4232 = vmatprep.subr.bf16.mxu0 %v3863
    %4233 = vmatpush2.bf16.msra.mxu0 %v3862
    %4234 = vmatprep.subr.bf16.mxu0 %v3859
    %4235 = vmatpush2.bf16.msra.mxu0 %v3858
    %4236 = vmatprep.subr.bf16.mxu0 %v3855
    %4237 = vmatpush2.bf16.msra.mxu0 %v3854
    %4238 = vmatprep.mubr.bf16.mxu0 %v3049
    %4239 = vmatmul.mubr.bf16.gmra.mxu0 %v3048
    %v4240 = vpop.f32.mrf.mxu0
    %v4241 = vadd.f32 0.0, %v4240
    %v4242 = vpop.f32.mrf.mxu0
    %v4243 = vadd.f32 0.0, %v4242
    %v4244 = vpop.f32.mrf.mxu0
    %v4245 = vpop.f32.mrf.mxu0
    %4246 = vdwg.mxu0
    %4247 = vmatprep.subr.bf16.mxu0 %v3915
    %4248 = vmatpush1.bf16.msra.mxu0 %v3914
    %4249 = vmatprep.subr.bf16.mxu0 %v3911
    %4250 = vmatpush1.bf16.msra.mxu0 %v3910
    %4251 = vmatprep.subr.bf16.mxu0 %v3907
    %4252 = vmatpush1.bf16.msra.mxu0 %v3906
    %4253 = vmatprep.subr.bf16.mxu0 %v3903
    %4254 = vmatpush1.bf16.msra.mxu0 %v3902
    %4255 = vmatprep.subr.bf16.mxu0 %v3899
    %4256 = vmatpush1.bf16.msra.mxu0 %v3898
    %4257 = vmatprep.subr.bf16.mxu0 %v3895
    %4258 = vmatpush1.bf16.msra.mxu0 %v3894
    %4259 = vmatprep.subr.bf16.mxu0 %v3891
    %4260 = vmatpush1.bf16.msra.mxu0 %v3890
    %4261 = vmatprep.subr.bf16.mxu0 %v3887
    %4262 = vmatpush1.bf16.msra.mxu0 %v3886
    %4263 = vmatprep.subr.bf16.mxu0 %v3947
    %4264 = vmatpush2.bf16.msra.mxu0 %v3946
    %4265 = vmatprep.subr.bf16.mxu0 %v3943
    %4266 = vmatpush2.bf16.msra.mxu0 %v3942
    %4267 = vmatprep.subr.bf16.mxu0 %v3939
    %4268 = vmatpush2.bf16.msra.mxu0 %v3938
    %4269 = vmatprep.subr.bf16.mxu0 %v3935
    %4270 = vmatpush2.bf16.msra.mxu0 %v3934
    %4271 = vmatprep.subr.bf16.mxu0 %v3931
    %4272 = vmatpush2.bf16.msra.mxu0 %v3930
    %4273 = vmatprep.subr.bf16.mxu0 %v3927
    %4274 = vmatpush2.bf16.msra.mxu0 %v3926
    %4275 = vmatprep.subr.bf16.mxu0 %v3923
    %4276 = vmatpush2.bf16.msra.mxu0 %v3922
    %4277 = vmatprep.subr.bf16.mxu0 %v3919
    %4278 = vmatpush2.bf16.msra.mxu0 %v3918
    %4279 = vmatprep.mubr.bf16.mxu0 %v3051
    %4280 = vmatmul.mubr.bf16.gmra.mxu0 %v3050
    %v4281 = vpop.f32.mrf.mxu0
    %v4282 = vadd.f32 %v4241, %v4281
    %v4283 = vpop.f32.mrf.mxu0
    %v4284 = vadd.f32 %v4243, %v4283
    %v4285 = vpop.f32.mrf.mxu0
    %v4286 = vpop.f32.mrf.mxu0
    %4287 = vdwg.mxu0
    %4288 = vmatprep.subr.bf16.mxu0 %v3979
    %4289 = vmatpush1.bf16.msra.mxu0 %v3978
    %4290 = vmatprep.subr.bf16.mxu0 %v3975
    %4291 = vmatpush1.bf16.msra.mxu0 %v3974
    %4292 = vmatprep.subr.bf16.mxu0 %v3971
    %4293 = vmatpush1.bf16.msra.mxu0 %v3970
    %4294 = vmatprep.subr.bf16.mxu0 %v3967
    %4295 = vmatpush1.bf16.msra.mxu0 %v3966
    %4296 = vmatprep.subr.bf16.mxu0 %v3963
    %4297 = vmatpush1.bf16.msra.mxu0 %v3962
    %4298 = vmatprep.subr.bf16.mxu0 %v3959
    %4299 = vmatpush1.bf16.msra.mxu0 %v3958
    %4300 = vmatprep.subr.bf16.mxu0 %v3955
    %4301 = vmatpush1.bf16.msra.mxu0 %v3954
    %4302 = vmatprep.subr.bf16.mxu0 %v3951
    %4303 = vmatpush1.bf16.msra.mxu0 %v3950
    %4304 = vmatprep.subr.bf16.mxu0 %v4011
    %4305 = vmatpush2.bf16.msra.mxu0 %v4010
    %4306 = vmatprep.subr.bf16.mxu0 %v4007
    %4307 = vmatpush2.bf16.msra.mxu0 %v4006
    %4308 = vmatprep.subr.bf16.mxu0 %v4003
    %4309 = vmatpush2.bf16.msra.mxu0 %v4002
    %4310 = vmatprep.subr.bf16.mxu0 %v3999
    %4311 = vmatpush2.bf16.msra.mxu0 %v3998
    %4312 = vmatprep.subr.bf16.mxu0 %v3995
    %4313 = vmatpush2.bf16.msra.mxu0 %v3994
    %4314 = vmatprep.subr.bf16.mxu0 %v3991
    %4315 = vmatpush2.bf16.msra.mxu0 %v3990
    %4316 = vmatprep.subr.bf16.mxu0 %v3987
    %4317 = vmatpush2.bf16.msra.mxu0 %v3986
    %4318 = vmatprep.subr.bf16.mxu0 %v3983
    %4319 = vmatpush2.bf16.msra.mxu0 %v3982
    %4320 = vmatprep.mubr.bf16.mxu0 %v3053
    %4321 = vmatmul.mubr.bf16.gmra.mxu0 %v3052
    %v4322 = vpop.f32.mrf.mxu0
    %v4323 = vadd.f32 %v4282, %v4322
    %v4324 = vpop.f32.mrf.mxu0
    %v4325 = vadd.f32 %v4284, %v4324
    %v4326 = vpop.f32.mrf.mxu0
    %v4327 = vpop.f32.mrf.mxu0
    %4328 = vdwg.mxu0
    %4329 = vmatprep.subr.bf16.mxu0 %v3853
    %4330 = vmatpush1.bf16.msra.mxu0 %v3852
    %4331 = vmatprep.subr.bf16.mxu0 %v3849
    %4332 = vmatpush1.bf16.msra.mxu0 %v3848
    %4333 = vmatprep.subr.bf16.mxu0 %v3845
    %4334 = vmatpush1.bf16.msra.mxu0 %v3844
    %4335 = vmatprep.subr.bf16.mxu0 %v3841
    %4336 = vmatpush1.bf16.msra.mxu0 %v3840
    %4337 = vmatprep.subr.bf16.mxu0 %v3837
    %4338 = vmatpush1.bf16.msra.mxu0 %v3836
    %4339 = vmatprep.subr.bf16.mxu0 %v3833
    %4340 = vmatpush1.bf16.msra.mxu0 %v3832
    %4341 = vmatprep.subr.bf16.mxu0 %v3829
    %4342 = vmatpush1.bf16.msra.mxu0 %v3828
    %4343 = vmatprep.subr.bf16.mxu0 %v3825
    %4344 = vmatpush1.bf16.msra.mxu0 %v3824
    %4345 = vmatprep.subr.bf16.mxu0 %v3885
    %4346 = vmatpush2.bf16.msra.mxu0 %v3884
    %4347 = vmatprep.subr.bf16.mxu0 %v3881
    %4348 = vmatpush2.bf16.msra.mxu0 %v3880
    %4349 = vmatprep.subr.bf16.mxu0 %v3877
    %4350 = vmatpush2.bf16.msra.mxu0 %v3876
    %4351 = vmatprep.subr.bf16.mxu0 %v3873
    %4352 = vmatpush2.bf16.msra.mxu0 %v3872
    %4353 = vmatprep.subr.bf16.mxu0 %v3869
    %4354 = vmatpush2.bf16.msra.mxu0 %v3868
    %4355 = vmatprep.subr.bf16.mxu0 %v3865
    %4356 = vmatpush2.bf16.msra.mxu0 %v3864
    %4357 = vmatprep.subr.bf16.mxu0 %v3861
    %4358 = vmatpush2.bf16.msra.mxu0 %v3860
    %4359 = vmatprep.subr.bf16.mxu0 %v3857
    %4360 = vmatpush2.bf16.msra.mxu0 %v3856
    %4361 = vmatprep.mubr.bf16.mxu0 %v3049
    %4362 = vmatmul.mubr.bf16.gmra.mxu0 %v3048
    %v4363 = vpop.f32.mrf.mxu0
    %v4364 = vadd.f32 0.0, %v4363
    %v4365 = vpop.f32.mrf.mxu0
    %v4366 = vadd.f32 0.0, %v4365
    %v4367 = vpop.f32.mrf.mxu0
    %v4368 = vpop.f32.mrf.mxu0
    %4369 = vdwg.mxu0
    %4370 = vmatprep.subr.bf16.mxu0 %v3917
    %4371 = vmatpush1.bf16.msra.mxu0 %v3916
    %4372 = vmatprep.subr.bf16.mxu0 %v3913
    %4373 = vmatpush1.bf16.msra.mxu0 %v3912
    %4374 = vmatprep.subr.bf16.mxu0 %v3909
    %4375 = vmatpush1.bf16.msra.mxu0 %v3908
    %4376 = vmatprep.subr.bf16.mxu0 %v3905
    %4377 = vmatpush1.bf16.msra.mxu0 %v3904
    %4378 = vmatprep.subr.bf16.mxu0 %v3901
    %4379 = vmatpush1.bf16.msra.mxu0 %v3900
    %4380 = vmatprep.subr.bf16.mxu0 %v3897
    %4381 = vmatpush1.bf16.msra.mxu0 %v3896
    %4382 = vmatprep.subr.bf16.mxu0 %v3893
    %4383 = vmatpush1.bf16.msra.mxu0 %v3892
    %4384 = vmatprep.subr.bf16.mxu0 %v3889
    %4385 = vmatpush1.bf16.msra.mxu0 %v3888
    %4386 = vmatprep.subr.bf16.mxu0 %v3949
    %4387 = vmatpush2.bf16.msra.mxu0 %v3948
    %4388 = vmatprep.subr.bf16.mxu0 %v3945
    %4389 = vmatpush2.bf16.msra.mxu0 %v3944
    %4390 = vmatprep.subr.bf16.mxu0 %v3941
    %4391 = vmatpush2.bf16.msra.mxu0 %v3940
    %4392 = vmatprep.subr.bf16.mxu0 %v3937
    %4393 = vmatpush2.bf16.msra.mxu0 %v3936
    %4394 = vmatprep.subr.bf16.mxu0 %v3933
    %4395 = vmatpush2.bf16.msra.mxu0 %v3932
    %4396 = vmatprep.subr.bf16.mxu0 %v3929
    %4397 = vmatpush2.bf16.msra.mxu0 %v3928
    %4398 = vmatprep.subr.bf16.mxu0 %v3925
    %4399 = vmatpush2.bf16.msra.mxu0 %v3924
    %4400 = vmatprep.subr.bf16.mxu0 %v3921
    %4401 = vmatpush2.bf16.msra.mxu0 %v3920
    %4402 = vmatprep.mubr.bf16.mxu0 %v3051
    %4403 = vmatmul.mubr.bf16.gmra.mxu0 %v3050
    %v4404 = vpop.f32.mrf.mxu0
    %v4405 = vadd.f32 %v4364, %v4404
    %v4406 = vpop.f32.mrf.mxu0
    %v4407 = vadd.f32 %v4366, %v4406
    %v4408 = vpop.f32.mrf.mxu0
    %v4409 = vpop.f32.mrf.mxu0
    %4410 = vdwg.mxu0
    %4411 = vmatprep.subr.bf16.mxu0 %v3981
    %4412 = vmatpush1.bf16.msra.mxu0 %v3980
    %4413 = vmatprep.subr.bf16.mxu0 %v3977
    %4414 = vmatpush1.bf16.msra.mxu0 %v3976
    %4415 = vmatprep.subr.bf16.mxu0 %v3973
    %4416 = vmatpush1.bf16.msra.mxu0 %v3972
    %4417 = vmatprep.subr.bf16.mxu0 %v3969
    %4418 = vmatpush1.bf16.msra.mxu0 %v3968
    %4419 = vmatprep.subr.bf16.mxu0 %v3965
    %4420 = vmatpush1.bf16.msra.mxu0 %v3964
    %4421 = vmatprep.subr.bf16.mxu0 %v3961
    %4422 = vmatpush1.bf16.msra.mxu0 %v3960
    %4423 = vmatprep.subr.bf16.mxu0 %v3957
    %4424 = vmatpush1.bf16.msra.mxu0 %v3956
    %4425 = vmatprep.subr.bf16.mxu0 %v3953
    %4426 = vmatpush1.bf16.msra.mxu0 %v3952
    %4427 = vmatprep.subr.bf16.mxu0 %v4013
    %4428 = vmatpush2.bf16.msra.mxu0 %v4012
    %4429 = vmatprep.subr.bf16.mxu0 %v4009
    %4430 = vmatpush2.bf16.msra.mxu0 %v4008
    %4431 = vmatprep.subr.bf16.mxu0 %v4005
    %4432 = vmatpush2.bf16.msra.mxu0 %v4004
    %4433 = vmatprep.subr.bf16.mxu0 %v4001
    %4434 = vmatpush2.bf16.msra.mxu0 %v4000
    %4435 = vmatprep.subr.bf16.mxu0 %v3997
    %4436 = vmatpush2.bf16.msra.mxu0 %v3996
    %4437 = vmatprep.subr.bf16.mxu0 %v3993
    %4438 = vmatpush2.bf16.msra.mxu0 %v3992
    %4439 = vmatprep.subr.bf16.mxu0 %v3989
    %4440 = vmatpush2.bf16.msra.mxu0 %v3988
    %4441 = vmatprep.subr.bf16.mxu0 %v3985
    %4442 = vmatpush2.bf16.msra.mxu0 %v3984
    %4443 = vmatprep.mubr.bf16.mxu0 %v3053
    %4444 = vmatmul.mubr.bf16.gmra.mxu0 %v3052
    %v4445 = vpop.f32.mrf.mxu0
    %v4446 = vadd.f32 %v4405, %v4445
    %v4447 = vpop.f32.mrf.mxu0
    %v4448 = vadd.f32 %v4407, %v4447
    %v4449 = vpop.f32.mrf.mxu0
    %v4450 = vpop.f32.mrf.mxu0
    %4451 = vdwg.mxu0
    %v4452 = vld [vmem:[%s2943] sm:$0xff]
    %v4453 = vld [vmem:[%s2943 + $0x8] sm:$0xff]
    %v4454 = vld [vmem:[%s2943] sm:$0xfe]
    %v4455 = vld [vmem:[%s2943 + $0x8] sm:$0xfe]
    %v4456 = vld [vmem:[%s2943 + $0x10] sm:$0x1]
    %v4457 = vld [vmem:[%s2943 + $0x18] sm:$0x1]
    %v4458 = vld [vmem:[%s2943] sm:$0xfc]
    %v4459 = vld [vmem:[%s2943 + $0x8] sm:$0xfc]
    %v4460 = vld [vmem:[%s2943 + $0x10] sm:$0x3]
    %v4461 = vld [vmem:[%s2943 + $0x18] sm:$0x3]
    %v4466 = vrot.slane %v4454, 1
    %v4467 = vrot.slane %v4456, 1
    %v4468 = vsel %vm3026, %v4466, %v4467
    %v4469 = vrot.slane %v4455, 1
    %v4470 = vrot.slane %v4457, 1
    %v4471 = vsel %vm3026, %v4469, %v4470
    %v4478 = vrot.slane %v4458, 2
    %v4479 = vrot.slane %v4460, 2
    %v4480 = vsel %vm3039, %v4478, %v4479
    %v4481 = vrot.slane %v4459, 2
    %v4482 = vrot.slane %v4461, 2
    %v4483 = vsel %vm3039, %v4481, %v4482
    %v4486 = vpack.c.bf16 %v4452, %v4452
    %v4487 = vpack.c.bf16 %v4453, %v4453
    %v4488 = vpack.c.bf16 %v4468, %v4468
    %v4489 = vpack.c.bf16 %v4471, %v4471
    %v4490 = vpack.c.bf16 %v4480, %v4480
    %v4491 = vpack.c.bf16 %v4483, %v4483
    %4492 = vmatprep.subr.bf16.mxu0 %v3851
    %4493 = vmatpush1.bf16.msra.mxu0 %v3850
    %4494 = vmatprep.subr.bf16.mxu0 %v3847
    %4495 = vmatpush1.bf16.msra.mxu0 %v3846
    %4496 = vmatprep.subr.bf16.mxu0 %v3843
    %4497 = vmatpush1.bf16.msra.mxu0 %v3842
    %4498 = vmatprep.subr.bf16.mxu0 %v3839
    %4499 = vmatpush1.bf16.msra.mxu0 %v3838
    %4500 = vmatprep.subr.bf16.mxu0 %v3835
    %4501 = vmatpush1.bf16.msra.mxu0 %v3834
    %4502 = vmatprep.subr.bf16.mxu0 %v3831
    %4503 = vmatpush1.bf16.msra.mxu0 %v3830
    %4504 = vmatprep.subr.bf16.mxu0 %v3827
    %4505 = vmatpush1.bf16.msra.mxu0 %v3826
    %4506 = vmatprep.subr.bf16.mxu0 %v3823
    %4507 = vmatpush1.bf16.msra.mxu0 %v3822
    %4508 = vmatprep.subr.bf16.mxu0 %v3883
    %4509 = vmatpush2.bf16.msra.mxu0 %v3882
    %4510 = vmatprep.subr.bf16.mxu0 %v3879
    %4511 = vmatpush2.bf16.msra.mxu0 %v3878
    %4512 = vmatprep.subr.bf16.mxu0 %v3875
    %4513 = vmatpush2.bf16.msra.mxu0 %v3874
    %4514 = vmatprep.subr.bf16.mxu0 %v3871
    %4515 = vmatpush2.bf16.msra.mxu0 %v3870
    %4516 = vmatprep.subr.bf16.mxu0 %v3867
    %4517 = vmatpush2.bf16.msra.mxu0 %v3866
    %4518 = vmatprep.subr.bf16.mxu0 %v3863
    %4519 = vmatpush2.bf16.msra.mxu0 %v3862
    %4520 = vmatprep.subr.bf16.mxu0 %v3859
    %4521 = vmatpush2.bf16.msra.mxu0 %v3858
    %4522 = vmatprep.subr.bf16.mxu0 %v3855
    %4523 = vmatpush2.bf16.msra.mxu0 %v3854
    %4524 = vmatprep.mubr.bf16.mxu0 %v4487
    %4525 = vmatmul.mubr.bf16.gmra.mxu0 %v4486
    %v4526 = vpop.f32.mrf.mxu0
    %v4527 = vadd.f32 0.0, %v4526
    %v4528 = vpop.f32.mrf.mxu0
    %v4529 = vadd.f32 0.0, %v4528
    %v4530 = vpop.f32.mrf.mxu0
    %v4531 = vpop.f32.mrf.mxu0
    %4532 = vdwg.mxu0
    %4533 = vmatprep.subr.bf16.mxu0 %v3915
    %4534 = vmatpush1.bf16.msra.mxu0 %v3914
    %4535 = vmatprep.subr.bf16.mxu0 %v3911
    %4536 = vmatpush1.bf16.msra.mxu0 %v3910
    %4537 = vmatprep.subr.bf16.mxu0 %v3907
    %4538 = vmatpush1.bf16.msra.mxu0 %v3906
    %4539 = vmatprep.subr.bf16.mxu0 %v3903
    %4540 = vmatpush1.bf16.msra.mxu0 %v3902
    %4541 = vmatprep.subr.bf16.mxu0 %v3899
    %4542 = vmatpush1.bf16.msra.mxu0 %v3898
    %4543 = vmatprep.subr.bf16.mxu0 %v3895
    %4544 = vmatpush1.bf16.msra.mxu0 %v3894
    %4545 = vmatprep.subr.bf16.mxu0 %v3891
    %4546 = vmatpush1.bf16.msra.mxu0 %v3890
    %4547 = vmatprep.subr.bf16.mxu0 %v3887
    %4548 = vmatpush1.bf16.msra.mxu0 %v3886
    %4549 = vmatprep.subr.bf16.mxu0 %v3947
    %4550 = vmatpush2.bf16.msra.mxu0 %v3946
    %4551 = vmatprep.subr.bf16.mxu0 %v3943
    %4552 = vmatpush2.bf16.msra.mxu0 %v3942
    %4553 = vmatprep.subr.bf16.mxu0 %v3939
    %4554 = vmatpush2.bf16.msra.mxu0 %v3938
    %4555 = vmatprep.subr.bf16.mxu0 %v3935
    %4556 = vmatpush2.bf16.msra.mxu0 %v3934
    %4557 = vmatprep.subr.bf16.mxu0 %v3931
    %4558 = vmatpush2.bf16.msra.mxu0 %v3930
    %4559 = vmatprep.subr.bf16.mxu0 %v3927
    %4560 = vmatpush2.bf16.msra.mxu0 %v3926
    %4561 = vmatprep.subr.bf16.mxu0 %v3923
    %4562 = vmatpush2.bf16.msra.mxu0 %v3922
    %4563 = vmatprep.subr.bf16.mxu0 %v3919
    %4564 = vmatpush2.bf16.msra.mxu0 %v3918
    %4565 = vmatprep.mubr.bf16.mxu0 %v4489
    %4566 = vmatmul.mubr.bf16.gmra.mxu0 %v4488
    %v4567 = vpop.f32.mrf.mxu0
    %v4568 = vadd.f32 %v4527, %v4567
    %v4569 = vpop.f32.mrf.mxu0
    %v4570 = vadd.f32 %v4529, %v4569
    %v4571 = vpop.f32.mrf.mxu0
    %v4572 = vpop.f32.mrf.mxu0
    %4573 = vdwg.mxu0
    %4574 = vmatprep.subr.bf16.mxu0 %v3979
    %4575 = vmatpush1.bf16.msra.mxu0 %v3978
    %4576 = vmatprep.subr.bf16.mxu0 %v3975
    %4577 = vmatpush1.bf16.msra.mxu0 %v3974
    %4578 = vmatprep.subr.bf16.mxu0 %v3971
    %4579 = vmatpush1.bf16.msra.mxu0 %v3970
    %4580 = vmatprep.subr.bf16.mxu0 %v3967
    %4581 = vmatpush1.bf16.msra.mxu0 %v3966
    %4582 = vmatprep.subr.bf16.mxu0 %v3963
    %4583 = vmatpush1.bf16.msra.mxu0 %v3962
    %4584 = vmatprep.subr.bf16.mxu0 %v3959
    %4585 = vmatpush1.bf16.msra.mxu0 %v3958
    %4586 = vmatprep.subr.bf16.mxu0 %v3955
    %4587 = vmatpush1.bf16.msra.mxu0 %v3954
    %4588 = vmatprep.subr.bf16.mxu0 %v3951
    %4589 = vmatpush1.bf16.msra.mxu0 %v3950
    %4590 = vmatprep.subr.bf16.mxu0 %v4011
    %4591 = vmatpush2.bf16.msra.mxu0 %v4010
    %4592 = vmatprep.subr.bf16.mxu0 %v4007
    %4593 = vmatpush2.bf16.msra.mxu0 %v4006
    %4594 = vmatprep.subr.bf16.mxu0 %v4003
    %4595 = vmatpush2.bf16.msra.mxu0 %v4002
    %4596 = vmatprep.subr.bf16.mxu0 %v3999
    %4597 = vmatpush2.bf16.msra.mxu0 %v3998
    %4598 = vmatprep.subr.bf16.mxu0 %v3995
    %4599 = vmatpush2.bf16.msra.mxu0 %v3994
    %4600 = vmatprep.subr.bf16.mxu0 %v3991
    %4601 = vmatpush2.bf16.msra.mxu0 %v3990
    %4602 = vmatprep.subr.bf16.mxu0 %v3987
    %4603 = vmatpush2.bf16.msra.mxu0 %v3986
    %4604 = vmatprep.subr.bf16.mxu0 %v3983
    %4605 = vmatpush2.bf16.msra.mxu0 %v3982
    %4606 = vmatprep.mubr.bf16.mxu0 %v4491
    %4607 = vmatmul.mubr.bf16.gmra.mxu0 %v4490
    %v4608 = vpop.f32.mrf.mxu0
    %v4609 = vadd.f32 %v4568, %v4608
    %v4610 = vpop.f32.mrf.mxu0
    %v4611 = vadd.f32 %v4570, %v4610
    %v4612 = vpop.f32.mrf.mxu0
    %v4613 = vpop.f32.mrf.mxu0
    %4614 = vdwg.mxu0
    %4615 = vmatprep.subr.bf16.mxu0 %v3853
    %4616 = vmatpush1.bf16.msra.mxu0 %v3852
    %4617 = vmatprep.subr.bf16.mxu0 %v3849
    %4618 = vmatpush1.bf16.msra.mxu0 %v3848
    %4619 = vmatprep.subr.bf16.mxu0 %v3845
    %4620 = vmatpush1.bf16.msra.mxu0 %v3844
    %4621 = vmatprep.subr.bf16.mxu0 %v3841
    %4622 = vmatpush1.bf16.msra.mxu0 %v3840
    %4623 = vmatprep.subr.bf16.mxu0 %v3837
    %4624 = vmatpush1.bf16.msra.mxu0 %v3836
    %4625 = vmatprep.subr.bf16.mxu0 %v3833
    %4626 = vmatpush1.bf16.msra.mxu0 %v3832
    %4627 = vmatprep.subr.bf16.mxu0 %v3829
    %4628 = vmatpush1.bf16.msra.mxu0 %v3828
    %4629 = vmatprep.subr.bf16.mxu0 %v3825
    %4630 = vmatpush1.bf16.msra.mxu0 %v3824
    %4631 = vmatprep.subr.bf16.mxu0 %v3885
    %4632 = vmatpush2.bf16.msra.mxu0 %v3884
    %4633 = vmatprep.subr.bf16.mxu0 %v3881
    %4634 = vmatpush2.bf16.msra.mxu0 %v3880
    %4635 = vmatprep.subr.bf16.mxu0 %v3877
    %4636 = vmatpush2.bf16.msra.mxu0 %v3876
    %4637 = vmatprep.subr.bf16.mxu0 %v3873
    %4638 = vmatpush2.bf16.msra.mxu0 %v3872
    %4639 = vmatprep.subr.bf16.mxu0 %v3869
    %4640 = vmatpush2.bf16.msra.mxu0 %v3868
    %4641 = vmatprep.subr.bf16.mxu0 %v3865
    %4642 = vmatpush2.bf16.msra.mxu0 %v3864
    %4643 = vmatprep.subr.bf16.mxu0 %v3861
    %4644 = vmatpush2.bf16.msra.mxu0 %v3860
    %4645 = vmatprep.subr.bf16.mxu0 %v3857
    %4646 = vmatpush2.bf16.msra.mxu0 %v3856
    %4647 = vmatprep.mubr.bf16.mxu0 %v4487
    %4648 = vmatmul.mubr.bf16.gmra.mxu0 %v4486
    %v4649 = vpop.f32.mrf.mxu0
    %v4650 = vadd.f32 0.0, %v4649
    %v4651 = vpop.f32.mrf.mxu0
    %v4652 = vadd.f32 0.0, %v4651
    %v4653 = vpop.f32.mrf.mxu0
    %v4654 = vpop.f32.mrf.mxu0
    %4655 = vdwg.mxu0
    %4656 = vmatprep.subr.bf16.mxu0 %v3917
    %4657 = vmatpush1.bf16.msra.mxu0 %v3916
    %4658 = vmatprep.subr.bf16.mxu0 %v3913
    %4659 = vmatpush1.bf16.msra.mxu0 %v3912
    %4660 = vmatprep.subr.bf16.mxu0 %v3909
    %4661 = vmatpush1.bf16.msra.mxu0 %v3908
    %4662 = vmatprep.subr.bf16.mxu0 %v3905
    %4663 = vmatpush1.bf16.msra.mxu0 %v3904
    %4664 = vmatprep.subr.bf16.mxu0 %v3901
    %4665 = vmatpush1.bf16.msra.mxu0 %v3900
    %4666 = vmatprep.subr.bf16.mxu0 %v3897
    %4667 = vmatpush1.bf16.msra.mxu0 %v3896
    %4668 = vmatprep.subr.bf16.mxu0 %v3893
    %4669 = vmatpush1.bf16.msra.mxu0 %v3892
    %4670 = vmatprep.subr.bf16.mxu0 %v3889
    %4671 = vmatpush1.bf16.msra.mxu0 %v3888
    %4672 = vmatprep.subr.bf16.mxu0 %v3949
    %4673 = vmatpush2.bf16.msra.mxu0 %v3948
    %4674 = vmatprep.subr.bf16.mxu0 %v3945
    %4675 = vmatpush2.bf16.msra.mxu0 %v3944
    %4676 = vmatprep.subr.bf16.mxu0 %v3941
    %4677 = vmatpush2.bf16.msra.mxu0 %v3940
    %4678 = vmatprep.subr.bf16.mxu0 %v3937
    %4679 = vmatpush2.bf16.msra.mxu0 %v3936
    %4680 = vmatprep.subr.bf16.mxu0 %v3933
    %4681 = vmatpush2.bf16.msra.mxu0 %v3932
    %4682 = vmatprep.subr.bf16.mxu0 %v3929
    %4683 = vmatpush2.bf16.msra.mxu0 %v3928
    %4684 = vmatprep.subr.bf16.mxu0 %v3925
    %4685 = vmatpush2.bf16.msra.mxu0 %v3924
    %4686 = vmatprep.subr.bf16.mxu0 %v3921
    %4687 = vmatpush2.bf16.msra.mxu0 %v3920
    %4688 = vmatprep.mubr.bf16.mxu0 %v4489
    %4689 = vmatmul.mubr.bf16.gmra.mxu0 %v4488
    %v4690 = vpop.f32.mrf.mxu0
    %v4691 = vadd.f32 %v4650, %v4690
    %v4692 = vpop.f32.mrf.mxu0
    %v4693 = vadd.f32 %v4652, %v4692
    %v4694 = vpop.f32.mrf.mxu0
    %v4695 = vpop.f32.mrf.mxu0
    %4696 = vdwg.mxu0
    %4697 = vmatprep.subr.bf16.mxu0 %v3981
    %4698 = vmatpush1.bf16.msra.mxu0 %v3980
    %4699 = vmatprep.subr.bf16.mxu0 %v3977
    %4700 = vmatpush1.bf16.msra.mxu0 %v3976
    %4701 = vmatprep.subr.bf16.mxu0 %v3973
    %4702 = vmatpush1.bf16.msra.mxu0 %v3972
    %4703 = vmatprep.subr.bf16.mxu0 %v3969
    %4704 = vmatpush1.bf16.msra.mxu0 %v3968
    %4705 = vmatprep.subr.bf16.mxu0 %v3965
    %4706 = vmatpush1.bf16.msra.mxu0 %v3964
    %4707 = vmatprep.subr.bf16.mxu0 %v3961
    %4708 = vmatpush1.bf16.msra.mxu0 %v3960
    %4709 = vmatprep.subr.bf16.mxu0 %v3957
    %4710 = vmatpush1.bf16.msra.mxu0 %v3956
    %4711 = vmatprep.subr.bf16.mxu0 %v3953
    %4712 = vmatpush1.bf16.msra.mxu0 %v3952
    %4713 = vmatprep.subr.bf16.mxu0 %v4013
    %4714 = vmatpush2.bf16.msra.mxu0 %v4012
    %4715 = vmatprep.subr.bf16.mxu0 %v4009
    %4716 = vmatpush2.bf16.msra.mxu0 %v4008
    %4717 = vmatprep.subr.bf16.mxu0 %v4005
    %4718 = vmatpush2.bf16.msra.mxu0 %v4004
    %4719 = vmatprep.subr.bf16.mxu0 %v4001
    %4720 = vmatpush2.bf16.msra.mxu0 %v4000
    %4721 = vmatprep.subr.bf16.mxu0 %v3997
    %4722 = vmatpush2.bf16.msra.mxu0 %v3996
    %4723 = vmatprep.subr.bf16.mxu0 %v3993
    %4724 = vmatpush2.bf16.msra.mxu0 %v3992
    %4725 = vmatprep.subr.bf16.mxu0 %v3989
    %4726 = vmatpush2.bf16.msra.mxu0 %v3988
    %4727 = vmatprep.subr.bf16.mxu0 %v3985
    %4728 = vmatpush2.bf16.msra.mxu0 %v3984
    %4729 = vmatprep.mubr.bf16.mxu0 %v4491
    %4730 = vmatmul.mubr.bf16.gmra.mxu0 %v4490
    %v4731 = vpop.f32.mrf.mxu0
    %v4732 = vadd.f32 %v4691, %v4731
    %v4733 = vpop.f32.mrf.mxu0
    %v4734 = vadd.f32 %v4693, %v4733
    %v4735 = vpop.f32.mrf.mxu0
    %v4736 = vpop.f32.mrf.mxu0
    %4737 = vdwg.mxu0
    %v4738 = vrot.slane %v4323, 4
    %v4739 = vadd.f32 %v4323, %v4738
    %v4740 = vrot.slane %v4739, 2
    %v4741 = vadd.f32 %v4739, %v4740
    %v4742 = vrot.slane %v4741, 1
    %v4743 = vadd.f32 %v4741, %v4742
    %v4744 = vrot.slane %v4325, 4
    %v4745 = vadd.f32 %v4325, %v4744
    %v4746 = vrot.slane %v4745, 2
    %v4747 = vadd.f32 %v4745, %v4746
    %v4748 = vrot.slane %v4747, 1
    %v4749 = vadd.f32 %v4747, %v4748
    %v4750 = vrot.slane %v4446, 4
    %v4751 = vadd.f32 %v4446, %v4750
    %v4752 = vrot.slane %v4751, 2
    %v4753 = vadd.f32 %v4751, %v4752
    %v4754 = vrot.slane %v4753, 1
    %v4755 = vadd.f32 %v4753, %v4754
    %v4756 = vrot.slane %v4448, 4
    %v4757 = vadd.f32 %v4448, %v4756
    %v4758 = vrot.slane %v4757, 2
    %v4759 = vadd.f32 %v4757, %v4758
    %v4760 = vrot.slane %v4759, 1
    %v4761 = vadd.f32 %v4759, %v4760
    %v4762 = vrot.slane %v4609, 4
    %v4763 = vadd.f32 %v4609, %v4762
    %v4764 = vrot.slane %v4763, 2
    %v4765 = vadd.f32 %v4763, %v4764
    %v4766 = vrot.slane %v4765, 1
    %v4767 = vadd.f32 %v4765, %v4766
    %v4768 = vrot.slane %v4611, 4
    %v4769 = vadd.f32 %v4611, %v4768
    %v4770 = vrot.slane %v4769, 2
    %v4771 = vadd.f32 %v4769, %v4770
    %v4772 = vrot.slane %v4771, 1
    %v4773 = vadd.f32 %v4771, %v4772
    %v4774 = vrot.slane %v4732, 4
    %v4775 = vadd.f32 %v4732, %v4774
    %v4776 = vrot.slane %v4775, 2
    %v4777 = vadd.f32 %v4775, %v4776
    %v4778 = vrot.slane %v4777, 1
    %v4779 = vadd.f32 %v4777, %v4778
    %v4780 = vrot.slane %v4734, 4
    %v4781 = vadd.f32 %v4734, %v4780
    %v4782 = vrot.slane %v4781, 2
    %v4783 = vadd.f32 %v4781, %v4782
    %v4784 = vrot.slane %v4783, 1
    %v4785 = vadd.f32 %v4783, %v4784
    %v4786 = vadd.f32 %v4743, %v4767
    %v4787 = vadd.f32 %v4749, %v4773
    %v4788 = vadd.f32 %v4755, %v4779
    %v4789 = vadd.f32 %v4761, %v4785
    %v4790 = vadd.f32 %v4786, %v4788
    %v4791 = vadd.f32 %v4787, %v4789
    %v4792 = vadd.f32 %v4790, %v4791
    %4794 = vrot.lane.b32.xlu0 %v4792, 64
    %v4795 = vpop.permute.xlu0 %4794
    %v4797 = vadd.f32 %v4792, %v4795
    %4799 = vrot.lane.b32.xlu0 %v4797, 96
    %v4800 = vpop.permute.xlu0 %4799
    %v4802 = vadd.f32 %v4797, %v4800
    %4804 = vrot.lane.b32.xlu0 %v4802, 112
    %v4805 = vpop.permute.xlu0 %4804
    %v4807 = vadd.f32 %v4802, %v4805
    %v4808 = vmul.f32 %v4807, 0.001953125
    %4810 = vrot.lane.b32.xlu0 %v4808, 16
    %v4811 = vpop.permute.xlu0 %4810
    %v4813 = vsel %vm263, %v4808, %v4811
    %4815 = vrot.lane.b32.xlu0 %v4813, 32
    %v4816 = vpop.permute.xlu0 %4815
    %v4818 = vsel %vm362, %v4813, %v4816
    %4820 = vrot.lane.b32.xlu0 %v4818, 64
    %v4821 = vpop.permute.xlu0 %4820
    %v4823 = vsel %vm604, %v4818, %v4821
    %v4824 = vlaneseq
    %v4825 = vshrl.u32 %v4824, 7
    %v4826 = vsub.s32 0, %v4825
    %v4827 = vrot.slane %v4823, %v4826
    %v4828 = vsub.f32 %v4323, %v4827
    %v4829 = vsub.f32 %v4325, %v4827
    %v4830 = vsub.f32 %v4446, %v4827
    %v4831 = vsub.f32 %v4448, %v4827
    %v4832 = vmul.f32 %v4828, %v4828
    %v4833 = vmul.f32 %v4829, %v4829
    %v4834 = vmul.f32 %v4830, %v4830
    %v4835 = vmul.f32 %v4831, %v4831
    %v4836 = vrot.slane %v4832, 4
    %v4837 = vadd.f32 %v4832, %v4836
    %v4838 = vrot.slane %v4837, 2
    %v4839 = vadd.f32 %v4837, %v4838
    %v4840 = vrot.slane %v4839, 1
    %v4841 = vadd.f32 %v4839, %v4840
    %v4842 = vrot.slane %v4833, 4
    %v4843 = vadd.f32 %v4833, %v4842
    %v4844 = vrot.slane %v4843, 2
    %v4845 = vadd.f32 %v4843, %v4844
    %v4846 = vrot.slane %v4845, 1
    %v4847 = vadd.f32 %v4845, %v4846
    %v4848 = vrot.slane %v4834, 4
    %v4849 = vadd.f32 %v4834, %v4848
    %v4850 = vrot.slane %v4849, 2
    %v4851 = vadd.f32 %v4849, %v4850
    %v4852 = vrot.slane %v4851, 1
    %v4853 = vadd.f32 %v4851, %v4852
    %v4854 = vrot.slane %v4835, 4
    %v4855 = vadd.f32 %v4835, %v4854
    %v4856 = vrot.slane %v4855, 2
    %v4857 = vadd.f32 %v4855, %v4856
    %v4858 = vrot.slane %v4857, 1
    %v4859 = vadd.f32 %v4857, %v4858
    %v4860 = vsub.f32 %v4609, %v4827
    %v4861 = vsub.f32 %v4611, %v4827
    %v4862 = vsub.f32 %v4732, %v4827
    %v4863 = vsub.f32 %v4734, %v4827
    %v4864 = vmul.f32 %v4860, %v4860
    %v4865 = vmul.f32 %v4861, %v4861
    %v4866 = vmul.f32 %v4862, %v4862
    %v4867 = vmul.f32 %v4863, %v4863
    %v4868 = vrot.slane %v4864, 4
    %v4869 = vadd.f32 %v4864, %v4868
    %v4870 = vrot.slane %v4869, 2
    %v4871 = vadd.f32 %v4869, %v4870
    %v4872 = vrot.slane %v4871, 1
    %v4873 = vadd.f32 %v4871, %v4872
    %v4874 = vrot.slane %v4865, 4
    %v4875 = vadd.f32 %v4865, %v4874
    %v4876 = vrot.slane %v4875, 2
    %v4877 = vadd.f32 %v4875, %v4876
    %v4878 = vrot.slane %v4877, 1
    %v4879 = vadd.f32 %v4877, %v4878
    %v4880 = vrot.slane %v4866, 4
    %v4881 = vadd.f32 %v4866, %v4880
    %v4882 = vrot.slane %v4881, 2
    %v4883 = vadd.f32 %v4881, %v4882
    %v4884 = vrot.slane %v4883, 1
    %v4885 = vadd.f32 %v4883, %v4884
    %v4886 = vrot.slane %v4867, 4
    %v4887 = vadd.f32 %v4867, %v4886
    %v4888 = vrot.slane %v4887, 2
    %v4889 = vadd.f32 %v4887, %v4888
    %v4890 = vrot.slane %v4889, 1
    %v4891 = vadd.f32 %v4889, %v4890
    %v4892 = vadd.f32 %v4841, %v4873
    %v4893 = vadd.f32 %v4847, %v4879
    %v4894 = vadd.f32 %v4853, %v4885
    %v4895 = vadd.f32 %v4859, %v4891
    %v4896 = vadd.f32 %v4892, %v4894
    %v4897 = vadd.f32 %v4893, %v4895
    %v4898 = vadd.f32 %v4896, %v4897
    %4900 = vrot.lane.b32.xlu0 %v4898, 64
    %v4901 = vpop.permute.xlu0 %4900
    %v4903 = vadd.f32 %v4898, %v4901
    %4905 = vrot.lane.b32.xlu0 %v4903, 96
    %v4906 = vpop.permute.xlu0 %4905
    %v4908 = vadd.f32 %v4903, %v4906
    %4910 = vrot.lane.b32.xlu0 %v4908, 112
    %v4911 = vpop.permute.xlu0 %4910
    %v4913 = vadd.f32 %v4908, %v4911
    %v4914 = vmul.f32 %v4913, 0.001953125
    %v4915 = vld [vmem:[%s11] sm:$0x1]
    %v4916 = vadd.f32 %v4914, 1e-05
    %v4917 = vrsqrt.pop %v4916
    %v4918 = vmul.f32 %v4915, %v4917
    %v4919 = vld [vmem:[#allocation17] sm:$0x1]
    %v4920 = vmul.f32 %v4808, %v4918
    %v4921 = vsub.f32 %v4919, %v4920
    %v4923 = vlaneseq
    %v4924 = vshrl.u32 %v4923, 7
    %v4925 = vsub.s32 0, %v4924
    %v4926 = vrot.slane %v4918, %v4925
    %4927 = vrot.lane.b32.xlu0 %v4926, 16
    %v4928 = vpop.permute.xlu0 %4927
    %v4930 = vsel %vm263, %v4918, %v4928
    %4932 = vrot.lane.b32.xlu0 %v4930, 32
    %v4933 = vpop.permute.xlu0 %4932
    %v4935 = vsel %vm362, %v4930, %v4933
    %4937 = vrot.lane.b32.xlu0 %v4935, 64
    %v4938 = vpop.permute.xlu0 %4937
    %v4940 = vsel %vm604, %v4935, %v4938
    %v4942 = vlaneseq
    %v4943 = vshrl.u32 %v4942, 7
    %v4944 = vsub.s32 0, %v4943
    %v4945 = vrot.slane %v4921, %v4944
    %4946 = vrot.lane.b32.xlu0 %v4945, 16
    %v4947 = vpop.permute.xlu0 %4946
    %v4949 = vsel %vm263, %v4921, %v4947
    %4951 = vrot.lane.b32.xlu0 %v4949, 32
    %v4952 = vpop.permute.xlu0 %4951
    %v4954 = vsel %vm362, %v4949, %v4952
    %4956 = vrot.lane.b32.xlu0 %v4954, 64
    %v4957 = vpop.permute.xlu0 %4956
    %v4959 = vsel %vm604, %v4954, %v4957
    %v4960 = vlaneseq
    %v4961 = vshrl.u32 %v4960, 7
    %v4962 = vsub.s32 0, %v4961
    %v4963 = vrot.slane %v4940, %v4962
    %v4964 = vmul.f32 %v4323, %v4963
    %v4965 = vmul.f32 %v4325, %v4963
    %v4966 = vmul.f32 %v4446, %v4963
    %v4967 = vmul.f32 %v4448, %v4963
    %v4968 = vlaneseq
    %v4969 = vshrl.u32 %v4968, 7
    %v4970 = vsub.s32 0, %v4969
    %v4971 = vrot.slane %v4959, %v4970
    %v4972 = vadd.f32 %v4964, %v4971
    %v4973 = vadd.f32 %v4965, %v4971
    %v4974 = vadd.f32 %v4966, %v4971
    %v4975 = vadd.f32 %v4967, %v4971
    %v4976 = vmax.f32 %v4972, 0.0
    %v4977 = vmax.f32 %v4973, 0.0
    %v4978 = vmax.f32 %v4974, 0.0
    %v4979 = vmax.f32 %v4975, 0.0
    %v4980 = vmul.f32 %v4609, %v4963
    %v4981 = vmul.f32 %v4611, %v4963
    %v4982 = vmul.f32 %v4732, %v4963
    %v4983 = vmul.f32 %v4734, %v4963
    %v4984 = vadd.f32 %v4980, %v4971
    %v4985 = vadd.f32 %v4981, %v4971
    %v4986 = vadd.f32 %v4982, %v4971
    %v4987 = vadd.f32 %v4983, %v4971
    %v4988 = vmax.f32 %v4984, 0.0
    %v4989 = vmax.f32 %v4985, 0.0
    %v4990 = vmax.f32 %v4986, 0.0
    %v4991 = vmax.f32 %v4987, 0.0
    %4992 = vst [vmem:[#allocation4] sm:$0xff] 0.0
    %4993 = vst [vmem:[#allocation4 + $0x8] sm:$0xff] 0.0
    %4994 = vst [vmem:[#allocation4 + $0x10] sm:$0xff] 0.0
    %4995 = vst [vmem:[#allocation4 + $0x18] sm:$0xff] 0.0
    %4996 = vst [vmem:[#allocation4 + $0x20] sm:$0x3] 0.0
    %4997 = vst [vmem:[#allocation4 + $0x28] sm:$0x3] 0.0
    %4998 = vst [vmem:[#allocation4 + $0x30] sm:$0xff] 0.0
    %4999 = vst [vmem:[#allocation4 + $0x38] sm:$0xff] 0.0
    %5000 = vst [vmem:[#allocation4 + $0x40] sm:$0xff] 0.0
    %5001 = vst [vmem:[#allocation4 + $0x48] sm:$0xff] 0.0
    %5002 = vst [vmem:[#allocation4 + $0x50] sm:$0x3] 0.0
    %5003 = vst [vmem:[#allocation4 + $0x58] sm:$0x3] 0.0
    %v5006 = vcombine.low %v4976, %v4977
    %v5008 = vunpack.c.l.s4 1966171168
    %v5009 = vunpack.c.0.s8 %v5008
    %v5010 = vlaneseq
    %v5011 = vshrl.u32 %v5010, 7
    %v5012 = vsub.s32 %v5009, %v5011
    %v5013 = vrot.slane %v5006, %v5012
    %v5015 = vunpack.c.l.s4 1966171168
    %v5016 = vunpack.c.0.s8 %v5015
    %v5017 = vlaneseq
    %v5018 = vshrl.u32 %v5017, 7
    %v5019 = vsub.s32 %v5016, %v5018
    %v5020 = vrot.slane %v5013, %v5019
    %s5022 = scalar_lea.vmem [#allocation4], 1
    %5023 = vst.msk [vmem:[%s5022] ss:$8 sm:$0x3] %vm777, %v5020
    %5024 = vst.msk [vmem:[%s5022] ss:$8 sm:$0x0] %vm777, %v5020
    %v5027 = vcombine.low %v4978, %v4979
    %v5029 = vunpack.c.l.s4 1966171168
    %v5030 = vunpack.c.0.s8 %v5029
    %v5031 = vlaneseq
    %v5032 = vshrl.u32 %v5031, 7
    %v5033 = vsub.s32 %v5030, %v5032
    %v5034 = vrot.slane %v5027, %v5033
    %v5036 = vunpack.c.l.s4 1966171168
    %v5037 = vunpack.c.0.s8 %v5036
    %v5038 = vlaneseq
    %v5039 = vshrl.u32 %v5038, 7
    %v5040 = vsub.s32 %v5037, %v5039
    %v5041 = vrot.slane %v5034, %v5040
    %s5043 = scalar_lea.vmem [#allocation4], 2
    %5044 = vst.msk [vmem:[%s5043] ss:$8 sm:$0x3] %vm777, %v5041
    %5045 = vst.msk [vmem:[%s5043] ss:$8 sm:$0x0] %vm777, %v5041
    %v5046 = vcombine.high %v5013, %v5013
    %v5048 = vunpack.c.l.s4 1966171168
    %v5049 = vunpack.c.0.s8 %v5048
    %v5050 = vlaneseq
    %v5051 = vshrl.u32 %v5050, 7
    %v5052 = vsub.s32 %v5049, %v5051
    %v5053 = vrot.slane %v5046, %v5052
    %s5055 = scalar_lea.vmem [#allocation4], 3
    %5056 = vst.msk [vmem:[%s5055] ss:$8 sm:$0x3] %vm777, %v5053
    %5057 = vst.msk [vmem:[%s5055] ss:$8 sm:$0x0] %vm777, %v5053
    %v5058 = vcombine.high %v5034, %v5034
    %v5060 = vunpack.c.l.s4 1966171168
    %v5061 = vunpack.c.0.s8 %v5060
    %v5062 = vlaneseq
    %v5063 = vshrl.u32 %v5062, 7
    %v5064 = vsub.s32 %v5061, %v5063
    %v5065 = vrot.slane %v5058, %v5064
    %s5067 = scalar_lea.vmem [#allocation4], 4
    %5068 = vst.msk [vmem:[%s5067] ss:$8 sm:$0x3] %vm777, %v5065
    %5069 = vst.msk [vmem:[%s5067] ss:$8 sm:$0x0] %vm777, %v5065
    %v5070 = vcombine.high %v5020, %v5020
    %s5072 = scalar_lea.vmem [#allocation4], 5
    %5073 = vst.msk [vmem:[%s5072] ss:$8 sm:$0x3] %vm777, %v5070
    %5074 = vst.msk [vmem:[%s5072] ss:$8 sm:$0x0] %vm777, %v5070
    %v5075 = vcombine.high %v5041, %v5041
    %s5077 = scalar_lea.vmem [#allocation4], 6
    %5078 = vst.msk [vmem:[%s5077] ss:$8 sm:$0x3] %vm777, %v5075
    %5079 = vst.msk [vmem:[%s5077] ss:$8 sm:$0x0] %vm777, %v5075
    %v5080 = vcombine.high %v5053, %v5053
    %s5082 = scalar_lea.vmem [#allocation4], 7
    %5083 = vst.msk [vmem:[%s5082] ss:$8 sm:$0x3] %vm777, %v5080
    %5084 = vst.msk [vmem:[%s5082] ss:$8 sm:$0x0] %vm777, %v5080
    %v5085 = vcombine.high %v5065, %v5065
    %s5087 = scalar_lea.vmem [#allocation4], 16
    %5088 = vst.msk [vmem:[%s5087] ss:$8 sm:$0x3] %vm777, %v5085
    %5089 = vst.msk [vmem:[%s5087] ss:$8 sm:$0x0] %vm777, %v5085
    %v5090 = vcombine.high %v4976, %v4977
    %v5092 = vunpack.c.l.s4 1966171168
    %v5093 = vunpack.c.0.s8 %v5092
    %v5094 = vlaneseq
    %v5095 = vshrl.u32 %v5094, 7
    %v5096 = vsub.s32 %v5093, %v5095
    %v5097 = vrot.slane %v5090, %v5096
    %v5099 = vunpack.c.l.s4 1966171168
    %v5100 = vunpack.c.0.s8 %v5099
    %v5101 = vlaneseq
    %v5102 = vshrl.u32 %v5101, 7
    %v5103 = vsub.s32 %v5100, %v5102
    %v5104 = vrot.slane %v5097, %v5103
    %s5106 = scalar_lea.vmem [#allocation4], 17
    %5107 = vst.msk [vmem:[%s5106] ss:$8 sm:$0x3] %vm777, %v5104
    %5108 = vst.msk [vmem:[%s5106] ss:$8 sm:$0x0] %vm777, %v5104
    %v5109 = vcombine.high %v4978, %v4979
    %v5111 = vunpack.c.l.s4 1966171168
    %v5112 = vunpack.c.0.s8 %v5111
    %v5113 = vlaneseq
    %v5114 = vshrl.u32 %v5113, 7
    %v5115 = vsub.s32 %v5112, %v5114
    %v5116 = vrot.slane %v5109, %v5115
    %v5118 = vunpack.c.l.s4 1966171168
    %v5119 = vunpack.c.0.s8 %v5118
    %v5120 = vlaneseq
    %v5121 = vshrl.u32 %v5120, 7
    %v5122 = vsub.s32 %v5119, %v5121
    %v5123 = vrot.slane %v5116, %v5122
    %s5125 = scalar_lea.vmem [#allocation4], 18
    %5126 = vst.msk [vmem:[%s5125] ss:$8 sm:$0x3] %vm777, %v5123
    %5127 = vst.msk [vmem:[%s5125] ss:$8 sm:$0x0] %vm777, %v5123
    %v5128 = vcombine.high %v5097, %v5097
    %v5130 = vunpack.c.l.s4 1966171168
    %v5131 = vunpack.c.0.s8 %v5130
    %v5132 = vlaneseq
    %v5133 = vshrl.u32 %v5132, 7
    %v5134 = vsub.s32 %v5131, %v5133
    %v5135 = vrot.slane %v5128, %v5134
    %s5137 = scalar_lea.vmem [#allocation4], 19
    %5138 = vst.msk [vmem:[%s5137] ss:$8 sm:$0x3] %vm777, %v5135
    %5139 = vst.msk [vmem:[%s5137] ss:$8 sm:$0x0] %vm777, %v5135
    %v5140 = vcombine.high %v5116, %v5116
    %v5142 = vunpack.c.l.s4 1966171168
    %v5143 = vunpack.c.0.s8 %v5142
    %v5144 = vlaneseq
    %v5145 = vshrl.u32 %v5144, 7
    %v5146 = vsub.s32 %v5143, %v5145
    %v5147 = vrot.slane %v5140, %v5146
    %s5149 = scalar_lea.vmem [#allocation4], 20
    %5150 = vst.msk [vmem:[%s5149] ss:$8 sm:$0x3] %vm777, %v5147
    %5151 = vst.msk [vmem:[%s5149] ss:$8 sm:$0x0] %vm777, %v5147
    %v5152 = vcombine.high %v5104, %v5104
    %s5154 = scalar_lea.vmem [#allocation4], 21
    %5155 = vst.msk [vmem:[%s5154] ss:$8 sm:$0x3] %vm777, %v5152
    %5156 = vst.msk [vmem:[%s5154] ss:$8 sm:$0x0] %vm777, %v5152
    %v5157 = vcombine.high %v5123, %v5123
    %s5159 = scalar_lea.vmem [#allocation4], 22
    %5160 = vst.msk [vmem:[%s5159] ss:$8 sm:$0x3] %vm777, %v5157
    %5161 = vst.msk [vmem:[%s5159] ss:$8 sm:$0x0] %vm777, %v5157
    %v5162 = vcombine.high %v5135, %v5135
    %s5164 = scalar_lea.vmem [#allocation4], 23
    %5165 = vst.msk [vmem:[%s5164] ss:$8 sm:$0x3] %vm777, %v5162
    %5166 = vst.msk [vmem:[%s5164] ss:$8 sm:$0x0] %vm777, %v5162
    %v5167 = vcombine.high %v5147, %v5147
    %s5169 = scalar_lea.vmem [#allocation4], 32
    %5170 = vst.msk [vmem:[%s5169] ss:$8 sm:$0x3] %vm777, %v5167
    %5171 = vst.msk [vmem:[%s5169] ss:$8 sm:$0x0] %vm777, %v5167
    %v5174 = vcombine.low %v4988, %v4989
    %v5176 = vunpack.c.l.s4 1966171168
    %v5177 = vunpack.c.0.s8 %v5176
    %v5178 = vlaneseq
    %v5179 = vshrl.u32 %v5178, 7
    %v5180 = vsub.s32 %v5177, %v5179
    %v5181 = vrot.slane %v5174, %v5180
    %v5183 = vunpack.c.l.s4 1966171168
    %v5184 = vunpack.c.0.s8 %v5183
    %v5185 = vlaneseq
    %v5186 = vshrl.u32 %v5185, 7
    %v5187 = vsub.s32 %v5184, %v5186
    %v5188 = vrot.slane %v5181, %v5187
    %s5190 = scalar_lea.vmem [#allocation4], 48
    %s5191 = scalar_lea.vmem %s5190, 1 [#allocation4]
    %5192 = vst.msk [vmem:[%s5191] ss:$8 sm:$0x3] %vm777, %v5188
    %5193 = vst.msk [vmem:[%s5191] ss:$8 sm:$0x0] %vm777, %v5188
    %v5196 = vcombine.low %v4990, %v4991
    %v5198 = vunpack.c.l.s4 1966171168
    %v5199 = vunpack.c.0.s8 %v5198
    %v5200 = vlaneseq
    %v5201 = vshrl.u32 %v5200, 7
    %v5202 = vsub.s32 %v5199, %v5201
    %v5203 = vrot.slane %v5196, %v5202
    %v5205 = vunpack.c.l.s4 1966171168
    %v5206 = vunpack.c.0.s8 %v5205
    %v5207 = vlaneseq
    %v5208 = vshrl.u32 %v5207, 7
    %v5209 = vsub.s32 %v5206, %v5208
    %v5210 = vrot.slane %v5203, %v5209
    %s5212 = scalar_lea.vmem %s5190, 2 [#allocation4]
    %5213 = vst.msk [vmem:[%s5212] ss:$8 sm:$0x3] %vm777, %v5210
    %5214 = vst.msk [vmem:[%s5212] ss:$8 sm:$0x0] %vm777, %v5210
    %v5215 = vcombine.high %v5181, %v5181
    %v5217 = vunpack.c.l.s4 1966171168
    %v5218 = vunpack.c.0.s8 %v5217
    %v5219 = vlaneseq
    %v5220 = vshrl.u32 %v5219, 7
    %v5221 = vsub.s32 %v5218, %v5220
    %v5222 = vrot.slane %v5215, %v5221
    %s5224 = scalar_lea.vmem %s5190, 3 [#allocation4]
    %5225 = vst.msk [vmem:[%s5224] ss:$8 sm:$0x3] %vm777, %v5222
    %5226 = vst.msk [vmem:[%s5224] ss:$8 sm:$0x0] %vm777, %v5222
    %v5227 = vcombine.high %v5203, %v5203
    %v5229 = vunpack.c.l.s4 1966171168
    %v5230 = vunpack.c.0.s8 %v5229
    %v5231 = vlaneseq
    %v5232 = vshrl.u32 %v5231, 7
    %v5233 = vsub.s32 %v5230, %v5232
    %v5234 = vrot.slane %v5227, %v5233
    %s5236 = scalar_lea.vmem %s5190, 4 [#allocation4]
    %5237 = vst.msk [vmem:[%s5236] ss:$8 sm:$0x3] %vm777, %v5234
    %5238 = vst.msk [vmem:[%s5236] ss:$8 sm:$0x0] %vm777, %v5234
    %v5239 = vcombine.high %v5188, %v5188
    %s5241 = scalar_lea.vmem %s5190, 5 [#allocation4]
    %5242 = vst.msk [vmem:[%s5241] ss:$8 sm:$0x3] %vm777, %v5239
    %5243 = vst.msk [vmem:[%s5241] ss:$8 sm:$0x0] %vm777, %v5239
    %v5244 = vcombine.high %v5210, %v5210
    %s5246 = scalar_lea.vmem %s5190, 6 [#allocation4]
    %5247 = vst.msk [vmem:[%s5246] ss:$8 sm:$0x3] %vm777, %v5244
    %5248 = vst.msk [vmem:[%s5246] ss:$8 sm:$0x0] %vm777, %v5244
    %v5249 = vcombine.high %v5222, %v5222
    %s5251 = scalar_lea.vmem %s5190, 7 [#allocation4]
    %5252 = vst.msk [vmem:[%s5251] ss:$8 sm:$0x3] %vm777, %v5249
    %5253 = vst.msk [vmem:[%s5251] ss:$8 sm:$0x0] %vm777, %v5249
    %v5254 = vcombine.high %v5234, %v5234
    %s5256 = scalar_lea.vmem %s5190, 16 [#allocation4]
    %5257 = vst.msk [vmem:[%s5256] ss:$8 sm:$0x3] %vm777, %v5254
    %5258 = vst.msk [vmem:[%s5256] ss:$8 sm:$0x0] %vm777, %v5254
    %v5259 = vcombine.high %v4988, %v4989
    %v5261 = vunpack.c.l.s4 1966171168
    %v5262 = vunpack.c.0.s8 %v5261
    %v5263 = vlaneseq
    %v5264 = vshrl.u32 %v5263, 7
    %v5265 = vsub.s32 %v5262, %v5264
    %v5266 = vrot.slane %v5259, %v5265
    %v5268 = vunpack.c.l.s4 1966171168
    %v5269 = vunpack.c.0.s8 %v5268
    %v5270 = vlaneseq
    %v5271 = vshrl.u32 %v5270, 7
    %v5272 = vsub.s32 %v5269, %v5271
    %v5273 = vrot.slane %v5266, %v5272
    %s5275 = scalar_lea.vmem %s5190, 17 [#allocation4]
    %5276 = vst.msk [vmem:[%s5275] ss:$8 sm:$0x3] %vm777, %v5273
    %5277 = vst.msk [vmem:[%s5275] ss:$8 sm:$0x0] %vm777, %v5273
    %v5278 = vcombine.high %v4990, %v4991
    %v5280 = vunpack.c.l.s4 1966171168
    %v5281 = vunpack.c.0.s8 %v5280
    %v5282 = vlaneseq
    %v5283 = vshrl.u32 %v5282, 7
    %v5284 = vsub.s32 %v5281, %v5283
    %v5285 = vrot.slane %v5278, %v5284
    %v5287 = vunpack.c.l.s4 1966171168
    %v5288 = vunpack.c.0.s8 %v5287
    %v5289 = vlaneseq
    %v5290 = vshrl.u32 %v5289, 7
    %v5291 = vsub.s32 %v5288, %v5290
    %v5292 = vrot.slane %v5285, %v5291
    %s5294 = scalar_lea.vmem %s5190, 18 [#allocation4]
    %5295 = vst.msk [vmem:[%s5294] ss:$8 sm:$0x3] %vm777, %v5292
    %5296 = vst.msk [vmem:[%s5294] ss:$8 sm:$0x0] %vm777, %v5292
    %v5297 = vcombine.high %v5266, %v5266
    %v5299 = vunpack.c.l.s4 1966171168
    %v5300 = vunpack.c.0.s8 %v5299
    %v5301 = vlaneseq
    %v5302 = vshrl.u32 %v5301, 7
    %v5303 = vsub.s32 %v5300, %v5302
    %v5304 = vrot.slane %v5297, %v5303
    %s5306 = scalar_lea.vmem %s5190, 19 [#allocation4]
    %5307 = vst.msk [vmem:[%s5306] ss:$8 sm:$0x3] %vm777, %v5304
    %5308 = vst.msk [vmem:[%s5306] ss:$8 sm:$0x0] %vm777, %v5304
    %v5309 = vcombine.high %v5285, %v5285
    %v5311 = vunpack.c.l.s4 1966171168
    %v5312 = vunpack.c.0.s8 %v5311
    %v5313 = vlaneseq
    %v5314 = vshrl.u32 %v5313, 7
    %v5315 = vsub.s32 %v5312, %v5314
    %v5316 = vrot.slane %v5309, %v5315
    %s5318 = scalar_lea.vmem %s5190, 20 [#allocation4]
    %5319 = vst.msk [vmem:[%s5318] ss:$8 sm:$0x3] %vm777, %v5316
    %5320 = vst.msk [vmem:[%s5318] ss:$8 sm:$0x0] %vm777, %v5316
    %v5321 = vcombine.high %v5273, %v5273
    %s5323 = scalar_lea.vmem %s5190, 21 [#allocation4]
    %5324 = vst.msk [vmem:[%s5323] ss:$8 sm:$0x3] %vm777, %v5321
    %5325 = vst.msk [vmem:[%s5323] ss:$8 sm:$0x0] %vm777, %v5321
    %v5326 = vcombine.high %v5292, %v5292
    %s5328 = scalar_lea.vmem %s5190, 22 [#allocation4]
    %5329 = vst.msk [vmem:[%s5328] ss:$8 sm:$0x3] %vm777, %v5326
    %5330 = vst.msk [vmem:[%s5328] ss:$8 sm:$0x0] %vm777, %v5326
    %v5331 = vcombine.high %v5304, %v5304
    %s5333 = scalar_lea.vmem %s5190, 23 [#allocation4]
    %5334 = vst.msk [vmem:[%s5333] ss:$8 sm:$0x3] %vm777, %v5331
    %5335 = vst.msk [vmem:[%s5333] ss:$8 sm:$0x0] %vm777, %v5331
    %v5336 = vcombine.high %v5316, %v5316
    %s5338 = scalar_lea.vmem %s5190, 32 [#allocation4]
    %5339 = vst.msk [vmem:[%s5338] ss:$8 sm:$0x3] %vm777, %v5336
    %5340 = vst.msk [vmem:[%s5338] ss:$8 sm:$0x0] %vm777, %v5336
    %v5341 = vld [vmem:[#allocation4] sm:$0xff]
    %v5342 = vld [vmem:[#allocation4 + $0x8] sm:$0xff]
    %v5343 = vld [vmem:[#allocation4 + $0x10] sm:$0xff]
    %v5344 = vld [vmem:[#allocation4 + $0x18] sm:$0xff]
    %v5345 = vld [vmem:[#allocation4] sm:$0xfe]
    %v5346 = vld [vmem:[#allocation4 + $0x8] sm:$0xfe]
    %v5347 = vld [vmem:[#allocation4 + $0x20] sm:$0x1]
    %v5348 = vld [vmem:[#allocation4 + $0x28] sm:$0x1]
    %v5349 = vld [vmem:[#allocation4] sm:$0xfc]
    %v5350 = vld [vmem:[#allocation4 + $0x8] sm:$0xfc]
    %v5351 = vld [vmem:[#allocation4 + $0x20] sm:$0x3]
    %v5352 = vld [vmem:[#allocation4 + $0x28] sm:$0x3]
    %v5359 = vrot.slane %v5345, 1
    %v5360 = vrot.slane %v5343, 1
    %v5361 = vsel %vm3026, %v5359, %v5360
    %v5362 = vrot.slane %v5346, 1
    %v5363 = vrot.slane %v5344, 1
    %v5364 = vsel %vm3026, %v5362, %v5363
    %v5365 = vrot.slane %v5347, 1
    %v5366 = vsel %vm3026, %v5360, %v5365
    %v5367 = vrot.slane %v5348, 1
    %v5368 = vsel %vm3026, %v5363, %v5367
    %v5377 = vrot.slane %v5349, 2
    %v5378 = vrot.slane %v5343, 2
    %v5379 = vsel %vm3039, %v5377, %v5378
    %v5380 = vrot.slane %v5350, 2
    %v5381 = vrot.slane %v5344, 2
    %v5382 = vsel %vm3039, %v5380, %v5381
    %v5383 = vrot.slane %v5351, 2
    %v5384 = vsel %vm3039, %v5378, %v5383
    %v5385 = vrot.slane %v5352, 2
    %v5386 = vsel %vm3039, %v5381, %v5385
    %v5391 = vpack.c.bf16 %v5343, %v5341
    %v5392 = vpack.c.bf16 %v5344, %v5342
    %v5393 = vpack.c.bf16 %v5366, %v5361
    %v5394 = vpack.c.bf16 %v5368, %v5364
    %v5395 = vpack.c.bf16 %v5384, %v5379
    %v5396 = vpack.c.bf16 %v5386, %v5382
    %v5397 = vld [vmem:[#allocation19] sm:$0xff]
    %v5398 = vld [vmem:[#allocation19 + $0x8] sm:$0xff]
    %v5399 = vld [vmem:[#allocation19 + $0x10] sm:$0xff]
    %v5400 = vld [vmem:[#allocation19 + $0x18] sm:$0xff]
    %v5401 = vld [vmem:[#allocation19 + $0x20] sm:$0xff]
    %v5402 = vld [vmem:[#allocation19 + $0x28] sm:$0xff]
    %v5403 = vld [vmem:[#allocation19 + $0x30] sm:$0xff]
    %v5404 = vld [vmem:[#allocation19 + $0x38] sm:$0xff]
    %v5405 = vld [vmem:[#allocation19 + $0x40] sm:$0xff]
    %v5406 = vld [vmem:[#allocation19 + $0x48] sm:$0xff]
    %v5407 = vld [vmem:[#allocation19 + $0x50] sm:$0xff]
    %v5408 = vld [vmem:[#allocation19 + $0x58] sm:$0xff]
    %v5409 = vld [vmem:[#allocation19 + $0x60] sm:$0xff]
    %v5410 = vld [vmem:[#allocation19 + $0x68] sm:$0xff]
    %v5411 = vld [vmem:[#allocation19 + $0x70] sm:$0xff]
    %v5412 = vld [vmem:[#allocation19 + $0x78] sm:$0xff]
    %v5413 = vld [vmem:[#allocation19 + $0x80] sm:$0xff]
    %v5414 = vld [vmem:[#allocation19 + $0x88] sm:$0xff]
    %v5415 = vld [vmem:[#allocation19 + $0x90] sm:$0xff]
    %v5416 = vld [vmem:[#allocation19 + $0x98] sm:$0xff]
    %v5417 = vld [vmem:[#allocation19 + $0xa0] sm:$0xff]
    %v5418 = vld [vmem:[#allocation19 + $0xa8] sm:$0xff]
    %v5419 = vld [vmem:[#allocation19 + $0xb0] sm:$0xff]
    %v5420 = vld [vmem:[#allocation19 + $0xb8] sm:$0xff]
    %v5421 = vld [vmem:[#allocation19 + $0xc0] sm:$0xff]
    %v5422 = vld [vmem:[#allocation19 + $0xc8] sm:$0xff]
    %v5423 = vld [vmem:[#allocation19 + $0xd0] sm:$0xff]
    %v5424 = vld [vmem:[#allocation19 + $0xd8] sm:$0xff]
    %v5425 = vld [vmem:[#allocation19 + $0xe0] sm:$0xff]
    %v5426 = vld [vmem:[#allocation19 + $0xe8] sm:$0xff]
    %v5427 = vld [vmem:[#allocation19 + $0xf0] sm:$0xff]
    %v5428 = vld [vmem:[#allocation19 + $0xf8] sm:$0xff]
    %v5429 = vld [vmem:[#allocation19 + $0x100] sm:$0xff]
    %v5430 = vld [vmem:[#allocation19 + $0x108] sm:$0xff]
    %v5431 = vld [vmem:[#allocation19 + $0x110] sm:$0xff]
    %v5432 = vld [vmem:[#allocation19 + $0x118] sm:$0xff]
    %v5433 = vld [vmem:[#allocation19 + $0x120] sm:$0xff]
    %v5434 = vld [vmem:[#allocation19 + $0x128] sm:$0xff]
    %v5435 = vld [vmem:[#allocation19 + $0x130] sm:$0xff]
    %v5436 = vld [vmem:[#allocation19 + $0x138] sm:$0xff]
    %v5437 = vld [vmem:[#allocation19 + $0x140] sm:$0xff]
    %v5438 = vld [vmem:[#allocation19 + $0x148] sm:$0xff]
    %v5439 = vld [vmem:[#allocation19 + $0x150] sm:$0xff]
    %v5440 = vld [vmem:[#allocation19 + $0x158] sm:$0xff]
    %v5441 = vld [vmem:[#allocation19 + $0x160] sm:$0xff]
    %v5442 = vld [vmem:[#allocation19 + $0x168] sm:$0xff]
    %v5443 = vld [vmem:[#allocation19 + $0x170] sm:$0xff]
    %v5444 = vld [vmem:[#allocation19 + $0x178] sm:$0xff]
    %v5445 = vld [vmem:[#allocation19 + $0x180] sm:$0xff]
    %v5446 = vld [vmem:[#allocation19 + $0x188] sm:$0xff]
    %v5447 = vld [vmem:[#allocation19 + $0x190] sm:$0xff]
    %v5448 = vld [vmem:[#allocation19 + $0x198] sm:$0xff]
    %v5449 = vld [vmem:[#allocation19 + $0x1a0] sm:$0xff]
    %v5450 = vld [vmem:[#allocation19 + $0x1a8] sm:$0xff]
    %v5451 = vld [vmem:[#allocation19 + $0x1b0] sm:$0xff]
    %v5452 = vld [vmem:[#allocation19 + $0x1b8] sm:$0xff]
    %v5453 = vld [vmem:[#allocation19 + $0x1c0] sm:$0xff]
    %v5454 = vld [vmem:[#allocation19 + $0x1c8] sm:$0xff]
    %v5455 = vld [vmem:[#allocation19 + $0x1d0] sm:$0xff]
    %v5456 = vld [vmem:[#allocation19 + $0x1d8] sm:$0xff]
    %v5457 = vld [vmem:[#allocation19 + $0x1e0] sm:$0xff]
    %v5458 = vld [vmem:[#allocation19 + $0x1e8] sm:$0xff]
    %v5459 = vld [vmem:[#allocation19 + $0x1f0] sm:$0xff]
    %v5460 = vld [vmem:[#allocation19 + $0x1f8] sm:$0xff]
    %v5461 = vld [vmem:[#allocation19 + $0x200] sm:$0xff]
    %v5462 = vld [vmem:[#allocation19 + $0x208] sm:$0xff]
    %v5463 = vld [vmem:[#allocation19 + $0x210] sm:$0xff]
    %v5464 = vld [vmem:[#allocation19 + $0x218] sm:$0xff]
    %v5465 = vld [vmem:[#allocation19 + $0x220] sm:$0xff]
    %v5466 = vld [vmem:[#allocation19 + $0x228] sm:$0xff]
    %v5467 = vld [vmem:[#allocation19 + $0x230] sm:$0xff]
    %v5468 = vld [vmem:[#allocation19 + $0x238] sm:$0xff]
    %v5469 = vld [vmem:[#allocation19 + $0x240] sm:$0xff]
    %v5470 = vld [vmem:[#allocation19 + $0x248] sm:$0xff]
    %v5471 = vld [vmem:[#allocation19 + $0x250] sm:$0xff]
    %v5472 = vld [vmem:[#allocation19 + $0x258] sm:$0xff]
    %v5473 = vld [vmem:[#allocation19 + $0x260] sm:$0xff]
    %v5474 = vld [vmem:[#allocation19 + $0x268] sm:$0xff]
    %v5475 = vld [vmem:[#allocation19 + $0x270] sm:$0xff]
    %v5476 = vld [vmem:[#allocation19 + $0x278] sm:$0xff]
    %v5477 = vld [vmem:[#allocation19 + $0x280] sm:$0xff]
    %v5478 = vld [vmem:[#allocation19 + $0x288] sm:$0xff]
    %v5479 = vld [vmem:[#allocation19 + $0x290] sm:$0xff]
    %v5480 = vld [vmem:[#allocation19 + $0x298] sm:$0xff]
    %v5481 = vld [vmem:[#allocation19 + $0x2a0] sm:$0xff]
    %v5482 = vld [vmem:[#allocation19 + $0x2a8] sm:$0xff]
    %v5483 = vld [vmem:[#allocation19 + $0x2b0] sm:$0xff]
    %v5484 = vld [vmem:[#allocation19 + $0x2b8] sm:$0xff]
    %v5485 = vld [vmem:[#allocation19 + $0x2c0] sm:$0xff]
    %v5486 = vld [vmem:[#allocation19 + $0x2c8] sm:$0xff]
    %v5487 = vld [vmem:[#allocation19 + $0x2d0] sm:$0xff]
    %v5488 = vld [vmem:[#allocation19 + $0x2d8] sm:$0xff]
    %v5489 = vld [vmem:[#allocation19 + $0x2e0] sm:$0xff]
    %v5490 = vld [vmem:[#allocation19 + $0x2e8] sm:$0xff]
    %v5491 = vld [vmem:[#allocation19 + $0x2f0] sm:$0xff]
    %v5492 = vld [vmem:[#allocation19 + $0x2f8] sm:$0xff]
    %v5493 = vld [vmem:[#allocation19 + $0x300] sm:$0xff]
    %v5494 = vld [vmem:[#allocation19 + $0x308] sm:$0xff]
    %v5495 = vld [vmem:[#allocation19 + $0x310] sm:$0xff]
    %v5496 = vld [vmem:[#allocation19 + $0x318] sm:$0xff]
    %v5497 = vld [vmem:[#allocation19 + $0x320] sm:$0xff]
    %v5498 = vld [vmem:[#allocation19 + $0x328] sm:$0xff]
    %v5499 = vld [vmem:[#allocation19 + $0x330] sm:$0xff]
    %v5500 = vld [vmem:[#allocation19 + $0x338] sm:$0xff]
    %v5501 = vld [vmem:[#allocation19 + $0x340] sm:$0xff]
    %v5502 = vld [vmem:[#allocation19 + $0x348] sm:$0xff]
    %v5503 = vld [vmem:[#allocation19 + $0x350] sm:$0xff]
    %v5504 = vld [vmem:[#allocation19 + $0x358] sm:$0xff]
    %v5505 = vld [vmem:[#allocation19 + $0x360] sm:$0xff]
    %v5506 = vld [vmem:[#allocation19 + $0x368] sm:$0xff]
    %v5507 = vld [vmem:[#allocation19 + $0x370] sm:$0xff]
    %v5508 = vld [vmem:[#allocation19 + $0x378] sm:$0xff]
    %v5509 = vld [vmem:[#allocation19 + $0x380] sm:$0xff]
    %v5510 = vld [vmem:[#allocation19 + $0x388] sm:$0xff]
    %v5511 = vld [vmem:[#allocation19 + $0x390] sm:$0xff]
    %v5512 = vld [vmem:[#allocation19 + $0x398] sm:$0xff]
    %v5513 = vld [vmem:[#allocation19 + $0x3a0] sm:$0xff]
    %v5514 = vld [vmem:[#allocation19 + $0x3a8] sm:$0xff]
    %v5515 = vld [vmem:[#allocation19 + $0x3b0] sm:$0xff]
    %v5516 = vld [vmem:[#allocation19 + $0x3b8] sm:$0xff]
    %v5517 = vld [vmem:[#allocation19 + $0x3c0] sm:$0xff]
    %v5518 = vld [vmem:[#allocation19 + $0x3c8] sm:$0xff]
    %v5519 = vld [vmem:[#allocation19 + $0x3d0] sm:$0xff]
    %v5520 = vld [vmem:[#allocation19 + $0x3d8] sm:$0xff]
    %v5521 = vld [vmem:[#allocation19 + $0x3e0] sm:$0xff]
    %v5522 = vld [vmem:[#allocation19 + $0x3e8] sm:$0xff]
    %v5523 = vld [vmem:[#allocation19 + $0x3f0] sm:$0xff]
    %v5524 = vld [vmem:[#allocation19 + $0x3f8] sm:$0xff]
    %v5525 = vld [vmem:[#allocation19 + $0x400] sm:$0xff]
    %v5526 = vld [vmem:[#allocation19 + $0x408] sm:$0xff]
    %v5527 = vld [vmem:[#allocation19 + $0x410] sm:$0xff]
    %v5528 = vld [vmem:[#allocation19 + $0x418] sm:$0xff]
    %v5529 = vld [vmem:[#allocation19 + $0x420] sm:$0xff]
    %v5530 = vld [vmem:[#allocation19 + $0x428] sm:$0xff]
    %v5531 = vld [vmem:[#allocation19 + $0x430] sm:$0xff]
    %v5532 = vld [vmem:[#allocation19 + $0x438] sm:$0xff]
    %v5533 = vld [vmem:[#allocation19 + $0x440] sm:$0xff]
    %v5534 = vld [vmem:[#allocation19 + $0x448] sm:$0xff]
    %v5535 = vld [vmem:[#allocation19 + $0x450] sm:$0xff]
    %v5536 = vld [vmem:[#allocation19 + $0x458] sm:$0xff]
    %v5537 = vld [vmem:[#allocation19 + $0x460] sm:$0xff]
    %v5538 = vld [vmem:[#allocation19 + $0x468] sm:$0xff]
    %v5539 = vld [vmem:[#allocation19 + $0x470] sm:$0xff]
    %v5540 = vld [vmem:[#allocation19 + $0x478] sm:$0xff]
    %v5541 = vld [vmem:[#allocation19 + $0x480] sm:$0xff]
    %v5542 = vld [vmem:[#allocation19 + $0x488] sm:$0xff]
    %v5543 = vld [vmem:[#allocation19 + $0x490] sm:$0xff]
    %v5544 = vld [vmem:[#allocation19 + $0x498] sm:$0xff]
    %v5545 = vld [vmem:[#allocation19 + $0x4a0] sm:$0xff]
    %v5546 = vld [vmem:[#allocation19 + $0x4a8] sm:$0xff]
    %v5547 = vld [vmem:[#allocation19 + $0x4b0] sm:$0xff]
    %v5548 = vld [vmem:[#allocation19 + $0x4b8] sm:$0xff]
    %v5549 = vld [vmem:[#allocation19 + $0x4c0] sm:$0xff]
    %v5550 = vld [vmem:[#allocation19 + $0x4c8] sm:$0xff]
    %v5551 = vld [vmem:[#allocation19 + $0x4d0] sm:$0xff]
    %v5552 = vld [vmem:[#allocation19 + $0x4d8] sm:$0xff]
    %v5553 = vld [vmem:[#allocation19 + $0x4e0] sm:$0xff]
    %v5554 = vld [vmem:[#allocation19 + $0x4e8] sm:$0xff]
    %v5555 = vld [vmem:[#allocation19 + $0x4f0] sm:$0xff]
    %v5556 = vld [vmem:[#allocation19 + $0x4f8] sm:$0xff]
    %v5557 = vld [vmem:[#allocation19 + $0x500] sm:$0xff]
    %v5558 = vld [vmem:[#allocation19 + $0x508] sm:$0xff]
    %v5559 = vld [vmem:[#allocation19 + $0x510] sm:$0xff]
    %v5560 = vld [vmem:[#allocation19 + $0x518] sm:$0xff]
    %v5561 = vld [vmem:[#allocation19 + $0x520] sm:$0xff]
    %v5562 = vld [vmem:[#allocation19 + $0x528] sm:$0xff]
    %v5563 = vld [vmem:[#allocation19 + $0x530] sm:$0xff]
    %v5564 = vld [vmem:[#allocation19 + $0x538] sm:$0xff]
    %v5565 = vld [vmem:[#allocation19 + $0x540] sm:$0xff]
    %v5566 = vld [vmem:[#allocation19 + $0x548] sm:$0xff]
    %v5567 = vld [vmem:[#allocation19 + $0x550] sm:$0xff]
    %v5568 = vld [vmem:[#allocation19 + $0x558] sm:$0xff]
    %v5569 = vld [vmem:[#allocation19 + $0x560] sm:$0xff]
    %v5570 = vld [vmem:[#allocation19 + $0x568] sm:$0xff]
    %v5571 = vld [vmem:[#allocation19 + $0x570] sm:$0xff]
    %v5572 = vld [vmem:[#allocation19 + $0x578] sm:$0xff]
    %v5573 = vld [vmem:[#allocation19 + $0x580] sm:$0xff]
    %v5574 = vld [vmem:[#allocation19 + $0x588] sm:$0xff]
    %v5575 = vld [vmem:[#allocation19 + $0x590] sm:$0xff]
    %v5576 = vld [vmem:[#allocation19 + $0x598] sm:$0xff]
    %v5577 = vld [vmem:[#allocation19 + $0x5a0] sm:$0xff]
    %v5578 = vld [vmem:[#allocation19 + $0x5a8] sm:$0xff]
    %v5579 = vld [vmem:[#allocation19 + $0x5b0] sm:$0xff]
    %v5580 = vld [vmem:[#allocation19 + $0x5b8] sm:$0xff]
    %v5581 = vld [vmem:[#allocation19 + $0x5c0] sm:$0xff]
    %v5582 = vld [vmem:[#allocation19 + $0x5c8] sm:$0xff]
    %v5583 = vld [vmem:[#allocation19 + $0x5d0] sm:$0xff]
    %v5584 = vld [vmem:[#allocation19 + $0x5d8] sm:$0xff]
    %v5585 = vld [vmem:[#allocation19 + $0x5e0] sm:$0xff]
    %v5586 = vld [vmem:[#allocation19 + $0x5e8] sm:$0xff]
    %v5587 = vld [vmem:[#allocation19 + $0x5f0] sm:$0xff]
    %v5588 = vld [vmem:[#allocation19 + $0x5f8] sm:$0xff]
    %v5781 = vunpack.c.l.b16 %v5397
    %v5782 = vunpack.c.h.b16 %v5397
    %v5783 = vunpack.c.l.b16 %v5398
    %v5784 = vunpack.c.h.b16 %v5398
    %v5785 = vunpack.c.l.b16 %v5399
    %v5786 = vunpack.c.h.b16 %v5399
    %v5787 = vunpack.c.l.b16 %v5400
    %v5788 = vunpack.c.h.b16 %v5400
    %v5789 = vunpack.c.l.b16 %v5401
    %v5790 = vunpack.c.h.b16 %v5401
    %v5791 = vunpack.c.l.b16 %v5402
    %v5792 = vunpack.c.h.b16 %v5402
    %v5793 = vunpack.c.l.b16 %v5403
    %v5794 = vunpack.c.h.b16 %v5403
    %v5795 = vunpack.c.l.b16 %v5404
    %v5796 = vunpack.c.h.b16 %v5404
    %v5797 = vunpack.c.l.b16 %v5405
    %v5798 = vunpack.c.h.b16 %v5405
    %v5799 = vunpack.c.l.b16 %v5406
    %v5800 = vunpack.c.h.b16 %v5406
    %v5801 = vunpack.c.l.b16 %v5407
    %v5802 = vunpack.c.h.b16 %v5407
    %v5803 = vunpack.c.l.b16 %v5408
    %v5804 = vunpack.c.h.b16 %v5408
    %v5805 = vunpack.c.l.b16 %v5409
    %v5806 = vunpack.c.h.b16 %v5409
    %v5807 = vunpack.c.l.b16 %v5410
    %v5808 = vunpack.c.h.b16 %v5410
    %v5809 = vunpack.c.l.b16 %v5411
    %v5810 = vunpack.c.h.b16 %v5411
    %v5811 = vunpack.c.l.b16 %v5412
    %v5812 = vunpack.c.h.b16 %v5412
    %v5813 = vunpack.c.l.b16 %v5413
    %v5814 = vunpack.c.h.b16 %v5413
    %v5815 = vunpack.c.l.b16 %v5414
    %v5816 = vunpack.c.h.b16 %v5414
    %v5817 = vunpack.c.l.b16 %v5415
    %v5818 = vunpack.c.h.b16 %v5415
    %v5819 = vunpack.c.l.b16 %v5416
    %v5820 = vunpack.c.h.b16 %v5416
    %v5821 = vunpack.c.l.b16 %v5417
    %v5822 = vunpack.c.h.b16 %v5417
    %v5823 = vunpack.c.l.b16 %v5418
    %v5824 = vunpack.c.h.b16 %v5418
    %v5825 = vunpack.c.l.b16 %v5419
    %v5826 = vunpack.c.h.b16 %v5419
    %v5827 = vunpack.c.l.b16 %v5420
    %v5828 = vunpack.c.h.b16 %v5420
    %v5829 = vunpack.c.l.b16 %v5421
    %v5830 = vunpack.c.h.b16 %v5421
    %v5831 = vunpack.c.l.b16 %v5422
    %v5832 = vunpack.c.h.b16 %v5422
    %v5833 = vunpack.c.l.b16 %v5423
    %v5834 = vunpack.c.h.b16 %v5423
    %v5835 = vunpack.c.l.b16 %v5424
    %v5836 = vunpack.c.h.b16 %v5424
    %v5837 = vunpack.c.l.b16 %v5425
    %v5838 = vunpack.c.h.b16 %v5425
    %v5839 = vunpack.c.l.b16 %v5426
    %v5840 = vunpack.c.h.b16 %v5426
    %v5841 = vunpack.c.l.b16 %v5427
    %v5842 = vunpack.c.h.b16 %v5427
    %v5843 = vunpack.c.l.b16 %v5428
    %v5844 = vunpack.c.h.b16 %v5428
    %v5845 = vunpack.c.l.b16 %v5429
    %v5846 = vunpack.c.h.b16 %v5429
    %v5847 = vunpack.c.l.b16 %v5430
    %v5848 = vunpack.c.h.b16 %v5430
    %v5849 = vunpack.c.l.b16 %v5431
    %v5850 = vunpack.c.h.b16 %v5431
    %v5851 = vunpack.c.l.b16 %v5432
    %v5852 = vunpack.c.h.b16 %v5432
    %v5853 = vunpack.c.l.b16 %v5433
    %v5854 = vunpack.c.h.b16 %v5433
    %v5855 = vunpack.c.l.b16 %v5434
    %v5856 = vunpack.c.h.b16 %v5434
    %v5857 = vunpack.c.l.b16 %v5435
    %v5858 = vunpack.c.h.b16 %v5435
    %v5859 = vunpack.c.l.b16 %v5436
    %v5860 = vunpack.c.h.b16 %v5436
    %v5861 = vunpack.c.l.b16 %v5437
    %v5862 = vunpack.c.h.b16 %v5437
    %v5863 = vunpack.c.l.b16 %v5438
    %v5864 = vunpack.c.h.b16 %v5438
    %v5865 = vunpack.c.l.b16 %v5439
    %v5866 = vunpack.c.h.b16 %v5439
    %v5867 = vunpack.c.l.b16 %v5440
    %v5868 = vunpack.c.h.b16 %v5440
    %v5869 = vunpack.c.l.b16 %v5441
    %v5870 = vunpack.c.h.b16 %v5441
    %v5871 = vunpack.c.l.b16 %v5442
    %v5872 = vunpack.c.h.b16 %v5442
    %v5873 = vunpack.c.l.b16 %v5443
    %v5874 = vunpack.c.h.b16 %v5443
    %v5875 = vunpack.c.l.b16 %v5444
    %v5876 = vunpack.c.h.b16 %v5444
    %v5877 = vunpack.c.l.b16 %v5445
    %v5878 = vunpack.c.h.b16 %v5445
    %v5879 = vunpack.c.l.b16 %v5446
    %v5880 = vunpack.c.h.b16 %v5446
    %v5881 = vunpack.c.l.b16 %v5447
    %v5882 = vunpack.c.h.b16 %v5447
    %v5883 = vunpack.c.l.b16 %v5448
    %v5884 = vunpack.c.h.b16 %v5448
    %v5885 = vunpack.c.l.b16 %v5449
    %v5886 = vunpack.c.h.b16 %v5449
    %v5887 = vunpack.c.l.b16 %v5450
    %v5888 = vunpack.c.h.b16 %v5450
    %v5889 = vunpack.c.l.b16 %v5451
    %v5890 = vunpack.c.h.b16 %v5451
    %v5891 = vunpack.c.l.b16 %v5452
    %v5892 = vunpack.c.h.b16 %v5452
    %v5893 = vunpack.c.l.b16 %v5453
    %v5894 = vunpack.c.h.b16 %v5453
    %v5895 = vunpack.c.l.b16 %v5454
    %v5896 = vunpack.c.h.b16 %v5454
    %v5897 = vunpack.c.l.b16 %v5455
    %v5898 = vunpack.c.h.b16 %v5455
    %v5899 = vunpack.c.l.b16 %v5456
    %v5900 = vunpack.c.h.b16 %v5456
    %v5901 = vunpack.c.l.b16 %v5457
    %v5902 = vunpack.c.h.b16 %v5457
    %v5903 = vunpack.c.l.b16 %v5458
    %v5904 = vunpack.c.h.b16 %v5458
    %v5905 = vunpack.c.l.b16 %v5459
    %v5906 = vunpack.c.h.b16 %v5459
    %v5907 = vunpack.c.l.b16 %v5460
    %v5908 = vunpack.c.h.b16 %v5460
    %v5909 = vunpack.c.l.b16 %v5461
    %v5910 = vunpack.c.h.b16 %v5461
    %v5911 = vunpack.c.l.b16 %v5462
    %v5912 = vunpack.c.h.b16 %v5462
    %v5913 = vunpack.c.l.b16 %v5463
    %v5914 = vunpack.c.h.b16 %v5463
    %v5915 = vunpack.c.l.b16 %v5464
    %v5916 = vunpack.c.h.b16 %v5464
    %v5917 = vunpack.c.l.b16 %v5465
    %v5918 = vunpack.c.h.b16 %v5465
    %v5919 = vunpack.c.l.b16 %v5466
    %v5920 = vunpack.c.h.b16 %v5466
    %v5921 = vunpack.c.l.b16 %v5467
    %v5922 = vunpack.c.h.b16 %v5467
    %v5923 = vunpack.c.l.b16 %v5468
    %v5924 = vunpack.c.h.b16 %v5468
    %v5925 = vunpack.c.l.b16 %v5469
    %v5926 = vunpack.c.h.b16 %v5469
    %v5927 = vunpack.c.l.b16 %v5470
    %v5928 = vunpack.c.h.b16 %v5470
    %v5929 = vunpack.c.l.b16 %v5471
    %v5930 = vunpack.c.h.b16 %v5471
    %v5931 = vunpack.c.l.b16 %v5472
    %v5932 = vunpack.c.h.b16 %v5472
    %v5933 = vunpack.c.l.b16 %v5473
    %v5934 = vunpack.c.h.b16 %v5473
    %v5935 = vunpack.c.l.b16 %v5474
    %v5936 = vunpack.c.h.b16 %v5474
    %v5937 = vunpack.c.l.b16 %v5475
    %v5938 = vunpack.c.h.b16 %v5475
    %v5939 = vunpack.c.l.b16 %v5476
    %v5940 = vunpack.c.h.b16 %v5476
    %v5941 = vunpack.c.l.b16 %v5477
    %v5942 = vunpack.c.h.b16 %v5477
    %v5943 = vunpack.c.l.b16 %v5478
    %v5944 = vunpack.c.h.b16 %v5478
    %v5945 = vunpack.c.l.b16 %v5479
    %v5946 = vunpack.c.h.b16 %v5479
    %v5947 = vunpack.c.l.b16 %v5480
    %v5948 = vunpack.c.h.b16 %v5480
    %v5949 = vunpack.c.l.b16 %v5481
    %v5950 = vunpack.c.h.b16 %v5481
    %v5951 = vunpack.c.l.b16 %v5482
    %v5952 = vunpack.c.h.b16 %v5482
    %v5953 = vunpack.c.l.b16 %v5483
    %v5954 = vunpack.c.h.b16 %v5483
    %v5955 = vunpack.c.l.b16 %v5484
    %v5956 = vunpack.c.h.b16 %v5484
    %v5957 = vunpack.c.l.b16 %v5485
    %v5958 = vunpack.c.h.b16 %v5485
    %v5959 = vunpack.c.l.b16 %v5486
    %v5960 = vunpack.c.h.b16 %v5486
    %v5961 = vunpack.c.l.b16 %v5487
    %v5962 = vunpack.c.h.b16 %v5487
    %v5963 = vunpack.c.l.b16 %v5488
    %v5964 = vunpack.c.h.b16 %v5488
    %v5965 = vunpack.c.l.b16 %v5489
    %v5966 = vunpack.c.h.b16 %v5489
    %v5967 = vunpack.c.l.b16 %v5490
    %v5968 = vunpack.c.h.b16 %v5490
    %v5969 = vunpack.c.l.b16 %v5491
    %v5970 = vunpack.c.h.b16 %v5491
    %v5971 = vunpack.c.l.b16 %v5492
    %v5972 = vunpack.c.h.b16 %v5492
    %v5973 = vunpack.c.l.b16 %v5493
    %v5974 = vunpack.c.h.b16 %v5493
    %v5975 = vunpack.c.l.b16 %v5494
    %v5976 = vunpack.c.h.b16 %v5494
    %v5977 = vunpack.c.l.b16 %v5495
    %v5978 = vunpack.c.h.b16 %v5495
    %v5979 = vunpack.c.l.b16 %v5496
    %v5980 = vunpack.c.h.b16 %v5496
    %v5981 = vunpack.c.l.b16 %v5497
    %v5982 = vunpack.c.h.b16 %v5497
    %v5983 = vunpack.c.l.b16 %v5498
    %v5984 = vunpack.c.h.b16 %v5498
    %v5985 = vunpack.c.l.b16 %v5499
    %v5986 = vunpack.c.h.b16 %v5499
    %v5987 = vunpack.c.l.b16 %v5500
    %v5988 = vunpack.c.h.b16 %v5500
    %v5989 = vunpack.c.l.b16 %v5501
    %v5990 = vunpack.c.h.b16 %v5501
    %v5991 = vunpack.c.l.b16 %v5502
    %v5992 = vunpack.c.h.b16 %v5502
    %v5993 = vunpack.c.l.b16 %v5503
    %v5994 = vunpack.c.h.b16 %v5503
    %v5995 = vunpack.c.l.b16 %v5504
    %v5996 = vunpack.c.h.b16 %v5504
    %v5997 = vunpack.c.l.b16 %v5505
    %v5998 = vunpack.c.h.b16 %v5505
    %v5999 = vunpack.c.l.b16 %v5506
    %v6000 = vunpack.c.h.b16 %v5506
    %v6001 = vunpack.c.l.b16 %v5507
    %v6002 = vunpack.c.h.b16 %v5507
    %v6003 = vunpack.c.l.b16 %v5508
    %v6004 = vunpack.c.h.b16 %v5508
    %v6005 = vunpack.c.l.b16 %v5509
    %v6006 = vunpack.c.h.b16 %v5509
    %v6007 = vunpack.c.l.b16 %v5510
    %v6008 = vunpack.c.h.b16 %v5510
    %v6009 = vunpack.c.l.b16 %v5511
    %v6010 = vunpack.c.h.b16 %v5511
    %v6011 = vunpack.c.l.b16 %v5512
    %v6012 = vunpack.c.h.b16 %v5512
    %v6013 = vunpack.c.l.b16 %v5513
    %v6014 = vunpack.c.h.b16 %v5513
    %v6015 = vunpack.c.l.b16 %v5514
    %v6016 = vunpack.c.h.b16 %v5514
    %v6017 = vunpack.c.l.b16 %v5515
    %v6018 = vunpack.c.h.b16 %v5515
    %v6019 = vunpack.c.l.b16 %v5516
    %v6020 = vunpack.c.h.b16 %v5516
    %v6021 = vunpack.c.l.b16 %v5517
    %v6022 = vunpack.c.h.b16 %v5517
    %v6023 = vunpack.c.l.b16 %v5518
    %v6024 = vunpack.c.h.b16 %v5518
    %v6025 = vunpack.c.l.b16 %v5519
    %v6026 = vunpack.c.h.b16 %v5519
    %v6027 = vunpack.c.l.b16 %v5520
    %v6028 = vunpack.c.h.b16 %v5520
    %v6029 = vunpack.c.l.b16 %v5521
    %v6030 = vunpack.c.h.b16 %v5521
    %v6031 = vunpack.c.l.b16 %v5522
    %v6032 = vunpack.c.h.b16 %v5522
    %v6033 = vunpack.c.l.b16 %v5523
    %v6034 = vunpack.c.h.b16 %v5523
    %v6035 = vunpack.c.l.b16 %v5524
    %v6036 = vunpack.c.h.b16 %v5524
    %v6037 = vunpack.c.l.b16 %v5525
    %v6038 = vunpack.c.h.b16 %v5525
    %v6039 = vunpack.c.l.b16 %v5526
    %v6040 = vunpack.c.h.b16 %v5526
    %v6041 = vunpack.c.l.b16 %v5527
    %v6042 = vunpack.c.h.b16 %v5527
    %v6043 = vunpack.c.l.b16 %v5528
    %v6044 = vunpack.c.h.b16 %v5528
    %v6045 = vunpack.c.l.b16 %v5529
    %v6046 = vunpack.c.h.b16 %v5529
    %v6047 = vunpack.c.l.b16 %v5530
    %v6048 = vunpack.c.h.b16 %v5530
    %v6049 = vunpack.c.l.b16 %v5531
    %v6050 = vunpack.c.h.b16 %v5531
    %v6051 = vunpack.c.l.b16 %v5532
    %v6052 = vunpack.c.h.b16 %v5532
    %v6053 = vunpack.c.l.b16 %v5533
    %v6054 = vunpack.c.h.b16 %v5533
    %v6055 = vunpack.c.l.b16 %v5534
    %v6056 = vunpack.c.h.b16 %v5534
    %v6057 = vunpack.c.l.b16 %v5535
    %v6058 = vunpack.c.h.b16 %v5535
    %v6059 = vunpack.c.l.b16 %v5536
    %v6060 = vunpack.c.h.b16 %v5536
    %v6061 = vunpack.c.l.b16 %v5537
    %v6062 = vunpack.c.h.b16 %v5537
    %v6063 = vunpack.c.l.b16 %v5538
    %v6064 = vunpack.c.h.b16 %v5538
    %v6065 = vunpack.c.l.b16 %v5539
    %v6066 = vunpack.c.h.b16 %v5539
    %v6067 = vunpack.c.l.b16 %v5540
    %v6068 = vunpack.c.h.b16 %v5540
    %v6069 = vunpack.c.l.b16 %v5541
    %v6070 = vunpack.c.h.b16 %v5541
    %v6071 = vunpack.c.l.b16 %v5542
    %v6072 = vunpack.c.h.b16 %v5542
    %v6073 = vunpack.c.l.b16 %v5543
    %v6074 = vunpack.c.h.b16 %v5543
    %v6075 = vunpack.c.l.b16 %v5544
    %v6076 = vunpack.c.h.b16 %v5544
    %v6077 = vunpack.c.l.b16 %v5545
    %v6078 = vunpack.c.h.b16 %v5545
    %v6079 = vunpack.c.l.b16 %v5546
    %v6080 = vunpack.c.h.b16 %v5546
    %v6081 = vunpack.c.l.b16 %v5547
    %v6082 = vunpack.c.h.b16 %v5547
    %v6083 = vunpack.c.l.b16 %v5548
    %v6084 = vunpack.c.h.b16 %v5548
    %v6085 = vunpack.c.l.b16 %v5549
    %v6086 = vunpack.c.h.b16 %v5549
    %v6087 = vunpack.c.l.b16 %v5550
    %v6088 = vunpack.c.h.b16 %v5550
    %v6089 = vunpack.c.l.b16 %v5551
    %v6090 = vunpack.c.h.b16 %v5551
    %v6091 = vunpack.c.l.b16 %v5552
    %v6092 = vunpack.c.h.b16 %v5552
    %v6093 = vunpack.c.l.b16 %v5553
    %v6094 = vunpack.c.h.b16 %v5553
    %v6095 = vunpack.c.l.b16 %v5554
    %v6096 = vunpack.c.h.b16 %v5554
    %v6097 = vunpack.c.l.b16 %v5555
    %v6098 = vunpack.c.h.b16 %v5555
    %v6099 = vunpack.c.l.b16 %v5556
    %v6100 = vunpack.c.h.b16 %v5556
    %v6101 = vunpack.c.l.b16 %v5557
    %v6102 = vunpack.c.h.b16 %v5557
    %v6103 = vunpack.c.l.b16 %v5558
    %v6104 = vunpack.c.h.b16 %v5558
    %v6105 = vunpack.c.l.b16 %v5559
    %v6106 = vunpack.c.h.b16 %v5559
    %v6107 = vunpack.c.l.b16 %v5560
    %v6108 = vunpack.c.h.b16 %v5560
    %v6109 = vunpack.c.l.b16 %v5561
    %v6110 = vunpack.c.h.b16 %v5561
    %v6111 = vunpack.c.l.b16 %v5562
    %v6112 = vunpack.c.h.b16 %v5562
    %v6113 = vunpack.c.l.b16 %v5563
    %v6114 = vunpack.c.h.b16 %v5563
    %v6115 = vunpack.c.l.b16 %v5564
    %v6116 = vunpack.c.h.b16 %v5564
    %v6117 = vunpack.c.l.b16 %v5565
    %v6118 = vunpack.c.h.b16 %v5565
    %v6119 = vunpack.c.l.b16 %v5566
    %v6120 = vunpack.c.h.b16 %v5566
    %v6121 = vunpack.c.l.b16 %v5567
    %v6122 = vunpack.c.h.b16 %v5567
    %v6123 = vunpack.c.l.b16 %v5568
    %v6124 = vunpack.c.h.b16 %v5568
    %v6125 = vunpack.c.l.b16 %v5569
    %v6126 = vunpack.c.h.b16 %v5569
    %v6127 = vunpack.c.l.b16 %v5570
    %v6128 = vunpack.c.h.b16 %v5570
    %v6129 = vunpack.c.l.b16 %v5571
    %v6130 = vunpack.c.h.b16 %v5571
    %v6131 = vunpack.c.l.b16 %v5572
    %v6132 = vunpack.c.h.b16 %v5572
    %v6133 = vunpack.c.l.b16 %v5573
    %v6134 = vunpack.c.h.b16 %v5573
    %v6135 = vunpack.c.l.b16 %v5574
    %v6136 = vunpack.c.h.b16 %v5574
    %v6137 = vunpack.c.l.b16 %v5575
    %v6138 = vunpack.c.h.b16 %v5575
    %v6139 = vunpack.c.l.b16 %v5576
    %v6140 = vunpack.c.h.b16 %v5576
    %v6141 = vunpack.c.l.b16 %v5577
    %v6142 = vunpack.c.h.b16 %v5577
    %v6143 = vunpack.c.l.b16 %v5578
    %v6144 = vunpack.c.h.b16 %v5578
    %v6145 = vunpack.c.l.b16 %v5579
    %v6146 = vunpack.c.h.b16 %v5579
    %v6147 = vunpack.c.l.b16 %v5580
    %v6148 = vunpack.c.h.b16 %v5580
    %v6149 = vunpack.c.l.b16 %v5581
    %v6150 = vunpack.c.h.b16 %v5581
    %v6151 = vunpack.c.l.b16 %v5582
    %v6152 = vunpack.c.h.b16 %v5582
    %v6153 = vunpack.c.l.b16 %v5583
    %v6154 = vunpack.c.h.b16 %v5583
    %v6155 = vunpack.c.l.b16 %v5584
    %v6156 = vunpack.c.h.b16 %v5584
    %v6157 = vunpack.c.l.b16 %v5585
    %v6158 = vunpack.c.h.b16 %v5585
    %v6159 = vunpack.c.l.b16 %v5586
    %v6160 = vunpack.c.h.b16 %v5586
    %v6161 = vunpack.c.l.b16 %v5587
    %v6162 = vunpack.c.h.b16 %v5587
    %v6163 = vunpack.c.l.b16 %v5588
    %v6164 = vunpack.c.h.b16 %v5588
    %v6165 = vpack.c.b16 %v5785, %v5781
    %v6166 = vpack.c.b16 %v5786, %v5782
    %v6167 = vpack.c.b16 %v5787, %v5783
    %v6168 = vpack.c.b16 %v5788, %v5784
    %v6169 = vpack.c.b16 %v5793, %v5789
    %v6170 = vpack.c.b16 %v5794, %v5790
    %v6171 = vpack.c.b16 %v5795, %v5791
    %v6172 = vpack.c.b16 %v5796, %v5792
    %v6173 = vpack.c.b16 %v5801, %v5797
    %v6174 = vpack.c.b16 %v5802, %v5798
    %v6175 = vpack.c.b16 %v5803, %v5799
    %v6176 = vpack.c.b16 %v5804, %v5800
    %v6177 = vpack.c.b16 %v5809, %v5805
    %v6178 = vpack.c.b16 %v5810, %v5806
    %v6179 = vpack.c.b16 %v5811, %v5807
    %v6180 = vpack.c.b16 %v5812, %v5808
    %v6181 = vpack.c.b16 %v5817, %v5813
    %v6182 = vpack.c.b16 %v5818, %v5814
    %v6183 = vpack.c.b16 %v5819, %v5815
    %v6184 = vpack.c.b16 %v5820, %v5816
    %v6185 = vpack.c.b16 %v5825, %v5821
    %v6186 = vpack.c.b16 %v5826, %v5822
    %v6187 = vpack.c.b16 %v5827, %v5823
    %v6188 = vpack.c.b16 %v5828, %v5824
    %v6189 = vpack.c.b16 %v5833, %v5829
    %v6190 = vpack.c.b16 %v5834, %v5830
    %v6191 = vpack.c.b16 %v5835, %v5831
    %v6192 = vpack.c.b16 %v5836, %v5832
    %v6193 = vpack.c.b16 %v5841, %v5837
    %v6194 = vpack.c.b16 %v5842, %v5838
    %v6195 = vpack.c.b16 %v5843, %v5839
    %v6196 = vpack.c.b16 %v5844, %v5840
    %v6197 = vpack.c.b16 %v5849, %v5845
    %v6198 = vpack.c.b16 %v5850, %v5846
    %v6199 = vpack.c.b16 %v5851, %v5847
    %v6200 = vpack.c.b16 %v5852, %v5848
    %v6201 = vpack.c.b16 %v5857, %v5853
    %v6202 = vpack.c.b16 %v5858, %v5854
    %v6203 = vpack.c.b16 %v5859, %v5855
    %v6204 = vpack.c.b16 %v5860, %v5856
    %v6205 = vpack.c.b16 %v5865, %v5861
    %v6206 = vpack.c.b16 %v5866, %v5862
    %v6207 = vpack.c.b16 %v5867, %v5863
    %v6208 = vpack.c.b16 %v5868, %v5864
    %v6209 = vpack.c.b16 %v5873, %v5869
    %v6210 = vpack.c.b16 %v5874, %v5870
    %v6211 = vpack.c.b16 %v5875, %v5871
    %v6212 = vpack.c.b16 %v5876, %v5872
    %v6213 = vpack.c.b16 %v5881, %v5877
    %v6214 = vpack.c.b16 %v5882, %v5878
    %v6215 = vpack.c.b16 %v5883, %v5879
    %v6216 = vpack.c.b16 %v5884, %v5880
    %v6217 = vpack.c.b16 %v5889, %v5885
    %v6218 = vpack.c.b16 %v5890, %v5886
    %v6219 = vpack.c.b16 %v5891, %v5887
    %v6220 = vpack.c.b16 %v5892, %v5888
    %v6221 = vpack.c.b16 %v5897, %v5893
    %v6222 = vpack.c.b16 %v5898, %v5894
    %v6223 = vpack.c.b16 %v5899, %v5895
    %v6224 = vpack.c.b16 %v5900, %v5896
    %v6225 = vpack.c.b16 %v5905, %v5901
    %v6226 = vpack.c.b16 %v5906, %v5902
    %v6227 = vpack.c.b16 %v5907, %v5903
    %v6228 = vpack.c.b16 %v5908, %v5904
    %v6229 = vpack.c.b16 %v5913, %v5909
    %v6230 = vpack.c.b16 %v5914, %v5910
    %v6231 = vpack.c.b16 %v5915, %v5911
    %v6232 = vpack.c.b16 %v5916, %v5912
    %v6233 = vpack.c.b16 %v5921, %v5917
    %v6234 = vpack.c.b16 %v5922, %v5918
    %v6235 = vpack.c.b16 %v5923, %v5919
    %v6236 = vpack.c.b16 %v5924, %v5920
    %v6237 = vpack.c.b16 %v5929, %v5925
    %v6238 = vpack.c.b16 %v5930, %v5926
    %v6239 = vpack.c.b16 %v5931, %v5927
    %v6240 = vpack.c.b16 %v5932, %v5928
    %v6241 = vpack.c.b16 %v5937, %v5933
    %v6242 = vpack.c.b16 %v5938, %v5934
    %v6243 = vpack.c.b16 %v5939, %v5935
    %v6244 = vpack.c.b16 %v5940, %v5936
    %v6245 = vpack.c.b16 %v5945, %v5941
    %v6246 = vpack.c.b16 %v5946, %v5942
    %v6247 = vpack.c.b16 %v5947, %v5943
    %v6248 = vpack.c.b16 %v5948, %v5944
    %v6249 = vpack.c.b16 %v5953, %v5949
    %v6250 = vpack.c.b16 %v5954, %v5950
    %v6251 = vpack.c.b16 %v5955, %v5951
    %v6252 = vpack.c.b16 %v5956, %v5952
    %v6253 = vpack.c.b16 %v5961, %v5957
    %v6254 = vpack.c.b16 %v5962, %v5958
    %v6255 = vpack.c.b16 %v5963, %v5959
    %v6256 = vpack.c.b16 %v5964, %v5960
    %v6257 = vpack.c.b16 %v5969, %v5965
    %v6258 = vpack.c.b16 %v5970, %v5966
    %v6259 = vpack.c.b16 %v5971, %v5967
    %v6260 = vpack.c.b16 %v5972, %v5968
    %v6261 = vpack.c.b16 %v5977, %v5973
    %v6262 = vpack.c.b16 %v5978, %v5974
    %v6263 = vpack.c.b16 %v5979, %v5975
    %v6264 = vpack.c.b16 %v5980, %v5976
    %v6265 = vpack.c.b16 %v5985, %v5981
    %v6266 = vpack.c.b16 %v5986, %v5982
    %v6267 = vpack.c.b16 %v5987, %v5983
    %v6268 = vpack.c.b16 %v5988, %v5984
    %v6269 = vpack.c.b16 %v5993, %v5989
    %v6270 = vpack.c.b16 %v5994, %v5990
    %v6271 = vpack.c.b16 %v5995, %v5991
    %v6272 = vpack.c.b16 %v5996, %v5992
    %v6273 = vpack.c.b16 %v6001, %v5997
    %v6274 = vpack.c.b16 %v6002, %v5998
    %v6275 = vpack.c.b16 %v6003, %v5999
    %v6276 = vpack.c.b16 %v6004, %v6000
    %v6277 = vpack.c.b16 %v6009, %v6005
    %v6278 = vpack.c.b16 %v6010, %v6006
    %v6279 = vpack.c.b16 %v6011, %v6007
    %v6280 = vpack.c.b16 %v6012, %v6008
    %v6281 = vpack.c.b16 %v6017, %v6013
    %v6282 = vpack.c.b16 %v6018, %v6014
    %v6283 = vpack.c.b16 %v6019, %v6015
    %v6284 = vpack.c.b16 %v6020, %v6016
    %v6285 = vpack.c.b16 %v6025, %v6021
    %v6286 = vpack.c.b16 %v6026, %v6022
    %v6287 = vpack.c.b16 %v6027, %v6023
    %v6288 = vpack.c.b16 %v6028, %v6024
    %v6289 = vpack.c.b16 %v6033, %v6029
    %v6290 = vpack.c.b16 %v6034, %v6030
    %v6291 = vpack.c.b16 %v6035, %v6031
    %v6292 = vpack.c.b16 %v6036, %v6032
    %v6293 = vpack.c.b16 %v6041, %v6037
    %v6294 = vpack.c.b16 %v6042, %v6038
    %v6295 = vpack.c.b16 %v6043, %v6039
    %v6296 = vpack.c.b16 %v6044, %v6040
    %v6297 = vpack.c.b16 %v6049, %v6045
    %v6298 = vpack.c.b16 %v6050, %v6046
    %v6299 = vpack.c.b16 %v6051, %v6047
    %v6300 = vpack.c.b16 %v6052, %v6048
    %v6301 = vpack.c.b16 %v6057, %v6053
    %v6302 = vpack.c.b16 %v6058, %v6054
    %v6303 = vpack.c.b16 %v6059, %v6055
    %v6304 = vpack.c.b16 %v6060, %v6056
    %v6305 = vpack.c.b16 %v6065, %v6061
    %v6306 = vpack.c.b16 %v6066, %v6062
    %v6307 = vpack.c.b16 %v6067, %v6063
    %v6308 = vpack.c.b16 %v6068, %v6064
    %v6309 = vpack.c.b16 %v6073, %v6069
    %v6310 = vpack.c.b16 %v6074, %v6070
    %v6311 = vpack.c.b16 %v6075, %v6071
    %v6312 = vpack.c.b16 %v6076, %v6072
    %v6313 = vpack.c.b16 %v6081, %v6077
    %v6314 = vpack.c.b16 %v6082, %v6078
    %v6315 = vpack.c.b16 %v6083, %v6079
    %v6316 = vpack.c.b16 %v6084, %v6080
    %v6317 = vpack.c.b16 %v6089, %v6085
    %v6318 = vpack.c.b16 %v6090, %v6086
    %v6319 = vpack.c.b16 %v6091, %v6087
    %v6320 = vpack.c.b16 %v6092, %v6088
    %v6321 = vpack.c.b16 %v6097, %v6093
    %v6322 = vpack.c.b16 %v6098, %v6094
    %v6323 = vpack.c.b16 %v6099, %v6095
    %v6324 = vpack.c.b16 %v6100, %v6096
    %v6325 = vpack.c.b16 %v6105, %v6101
    %v6326 = vpack.c.b16 %v6106, %v6102
    %v6327 = vpack.c.b16 %v6107, %v6103
    %v6328 = vpack.c.b16 %v6108, %v6104
    %v6329 = vpack.c.b16 %v6113, %v6109
    %v6330 = vpack.c.b16 %v6114, %v6110
    %v6331 = vpack.c.b16 %v6115, %v6111
    %v6332 = vpack.c.b16 %v6116, %v6112
    %v6333 = vpack.c.b16 %v6121, %v6117
    %v6334 = vpack.c.b16 %v6122, %v6118
    %v6335 = vpack.c.b16 %v6123, %v6119
    %v6336 = vpack.c.b16 %v6124, %v6120
    %v6337 = vpack.c.b16 %v6129, %v6125
    %v6338 = vpack.c.b16 %v6130, %v6126
    %v6339 = vpack.c.b16 %v6131, %v6127
    %v6340 = vpack.c.b16 %v6132, %v6128
    %v6341 = vpack.c.b16 %v6137, %v6133
    %v6342 = vpack.c.b16 %v6138, %v6134
    %v6343 = vpack.c.b16 %v6139, %v6135
    %v6344 = vpack.c.b16 %v6140, %v6136
    %v6345 = vpack.c.b16 %v6145, %v6141
    %v6346 = vpack.c.b16 %v6146, %v6142
    %v6347 = vpack.c.b16 %v6147, %v6143
    %v6348 = vpack.c.b16 %v6148, %v6144
    %v6349 = vpack.c.b16 %v6153, %v6149
    %v6350 = vpack.c.b16 %v6154, %v6150
    %v6351 = vpack.c.b16 %v6155, %v6151
    %v6352 = vpack.c.b16 %v6156, %v6152
    %v6353 = vpack.c.b16 %v6161, %v6157
    %v6354 = vpack.c.b16 %v6162, %v6158
    %v6355 = vpack.c.b16 %v6163, %v6159
    %v6356 = vpack.c.b16 %v6164, %v6160
    %6549 = vmatprep.subr.bf16.mxu0 %v6194
    %6550 = vmatpush1.bf16.msra.mxu0 %v6193
    %6551 = vmatprep.subr.bf16.mxu0 %v6190
    %6552 = vmatpush1.bf16.msra.mxu0 %v6189
    %6553 = vmatprep.subr.bf16.mxu0 %v6186
    %6554 = vmatpush1.bf16.msra.mxu0 %v6185
    %6555 = vmatprep.subr.bf16.mxu0 %v6182
    %6556 = vmatpush1.bf16.msra.mxu0 %v6181
    %6557 = vmatprep.subr.bf16.mxu0 %v6178
    %6558 = vmatpush1.bf16.msra.mxu0 %v6177
    %6559 = vmatprep.subr.bf16.mxu0 %v6174
    %6560 = vmatpush1.bf16.msra.mxu0 %v6173
    %6561 = vmatprep.subr.bf16.mxu0 %v6170
    %6562 = vmatpush1.bf16.msra.mxu0 %v6169
    %6563 = vmatprep.subr.bf16.mxu0 %v6166
    %6564 = vmatpush1.bf16.msra.mxu0 %v6165
    %6565 = vmatprep.subr.bf16.mxu0 %v6226
    %6566 = vmatpush2.bf16.msra.mxu0 %v6225
    %6567 = vmatprep.subr.bf16.mxu0 %v6222
    %6568 = vmatpush2.bf16.msra.mxu0 %v6221
    %6569 = vmatprep.subr.bf16.mxu0 %v6218
    %6570 = vmatpush2.bf16.msra.mxu0 %v6217
    %6571 = vmatprep.subr.bf16.mxu0 %v6214
    %6572 = vmatpush2.bf16.msra.mxu0 %v6213
    %6573 = vmatprep.subr.bf16.mxu0 %v6210
    %6574 = vmatpush2.bf16.msra.mxu0 %v6209
    %6575 = vmatprep.subr.bf16.mxu0 %v6206
    %6576 = vmatpush2.bf16.msra.mxu0 %v6205
    %6577 = vmatprep.subr.bf16.mxu0 %v6202
    %6578 = vmatpush2.bf16.msra.mxu0 %v6201
    %6579 = vmatprep.subr.bf16.mxu0 %v6198
    %6580 = vmatpush2.bf16.msra.mxu0 %v6197
    %6581 = vmatprep.mubr.bf16.mxu0 %v5392
    %6582 = vmatmul.mubr.bf16.gmra.mxu0 %v5391
    %v6583 = vpop.f32.mrf.mxu0
    %v6584 = vadd.f32 0.0, %v6583
    %v6585 = vpop.f32.mrf.mxu0
    %v6586 = vadd.f32 0.0, %v6585
    %v6587 = vpop.f32.mrf.mxu0
    %v6588 = vadd.f32 0.0, %v6587
    %v6589 = vpop.f32.mrf.mxu0
    %v6590 = vadd.f32 0.0, %v6589
    %6591 = vdwg.mxu0
    %6592 = vmatprep.subr.bf16.mxu0 %v6258
    %6593 = vmatpush1.bf16.msra.mxu0 %v6257
    %6594 = vmatprep.subr.bf16.mxu0 %v6254
    %6595 = vmatpush1.bf16.msra.mxu0 %v6253
    %6596 = vmatprep.subr.bf16.mxu0 %v6250
    %6597 = vmatpush1.bf16.msra.mxu0 %v6249
    %6598 = vmatprep.subr.bf16.mxu0 %v6246
    %6599 = vmatpush1.bf16.msra.mxu0 %v6245
    %6600 = vmatprep.subr.bf16.mxu0 %v6242
    %6601 = vmatpush1.bf16.msra.mxu0 %v6241
    %6602 = vmatprep.subr.bf16.mxu0 %v6238
    %6603 = vmatpush1.bf16.msra.mxu0 %v6237
    %6604 = vmatprep.subr.bf16.mxu0 %v6234
    %6605 = vmatpush1.bf16.msra.mxu0 %v6233
    %6606 = vmatprep.subr.bf16.mxu0 %v6230
    %6607 = vmatpush1.bf16.msra.mxu0 %v6229
    %6608 = vmatprep.subr.bf16.mxu0 %v6290
    %6609 = vmatpush2.bf16.msra.mxu0 %v6289
    %6610 = vmatprep.subr.bf16.mxu0 %v6286
    %6611 = vmatpush2.bf16.msra.mxu0 %v6285
    %6612 = vmatprep.subr.bf16.mxu0 %v6282
    %6613 = vmatpush2.bf16.msra.mxu0 %v6281
    %6614 = vmatprep.subr.bf16.mxu0 %v6278
    %6615 = vmatpush2.bf16.msra.mxu0 %v6277
    %6616 = vmatprep.subr.bf16.mxu0 %v6274
    %6617 = vmatpush2.bf16.msra.mxu0 %v6273
    %6618 = vmatprep.subr.bf16.mxu0 %v6270
    %6619 = vmatpush2.bf16.msra.mxu0 %v6269
    %6620 = vmatprep.subr.bf16.mxu0 %v6266
    %6621 = vmatpush2.bf16.msra.mxu0 %v6265
    %6622 = vmatprep.subr.bf16.mxu0 %v6262
    %6623 = vmatpush2.bf16.msra.mxu0 %v6261
    %6624 = vmatprep.mubr.bf16.mxu0 %v5394
    %6625 = vmatmul.mubr.bf16.gmra.mxu0 %v5393
    %v6626 = vpop.f32.mrf.mxu0
    %v6627 = vadd.f32 %v6584, %v6626
    %v6628 = vpop.f32.mrf.mxu0
    %v6629 = vadd.f32 %v6586, %v6628
    %v6630 = vpop.f32.mrf.mxu0
    %v6631 = vadd.f32 %v6588, %v6630
    %v6632 = vpop.f32.mrf.mxu0
    %v6633 = vadd.f32 %v6590, %v6632
    %6634 = vdwg.mxu0
    %6635 = vmatprep.subr.bf16.mxu0 %v6322
    %6636 = vmatpush1.bf16.msra.mxu0 %v6321
    %6637 = vmatprep.subr.bf16.mxu0 %v6318
    %6638 = vmatpush1.bf16.msra.mxu0 %v6317
    %6639 = vmatprep.subr.bf16.mxu0 %v6314
    %6640 = vmatpush1.bf16.msra.mxu0 %v6313
    %6641 = vmatprep.subr.bf16.mxu0 %v6310
    %6642 = vmatpush1.bf16.msra.mxu0 %v6309
    %6643 = vmatprep.subr.bf16.mxu0 %v6306
    %6644 = vmatpush1.bf16.msra.mxu0 %v6305
    %6645 = vmatprep.subr.bf16.mxu0 %v6302
    %6646 = vmatpush1.bf16.msra.mxu0 %v6301
    %6647 = vmatprep.subr.bf16.mxu0 %v6298
    %6648 = vmatpush1.bf16.msra.mxu0 %v6297
    %6649 = vmatprep.subr.bf16.mxu0 %v6294
    %6650 = vmatpush1.bf16.msra.mxu0 %v6293
    %6651 = vmatprep.subr.bf16.mxu0 %v6354
    %6652 = vmatpush2.bf16.msra.mxu0 %v6353
    %6653 = vmatprep.subr.bf16.mxu0 %v6350
    %6654 = vmatpush2.bf16.msra.mxu0 %v6349
    %6655 = vmatprep.subr.bf16.mxu0 %v6346
    %6656 = vmatpush2.bf16.msra.mxu0 %v6345
    %6657 = vmatprep.subr.bf16.mxu0 %v6342
    %6658 = vmatpush2.bf16.msra.mxu0 %v6341
    %6659 = vmatprep.subr.bf16.mxu0 %v6338
    %6660 = vmatpush2.bf16.msra.mxu0 %v6337
    %6661 = vmatprep.subr.bf16.mxu0 %v6334
    %6662 = vmatpush2.bf16.msra.mxu0 %v6333
    %6663 = vmatprep.subr.bf16.mxu0 %v6330
    %6664 = vmatpush2.bf16.msra.mxu0 %v6329
    %6665 = vmatprep.subr.bf16.mxu0 %v6326
    %6666 = vmatpush2.bf16.msra.mxu0 %v6325
    %6667 = vmatprep.mubr.bf16.mxu0 %v5396
    %6668 = vmatmul.mubr.bf16.gmra.mxu0 %v5395
    %v6669 = vpop.f32.mrf.mxu0
    %v6670 = vadd.f32 %v6627, %v6669
    %v6671 = vpop.f32.mrf.mxu0
    %v6672 = vadd.f32 %v6629, %v6671
    %v6673 = vpop.f32.mrf.mxu0
    %v6674 = vadd.f32 %v6631, %v6673
    %v6675 = vpop.f32.mrf.mxu0
    %v6676 = vadd.f32 %v6633, %v6675
    %6677 = vdwg.mxu0
    %6678 = vmatprep.subr.bf16.mxu0 %v6196
    %6679 = vmatpush1.bf16.msra.mxu0 %v6195
    %6680 = vmatprep.subr.bf16.mxu0 %v6192
    %6681 = vmatpush1.bf16.msra.mxu0 %v6191
    %6682 = vmatprep.subr.bf16.mxu0 %v6188
    %6683 = vmatpush1.bf16.msra.mxu0 %v6187
    %6684 = vmatprep.subr.bf16.mxu0 %v6184
    %6685 = vmatpush1.bf16.msra.mxu0 %v6183
    %6686 = vmatprep.subr.bf16.mxu0 %v6180
    %6687 = vmatpush1.bf16.msra.mxu0 %v6179
    %6688 = vmatprep.subr.bf16.mxu0 %v6176
    %6689 = vmatpush1.bf16.msra.mxu0 %v6175
    %6690 = vmatprep.subr.bf16.mxu0 %v6172
    %6691 = vmatpush1.bf16.msra.mxu0 %v6171
    %6692 = vmatprep.subr.bf16.mxu0 %v6168
    %6693 = vmatpush1.bf16.msra.mxu0 %v6167
    %6694 = vmatprep.subr.bf16.mxu0 %v6228
    %6695 = vmatpush2.bf16.msra.mxu0 %v6227
    %6696 = vmatprep.subr.bf16.mxu0 %v6224
    %6697 = vmatpush2.bf16.msra.mxu0 %v6223
    %6698 = vmatprep.subr.bf16.mxu0 %v6220
    %6699 = vmatpush2.bf16.msra.mxu0 %v6219
    %6700 = vmatprep.subr.bf16.mxu0 %v6216
    %6701 = vmatpush2.bf16.msra.mxu0 %v6215
    %6702 = vmatprep.subr.bf16.mxu0 %v6212
    %6703 = vmatpush2.bf16.msra.mxu0 %v6211
    %6704 = vmatprep.subr.bf16.mxu0 %v6208
    %6705 = vmatpush2.bf16.msra.mxu0 %v6207
    %6706 = vmatprep.subr.bf16.mxu0 %v6204
    %6707 = vmatpush2.bf16.msra.mxu0 %v6203
    %6708 = vmatprep.subr.bf16.mxu0 %v6200
    %6709 = vmatpush2.bf16.msra.mxu0 %v6199
    %6710 = vmatprep.mubr.bf16.mxu0 %v5392
    %6711 = vmatmul.mubr.bf16.gmra.mxu0 %v5391
    %v6712 = vpop.f32.mrf.mxu0
    %v6713 = vadd.f32 0.0, %v6712
    %v6714 = vpop.f32.mrf.mxu0
    %v6715 = vadd.f32 0.0, %v6714
    %v6716 = vpop.f32.mrf.mxu0
    %v6717 = vadd.f32 0.0, %v6716
    %v6718 = vpop.f32.mrf.mxu0
    %v6719 = vadd.f32 0.0, %v6718
    %6720 = vdwg.mxu0
    %6721 = vmatprep.subr.bf16.mxu0 %v6260
    %6722 = vmatpush1.bf16.msra.mxu0 %v6259
    %6723 = vmatprep.subr.bf16.mxu0 %v6256
    %6724 = vmatpush1.bf16.msra.mxu0 %v6255
    %6725 = vmatprep.subr.bf16.mxu0 %v6252
    %6726 = vmatpush1.bf16.msra.mxu0 %v6251
    %6727 = vmatprep.subr.bf16.mxu0 %v6248
    %6728 = vmatpush1.bf16.msra.mxu0 %v6247
    %6729 = vmatprep.subr.bf16.mxu0 %v6244
    %6730 = vmatpush1.bf16.msra.mxu0 %v6243
    %6731 = vmatprep.subr.bf16.mxu0 %v6240
    %6732 = vmatpush1.bf16.msra.mxu0 %v6239
    %6733 = vmatprep.subr.bf16.mxu0 %v6236
    %6734 = vmatpush1.bf16.msra.mxu0 %v6235
    %6735 = vmatprep.subr.bf16.mxu0 %v6232
    %6736 = vmatpush1.bf16.msra.mxu0 %v6231
    %6737 = vmatprep.subr.bf16.mxu0 %v6292
    %6738 = vmatpush2.bf16.msra.mxu0 %v6291
    %6739 = vmatprep.subr.bf16.mxu0 %v6288
    %6740 = vmatpush2.bf16.msra.mxu0 %v6287
    %6741 = vmatprep.subr.bf16.mxu0 %v6284
    %6742 = vmatpush2.bf16.msra.mxu0 %v6283
    %6743 = vmatprep.subr.bf16.mxu0 %v6280
    %6744 = vmatpush2.bf16.msra.mxu0 %v6279
    %6745 = vmatprep.subr.bf16.mxu0 %v6276
    %6746 = vmatpush2.bf16.msra.mxu0 %v6275
    %6747 = vmatprep.subr.bf16.mxu0 %v6272
    %6748 = vmatpush2.bf16.msra.mxu0 %v6271
    %6749 = vmatprep.subr.bf16.mxu0 %v6268
    %6750 = vmatpush2.bf16.msra.mxu0 %v6267
    %6751 = vmatprep.subr.bf16.mxu0 %v6264
    %6752 = vmatpush2.bf16.msra.mxu0 %v6263
    %6753 = vmatprep.mubr.bf16.mxu0 %v5394
    %6754 = vmatmul.mubr.bf16.gmra.mxu0 %v5393
    %v6755 = vpop.f32.mrf.mxu0
    %v6756 = vadd.f32 %v6713, %v6755
    %v6757 = vpop.f32.mrf.mxu0
    %v6758 = vadd.f32 %v6715, %v6757
    %v6759 = vpop.f32.mrf.mxu0
    %v6760 = vadd.f32 %v6717, %v6759
    %v6761 = vpop.f32.mrf.mxu0
    %v6762 = vadd.f32 %v6719, %v6761
    %6763 = vdwg.mxu0
    %6764 = vmatprep.subr.bf16.mxu0 %v6324
    %6765 = vmatpush1.bf16.msra.mxu0 %v6323
    %6766 = vmatprep.subr.bf16.mxu0 %v6320
    %6767 = vmatpush1.bf16.msra.mxu0 %v6319
    %6768 = vmatprep.subr.bf16.mxu0 %v6316
    %6769 = vmatpush1.bf16.msra.mxu0 %v6315
    %6770 = vmatprep.subr.bf16.mxu0 %v6312
    %6771 = vmatpush1.bf16.msra.mxu0 %v6311
    %6772 = vmatprep.subr.bf16.mxu0 %v6308
    %6773 = vmatpush1.bf16.msra.mxu0 %v6307
    %6774 = vmatprep.subr.bf16.mxu0 %v6304
    %6775 = vmatpush1.bf16.msra.mxu0 %v6303
    %6776 = vmatprep.subr.bf16.mxu0 %v6300
    %6777 = vmatpush1.bf16.msra.mxu0 %v6299
    %6778 = vmatprep.subr.bf16.mxu0 %v6296
    %6779 = vmatpush1.bf16.msra.mxu0 %v6295
    %6780 = vmatprep.subr.bf16.mxu0 %v6356
    %6781 = vmatpush2.bf16.msra.mxu0 %v6355
    %6782 = vmatprep.subr.bf16.mxu0 %v6352
    %6783 = vmatpush2.bf16.msra.mxu0 %v6351
    %6784 = vmatprep.subr.bf16.mxu0 %v6348
    %6785 = vmatpush2.bf16.msra.mxu0 %v6347
    %6786 = vmatprep.subr.bf16.mxu0 %v6344
    %6787 = vmatpush2.bf16.msra.mxu0 %v6343
    %6788 = vmatprep.subr.bf16.mxu0 %v6340
    %6789 = vmatpush2.bf16.msra.mxu0 %v6339
    %6790 = vmatprep.subr.bf16.mxu0 %v6336
    %6791 = vmatpush2.bf16.msra.mxu0 %v6335
    %6792 = vmatprep.subr.bf16.mxu0 %v6332
    %6793 = vmatpush2.bf16.msra.mxu0 %v6331
    %6794 = vmatprep.subr.bf16.mxu0 %v6328
    %6795 = vmatpush2.bf16.msra.mxu0 %v6327
    %6796 = vmatprep.mubr.bf16.mxu0 %v5396
    %6797 = vmatmul.mubr.bf16.gmra.mxu0 %v5395
    %v6798 = vpop.f32.mrf.mxu0
    %v6799 = vadd.f32 %v6756, %v6798
    %v6800 = vpop.f32.mrf.mxu0
    %v6801 = vadd.f32 %v6758, %v6800
    %v6802 = vpop.f32.mrf.mxu0
    %v6803 = vadd.f32 %v6760, %v6802
    %v6804 = vpop.f32.mrf.mxu0
    %v6805 = vadd.f32 %v6762, %v6804
    %6806 = vdwg.mxu0
    %v6807 = vld [vmem:[%s5190] sm:$0xff]
    %v6808 = vld [vmem:[%s5190 + $0x8] sm:$0xff]
    %v6809 = vld [vmem:[%s5190 + $0x10] sm:$0xff]
    %v6810 = vld [vmem:[%s5190 + $0x18] sm:$0xff]
    %v6811 = vld [vmem:[%s5190] sm:$0xfe]
    %v6812 = vld [vmem:[%s5190 + $0x8] sm:$0xfe]
    %v6813 = vld [vmem:[%s5190 + $0x20] sm:$0x1]
    %v6814 = vld [vmem:[%s5190 + $0x28] sm:$0x1]
    %v6815 = vld [vmem:[%s5190] sm:$0xfc]
    %v6816 = vld [vmem:[%s5190 + $0x8] sm:$0xfc]
    %v6817 = vld [vmem:[%s5190 + $0x20] sm:$0x3]
    %v6818 = vld [vmem:[%s5190 + $0x28] sm:$0x3]
    %v6825 = vrot.slane %v6811, 1
    %v6826 = vrot.slane %v6809, 1
    %v6827 = vsel %vm3026, %v6825, %v6826
    %v6828 = vrot.slane %v6812, 1
    %v6829 = vrot.slane %v6810, 1
    %v6830 = vsel %vm3026, %v6828, %v6829
    %v6831 = vrot.slane %v6813, 1
    %v6832 = vsel %vm3026, %v6826, %v6831
    %v6833 = vrot.slane %v6814, 1
    %v6834 = vsel %vm3026, %v6829, %v6833
    %v6843 = vrot.slane %v6815, 2
    %v6844 = vrot.slane %v6809, 2
    %v6845 = vsel %vm3039, %v6843, %v6844
    %v6846 = vrot.slane %v6816, 2
    %v6847 = vrot.slane %v6810, 2
    %v6848 = vsel %vm3039, %v6846, %v6847
    %v6849 = vrot.slane %v6817, 2
    %v6850 = vsel %vm3039, %v6844, %v6849
    %v6851 = vrot.slane %v6818, 2
    %v6852 = vsel %vm3039, %v6847, %v6851
    %v6857 = vpack.c.bf16 %v6809, %v6807
    %v6858 = vpack.c.bf16 %v6810, %v6808
    %v6859 = vpack.c.bf16 %v6832, %v6827
    %v6860 = vpack.c.bf16 %v6834, %v6830
    %v6861 = vpack.c.bf16 %v6850, %v6845
    %v6862 = vpack.c.bf16 %v6852, %v6848
    %6863 = vmatprep.subr.bf16.mxu0 %v6194
    %6864 = vmatpush1.bf16.msra.mxu0 %v6193
    %6865 = vmatprep.subr.bf16.mxu0 %v6190
    %6866 = vmatpush1.bf16.msra.mxu0 %v6189
    %6867 = vmatprep.subr.bf16.mxu0 %v6186
    %6868 = vmatpush1.bf16.msra.mxu0 %v6185
    %6869 = vmatprep.subr.bf16.mxu0 %v6182
    %6870 = vmatpush1.bf16.msra.mxu0 %v6181
    %6871 = vmatprep.subr.bf16.mxu0 %v6178
    %6872 = vmatpush1.bf16.msra.mxu0 %v6177
    %6873 = vmatprep.subr.bf16.mxu0 %v6174
    %6874 = vmatpush1.bf16.msra.mxu0 %v6173
    %6875 = vmatprep.subr.bf16.mxu0 %v6170
    %6876 = vmatpush1.bf16.msra.mxu0 %v6169
    %6877 = vmatprep.subr.bf16.mxu0 %v6166
    %6878 = vmatpush1.bf16.msra.mxu0 %v6165
    %6879 = vmatprep.subr.bf16.mxu0 %v6226
    %6880 = vmatpush2.bf16.msra.mxu0 %v6225
    %6881 = vmatprep.subr.bf16.mxu0 %v6222
    %6882 = vmatpush2.bf16.msra.mxu0 %v6221
    %6883 = vmatprep.subr.bf16.mxu0 %v6218
    %6884 = vmatpush2.bf16.msra.mxu0 %v6217
    %6885 = vmatprep.subr.bf16.mxu0 %v6214
    %6886 = vmatpush2.bf16.msra.mxu0 %v6213
    %6887 = vmatprep.subr.bf16.mxu0 %v6210
    %6888 = vmatpush2.bf16.msra.mxu0 %v6209
    %6889 = vmatprep.subr.bf16.mxu0 %v6206
    %6890 = vmatpush2.bf16.msra.mxu0 %v6205
    %6891 = vmatprep.subr.bf16.mxu0 %v6202
    %6892 = vmatpush2.bf16.msra.mxu0 %v6201
    %6893 = vmatprep.subr.bf16.mxu0 %v6198
    %6894 = vmatpush2.bf16.msra.mxu0 %v6197
    %6895 = vmatprep.mubr.bf16.mxu0 %v6858
    %6896 = vmatmul.mubr.bf16.gmra.mxu0 %v6857
    %v6897 = vpop.f32.mrf.mxu0
    %v6898 = vadd.f32 0.0, %v6897
    %v6899 = vpop.f32.mrf.mxu0
    %v6900 = vadd.f32 0.0, %v6899
    %v6901 = vpop.f32.mrf.mxu0
    %v6902 = vadd.f32 0.0, %v6901
    %v6903 = vpop.f32.mrf.mxu0
    %v6904 = vadd.f32 0.0, %v6903
    %6905 = vdwg.mxu0
    %6906 = vmatprep.subr.bf16.mxu0 %v6258
    %6907 = vmatpush1.bf16.msra.mxu0 %v6257
    %6908 = vmatprep.subr.bf16.mxu0 %v6254
    %6909 = vmatpush1.bf16.msra.mxu0 %v6253
    %6910 = vmatprep.subr.bf16.mxu0 %v6250
    %6911 = vmatpush1.bf16.msra.mxu0 %v6249
    %6912 = vmatprep.subr.bf16.mxu0 %v6246
    %6913 = vmatpush1.bf16.msra.mxu0 %v6245
    %6914 = vmatprep.subr.bf16.mxu0 %v6242
    %6915 = vmatpush1.bf16.msra.mxu0 %v6241
    %6916 = vmatprep.subr.bf16.mxu0 %v6238
    %6917 = vmatpush1.bf16.msra.mxu0 %v6237
    %6918 = vmatprep.subr.bf16.mxu0 %v6234
    %6919 = vmatpush1.bf16.msra.mxu0 %v6233
    %6920 = vmatprep.subr.bf16.mxu0 %v6230
    %6921 = vmatpush1.bf16.msra.mxu0 %v6229
    %6922 = vmatprep.subr.bf16.mxu0 %v6290
    %6923 = vmatpush2.bf16.msra.mxu0 %v6289
    %6924 = vmatprep.subr.bf16.mxu0 %v6286
    %6925 = vmatpush2.bf16.msra.mxu0 %v6285
    %6926 = vmatprep.subr.bf16.mxu0 %v6282
    %6927 = vmatpush2.bf16.msra.mxu0 %v6281
    %6928 = vmatprep.subr.bf16.mxu0 %v6278
    %6929 = vmatpush2.bf16.msra.mxu0 %v6277
    %6930 = vmatprep.subr.bf16.mxu0 %v6274
    %6931 = vmatpush2.bf16.msra.mxu0 %v6273
    %6932 = vmatprep.subr.bf16.mxu0 %v6270
    %6933 = vmatpush2.bf16.msra.mxu0 %v6269
    %6934 = vmatprep.subr.bf16.mxu0 %v6266
    %6935 = vmatpush2.bf16.msra.mxu0 %v6265
    %6936 = vmatprep.subr.bf16.mxu0 %v6262
    %6937 = vmatpush2.bf16.msra.mxu0 %v6261
    %6938 = vmatprep.mubr.bf16.mxu0 %v6860
    %6939 = vmatmul.mubr.bf16.gmra.mxu0 %v6859
    %v6940 = vpop.f32.mrf.mxu0
    %v6941 = vadd.f32 %v6898, %v6940
    %v6942 = vpop.f32.mrf.mxu0
    %v6943 = vadd.f32 %v6900, %v6942
    %v6944 = vpop.f32.mrf.mxu0
    %v6945 = vadd.f32 %v6902, %v6944
    %v6946 = vpop.f32.mrf.mxu0
    %v6947 = vadd.f32 %v6904, %v6946
    %6948 = vdwg.mxu0
    %6949 = vmatprep.subr.bf16.mxu0 %v6322
    %6950 = vmatpush1.bf16.msra.mxu0 %v6321
    %6951 = vmatprep.subr.bf16.mxu0 %v6318
    %6952 = vmatpush1.bf16.msra.mxu0 %v6317
    %6953 = vmatprep.subr.bf16.mxu0 %v6314
    %6954 = vmatpush1.bf16.msra.mxu0 %v6313
    %6955 = vmatprep.subr.bf16.mxu0 %v6310
    %6956 = vmatpush1.bf16.msra.mxu0 %v6309
    %6957 = vmatprep.subr.bf16.mxu0 %v6306
    %6958 = vmatpush1.bf16.msra.mxu0 %v6305
    %6959 = vmatprep.subr.bf16.mxu0 %v6302
    %6960 = vmatpush1.bf16.msra.mxu0 %v6301
    %6961 = vmatprep.subr.bf16.mxu0 %v6298
    %6962 = vmatpush1.bf16.msra.mxu0 %v6297
    %6963 = vmatprep.subr.bf16.mxu0 %v6294
    %6964 = vmatpush1.bf16.msra.mxu0 %v6293
    %6965 = vmatprep.subr.bf16.mxu0 %v6354
    %6966 = vmatpush2.bf16.msra.mxu0 %v6353
    %6967 = vmatprep.subr.bf16.mxu0 %v6350
    %6968 = vmatpush2.bf16.msra.mxu0 %v6349
    %6969 = vmatprep.subr.bf16.mxu0 %v6346
    %6970 = vmatpush2.bf16.msra.mxu0 %v6345
    %6971 = vmatprep.subr.bf16.mxu0 %v6342
    %6972 = vmatpush2.bf16.msra.mxu0 %v6341
    %6973 = vmatprep.subr.bf16.mxu0 %v6338
    %6974 = vmatpush2.bf16.msra.mxu0 %v6337
    %6975 = vmatprep.subr.bf16.mxu0 %v6334
    %6976 = vmatpush2.bf16.msra.mxu0 %v6333
    %6977 = vmatprep.subr.bf16.mxu0 %v6330
    %6978 = vmatpush2.bf16.msra.mxu0 %v6329
    %6979 = vmatprep.subr.bf16.mxu0 %v6326
    %6980 = vmatpush2.bf16.msra.mxu0 %v6325
    %6981 = vmatprep.mubr.bf16.mxu0 %v6862
    %6982 = vmatmul.mubr.bf16.gmra.mxu0 %v6861
    %v6983 = vpop.f32.mrf.mxu0
    %v6984 = vadd.f32 %v6941, %v6983
    %v6985 = vpop.f32.mrf.mxu0
    %v6986 = vadd.f32 %v6943, %v6985
    %v6987 = vpop.f32.mrf.mxu0
    %v6988 = vadd.f32 %v6945, %v6987
    %v6989 = vpop.f32.mrf.mxu0
    %v6990 = vadd.f32 %v6947, %v6989
    %6991 = vdwg.mxu0
    %6992 = vmatprep.subr.bf16.mxu0 %v6196
    %6993 = vmatpush1.bf16.msra.mxu0 %v6195
    %6994 = vmatprep.subr.bf16.mxu0 %v6192
    %6995 = vmatpush1.bf16.msra.mxu0 %v6191
    %6996 = vmatprep.subr.bf16.mxu0 %v6188
    %6997 = vmatpush1.bf16.msra.mxu0 %v6187
    %6998 = vmatprep.subr.bf16.mxu0 %v6184
    %6999 = vmatpush1.bf16.msra.mxu0 %v6183
    %7000 = vmatprep.subr.bf16.mxu0 %v6180
    %7001 = vmatpush1.bf16.msra.mxu0 %v6179
    %7002 = vmatprep.subr.bf16.mxu0 %v6176
    %7003 = vmatpush1.bf16.msra.mxu0 %v6175
    %7004 = vmatprep.subr.bf16.mxu0 %v6172
    %7005 = vmatpush1.bf16.msra.mxu0 %v6171
    %7006 = vmatprep.subr.bf16.mxu0 %v6168
    %7007 = vmatpush1.bf16.msra.mxu0 %v6167
    %7008 = vmatprep.subr.bf16.mxu0 %v6228
    %7009 = vmatpush2.bf16.msra.mxu0 %v6227
    %7010 = vmatprep.subr.bf16.mxu0 %v6224
    %7011 = vmatpush2.bf16.msra.mxu0 %v6223
    %7012 = vmatprep.subr.bf16.mxu0 %v6220
    %7013 = vmatpush2.bf16.msra.mxu0 %v6219
    %7014 = vmatprep.subr.bf16.mxu0 %v6216
    %7015 = vmatpush2.bf16.msra.mxu0 %v6215
    %7016 = vmatprep.subr.bf16.mxu0 %v6212
    %7017 = vmatpush2.bf16.msra.mxu0 %v6211
    %7018 = vmatprep.subr.bf16.mxu0 %v6208
    %7019 = vmatpush2.bf16.msra.mxu0 %v6207
    %7020 = vmatprep.subr.bf16.mxu0 %v6204
    %7021 = vmatpush2.bf16.msra.mxu0 %v6203
    %7022 = vmatprep.subr.bf16.mxu0 %v6200
    %7023 = vmatpush2.bf16.msra.mxu0 %v6199
    %7024 = vmatprep.mubr.bf16.mxu0 %v6858
    %7025 = vmatmul.mubr.bf16.gmra.mxu0 %v6857
    %v7026 = vpop.f32.mrf.mxu0
    %v7027 = vadd.f32 0.0, %v7026
    %v7028 = vpop.f32.mrf.mxu0
    %v7029 = vadd.f32 0.0, %v7028
    %v7030 = vpop.f32.mrf.mxu0
    %v7031 = vadd.f32 0.0, %v7030
    %v7032 = vpop.f32.mrf.mxu0
    %v7033 = vadd.f32 0.0, %v7032
    %7034 = vdwg.mxu0
    %7035 = vmatprep.subr.bf16.mxu0 %v6260
    %7036 = vmatpush1.bf16.msra.mxu0 %v6259
    %7037 = vmatprep.subr.bf16.mxu0 %v6256
    %7038 = vmatpush1.bf16.msra.mxu0 %v6255
    %7039 = vmatprep.subr.bf16.mxu0 %v6252
    %7040 = vmatpush1.bf16.msra.mxu0 %v6251
    %7041 = vmatprep.subr.bf16.mxu0 %v6248
    %7042 = vmatpush1.bf16.msra.mxu0 %v6247
    %7043 = vmatprep.subr.bf16.mxu0 %v6244
    %7044 = vmatpush1.bf16.msra.mxu0 %v6243
    %7045 = vmatprep.subr.bf16.mxu0 %v6240
    %7046 = vmatpush1.bf16.msra.mxu0 %v6239
    %7047 = vmatprep.subr.bf16.mxu0 %v6236
    %7048 = vmatpush1.bf16.msra.mxu0 %v6235
    %7049 = vmatprep.subr.bf16.mxu0 %v6232
    %7050 = vmatpush1.bf16.msra.mxu0 %v6231
    %7051 = vmatprep.subr.bf16.mxu0 %v6292
    %7052 = vmatpush2.bf16.msra.mxu0 %v6291
    %7053 = vmatprep.subr.bf16.mxu0 %v6288
    %7054 = vmatpush2.bf16.msra.mxu0 %v6287
    %7055 = vmatprep.subr.bf16.mxu0 %v6284
    %7056 = vmatpush2.bf16.msra.mxu0 %v6283
    %7057 = vmatprep.subr.bf16.mxu0 %v6280
    %7058 = vmatpush2.bf16.msra.mxu0 %v6279
    %7059 = vmatprep.subr.bf16.mxu0 %v6276
    %7060 = vmatpush2.bf16.msra.mxu0 %v6275
    %7061 = vmatprep.subr.bf16.mxu0 %v6272
    %7062 = vmatpush2.bf16.msra.mxu0 %v6271
    %7063 = vmatprep.subr.bf16.mxu0 %v6268
    %7064 = vmatpush2.bf16.msra.mxu0 %v6267
    %7065 = vmatprep.subr.bf16.mxu0 %v6264
    %7066 = vmatpush2.bf16.msra.mxu0 %v6263
    %7067 = vmatprep.mubr.bf16.mxu0 %v6860
    %7068 = vmatmul.mubr.bf16.gmra.mxu0 %v6859
    %v7069 = vpop.f32.mrf.mxu0
    %v7070 = vadd.f32 %v7027, %v7069
    %v7071 = vpop.f32.mrf.mxu0
    %v7072 = vadd.f32 %v7029, %v7071
    %v7073 = vpop.f32.mrf.mxu0
    %v7074 = vadd.f32 %v7031, %v7073
    %v7075 = vpop.f32.mrf.mxu0
    %v7076 = vadd.f32 %v7033, %v7075
    %7077 = vdwg.mxu0
    %7078 = vmatprep.subr.bf16.mxu0 %v6324
    %7079 = vmatpush1.bf16.msra.mxu0 %v6323
    %7080 = vmatprep.subr.bf16.mxu0 %v6320
    %7081 = vmatpush1.bf16.msra.mxu0 %v6319
    %7082 = vmatprep.subr.bf16.mxu0 %v6316
    %7083 = vmatpush1.bf16.msra.mxu0 %v6315
    %7084 = vmatprep.subr.bf16.mxu0 %v6312
    %7085 = vmatpush1.bf16.msra.mxu0 %v6311
    %7086 = vmatprep.subr.bf16.mxu0 %v6308
    %7087 = vmatpush1.bf16.msra.mxu0 %v6307
    %7088 = vmatprep.subr.bf16.mxu0 %v6304
    %7089 = vmatpush1.bf16.msra.mxu0 %v6303
    %7090 = vmatprep.subr.bf16.mxu0 %v6300
    %7091 = vmatpush1.bf16.msra.mxu0 %v6299
    %7092 = vmatprep.subr.bf16.mxu0 %v6296
    %7093 = vmatpush1.bf16.msra.mxu0 %v6295
    %7094 = vmatprep.subr.bf16.mxu0 %v6356
    %7095 = vmatpush2.bf16.msra.mxu0 %v6355
    %7096 = vmatprep.subr.bf16.mxu0 %v6352
    %7097 = vmatpush2.bf16.msra.mxu0 %v6351
    %7098 = vmatprep.subr.bf16.mxu0 %v6348
    %7099 = vmatpush2.bf16.msra.mxu0 %v6347
    %7100 = vmatprep.subr.bf16.mxu0 %v6344
    %7101 = vmatpush2.bf16.msra.mxu0 %v6343
    %7102 = vmatprep.subr.bf16.mxu0 %v6340
    %7103 = vmatpush2.bf16.msra.mxu0 %v6339
    %7104 = vmatprep.subr.bf16.mxu0 %v6336
    %7105 = vmatpush2.bf16.msra.mxu0 %v6335
    %7106 = vmatprep.subr.bf16.mxu0 %v6332
    %7107 = vmatpush2.bf16.msra.mxu0 %v6331
    %7108 = vmatprep.subr.bf16.mxu0 %v6328
    %7109 = vmatpush2.bf16.msra.mxu0 %v6327
    %7110 = vmatprep.mubr.bf16.mxu0 %v6862
    %7111 = vmatmul.mubr.bf16.gmra.mxu0 %v6861
    %v7112 = vpop.f32.mrf.mxu0
    %v7113 = vadd.f32 %v7070, %v7112
    %v7114 = vpop.f32.mrf.mxu0
    %v7115 = vadd.f32 %v7072, %v7114
    %v7116 = vpop.f32.mrf.mxu0
    %v7117 = vadd.f32 %v7074, %v7116
    %v7118 = vpop.f32.mrf.mxu0
    %v7119 = vadd.f32 %v7076, %v7118
    %7120 = vdwg.mxu0
    %v7121 = vadd.f32 %v6670, %v6674
    %v7122 = vrot.slane %v7121, 4
    %v7123 = vadd.f32 %v7121, %v7122
    %v7124 = vrot.slane %v7123, 2
    %v7125 = vadd.f32 %v7123, %v7124
    %v7126 = vrot.slane %v7125, 1
    %v7127 = vadd.f32 %v7125, %v7126
    %v7128 = vadd.f32 %v6672, %v6676
    %v7129 = vrot.slane %v7128, 4
    %v7130 = vadd.f32 %v7128, %v7129
    %v7131 = vrot.slane %v7130, 2
    %v7132 = vadd.f32 %v7130, %v7131
    %v7133 = vrot.slane %v7132, 1
    %v7134 = vadd.f32 %v7132, %v7133
    %v7135 = vadd.f32 %v6799, %v6803
    %v7136 = vrot.slane %v7135, 4
    %v7137 = vadd.f32 %v7135, %v7136
    %v7138 = vrot.slane %v7137, 2
    %v7139 = vadd.f32 %v7137, %v7138
    %v7140 = vrot.slane %v7139, 1
    %v7141 = vadd.f32 %v7139, %v7140
    %v7142 = vadd.f32 %v6801, %v6805
    %v7143 = vrot.slane %v7142, 4
    %v7144 = vadd.f32 %v7142, %v7143
    %v7145 = vrot.slane %v7144, 2
    %v7146 = vadd.f32 %v7144, %v7145
    %v7147 = vrot.slane %v7146, 1
    %v7148 = vadd.f32 %v7146, %v7147
    %v7149 = vadd.f32 %v6984, %v6988
    %v7150 = vrot.slane %v7149, 4
    %v7151 = vadd.f32 %v7149, %v7150
    %v7152 = vrot.slane %v7151, 2
    %v7153 = vadd.f32 %v7151, %v7152
    %v7154 = vrot.slane %v7153, 1
    %v7155 = vadd.f32 %v7153, %v7154
    %v7156 = vadd.f32 %v6986, %v6990
    %v7157 = vrot.slane %v7156, 4
    %v7158 = vadd.f32 %v7156, %v7157
    %v7159 = vrot.slane %v7158, 2
    %v7160 = vadd.f32 %v7158, %v7159
    %v7161 = vrot.slane %v7160, 1
    %v7162 = vadd.f32 %v7160, %v7161
    %v7163 = vadd.f32 %v7113, %v7117
    %v7164 = vrot.slane %v7163, 4
    %v7165 = vadd.f32 %v7163, %v7164
    %v7166 = vrot.slane %v7165, 2
    %v7167 = vadd.f32 %v7165, %v7166
    %v7168 = vrot.slane %v7167, 1
    %v7169 = vadd.f32 %v7167, %v7168
    %v7170 = vadd.f32 %v7115, %v7119
    %v7171 = vrot.slane %v7170, 4
    %v7172 = vadd.f32 %v7170, %v7171
    %v7173 = vrot.slane %v7172, 2
    %v7174 = vadd.f32 %v7172, %v7173
    %v7175 = vrot.slane %v7174, 1
    %v7176 = vadd.f32 %v7174, %v7175
    %v7177 = vadd.f32 %v7127, %v7155
    %v7178 = vadd.f32 %v7134, %v7162
    %v7179 = vadd.f32 %v7141, %v7169
    %v7180 = vadd.f32 %v7148, %v7176
    %v7181 = vadd.f32 %v7177, %v7179
    %v7182 = vadd.f32 %v7178, %v7180
    %v7183 = vadd.f32 %v7181, %v7182
    %7185 = vrot.lane.b32.xlu0 %v7183, 64
    %v7186 = vpop.permute.xlu0 %7185
    %v7188 = vadd.f32 %v7183, %v7186
    %7190 = vrot.lane.b32.xlu0 %v7188, 96
    %v7191 = vpop.permute.xlu0 %7190
    %v7193 = vadd.f32 %v7188, %v7191
    %7195 = vrot.lane.b32.xlu0 %v7193, 112
    %v7196 = vpop.permute.xlu0 %7195
    %v7198 = vadd.f32 %v7193, %v7196
    %7200 = vrot.lane.b32.xlu0 %v7198, 120
    %v7201 = vpop.permute.xlu0 %7200
    %v7203 = vadd.f32 %v7198, %v7201
    %v7204 = vmul.f32 %v7203, 0.00048828125
    %7206 = vrot.lane.b32.xlu0 %v7204, 8
    %v7207 = vpop.permute.xlu0 %7206
    %vm7209 = vcmask 64512
    %v7210 = vsel %vm7209, %v7204, %v7207
    %7212 = vrot.lane.b32.xlu0 %v7210, 16
    %v7213 = vpop.permute.xlu0 %7212
    %v7215 = vsel %vm263, %v7210, %v7213
    %7217 = vrot.lane.b32.xlu0 %v7215, 32
    %v7218 = vpop.permute.xlu0 %7217
    %v7220 = vsel %vm362, %v7215, %v7218
    %7222 = vrot.lane.b32.xlu0 %v7220, 64
    %v7223 = vpop.permute.xlu0 %7222
    %v7225 = vsel %vm604, %v7220, %v7223
    %v7226 = vlaneseq
    %v7227 = vshrl.u32 %v7226, 7
    %v7228 = vsub.s32 0, %v7227
    %v7229 = vrot.slane %v7225, %v7228
    %v7230 = vsub.f32 %v6670, %v7229
    %v7231 = vsub.f32 %v6672, %v7229
    %v7232 = vsub.f32 %v6799, %v7229
    %v7233 = vsub.f32 %v6801, %v7229
    %v7234 = vsub.f32 %v6674, %v7229
    %v7235 = vsub.f32 %v6676, %v7229
    %v7236 = vsub.f32 %v6803, %v7229
    %v7237 = vsub.f32 %v6805, %v7229
    %v7238 = vmul.f32 %v7230, %v7230
    %v7239 = vmul.f32 %v7231, %v7231
    %v7240 = vmul.f32 %v7232, %v7232
    %v7241 = vmul.f32 %v7233, %v7233
    %v7242 = vmul.f32 %v7234, %v7234
    %v7243 = vmul.f32 %v7235, %v7235
    %v7244 = vmul.f32 %v7236, %v7236
    %v7245 = vmul.f32 %v7237, %v7237
    %v7246 = vadd.f32 %v7238, %v7242
    %v7247 = vrot.slane %v7246, 4
    %v7248 = vadd.f32 %v7246, %v7247
    %v7249 = vrot.slane %v7248, 2
    %v7250 = vadd.f32 %v7248, %v7249
    %v7251 = vrot.slane %v7250, 1
    %v7252 = vadd.f32 %v7250, %v7251
    %v7253 = vadd.f32 %v7239, %v7243
    %v7254 = vrot.slane %v7253, 4
    %v7255 = vadd.f32 %v7253, %v7254
    %v7256 = vrot.slane %v7255, 2
    %v7257 = vadd.f32 %v7255, %v7256
    %v7258 = vrot.slane %v7257, 1
    %v7259 = vadd.f32 %v7257, %v7258
    %v7260 = vadd.f32 %v7240, %v7244
    %v7261 = vrot.slane %v7260, 4
    %v7262 = vadd.f32 %v7260, %v7261
    %v7263 = vrot.slane %v7262, 2
    %v7264 = vadd.f32 %v7262, %v7263
    %v7265 = vrot.slane %v7264, 1
    %v7266 = vadd.f32 %v7264, %v7265
    %v7267 = vadd.f32 %v7241, %v7245
    %v7268 = vrot.slane %v7267, 4
    %v7269 = vadd.f32 %v7267, %v7268
    %v7270 = vrot.slane %v7269, 2
    %v7271 = vadd.f32 %v7269, %v7270
    %v7272 = vrot.slane %v7271, 1
    %v7273 = vadd.f32 %v7271, %v7272
    %v7274 = vsub.f32 %v6984, %v7229
    %v7275 = vsub.f32 %v6986, %v7229
    %v7276 = vsub.f32 %v7113, %v7229
    %v7277 = vsub.f32 %v7115, %v7229
    %v7278 = vsub.f32 %v6988, %v7229
    %v7279 = vsub.f32 %v6990, %v7229
    %v7280 = vsub.f32 %v7117, %v7229
    %v7281 = vsub.f32 %v7119, %v7229
    %v7282 = vmul.f32 %v7274, %v7274
    %v7283 = vmul.f32 %v7275, %v7275
    %v7284 = vmul.f32 %v7276, %v7276
    %v7285 = vmul.f32 %v7277, %v7277
    %v7286 = vmul.f32 %v7278, %v7278
    %v7287 = vmul.f32 %v7279, %v7279
    %v7288 = vmul.f32 %v7280, %v7280
    %v7289 = vmul.f32 %v7281, %v7281
    %v7290 = vadd.f32 %v7282, %v7286
    %v7291 = vrot.slane %v7290, 4
    %v7292 = vadd.f32 %v7290, %v7291
    %v7293 = vrot.slane %v7292, 2
    %v7294 = vadd.f32 %v7292, %v7293
    %v7295 = vrot.slane %v7294, 1
    %v7296 = vadd.f32 %v7294, %v7295
    %v7297 = vadd.f32 %v7283, %v7287
    %v7298 = vrot.slane %v7297, 4
    %v7299 = vadd.f32 %v7297, %v7298
    %v7300 = vrot.slane %v7299, 2
    %v7301 = vadd.f32 %v7299, %v7300
    %v7302 = vrot.slane %v7301, 1
    %v7303 = vadd.f32 %v7301, %v7302
    %v7304 = vadd.f32 %v7284, %v7288
    %v7305 = vrot.slane %v7304, 4
    %v7306 = vadd.f32 %v7304, %v7305
    %v7307 = vrot.slane %v7306, 2
    %v7308 = vadd.f32 %v7306, %v7307
    %v7309 = vrot.slane %v7308, 1
    %v7310 = vadd.f32 %v7308, %v7309
    %v7311 = vadd.f32 %v7285, %v7289
    %v7312 = vrot.slane %v7311, 4
    %v7313 = vadd.f32 %v7311, %v7312
    %v7314 = vrot.slane %v7313, 2
    %v7315 = vadd.f32 %v7313, %v7314
    %v7316 = vrot.slane %v7315, 1
    %v7317 = vadd.f32 %v7315, %v7316
    %v7318 = vadd.f32 %v7252, %v7296
    %v7319 = vadd.f32 %v7259, %v7303
    %v7320 = vadd.f32 %v7266, %v7310
    %v7321 = vadd.f32 %v7273, %v7317
    %v7322 = vadd.f32 %v7318, %v7320
    %v7323 = vadd.f32 %v7319, %v7321
    %v7324 = vadd.f32 %v7322, %v7323
    %7326 = vrot.lane.b32.xlu0 %v7324, 64
    %v7327 = vpop.permute.xlu0 %7326
    %v7329 = vadd.f32 %v7324, %v7327
    %7331 = vrot.lane.b32.xlu0 %v7329, 96
    %v7332 = vpop.permute.xlu0 %7331
    %v7334 = vadd.f32 %v7329, %v7332
    %7336 = vrot.lane.b32.xlu0 %v7334, 112
    %v7337 = vpop.permute.xlu0 %7336
    %v7339 = vadd.f32 %v7334, %v7337
    %7341 = vrot.lane.b32.xlu0 %v7339, 120
    %v7342 = vpop.permute.xlu0 %7341
    %v7344 = vadd.f32 %v7339, %v7342
    %v7345 = vmul.f32 %v7344, 0.00048828125
    %v7346 = vld [vmem:[%s14] sm:$0x1]
    %v7347 = vadd.f32 %v7345, 1e-05
    %v7348 = vrsqrt.pop %v7347
    %v7349 = vmul.f32 %v7346, %v7348
    %v7350 = vld [vmem:[#allocation20] sm:$0x1]
    %v7351 = vmul.f32 %v7204, %v7349
    %v7352 = vsub.f32 %v7350, %v7351
    %v7354 = vlaneseq
    %v7355 = vshrl.u32 %v7354, 7
    %v7356 = vsub.s32 0, %v7355
    %v7357 = vrot.slane %v7349, %v7356
    %7358 = vrot.lane.b32.xlu0 %v7357, 8
    %v7359 = vpop.permute.xlu0 %7358
    %v7361 = vsel %vm7209, %v7349, %v7359
    %7363 = vrot.lane.b32.xlu0 %v7361, 16
    %v7364 = vpop.permute.xlu0 %7363
    %v7366 = vsel %vm263, %v7361, %v7364
    %7368 = vrot.lane.b32.xlu0 %v7366, 32
    %v7369 = vpop.permute.xlu0 %7368
    %v7371 = vsel %vm362, %v7366, %v7369
    %7373 = vrot.lane.b32.xlu0 %v7371, 64
    %v7374 = vpop.permute.xlu0 %7373
    %v7376 = vsel %vm604, %v7371, %v7374
    %v7378 = vlaneseq
    %v7379 = vshrl.u32 %v7378, 7
    %v7380 = vsub.s32 0, %v7379
    %v7381 = vrot.slane %v7352, %v7380
    %7382 = vrot.lane.b32.xlu0 %v7381, 8
    %v7383 = vpop.permute.xlu0 %7382
    %v7385 = vsel %vm7209, %v7352, %v7383
    %7387 = vrot.lane.b32.xlu0 %v7385, 16
    %v7388 = vpop.permute.xlu0 %7387
    %v7390 = vsel %vm263, %v7385, %v7388
    %7392 = vrot.lane.b32.xlu0 %v7390, 32
    %v7393 = vpop.permute.xlu0 %7392
    %v7395 = vsel %vm362, %v7390, %v7393
    %7397 = vrot.lane.b32.xlu0 %v7395, 64
    %v7398 = vpop.permute.xlu0 %7397
    %v7400 = vsel %vm604, %v7395, %v7398
    %v7401 = vlaneseq
    %v7402 = vshrl.u32 %v7401, 7
    %v7403 = vsub.s32 0, %v7402
    %v7404 = vrot.slane %v7376, %v7403
    %v7405 = vmul.f32 %v6670, %v7404
    %v7406 = vmul.f32 %v6672, %v7404
    %v7407 = vmul.f32 %v6799, %v7404
    %v7408 = vmul.f32 %v6801, %v7404
    %v7409 = vmul.f32 %v6674, %v7404
    %v7410 = vmul.f32 %v6676, %v7404
    %v7411 = vmul.f32 %v6803, %v7404
    %v7412 = vmul.f32 %v6805, %v7404
    %v7413 = vlaneseq
    %v7414 = vshrl.u32 %v7413, 7
    %v7415 = vsub.s32 0, %v7414
    %v7416 = vrot.slane %v7400, %v7415
    %v7417 = vadd.f32 %v7405, %v7416
    %v7418 = vadd.f32 %v7406, %v7416
    %v7419 = vadd.f32 %v7407, %v7416
    %v7420 = vadd.f32 %v7408, %v7416
    %v7421 = vadd.f32 %v7409, %v7416
    %v7422 = vadd.f32 %v7410, %v7416
    %v7423 = vadd.f32 %v7411, %v7416
    %v7424 = vadd.f32 %v7412, %v7416
    %v7425 = vmax.f32 %v7417, 0.0
    %v7426 = vmax.f32 %v7418, 0.0
    %v7427 = vmax.f32 %v7419, 0.0
    %v7428 = vmax.f32 %v7420, 0.0
    %v7429 = vmax.f32 %v7421, 0.0
    %v7430 = vmax.f32 %v7422, 0.0
    %v7431 = vmax.f32 %v7423, 0.0
    %v7432 = vmax.f32 %v7424, 0.0
    %v7433 = vmul.f32 %v6984, %v7404
    %v7434 = vmul.f32 %v6986, %v7404
    %v7435 = vmul.f32 %v7113, %v7404
    %v7436 = vmul.f32 %v7115, %v7404
    %v7437 = vmul.f32 %v6988, %v7404
    %v7438 = vmul.f32 %v6990, %v7404
    %v7439 = vmul.f32 %v7117, %v7404
    %v7440 = vmul.f32 %v7119, %v7404
    %v7441 = vadd.f32 %v7433, %v7416
    %v7442 = vadd.f32 %v7434, %v7416
    %v7443 = vadd.f32 %v7435, %v7416
    %v7444 = vadd.f32 %v7436, %v7416
    %v7445 = vadd.f32 %v7437, %v7416
    %v7446 = vadd.f32 %v7438, %v7416
    %v7447 = vadd.f32 %v7439, %v7416
    %v7448 = vadd.f32 %v7440, %v7416
    %v7449 = vmax.f32 %v7441, 0.0
    %v7450 = vmax.f32 %v7442, 0.0
    %v7451 = vmax.f32 %v7443, 0.0
    %v7452 = vmax.f32 %v7444, 0.0
    %v7453 = vmax.f32 %v7445, 0.0
    %v7454 = vmax.f32 %v7446, 0.0
    %v7455 = vmax.f32 %v7447, 0.0
    %v7456 = vmax.f32 %v7448, 0.0
    %7457 = vst [vmem:[#allocation5] sm:$0xff] 0.0
    %7458 = vst [vmem:[#allocation5 + $0x8] sm:$0xff] 0.0
    %7459 = vst [vmem:[#allocation5 + $0x10] sm:$0xff] 0.0
    %7460 = vst [vmem:[#allocation5 + $0x18] sm:$0xff] 0.0
    %7461 = vst [vmem:[#allocation5 + $0x20] sm:$0xff] 0.0
    %7462 = vst [vmem:[#allocation5 + $0x28] sm:$0xff] 0.0
    %7463 = vst [vmem:[#allocation5 + $0x30] sm:$0xff] 0.0
    %7464 = vst [vmem:[#allocation5 + $0x38] sm:$0xff] 0.0
    %7465 = vst [vmem:[#allocation5 + $0x40] sm:$0x3] 0.0
    %7466 = vst [vmem:[#allocation5 + $0x48] sm:$0x3] 0.0
    %7467 = vst [vmem:[#allocation5 + $0x50] sm:$0xff] 0.0
    %7468 = vst [vmem:[#allocation5 + $0x58] sm:$0xff] 0.0
    %7469 = vst [vmem:[#allocation5 + $0x60] sm:$0xff] 0.0
    %7470 = vst [vmem:[#allocation5 + $0x68] sm:$0xff] 0.0
    %7471 = vst [vmem:[#allocation5 + $0x70] sm:$0xff] 0.0
    %7472 = vst [vmem:[#allocation5 + $0x78] sm:$0xff] 0.0
    %7473 = vst [vmem:[#allocation5 + $0x80] sm:$0xff] 0.0
    %7474 = vst [vmem:[#allocation5 + $0x88] sm:$0xff] 0.0
    %7475 = vst [vmem:[#allocation5 + $0x90] sm:$0x3] 0.0
    %7476 = vst [vmem:[#allocation5 + $0x98] sm:$0x3] 0.0
    %v7479 = vcombine.low %v7425, %v7426
    %v7481 = vunpack.c.l.s4 1966171168
    %v7482 = vunpack.c.0.s8 %v7481
    %v7483 = vlaneseq
    %v7484 = vshrl.u32 %v7483, 7
    %v7485 = vsub.s32 %v7482, %v7484
    %v7486 = vrot.slane %v7479, %v7485
    %v7488 = vunpack.c.l.s4 1966171168
    %v7489 = vunpack.c.0.s8 %v7488
    %v7490 = vlaneseq
    %v7491 = vshrl.u32 %v7490, 7
    %v7492 = vsub.s32 %v7489, %v7491
    %v7493 = vrot.slane %v7486, %v7492
    %s7495 = scalar_lea.vmem [#allocation5], 1
    %7496 = vst.msk [vmem:[%s7495] ss:$8 sm:$0x3] %vm777, %v7493
    %7497 = vst.msk [vmem:[%s7495] ss:$8 sm:$0x0] %vm777, %v7493
    %v7500 = vcombine.low %v7427, %v7428
    %v7502 = vunpack.c.l.s4 1966171168
    %v7503 = vunpack.c.0.s8 %v7502
    %v7504 = vlaneseq
    %v7505 = vshrl.u32 %v7504, 7
    %v7506 = vsub.s32 %v7503, %v7505
    %v7507 = vrot.slane %v7500, %v7506
    %v7509 = vunpack.c.l.s4 1966171168
    %v7510 = vunpack.c.0.s8 %v7509
    %v7511 = vlaneseq
    %v7512 = vshrl.u32 %v7511, 7
    %v7513 = vsub.s32 %v7510, %v7512
    %v7514 = vrot.slane %v7507, %v7513
    %s7516 = scalar_lea.vmem [#allocation5], 2
    %7517 = vst.msk [vmem:[%s7516] ss:$8 sm:$0x3] %vm777, %v7514
    %7518 = vst.msk [vmem:[%s7516] ss:$8 sm:$0x0] %vm777, %v7514
    %v7519 = vcombine.high %v7486, %v7486
    %v7521 = vunpack.c.l.s4 1966171168
    %v7522 = vunpack.c.0.s8 %v7521
    %v7523 = vlaneseq
    %v7524 = vshrl.u32 %v7523, 7
    %v7525 = vsub.s32 %v7522, %v7524
    %v7526 = vrot.slane %v7519, %v7525
    %s7528 = scalar_lea.vmem [#allocation5], 3
    %7529 = vst.msk [vmem:[%s7528] ss:$8 sm:$0x3] %vm777, %v7526
    %7530 = vst.msk [vmem:[%s7528] ss:$8 sm:$0x0] %vm777, %v7526
    %v7531 = vcombine.high %v7507, %v7507
    %v7533 = vunpack.c.l.s4 1966171168
    %v7534 = vunpack.c.0.s8 %v7533
    %v7535 = vlaneseq
    %v7536 = vshrl.u32 %v7535, 7
    %v7537 = vsub.s32 %v7534, %v7536
    %v7538 = vrot.slane %v7531, %v7537
    %s7540 = scalar_lea.vmem [#allocation5], 4
    %7541 = vst.msk [vmem:[%s7540] ss:$8 sm:$0x3] %vm777, %v7538
    %7542 = vst.msk [vmem:[%s7540] ss:$8 sm:$0x0] %vm777, %v7538
    %v7543 = vcombine.high %v7493, %v7493
    %s7545 = scalar_lea.vmem [#allocation5], 5
    %7546 = vst.msk [vmem:[%s7545] ss:$8 sm:$0x3] %vm777, %v7543
    %7547 = vst.msk [vmem:[%s7545] ss:$8 sm:$0x0] %vm777, %v7543
    %v7548 = vcombine.high %v7514, %v7514
    %s7550 = scalar_lea.vmem [#allocation5], 6
    %7551 = vst.msk [vmem:[%s7550] ss:$8 sm:$0x3] %vm777, %v7548
    %7552 = vst.msk [vmem:[%s7550] ss:$8 sm:$0x0] %vm777, %v7548
    %v7553 = vcombine.high %v7526, %v7526
    %s7555 = scalar_lea.vmem [#allocation5], 7
    %7556 = vst.msk [vmem:[%s7555] ss:$8 sm:$0x3] %vm777, %v7553
    %7557 = vst.msk [vmem:[%s7555] ss:$8 sm:$0x0] %vm777, %v7553
    %v7558 = vcombine.high %v7538, %v7538
    %s7560 = scalar_lea.vmem [#allocation5], 16
    %7561 = vst.msk [vmem:[%s7560] ss:$8 sm:$0x3] %vm777, %v7558
    %7562 = vst.msk [vmem:[%s7560] ss:$8 sm:$0x0] %vm777, %v7558
    %v7563 = vcombine.high %v7425, %v7426
    %v7565 = vunpack.c.l.s4 1966171168
    %v7566 = vunpack.c.0.s8 %v7565
    %v7567 = vlaneseq
    %v7568 = vshrl.u32 %v7567, 7
    %v7569 = vsub.s32 %v7566, %v7568
    %v7570 = vrot.slane %v7563, %v7569
    %v7572 = vunpack.c.l.s4 1966171168
    %v7573 = vunpack.c.0.s8 %v7572
    %v7574 = vlaneseq
    %v7575 = vshrl.u32 %v7574, 7
    %v7576 = vsub.s32 %v7573, %v7575
    %v7577 = vrot.slane %v7570, %v7576
    %s7579 = scalar_lea.vmem [#allocation5], 17
    %7580 = vst.msk [vmem:[%s7579] ss:$8 sm:$0x3] %vm777, %v7577
    %7581 = vst.msk [vmem:[%s7579] ss:$8 sm:$0x0] %vm777, %v7577
    %v7582 = vcombine.high %v7427, %v7428
    %v7584 = vunpack.c.l.s4 1966171168
    %v7585 = vunpack.c.0.s8 %v7584
    %v7586 = vlaneseq
    %v7587 = vshrl.u32 %v7586, 7
    %v7588 = vsub.s32 %v7585, %v7587
    %v7589 = vrot.slane %v7582, %v7588
    %v7591 = vunpack.c.l.s4 1966171168
    %v7592 = vunpack.c.0.s8 %v7591
    %v7593 = vlaneseq
    %v7594 = vshrl.u32 %v7593, 7
    %v7595 = vsub.s32 %v7592, %v7594
    %v7596 = vrot.slane %v7589, %v7595
    %s7598 = scalar_lea.vmem [#allocation5], 18
    %7599 = vst.msk [vmem:[%s7598] ss:$8 sm:$0x3] %vm777, %v7596
    %7600 = vst.msk [vmem:[%s7598] ss:$8 sm:$0x0] %vm777, %v7596
    %v7601 = vcombine.high %v7570, %v7570
    %v7603 = vunpack.c.l.s4 1966171168
    %v7604 = vunpack.c.0.s8 %v7603
    %v7605 = vlaneseq
    %v7606 = vshrl.u32 %v7605, 7
    %v7607 = vsub.s32 %v7604, %v7606
    %v7608 = vrot.slane %v7601, %v7607
    %s7610 = scalar_lea.vmem [#allocation5], 19
    %7611 = vst.msk [vmem:[%s7610] ss:$8 sm:$0x3] %vm777, %v7608
    %7612 = vst.msk [vmem:[%s7610] ss:$8 sm:$0x0] %vm777, %v7608
    %v7613 = vcombine.high %v7589, %v7589
    %v7615 = vunpack.c.l.s4 1966171168
    %v7616 = vunpack.c.0.s8 %v7615
    %v7617 = vlaneseq
    %v7618 = vshrl.u32 %v7617, 7
    %v7619 = vsub.s32 %v7616, %v7618
    %v7620 = vrot.slane %v7613, %v7619
    %s7622 = scalar_lea.vmem [#allocation5], 20
    %7623 = vst.msk [vmem:[%s7622] ss:$8 sm:$0x3] %vm777, %v7620
    %7624 = vst.msk [vmem:[%s7622] ss:$8 sm:$0x0] %vm777, %v7620
    %v7625 = vcombine.high %v7577, %v7577
    %s7627 = scalar_lea.vmem [#allocation5], 21
    %7628 = vst.msk [vmem:[%s7627] ss:$8 sm:$0x3] %vm777, %v7625
    %7629 = vst.msk [vmem:[%s7627] ss:$8 sm:$0x0] %vm777, %v7625
    %v7630 = vcombine.high %v7596, %v7596
    %s7632 = scalar_lea.vmem [#allocation5], 22
    %7633 = vst.msk [vmem:[%s7632] ss:$8 sm:$0x3] %vm777, %v7630
    %7634 = vst.msk [vmem:[%s7632] ss:$8 sm:$0x0] %vm777, %v7630
    %v7635 = vcombine.high %v7608, %v7608
    %s7637 = scalar_lea.vmem [#allocation5], 23
    %7638 = vst.msk [vmem:[%s7637] ss:$8 sm:$0x3] %vm777, %v7635
    %7639 = vst.msk [vmem:[%s7637] ss:$8 sm:$0x0] %vm777, %v7635
    %v7640 = vcombine.high %v7620, %v7620
    %s7642 = scalar_lea.vmem [#allocation5], 32
    %7643 = vst.msk [vmem:[%s7642] ss:$8 sm:$0x3] %vm777, %v7640
    %7644 = vst.msk [vmem:[%s7642] ss:$8 sm:$0x0] %vm777, %v7640
    %v7647 = vcombine.low %v7429, %v7430
    %v7649 = vunpack.c.l.s4 1966171168
    %v7650 = vunpack.c.0.s8 %v7649
    %v7651 = vlaneseq
    %v7652 = vshrl.u32 %v7651, 7
    %v7653 = vsub.s32 %v7650, %v7652
    %v7654 = vrot.slane %v7647, %v7653
    %v7656 = vunpack.c.l.s4 1966171168
    %v7657 = vunpack.c.0.s8 %v7656
    %v7658 = vlaneseq
    %v7659 = vshrl.u32 %v7658, 7
    %v7660 = vsub.s32 %v7657, %v7659
    %v7661 = vrot.slane %v7654, %v7660
    %s7663 = scalar_lea.vmem [#allocation5], 33
    %7664 = vst.msk [vmem:[%s7663] ss:$8 sm:$0x3] %vm777, %v7661
    %7665 = vst.msk [vmem:[%s7663] ss:$8 sm:$0x0] %vm777, %v7661
    %v7668 = vcombine.low %v7431, %v7432
    %v7670 = vunpack.c.l.s4 1966171168
    %v7671 = vunpack.c.0.s8 %v7670
    %v7672 = vlaneseq
    %v7673 = vshrl.u32 %v7672, 7
    %v7674 = vsub.s32 %v7671, %v7673
    %v7675 = vrot.slane %v7668, %v7674
    %v7677 = vunpack.c.l.s4 1966171168
    %v7678 = vunpack.c.0.s8 %v7677
    %v7679 = vlaneseq
    %v7680 = vshrl.u32 %v7679, 7
    %v7681 = vsub.s32 %v7678, %v7680
    %v7682 = vrot.slane %v7675, %v7681
    %s7684 = scalar_lea.vmem [#allocation5], 34
    %7685 = vst.msk [vmem:[%s7684] ss:$8 sm:$0x3] %vm777, %v7682
    %7686 = vst.msk [vmem:[%s7684] ss:$8 sm:$0x0] %vm777, %v7682
    %v7687 = vcombine.high %v7654, %v7654
    %v7689 = vunpack.c.l.s4 1966171168
    %v7690 = vunpack.c.0.s8 %v7689
    %v7691 = vlaneseq
    %v7692 = vshrl.u32 %v7691, 7
    %v7693 = vsub.s32 %v7690, %v7692
    %v7694 = vrot.slane %v7687, %v7693
    %s7696 = scalar_lea.vmem [#allocation5], 35
    %7697 = vst.msk [vmem:[%s7696] ss:$8 sm:$0x3] %vm777, %v7694
    %7698 = vst.msk [vmem:[%s7696] ss:$8 sm:$0x0] %vm777, %v7694
    %v7699 = vcombine.high %v7675, %v7675
    %v7701 = vunpack.c.l.s4 1966171168
    %v7702 = vunpack.c.0.s8 %v7701
    %v7703 = vlaneseq
    %v7704 = vshrl.u32 %v7703, 7
    %v7705 = vsub.s32 %v7702, %v7704
    %v7706 = vrot.slane %v7699, %v7705
    %s7708 = scalar_lea.vmem [#allocation5], 36
    %7709 = vst.msk [vmem:[%s7708] ss:$8 sm:$0x3] %vm777, %v7706
    %7710 = vst.msk [vmem:[%s7708] ss:$8 sm:$0x0] %vm777, %v7706
    %v7711 = vcombine.high %v7661, %v7661
    %s7713 = scalar_lea.vmem [#allocation5], 37
    %7714 = vst.msk [vmem:[%s7713] ss:$8 sm:$0x3] %vm777, %v7711
    %7715 = vst.msk [vmem:[%s7713] ss:$8 sm:$0x0] %vm777, %v7711
    %v7716 = vcombine.high %v7682, %v7682
    %s7718 = scalar_lea.vmem [#allocation5], 38
    %7719 = vst.msk [vmem:[%s7718] ss:$8 sm:$0x3] %vm777, %v7716
    %7720 = vst.msk [vmem:[%s7718] ss:$8 sm:$0x0] %vm777, %v7716
    %v7721 = vcombine.high %v7694, %v7694
    %s7723 = scalar_lea.vmem [#allocation5], 39
    %7724 = vst.msk [vmem:[%s7723] ss:$8 sm:$0x3] %vm777, %v7721
    %7725 = vst.msk [vmem:[%s7723] ss:$8 sm:$0x0] %vm777, %v7721
    %v7726 = vcombine.high %v7706, %v7706
    %s7728 = scalar_lea.vmem [#allocation5], 48
    %7729 = vst.msk [vmem:[%s7728] ss:$8 sm:$0x3] %vm777, %v7726
    %7730 = vst.msk [vmem:[%s7728] ss:$8 sm:$0x0] %vm777, %v7726
    %v7731 = vcombine.high %v7429, %v7430
    %v7733 = vunpack.c.l.s4 1966171168
    %v7734 = vunpack.c.0.s8 %v7733
    %v7735 = vlaneseq
    %v7736 = vshrl.u32 %v7735, 7
    %v7737 = vsub.s32 %v7734, %v7736
    %v7738 = vrot.slane %v7731, %v7737
    %v7740 = vunpack.c.l.s4 1966171168
    %v7741 = vunpack.c.0.s8 %v7740
    %v7742 = vlaneseq
    %v7743 = vshrl.u32 %v7742, 7
    %v7744 = vsub.s32 %v7741, %v7743
    %v7745 = vrot.slane %v7738, %v7744
    %s7747 = scalar_lea.vmem [#allocation5], 49
    %7748 = vst.msk [vmem:[%s7747] ss:$8 sm:$0x3] %vm777, %v7745
    %7749 = vst.msk [vmem:[%s7747] ss:$8 sm:$0x0] %vm777, %v7745
    %v7750 = vcombine.high %v7431, %v7432
    %v7752 = vunpack.c.l.s4 1966171168
    %v7753 = vunpack.c.0.s8 %v7752
    %v7754 = vlaneseq
    %v7755 = vshrl.u32 %v7754, 7
    %v7756 = vsub.s32 %v7753, %v7755
    %v7757 = vrot.slane %v7750, %v7756
    %v7759 = vunpack.c.l.s4 1966171168
    %v7760 = vunpack.c.0.s8 %v7759
    %v7761 = vlaneseq
    %v7762 = vshrl.u32 %v7761, 7
    %v7763 = vsub.s32 %v7760, %v7762
    %v7764 = vrot.slane %v7757, %v7763
    %s7766 = scalar_lea.vmem [#allocation5], 50
    %7767 = vst.msk [vmem:[%s7766] ss:$8 sm:$0x3] %vm777, %v7764
    %7768 = vst.msk [vmem:[%s7766] ss:$8 sm:$0x0] %vm777, %v7764
    %v7769 = vcombine.high %v7738, %v7738
    %v7771 = vunpack.c.l.s4 1966171168
    %v7772 = vunpack.c.0.s8 %v7771
    %v7773 = vlaneseq
    %v7774 = vshrl.u32 %v7773, 7
    %v7775 = vsub.s32 %v7772, %v7774
    %v7776 = vrot.slane %v7769, %v7775
    %s7778 = scalar_lea.vmem [#allocation5], 51
    %7779 = vst.msk [vmem:[%s7778] ss:$8 sm:$0x3] %vm777, %v7776
    %7780 = vst.msk [vmem:[%s7778] ss:$8 sm:$0x0] %vm777, %v7776
    %v7781 = vcombine.high %v7757, %v7757
    %v7783 = vunpack.c.l.s4 1966171168
    %v7784 = vunpack.c.0.s8 %v7783
    %v7785 = vlaneseq
    %v7786 = vshrl.u32 %v7785, 7
    %v7787 = vsub.s32 %v7784, %v7786
    %v7788 = vrot.slane %v7781, %v7787
    %s7790 = scalar_lea.vmem [#allocation5], 52
    %7791 = vst.msk [vmem:[%s7790] ss:$8 sm:$0x3] %vm777, %v7788
    %7792 = vst.msk [vmem:[%s7790] ss:$8 sm:$0x0] %vm777, %v7788
    %v7793 = vcombine.high %v7745, %v7745
    %s7795 = scalar_lea.vmem [#allocation5], 53
    %7796 = vst.msk [vmem:[%s7795] ss:$8 sm:$0x3] %vm777, %v7793
    %7797 = vst.msk [vmem:[%s7795] ss:$8 sm:$0x0] %vm777, %v7793
    %v7798 = vcombine.high %v7764, %v7764
    %s7800 = scalar_lea.vmem [#allocation5], 54
    %7801 = vst.msk [vmem:[%s7800] ss:$8 sm:$0x3] %vm777, %v7798
    %7802 = vst.msk [vmem:[%s7800] ss:$8 sm:$0x0] %vm777, %v7798
    %v7803 = vcombine.high %v7776, %v7776
    %s7805 = scalar_lea.vmem [#allocation5], 55
    %7806 = vst.msk [vmem:[%s7805] ss:$8 sm:$0x3] %vm777, %v7803
    %7807 = vst.msk [vmem:[%s7805] ss:$8 sm:$0x0] %vm777, %v7803
    %v7808 = vcombine.high %v7788, %v7788
    %s7810 = scalar_lea.vmem [#allocation5], 64
    %7811 = vst.msk [vmem:[%s7810] ss:$8 sm:$0x3] %vm777, %v7808
    %7812 = vst.msk [vmem:[%s7810] ss:$8 sm:$0x0] %vm777, %v7808
    %v7815 = vcombine.low %v7449, %v7450
    %v7817 = vunpack.c.l.s4 1966171168
    %v7818 = vunpack.c.0.s8 %v7817
    %v7819 = vlaneseq
    %v7820 = vshrl.u32 %v7819, 7
    %v7821 = vsub.s32 %v7818, %v7820
    %v7822 = vrot.slane %v7815, %v7821
    %v7824 = vunpack.c.l.s4 1966171168
    %v7825 = vunpack.c.0.s8 %v7824
    %v7826 = vlaneseq
    %v7827 = vshrl.u32 %v7826, 7
    %v7828 = vsub.s32 %v7825, %v7827
    %v7829 = vrot.slane %v7822, %v7828
    %s7831 = scalar_lea.vmem [#allocation5], 80
    %s7832 = scalar_lea.vmem %s7831, 1 [#allocation5]
    %7833 = vst.msk [vmem:[%s7832] ss:$8 sm:$0x3] %vm777, %v7829
    %7834 = vst.msk [vmem:[%s7832] ss:$8 sm:$0x0] %vm777, %v7829
    %v7837 = vcombine.low %v7451, %v7452
    %v7839 = vunpack.c.l.s4 1966171168
    %v7840 = vunpack.c.0.s8 %v7839
    %v7841 = vlaneseq
    %v7842 = vshrl.u32 %v7841, 7
    %v7843 = vsub.s32 %v7840, %v7842
    %v7844 = vrot.slane %v7837, %v7843
    %v7846 = vunpack.c.l.s4 1966171168
    %v7847 = vunpack.c.0.s8 %v7846
    %v7848 = vlaneseq
    %v7849 = vshrl.u32 %v7848, 7
    %v7850 = vsub.s32 %v7847, %v7849
    %v7851 = vrot.slane %v7844, %v7850
    %s7853 = scalar_lea.vmem %s7831, 2 [#allocation5]
    %7854 = vst.msk [vmem:[%s7853] ss:$8 sm:$0x3] %vm777, %v7851
    %7855 = vst.msk [vmem:[%s7853] ss:$8 sm:$0x0] %vm777, %v7851
    %v7856 = vcombine.high %v7822, %v7822
    %v7858 = vunpack.c.l.s4 1966171168
    %v7859 = vunpack.c.0.s8 %v7858
    %v7860 = vlaneseq
    %v7861 = vshrl.u32 %v7860, 7
    %v7862 = vsub.s32 %v7859, %v7861
    %v7863 = vrot.slane %v7856, %v7862
    %s7865 = scalar_lea.vmem %s7831, 3 [#allocation5]
    %7866 = vst.msk [vmem:[%s7865] ss:$8 sm:$0x3] %vm777, %v7863
    %7867 = vst.msk [vmem:[%s7865] ss:$8 sm:$0x0] %vm777, %v7863
    %v7868 = vcombine.high %v7844, %v7844
    %v7870 = vunpack.c.l.s4 1966171168
    %v7871 = vunpack.c.0.s8 %v7870
    %v7872 = vlaneseq
    %v7873 = vshrl.u32 %v7872, 7
    %v7874 = vsub.s32 %v7871, %v7873
    %v7875 = vrot.slane %v7868, %v7874
    %s7877 = scalar_lea.vmem %s7831, 4 [#allocation5]
    %7878 = vst.msk [vmem:[%s7877] ss:$8 sm:$0x3] %vm777, %v7875
    %7879 = vst.msk [vmem:[%s7877] ss:$8 sm:$0x0] %vm777, %v7875
    %v7880 = vcombine.high %v7829, %v7829
    %s7882 = scalar_lea.vmem %s7831, 5 [#allocation5]
    %7883 = vst.msk [vmem:[%s7882] ss:$8 sm:$0x3] %vm777, %v7880
    %7884 = vst.msk [vmem:[%s7882] ss:$8 sm:$0x0] %vm777, %v7880
    %v7885 = vcombine.high %v7851, %v7851
    %s7887 = scalar_lea.vmem %s7831, 6 [#allocation5]
    %7888 = vst.msk [vmem:[%s7887] ss:$8 sm:$0x3] %vm777, %v7885
    %7889 = vst.msk [vmem:[%s7887] ss:$8 sm:$0x0] %vm777, %v7885
    %v7890 = vcombine.high %v7863, %v7863
    %s7892 = scalar_lea.vmem %s7831, 7 [#allocation5]
    %7893 = vst.msk [vmem:[%s7892] ss:$8 sm:$0x3] %vm777, %v7890
    %7894 = vst.msk [vmem:[%s7892] ss:$8 sm:$0x0] %vm777, %v7890
    %v7895 = vcombine.high %v7875, %v7875
    %s7897 = scalar_lea.vmem %s7831, 16 [#allocation5]
    %7898 = vst.msk [vmem:[%s7897] ss:$8 sm:$0x3] %vm777, %v7895
    %7899 = vst.msk [vmem:[%s7897] ss:$8 sm:$0x0] %vm777, %v7895
    %v7900 = vcombine.high %v7449, %v7450
    %v7902 = vunpack.c.l.s4 1966171168
    %v7903 = vunpack.c.0.s8 %v7902
    %v7904 = vlaneseq
    %v7905 = vshrl.u32 %v7904, 7
    %v7906 = vsub.s32 %v7903, %v7905
    %v7907 = vrot.slane %v7900, %v7906
    %v7909 = vunpack.c.l.s4 1966171168
    %v7910 = vunpack.c.0.s8 %v7909
    %v7911 = vlaneseq
    %v7912 = vshrl.u32 %v7911, 7
    %v7913 = vsub.s32 %v7910, %v7912
    %v7914 = vrot.slane %v7907, %v7913
    %s7916 = scalar_lea.vmem %s7831, 17 [#allocation5]
    %7917 = vst.msk [vmem:[%s7916] ss:$8 sm:$0x3] %vm777, %v7914
    %7918 = vst.msk [vmem:[%s7916] ss:$8 sm:$0x0] %vm777, %v7914
    %v7919 = vcombine.high %v7451, %v7452
    %v7921 = vunpack.c.l.s4 1966171168
    %v7922 = vunpack.c.0.s8 %v7921
    %v7923 = vlaneseq
    %v7924 = vshrl.u32 %v7923, 7
    %v7925 = vsub.s32 %v7922, %v7924
    %v7926 = vrot.slane %v7919, %v7925
    %v7928 = vunpack.c.l.s4 1966171168
    %v7929 = vunpack.c.0.s8 %v7928
    %v7930 = vlaneseq
    %v7931 = vshrl.u32 %v7930, 7
    %v7932 = vsub.s32 %v7929, %v7931
    %v7933 = vrot.slane %v7926, %v7932
    %s7935 = scalar_lea.vmem %s7831, 18 [#allocation5]
    %7936 = vst.msk [vmem:[%s7935] ss:$8 sm:$0x3] %vm777, %v7933
    %7937 = vst.msk [vmem:[%s7935] ss:$8 sm:$0x0] %vm777, %v7933
    %v7938 = vcombine.high %v7907, %v7907
    %v7940 = vunpack.c.l.s4 1966171168
    %v7941 = vunpack.c.0.s8 %v7940
    %v7942 = vlaneseq
    %v7943 = vshrl.u32 %v7942, 7
    %v7944 = vsub.s32 %v7941, %v7943
    %v7945 = vrot.slane %v7938, %v7944
    %s7947 = scalar_lea.vmem %s7831, 19 [#allocation5]
    %7948 = vst.msk [vmem:[%s7947] ss:$8 sm:$0x3] %vm777, %v7945
    %7949 = vst.msk [vmem:[%s7947] ss:$8 sm:$0x0] %vm777, %v7945
    %v7950 = vcombine.high %v7926, %v7926
    %v7952 = vunpack.c.l.s4 1966171168
    %v7953 = vunpack.c.0.s8 %v7952
    %v7954 = vlaneseq
    %v7955 = vshrl.u32 %v7954, 7
    %v7956 = vsub.s32 %v7953, %v7955
    %v7957 = vrot.slane %v7950, %v7956
    %s7959 = scalar_lea.vmem %s7831, 20 [#allocation5]
    %7960 = vst.msk [vmem:[%s7959] ss:$8 sm:$0x3] %vm777, %v7957
    %7961 = vst.msk [vmem:[%s7959] ss:$8 sm:$0x0] %vm777, %v7957
    %v7962 = vcombine.high %v7914, %v7914
    %s7964 = scalar_lea.vmem %s7831, 21 [#allocation5]
    %7965 = vst.msk [vmem:[%s7964] ss:$8 sm:$0x3] %vm777, %v7962
    %7966 = vst.msk [vmem:[%s7964] ss:$8 sm:$0x0] %vm777, %v7962
    %v7967 = vcombine.high %v7933, %v7933
    %s7969 = scalar_lea.vmem %s7831, 22 [#allocation5]
    %7970 = vst.msk [vmem:[%s7969] ss:$8 sm:$0x3] %vm777, %v7967
    %7971 = vst.msk [vmem:[%s7969] ss:$8 sm:$0x0] %vm777, %v7967
    %v7972 = vcombine.high %v7945, %v7945
    %s7974 = scalar_lea.vmem %s7831, 23 [#allocation5]
    %7975 = vst.msk [vmem:[%s7974] ss:$8 sm:$0x3] %vm777, %v7972
    %7976 = vst.msk [vmem:[%s7974] ss:$8 sm:$0x0] %vm777, %v7972
    %v7977 = vcombine.high %v7957, %v7957
    %s7979 = scalar_lea.vmem %s7831, 32 [#allocation5]
    %7980 = vst.msk [vmem:[%s7979] ss:$8 sm:$0x3] %vm777, %v7977
    %7981 = vst.msk [vmem:[%s7979] ss:$8 sm:$0x0] %vm777, %v7977
    %v7984 = vcombine.low %v7453, %v7454
    %v7986 = vunpack.c.l.s4 1966171168
    %v7987 = vunpack.c.0.s8 %v7986
    %v7988 = vlaneseq
    %v7989 = vshrl.u32 %v7988, 7
    %v7990 = vsub.s32 %v7987, %v7989
    %v7991 = vrot.slane %v7984, %v7990
    %v7993 = vunpack.c.l.s4 1966171168
    %v7994 = vunpack.c.0.s8 %v7993
    %v7995 = vlaneseq
    %v7996 = vshrl.u32 %v7995, 7
    %v7997 = vsub.s32 %v7994, %v7996
    %v7998 = vrot.slane %v7991, %v7997
    %s8000 = scalar_lea.vmem %s7831, 33 [#allocation5]
    %8001 = vst.msk [vmem:[%s8000] ss:$8 sm:$0x3] %vm777, %v7998
    %8002 = vst.msk [vmem:[%s8000] ss:$8 sm:$0x0] %vm777, %v7998
    %v8005 = vcombine.low %v7455, %v7456
    %v8007 = vunpack.c.l.s4 1966171168
    %v8008 = vunpack.c.0.s8 %v8007
    %v8009 = vlaneseq
    %v8010 = vshrl.u32 %v8009, 7
    %v8011 = vsub.s32 %v8008, %v8010
    %v8012 = vrot.slane %v8005, %v8011
    %v8014 = vunpack.c.l.s4 1966171168
    %v8015 = vunpack.c.0.s8 %v8014
    %v8016 = vlaneseq
    %v8017 = vshrl.u32 %v8016, 7
    %v8018 = vsub.s32 %v8015, %v8017
    %v8019 = vrot.slane %v8012, %v8018
    %s8021 = scalar_lea.vmem %s7831, 34 [#allocation5]
    %8022 = vst.msk [vmem:[%s8021] ss:$8 sm:$0x3] %vm777, %v8019
    %8023 = vst.msk [vmem:[%s8021] ss:$8 sm:$0x0] %vm777, %v8019
    %v8024 = vcombine.high %v7991, %v7991
    %v8026 = vunpack.c.l.s4 1966171168
    %v8027 = vunpack.c.0.s8 %v8026
    %v8028 = vlaneseq
    %v8029 = vshrl.u32 %v8028, 7
    %v8030 = vsub.s32 %v8027, %v8029
    %v8031 = vrot.slane %v8024, %v8030
    %s8033 = scalar_lea.vmem %s7831, 35 [#allocation5]
    %8034 = vst.msk [vmem:[%s8033] ss:$8 sm:$0x3] %vm777, %v8031
    %8035 = vst.msk [vmem:[%s8033] ss:$8 sm:$0x0] %vm777, %v8031
    %v8036 = vcombine.high %v8012, %v8012
    %v8038 = vunpack.c.l.s4 1966171168
    %v8039 = vunpack.c.0.s8 %v8038
    %v8040 = vlaneseq
    %v8041 = vshrl.u32 %v8040, 7
    %v8042 = vsub.s32 %v8039, %v8041
    %v8043 = vrot.slane %v8036, %v8042
    %s8045 = scalar_lea.vmem %s7831, 36 [#allocation5]
    %8046 = vst.msk [vmem:[%s8045] ss:$8 sm:$0x3] %vm777, %v8043
    %8047 = vst.msk [vmem:[%s8045] ss:$8 sm:$0x0] %vm777, %v8043
    %v8048 = vcombine.high %v7998, %v7998
    %s8050 = scalar_lea.vmem %s7831, 37 [#allocation5]
    %8051 = vst.msk [vmem:[%s8050] ss:$8 sm:$0x3] %vm777, %v8048
    %8052 = vst.msk [vmem:[%s8050] ss:$8 sm:$0x0] %vm777, %v8048
    %v8053 = vcombine.high %v8019, %v8019
    %s8055 = scalar_lea.vmem %s7831, 38 [#allocation5]
    %8056 = vst.msk [vmem:[%s8055] ss:$8 sm:$0x3] %vm777, %v8053
    %8057 = vst.msk [vmem:[%s8055] ss:$8 sm:$0x0] %vm777, %v8053
    %v8058 = vcombine.high %v8031, %v8031
    %s8060 = scalar_lea.vmem %s7831, 39 [#allocation5]
    %8061 = vst.msk [vmem:[%s8060] ss:$8 sm:$0x3] %vm777, %v8058
    %8062 = vst.msk [vmem:[%s8060] ss:$8 sm:$0x0] %vm777, %v8058
    %v8063 = vcombine.high %v8043, %v8043
    %s8065 = scalar_lea.vmem %s7831, 48 [#allocation5]
    %8066 = vst.msk [vmem:[%s8065] ss:$8 sm:$0x3] %vm777, %v8063
    %8067 = vst.msk [vmem:[%s8065] ss:$8 sm:$0x0] %vm777, %v8063
    %v8068 = vcombine.high %v7453, %v7454
    %v8070 = vunpack.c.l.s4 1966171168
    %v8071 = vunpack.c.0.s8 %v8070
    %v8072 = vlaneseq
    %v8073 = vshrl.u32 %v8072, 7
    %v8074 = vsub.s32 %v8071, %v8073
    %v8075 = vrot.slane %v8068, %v8074
    %v8077 = vunpack.c.l.s4 1966171168
    %v8078 = vunpack.c.0.s8 %v8077
    %v8079 = vlaneseq
    %v8080 = vshrl.u32 %v8079, 7
    %v8081 = vsub.s32 %v8078, %v8080
    %v8082 = vrot.slane %v8075, %v8081
    %s8084 = scalar_lea.vmem %s7831, 49 [#allocation5]
    %8085 = vst.msk [vmem:[%s8084] ss:$8 sm:$0x3] %vm777, %v8082
    %8086 = vst.msk [vmem:[%s8084] ss:$8 sm:$0x0] %vm777, %v8082
    %v8087 = vcombine.high %v7455, %v7456
    %v8089 = vunpack.c.l.s4 1966171168
    %v8090 = vunpack.c.0.s8 %v8089
    %v8091 = vlaneseq
    %v8092 = vshrl.u32 %v8091, 7
    %v8093 = vsub.s32 %v8090, %v8092
    %v8094 = vrot.slane %v8087, %v8093
    %v8096 = vunpack.c.l.s4 1966171168
    %v8097 = vunpack.c.0.s8 %v8096
    %v8098 = vlaneseq
    %v8099 = vshrl.u32 %v8098, 7
    %v8100 = vsub.s32 %v8097, %v8099
    %v8101 = vrot.slane %v8094, %v8100
    %s8103 = scalar_lea.vmem %s7831, 50 [#allocation5]
    %8104 = vst.msk [vmem:[%s8103] ss:$8 sm:$0x3] %vm777, %v8101
    %8105 = vst.msk [vmem:[%s8103] ss:$8 sm:$0x0] %vm777, %v8101
    %v8106 = vcombine.high %v8075, %v8075
    %v8108 = vunpack.c.l.s4 1966171168
    %v8109 = vunpack.c.0.s8 %v8108
    %v8110 = vlaneseq
    %v8111 = vshrl.u32 %v8110, 7
    %v8112 = vsub.s32 %v8109, %v8111
    %v8113 = vrot.slane %v8106, %v8112
    %s8115 = scalar_lea.vmem %s7831, 51 [#allocation5]
    %8116 = vst.msk [vmem:[%s8115] ss:$8 sm:$0x3] %vm777, %v8113
    %8117 = vst.msk [vmem:[%s8115] ss:$8 sm:$0x0] %vm777, %v8113
    %v8118 = vcombine.high %v8094, %v8094
    %v8120 = vunpack.c.l.s4 1966171168
    %v8121 = vunpack.c.0.s8 %v8120
    %v8122 = vlaneseq
    %v8123 = vshrl.u32 %v8122, 7
    %v8124 = vsub.s32 %v8121, %v8123
    %v8125 = vrot.slane %v8118, %v8124
    %s8127 = scalar_lea.vmem %s7831, 52 [#allocation5]
    %8128 = vst.msk [vmem:[%s8127] ss:$8 sm:$0x3] %vm777, %v8125
    %8129 = vst.msk [vmem:[%s8127] ss:$8 sm:$0x0] %vm777, %v8125
    %v8130 = vcombine.high %v8082, %v8082
    %s8132 = scalar_lea.vmem %s7831, 53 [#allocation5]
    %8133 = vst.msk [vmem:[%s8132] ss:$8 sm:$0x3] %vm777, %v8130
    %8134 = vst.msk [vmem:[%s8132] ss:$8 sm:$0x0] %vm777, %v8130
    %v8135 = vcombine.high %v8101, %v8101
    %s8137 = scalar_lea.vmem %s7831, 54 [#allocation5]
    %8138 = vst.msk [vmem:[%s8137] ss:$8 sm:$0x3] %vm777, %v8135
    %8139 = vst.msk [vmem:[%s8137] ss:$8 sm:$0x0] %vm777, %v8135
    %v8140 = vcombine.high %v8113, %v8113
    %s8142 = scalar_lea.vmem %s7831, 55 [#allocation5]
    %8143 = vst.msk [vmem:[%s8142] ss:$8 sm:$0x3] %vm777, %v8140
    %8144 = vst.msk [vmem:[%s8142] ss:$8 sm:$0x0] %vm777, %v8140
    %v8145 = vcombine.high %v8125, %v8125
    %s8147 = scalar_lea.vmem %s7831, 64 [#allocation5]
    %8148 = vst.msk [vmem:[%s8147] ss:$8 sm:$0x3] %vm777, %v8145
    %8149 = vst.msk [vmem:[%s8147] ss:$8 sm:$0x0] %vm777, %v8145
    %v8150 = vld [vmem:[#allocation5] sm:$0xff]
    %v8151 = vld [vmem:[#allocation5 + $0x8] sm:$0xff]
    %v8152 = vld [vmem:[#allocation5 + $0x10] sm:$0xff]
    %v8153 = vld [vmem:[#allocation5 + $0x18] sm:$0xff]
    %v8154 = vld [vmem:[#allocation5 + $0x20] sm:$0xff]
    %v8155 = vld [vmem:[#allocation5 + $0x28] sm:$0xff]
    %v8156 = vld [vmem:[#allocation5 + $0x30] sm:$0xff]
    %v8157 = vld [vmem:[#allocation5 + $0x38] sm:$0xff]
    %v8158 = vld [vmem:[#allocation5] sm:$0xfe]
    %v8159 = vld [vmem:[#allocation5 + $0x8] sm:$0xfe]
    %v8160 = vld [vmem:[#allocation5 + $0x40] sm:$0x1]
    %v8161 = vld [vmem:[#allocation5 + $0x48] sm:$0x1]
    %v8162 = vld [vmem:[#allocation5] sm:$0xfc]
    %v8163 = vld [vmem:[#allocation5 + $0x8] sm:$0xfc]
    %v8164 = vld [vmem:[#allocation5 + $0x40] sm:$0x3]
    %v8165 = vld [vmem:[#allocation5 + $0x48] sm:$0x3]
    %v8176 = vrot.slane %v8158, 1
    %v8177 = vrot.slane %v8152, 1
    %v8178 = vsel %vm3026, %v8176, %v8177
    %v8179 = vrot.slane %v8159, 1
    %v8180 = vrot.slane %v8153, 1
    %v8181 = vsel %vm3026, %v8179, %v8180
    %v8182 = vrot.slane %v8154, 1
    %v8183 = vsel %vm3026, %v8177, %v8182
    %v8184 = vrot.slane %v8155, 1
    %v8185 = vsel %vm3026, %v8180, %v8184
    %v8186 = vrot.slane %v8156, 1
    %v8187 = vsel %vm3026, %v8182, %v8186
    %v8188 = vrot.slane %v8157, 1
    %v8189 = vsel %vm3026, %v8184, %v8188
    %v8190 = vrot.slane %v8160, 1
    %v8191 = vsel %vm3026, %v8186, %v8190
    %v8192 = vrot.slane %v8161, 1
    %v8193 = vsel %vm3026, %v8188, %v8192
    %v8206 = vrot.slane %v8162, 2
    %v8207 = vrot.slane %v8152, 2
    %v8208 = vsel %vm3039, %v8206, %v8207
    %v8209 = vrot.slane %v8163, 2
    %v8210 = vrot.slane %v8153, 2
    %v8211 = vsel %vm3039, %v8209, %v8210
    %v8212 = vrot.slane %v8154, 2
    %v8213 = vsel %vm3039, %v8207, %v8212
    %v8214 = vrot.slane %v8155, 2
    %v8215 = vsel %vm3039, %v8210, %v8214
    %v8216 = vrot.slane %v8156, 2
    %v8217 = vsel %vm3039, %v8212, %v8216
    %v8218 = vrot.slane %v8157, 2
    %v8219 = vsel %vm3039, %v8214, %v8218
    %v8220 = vrot.slane %v8164, 2
    %v8221 = vsel %vm3039, %v8216, %v8220
    %v8222 = vrot.slane %v8165, 2
    %v8223 = vsel %vm3039, %v8218, %v8222
    %v8232 = vpack.c.bf16 %v8152, %v8150
    %v8233 = vpack.c.bf16 %v8153, %v8151
    %v8234 = vpack.c.bf16 %v8183, %v8178
    %v8235 = vpack.c.bf16 %v8185, %v8181
    %v8236 = vpack.c.bf16 %v8213, %v8208
    %v8237 = vpack.c.bf16 %v8215, %v8211
    %v8238 = vpack.c.bf16 %v8156, %v8154
    %v8239 = vpack.c.bf16 %v8157, %v8155
    %v8240 = vpack.c.bf16 %v8191, %v8187
    %v8241 = vpack.c.bf16 %v8193, %v8189
    %v8242 = vpack.c.bf16 %v8221, %v8217
    %v8243 = vpack.c.bf16 %v8223, %v8219
    %v8244 = vld [vmem:[#allocation22] sm:$0xff]
    %v8245 = vld [vmem:[#allocation22 + $0x8] sm:$0xf]
    %v8246 = vld [vmem:[#allocation22 + $0xc] sm:$0xff]
    %v8247 = vld [vmem:[#allocation22 + $0x14] sm:$0xf]
    %v8248 = vld [vmem:[#allocation22 + $0x18] sm:$0xff]
    %v8249 = vld [vmem:[#allocation22 + $0x20] sm:$0xf]
    %v8250 = vld [vmem:[#allocation22 + $0x24] sm:$0xff]
    %v8251 = vld [vmem:[#allocation22 + $0x2c] sm:$0xf]
    %v8252 = vld [vmem:[#allocation22 + $0x30] sm:$0xff]
    %v8253 = vld [vmem:[#allocation22 + $0x38] sm:$0xf]
    %v8254 = vld [vmem:[#allocation22 + $0x3c] sm:$0xff]
    %v8255 = vld [vmem:[#allocation22 + $0x44] sm:$0xf]
    %v8256 = vld [vmem:[#allocation22 + $0x48] sm:$0xff]
    %v8257 = vld [vmem:[#allocation22 + $0x50] sm:$0xf]
    %v8258 = vld [vmem:[#allocation22 + $0x54] sm:$0xff]
    %v8259 = vld [vmem:[#allocation22 + $0x5c] sm:$0xf]
    %v8260 = vld [vmem:[#allocation22 + $0x60] sm:$0xff]
    %v8261 = vld [vmem:[#allocation22 + $0x68] sm:$0xf]
    %v8262 = vld [vmem:[#allocation22 + $0x6c] sm:$0xff]
    %v8263 = vld [vmem:[#allocation22 + $0x74] sm:$0xf]
    %v8264 = vld [vmem:[#allocation22 + $0x78] sm:$0xff]
    %v8265 = vld [vmem:[#allocation22 + $0x80] sm:$0xf]
    %v8266 = vld [vmem:[#allocation22 + $0x84] sm:$0xff]
    %v8267 = vld [vmem:[#allocation22 + $0x8c] sm:$0xf]
    %v8268 = vld [vmem:[#allocation22 + $0x90] sm:$0xff]
    %v8269 = vld [vmem:[#allocation22 + $0x98] sm:$0xf]
    %v8270 = vld [vmem:[#allocation22 + $0x9c] sm:$0xff]
    %v8271 = vld [vmem:[#allocation22 + $0xa4] sm:$0xf]
    %v8272 = vld [vmem:[#allocation22 + $0xa8] sm:$0xff]
    %v8273 = vld [vmem:[#allocation22 + $0xb0] sm:$0xf]
    %v8274 = vld [vmem:[#allocation22 + $0xb4] sm:$0xff]
    %v8275 = vld [vmem:[#allocation22 + $0xbc] sm:$0xf]
    %v8276 = vld [vmem:[#allocation22 + $0xc0] sm:$0xff]
    %v8277 = vld [vmem:[#allocation22 + $0xc8] sm:$0xf]
    %v8278 = vld [vmem:[#allocation22 + $0xcc] sm:$0xff]
    %v8279 = vld [vmem:[#allocation22 + $0xd4] sm:$0xf]
    %v8280 = vld [vmem:[#allocation22 + $0xd8] sm:$0xff]
    %v8281 = vld [vmem:[#allocation22 + $0xe0] sm:$0xf]
    %v8282 = vld [vmem:[#allocation22 + $0xe4] sm:$0xff]
    %v8283 = vld [vmem:[#allocation22 + $0xec] sm:$0xf]
    %v8284 = vld [vmem:[#allocation22 + $0xf0] sm:$0xff]
    %v8285 = vld [vmem:[#allocation22 + $0xf8] sm:$0xf]
    %v8286 = vld [vmem:[#allocation22 + $0xfc] sm:$0xff]
    %v8287 = vld [vmem:[#allocation22 + $0x104] sm:$0xf]
    %v8288 = vld [vmem:[#allocation22 + $0x108] sm:$0xff]
    %v8289 = vld [vmem:[#allocation22 + $0x110] sm:$0xf]
    %v8290 = vld [vmem:[#allocation22 + $0x114] sm:$0xff]
    %v8291 = vld [vmem:[#allocation22 + $0x11c] sm:$0xf]
    %v8292 = vld [vmem:[#allocation22 + $0x120] sm:$0xff]
    %v8293 = vld [vmem:[#allocation22 + $0x128] sm:$0xf]
    %v8294 = vld [vmem:[#allocation22 + $0x12c] sm:$0xff]
    %v8295 = vld [vmem:[#allocation22 + $0x134] sm:$0xf]
    %v8296 = vld [vmem:[#allocation22 + $0x138] sm:$0xff]
    %v8297 = vld [vmem:[#allocation22 + $0x140] sm:$0xf]
    %v8298 = vld [vmem:[#allocation22 + $0x144] sm:$0xff]
    %v8299 = vld [vmem:[#allocation22 + $0x14c] sm:$0xf]
    %v8300 = vld [vmem:[#allocation22 + $0x150] sm:$0xff]
    %v8301 = vld [vmem:[#allocation22 + $0x158] sm:$0xf]
    %v8302 = vld [vmem:[#allocation22 + $0x15c] sm:$0xff]
    %v8303 = vld [vmem:[#allocation22 + $0x164] sm:$0xf]
    %v8304 = vld [vmem:[#allocation22 + $0x168] sm:$0xff]
    %v8305 = vld [vmem:[#allocation22 + $0x170] sm:$0xf]
    %v8306 = vld [vmem:[#allocation22 + $0x174] sm:$0xff]
    %v8307 = vld [vmem:[#allocation22 + $0x17c] sm:$0xf]
    %v8308 = vld [vmem:[#allocation22 + $0x180] sm:$0xff]
    %v8309 = vld [vmem:[#allocation22 + $0x188] sm:$0xf]
    %v8310 = vld [vmem:[#allocation22 + $0x18c] sm:$0xff]
    %v8311 = vld [vmem:[#allocation22 + $0x194] sm:$0xf]
    %v8312 = vld [vmem:[#allocation22 + $0x198] sm:$0xff]
    %v8313 = vld [vmem:[#allocation22 + $0x1a0] sm:$0xf]
    %v8314 = vld [vmem:[#allocation22 + $0x1a4] sm:$0xff]
    %v8315 = vld [vmem:[#allocation22 + $0x1ac] sm:$0xf]
    %v8316 = vld [vmem:[#allocation22 + $0x1b0] sm:$0xff]
    %v8317 = vld [vmem:[#allocation22 + $0x1b8] sm:$0xf]
    %v8318 = vld [vmem:[#allocation22 + $0x1bc] sm:$0xff]
    %v8319 = vld [vmem:[#allocation22 + $0x1c4] sm:$0xf]
    %v8320 = vld [vmem:[#allocation22 + $0x1c8] sm:$0xff]
    %v8321 = vld [vmem:[#allocation22 + $0x1d0] sm:$0xf]
    %v8322 = vld [vmem:[#allocation22 + $0x1d4] sm:$0xff]
    %v8323 = vld [vmem:[#allocation22 + $0x1dc] sm:$0xf]
    %v8324 = vld [vmem:[#allocation22 + $0x1e0] sm:$0xff]
    %v8325 = vld [vmem:[#allocation22 + $0x1e8] sm:$0xf]
    %v8326 = vld [vmem:[#allocation22 + $0x1ec] sm:$0xff]
    %v8327 = vld [vmem:[#allocation22 + $0x1f4] sm:$0xf]
    %v8328 = vld [vmem:[#allocation22 + $0x1f8] sm:$0xff]
    %v8329 = vld [vmem:[#allocation22 + $0x200] sm:$0xf]
    %v8330 = vld [vmem:[#allocation22 + $0x204] sm:$0xff]
    %v8331 = vld [vmem:[#allocation22 + $0x20c] sm:$0xf]
    %v8332 = vld [vmem:[#allocation22 + $0x210] sm:$0xff]
    %v8333 = vld [vmem:[#allocation22 + $0x218] sm:$0xf]
    %v8334 = vld [vmem:[#allocation22 + $0x21c] sm:$0xff]
    %v8335 = vld [vmem:[#allocation22 + $0x224] sm:$0xf]
    %v8336 = vld [vmem:[#allocation22 + $0x228] sm:$0xff]
    %v8337 = vld [vmem:[#allocation22 + $0x230] sm:$0xf]
    %v8338 = vld [vmem:[#allocation22 + $0x234] sm:$0xff]
    %v8339 = vld [vmem:[#allocation22 + $0x23c] sm:$0xf]
    %v8340 = vld [vmem:[#allocation22 + $0x240] sm:$0xff]
    %v8341 = vld [vmem:[#allocation22 + $0x248] sm:$0xf]
    %v8342 = vld [vmem:[#allocation22 + $0x24c] sm:$0xff]
    %v8343 = vld [vmem:[#allocation22 + $0x254] sm:$0xf]
    %v8344 = vld [vmem:[#allocation22 + $0x258] sm:$0xff]
    %v8345 = vld [vmem:[#allocation22 + $0x260] sm:$0xf]
    %v8346 = vld [vmem:[#allocation22 + $0x264] sm:$0xff]
    %v8347 = vld [vmem:[#allocation22 + $0x26c] sm:$0xf]
    %v8348 = vld [vmem:[#allocation22 + $0x270] sm:$0xff]
    %v8349 = vld [vmem:[#allocation22 + $0x278] sm:$0xf]
    %v8350 = vld [vmem:[#allocation22 + $0x27c] sm:$0xff]
    %v8351 = vld [vmem:[#allocation22 + $0x284] sm:$0xf]
    %v8352 = vld [vmem:[#allocation22 + $0x288] sm:$0xff]
    %v8353 = vld [vmem:[#allocation22 + $0x290] sm:$0xf]
    %v8354 = vld [vmem:[#allocation22 + $0x294] sm:$0xff]
    %v8355 = vld [vmem:[#allocation22 + $0x29c] sm:$0xf]
    %v8356 = vld [vmem:[#allocation22 + $0x2a0] sm:$0xff]
    %v8357 = vld [vmem:[#allocation22 + $0x2a8] sm:$0xf]
    %v8358 = vld [vmem:[#allocation22 + $0x2ac] sm:$0xff]
    %v8359 = vld [vmem:[#allocation22 + $0x2b4] sm:$0xf]
    %v8360 = vld [vmem:[#allocation22 + $0x2b8] sm:$0xff]
    %v8361 = vld [vmem:[#allocation22 + $0x2c0] sm:$0xf]
    %v8362 = vld [vmem:[#allocation22 + $0x2c4] sm:$0xff]
    %v8363 = vld [vmem:[#allocation22 + $0x2cc] sm:$0xf]
    %v8364 = vld [vmem:[#allocation22 + $0x2d0] sm:$0xff]
    %v8365 = vld [vmem:[#allocation22 + $0x2d8] sm:$0xf]
    %v8366 = vld [vmem:[#allocation22 + $0x2dc] sm:$0xff]
    %v8367 = vld [vmem:[#allocation22 + $0x2e4] sm:$0xf]
    %v8368 = vld [vmem:[#allocation22 + $0x2e8] sm:$0xff]
    %v8369 = vld [vmem:[#allocation22 + $0x2f0] sm:$0xf]
    %v8370 = vld [vmem:[#allocation22 + $0x2f4] sm:$0xff]
    %v8371 = vld [vmem:[#allocation22 + $0x2fc] sm:$0xf]
    %v8372 = vld [vmem:[#allocation22 + $0x300] sm:$0xff]
    %v8373 = vld [vmem:[#allocation22 + $0x308] sm:$0xf]
    %v8374 = vld [vmem:[#allocation22 + $0x30c] sm:$0xff]
    %v8375 = vld [vmem:[#allocation22 + $0x314] sm:$0xf]
    %v8376 = vld [vmem:[#allocation22 + $0x318] sm:$0xff]
    %v8377 = vld [vmem:[#allocation22 + $0x320] sm:$0xf]
    %v8378 = vld [vmem:[#allocation22 + $0x324] sm:$0xff]
    %v8379 = vld [vmem:[#allocation22 + $0x32c] sm:$0xf]
    %v8380 = vld [vmem:[#allocation22 + $0x330] sm:$0xff]
    %v8381 = vld [vmem:[#allocation22 + $0x338] sm:$0xf]
    %v8382 = vld [vmem:[#allocation22 + $0x33c] sm:$0xff]
    %v8383 = vld [vmem:[#allocation22 + $0x344] sm:$0xf]
    %v8384 = vld [vmem:[#allocation22 + $0x348] sm:$0xff]
    %v8385 = vld [vmem:[#allocation22 + $0x350] sm:$0xf]
    %v8386 = vld [vmem:[#allocation22 + $0x354] sm:$0xff]
    %v8387 = vld [vmem:[#allocation22 + $0x35c] sm:$0xf]
    %v8388 = vld [vmem:[#allocation22 + $0x360] sm:$0xff]
    %v8389 = vld [vmem:[#allocation22 + $0x368] sm:$0xf]
    %v8390 = vld [vmem:[#allocation22 + $0x36c] sm:$0xff]
    %v8391 = vld [vmem:[#allocation22 + $0x374] sm:$0xf]
    %v8392 = vld [vmem:[#allocation22 + $0x378] sm:$0xff]
    %v8393 = vld [vmem:[#allocation22 + $0x380] sm:$0xf]
    %v8394 = vld [vmem:[#allocation22 + $0x384] sm:$0xff]
    %v8395 = vld [vmem:[#allocation22 + $0x38c] sm:$0xf]
    %v8396 = vld [vmem:[#allocation22 + $0x390] sm:$0xff]
    %v8397 = vld [vmem:[#allocation22 + $0x398] sm:$0xf]
    %v8398 = vld [vmem:[#allocation22 + $0x39c] sm:$0xff]
    %v8399 = vld [vmem:[#allocation22 + $0x3a4] sm:$0xf]
    %v8400 = vld [vmem:[#allocation22 + $0x3a8] sm:$0xff]
    %v8401 = vld [vmem:[#allocation22 + $0x3b0] sm:$0xf]
    %v8402 = vld [vmem:[#allocation22 + $0x3b4] sm:$0xff]
    %v8403 = vld [vmem:[#allocation22 + $0x3bc] sm:$0xf]
    %v8404 = vld [vmem:[#allocation22 + $0x3c0] sm:$0xff]
    %v8405 = vld [vmem:[#allocation22 + $0x3c8] sm:$0xf]
    %v8406 = vld [vmem:[#allocation22 + $0x3cc] sm:$0xff]
    %v8407 = vld [vmem:[#allocation22 + $0x3d4] sm:$0xf]
    %v8408 = vld [vmem:[#allocation22 + $0x3d8] sm:$0xff]
    %v8409 = vld [vmem:[#allocation22 + $0x3e0] sm:$0xf]
    %v8410 = vld [vmem:[#allocation22 + $0x3e4] sm:$0xff]
    %v8411 = vld [vmem:[#allocation22 + $0x3ec] sm:$0xf]
    %v8412 = vld [vmem:[#allocation22 + $0x3f0] sm:$0xff]
    %v8413 = vld [vmem:[#allocation22 + $0x3f8] sm:$0xf]
    %v8414 = vld [vmem:[#allocation22 + $0x3fc] sm:$0xff]
    %v8415 = vld [vmem:[#allocation22 + $0x404] sm:$0xf]
    %v8416 = vld [vmem:[#allocation22 + $0x408] sm:$0xff]
    %v8417 = vld [vmem:[#allocation22 + $0x410] sm:$0xf]
    %v8418 = vld [vmem:[#allocation22 + $0x414] sm:$0xff]
    %v8419 = vld [vmem:[#allocation22 + $0x41c] sm:$0xf]
    %v8420 = vld [vmem:[#allocation22 + $0x420] sm:$0xff]
    %v8421 = vld [vmem:[#allocation22 + $0x428] sm:$0xf]
    %v8422 = vld [vmem:[#allocation22 + $0x42c] sm:$0xff]
    %v8423 = vld [vmem:[#allocation22 + $0x434] sm:$0xf]
    %v8424 = vld [vmem:[#allocation22 + $0x438] sm:$0xff]
    %v8425 = vld [vmem:[#allocation22 + $0x440] sm:$0xf]
    %v8426 = vld [vmem:[#allocation22 + $0x444] sm:$0xff]
    %v8427 = vld [vmem:[#allocation22 + $0x44c] sm:$0xf]
    %v8428 = vld [vmem:[#allocation22 + $0x450] sm:$0xff]
    %v8429 = vld [vmem:[#allocation22 + $0x458] sm:$0xf]
    %v8430 = vld [vmem:[#allocation22 + $0x45c] sm:$0xff]
    %v8431 = vld [vmem:[#allocation22 + $0x464] sm:$0xf]
    %v8432 = vld [vmem:[#allocation22 + $0x468] sm:$0xff]
    %v8433 = vld [vmem:[#allocation22 + $0x470] sm:$0xf]
    %v8434 = vld [vmem:[#allocation22 + $0x474] sm:$0xff]
    %v8435 = vld [vmem:[#allocation22 + $0x47c] sm:$0xf]
    %v8628 = vunpack.c.l.b16 %v8244
    %v8629 = vunpack.c.h.b16 %v8244
    %v8630 = vunpack.c.l.b16 %v8245
    %v8631 = vunpack.c.l.b16 %v8246
    %v8632 = vunpack.c.h.b16 %v8246
    %v8633 = vunpack.c.l.b16 %v8247
    %v8634 = vunpack.c.l.b16 %v8248
    %v8635 = vunpack.c.h.b16 %v8248
    %v8636 = vunpack.c.l.b16 %v8249
    %v8637 = vunpack.c.l.b16 %v8250
    %v8638 = vunpack.c.h.b16 %v8250
    %v8639 = vunpack.c.l.b16 %v8251
    %v8640 = vunpack.c.l.b16 %v8252
    %v8641 = vunpack.c.h.b16 %v8252
    %v8642 = vunpack.c.l.b16 %v8253
    %v8643 = vunpack.c.l.b16 %v8254
    %v8644 = vunpack.c.h.b16 %v8254
    %v8645 = vunpack.c.l.b16 %v8255
    %v8646 = vunpack.c.l.b16 %v8256
    %v8647 = vunpack.c.h.b16 %v8256
    %v8648 = vunpack.c.l.b16 %v8257
    %v8649 = vunpack.c.l.b16 %v8258
    %v8650 = vunpack.c.h.b16 %v8258
    %v8651 = vunpack.c.l.b16 %v8259
    %v8652 = vunpack.c.l.b16 %v8260
    %v8653 = vunpack.c.h.b16 %v8260
    %v8654 = vunpack.c.l.b16 %v8261
    %v8655 = vunpack.c.l.b16 %v8262
    %v8656 = vunpack.c.h.b16 %v8262
    %v8657 = vunpack.c.l.b16 %v8263
    %v8658 = vunpack.c.l.b16 %v8264
    %v8659 = vunpack.c.h.b16 %v8264
    %v8660 = vunpack.c.l.b16 %v8265
    %v8661 = vunpack.c.l.b16 %v8266
    %v8662 = vunpack.c.h.b16 %v8266
    %v8663 = vunpack.c.l.b16 %v8267
    %v8664 = vunpack.c.l.b16 %v8268
    %v8665 = vunpack.c.h.b16 %v8268
    %v8666 = vunpack.c.l.b16 %v8269
    %v8667 = vunpack.c.l.b16 %v8270
    %v8668 = vunpack.c.h.b16 %v8270
    %v8669 = vunpack.c.l.b16 %v8271
    %v8670 = vunpack.c.l.b16 %v8272
    %v8671 = vunpack.c.h.b16 %v8272
    %v8672 = vunpack.c.l.b16 %v8273
    %v8673 = vunpack.c.l.b16 %v8274
    %v8674 = vunpack.c.h.b16 %v8274
    %v8675 = vunpack.c.l.b16 %v8275
    %v8676 = vunpack.c.l.b16 %v8276
    %v8677 = vunpack.c.h.b16 %v8276
    %v8678 = vunpack.c.l.b16 %v8277
    %v8679 = vunpack.c.l.b16 %v8278
    %v8680 = vunpack.c.h.b16 %v8278
    %v8681 = vunpack.c.l.b16 %v8279
    %v8682 = vunpack.c.l.b16 %v8280
    %v8683 = vunpack.c.h.b16 %v8280
    %v8684 = vunpack.c.l.b16 %v8281
    %v8685 = vunpack.c.l.b16 %v8282
    %v8686 = vunpack.c.h.b16 %v8282
    %v8687 = vunpack.c.l.b16 %v8283
    %v8688 = vunpack.c.l.b16 %v8284
    %v8689 = vunpack.c.h.b16 %v8284
    %v8690 = vunpack.c.l.b16 %v8285
    %v8691 = vunpack.c.l.b16 %v8286
    %v8692 = vunpack.c.h.b16 %v8286
    %v8693 = vunpack.c.l.b16 %v8287
    %v8694 = vunpack.c.l.b16 %v8288
    %v8695 = vunpack.c.h.b16 %v8288
    %v8696 = vunpack.c.l.b16 %v8289
    %v8697 = vunpack.c.l.b16 %v8290
    %v8698 = vunpack.c.h.b16 %v8290
    %v8699 = vunpack.c.l.b16 %v8291
    %v8700 = vunpack.c.l.b16 %v8292
    %v8701 = vunpack.c.h.b16 %v8292
    %v8702 = vunpack.c.l.b16 %v8293
    %v8703 = vunpack.c.l.b16 %v8294
    %v8704 = vunpack.c.h.b16 %v8294
    %v8705 = vunpack.c.l.b16 %v8295
    %v8706 = vunpack.c.l.b16 %v8296
    %v8707 = vunpack.c.h.b16 %v8296
    %v8708 = vunpack.c.l.b16 %v8297
    %v8709 = vunpack.c.l.b16 %v8298
    %v8710 = vunpack.c.h.b16 %v8298
    %v8711 = vunpack.c.l.b16 %v8299
    %v8712 = vunpack.c.l.b16 %v8300
    %v8713 = vunpack.c.h.b16 %v8300
    %v8714 = vunpack.c.l.b16 %v8301
    %v8715 = vunpack.c.l.b16 %v8302
    %v8716 = vunpack.c.h.b16 %v8302
    %v8717 = vunpack.c.l.b16 %v8303
    %v8718 = vunpack.c.l.b16 %v8304
    %v8719 = vunpack.c.h.b16 %v8304
    %v8720 = vunpack.c.l.b16 %v8305
    %v8721 = vunpack.c.l.b16 %v8306
    %v8722 = vunpack.c.h.b16 %v8306
    %v8723 = vunpack.c.l.b16 %v8307
    %v8724 = vunpack.c.l.b16 %v8308
    %v8725 = vunpack.c.h.b16 %v8308
    %v8726 = vunpack.c.l.b16 %v8309
    %v8727 = vunpack.c.l.b16 %v8310
    %v8728 = vunpack.c.h.b16 %v8310
    %v8729 = vunpack.c.l.b16 %v8311
    %v8730 = vunpack.c.l.b16 %v8312
    %v8731 = vunpack.c.h.b16 %v8312
    %v8732 = vunpack.c.l.b16 %v8313
    %v8733 = vunpack.c.l.b16 %v8314
    %v8734 = vunpack.c.h.b16 %v8314
    %v8735 = vunpack.c.l.b16 %v8315
    %v8736 = vunpack.c.l.b16 %v8316
    %v8737 = vunpack.c.h.b16 %v8316
    %v8738 = vunpack.c.l.b16 %v8317
    %v8739 = vunpack.c.l.b16 %v8318
    %v8740 = vunpack.c.h.b16 %v8318
    %v8741 = vunpack.c.l.b16 %v8319
    %v8742 = vunpack.c.l.b16 %v8320
    %v8743 = vunpack.c.h.b16 %v8320
    %v8744 = vunpack.c.l.b16 %v8321
    %v8745 = vunpack.c.l.b16 %v8322
    %v8746 = vunpack.c.h.b16 %v8322
    %v8747 = vunpack.c.l.b16 %v8323
    %v8748 = vunpack.c.l.b16 %v8324
    %v8749 = vunpack.c.h.b16 %v8324
    %v8750 = vunpack.c.l.b16 %v8325
    %v8751 = vunpack.c.l.b16 %v8326
    %v8752 = vunpack.c.h.b16 %v8326
    %v8753 = vunpack.c.l.b16 %v8327
    %v8754 = vunpack.c.l.b16 %v8328
    %v8755 = vunpack.c.h.b16 %v8328
    %v8756 = vunpack.c.l.b16 %v8329
    %v8757 = vunpack.c.l.b16 %v8330
    %v8758 = vunpack.c.h.b16 %v8330
    %v8759 = vunpack.c.l.b16 %v8331
    %v8760 = vunpack.c.l.b16 %v8332
    %v8761 = vunpack.c.h.b16 %v8332
    %v8762 = vunpack.c.l.b16 %v8333
    %v8763 = vunpack.c.l.b16 %v8334
    %v8764 = vunpack.c.h.b16 %v8334
    %v8765 = vunpack.c.l.b16 %v8335
    %v8766 = vunpack.c.l.b16 %v8336
    %v8767 = vunpack.c.h.b16 %v8336
    %v8768 = vunpack.c.l.b16 %v8337
    %v8769 = vunpack.c.l.b16 %v8338
    %v8770 = vunpack.c.h.b16 %v8338
    %v8771 = vunpack.c.l.b16 %v8339
    %v8772 = vunpack.c.l.b16 %v8340
    %v8773 = vunpack.c.h.b16 %v8340
    %v8774 = vunpack.c.l.b16 %v8341
    %v8775 = vunpack.c.l.b16 %v8342
    %v8776 = vunpack.c.h.b16 %v8342
    %v8777 = vunpack.c.l.b16 %v8343
    %v8778 = vunpack.c.l.b16 %v8344
    %v8779 = vunpack.c.h.b16 %v8344
    %v8780 = vunpack.c.l.b16 %v8345
    %v8781 = vunpack.c.l.b16 %v8346
    %v8782 = vunpack.c.h.b16 %v8346
    %v8783 = vunpack.c.l.b16 %v8347
    %v8784 = vunpack.c.l.b16 %v8348
    %v8785 = vunpack.c.h.b16 %v8348
    %v8786 = vunpack.c.l.b16 %v8349
    %v8787 = vunpack.c.l.b16 %v8350
    %v8788 = vunpack.c.h.b16 %v8350
    %v8789 = vunpack.c.l.b16 %v8351
    %v8790 = vunpack.c.l.b16 %v8352
    %v8791 = vunpack.c.h.b16 %v8352
    %v8792 = vunpack.c.l.b16 %v8353
    %v8793 = vunpack.c.l.b16 %v8354
    %v8794 = vunpack.c.h.b16 %v8354
    %v8795 = vunpack.c.l.b16 %v8355
    %v8796 = vunpack.c.l.b16 %v8356
    %v8797 = vunpack.c.h.b16 %v8356
    %v8798 = vunpack.c.l.b16 %v8357
    %v8799 = vunpack.c.l.b16 %v8358
    %v8800 = vunpack.c.h.b16 %v8358
    %v8801 = vunpack.c.l.b16 %v8359
    %v8802 = vunpack.c.l.b16 %v8360
    %v8803 = vunpack.c.h.b16 %v8360
    %v8804 = vunpack.c.l.b16 %v8361
    %v8805 = vunpack.c.l.b16 %v8362
    %v8806 = vunpack.c.h.b16 %v8362
    %v8807 = vunpack.c.l.b16 %v8363
    %v8808 = vunpack.c.l.b16 %v8364
    %v8809 = vunpack.c.h.b16 %v8364
    %v8810 = vunpack.c.l.b16 %v8365
    %v8811 = vunpack.c.l.b16 %v8366
    %v8812 = vunpack.c.h.b16 %v8366
    %v8813 = vunpack.c.l.b16 %v8367
    %v8814 = vunpack.c.l.b16 %v8368
    %v8815 = vunpack.c.h.b16 %v8368
    %v8816 = vunpack.c.l.b16 %v8369
    %v8817 = vunpack.c.l.b16 %v8370
    %v8818 = vunpack.c.h.b16 %v8370
    %v8819 = vunpack.c.l.b16 %v8371
    %v8820 = vunpack.c.l.b16 %v8372
    %v8821 = vunpack.c.h.b16 %v8372
    %v8822 = vunpack.c.l.b16 %v8373
    %v8823 = vunpack.c.l.b16 %v8374
    %v8824 = vunpack.c.h.b16 %v8374
    %v8825 = vunpack.c.l.b16 %v8375
    %v8826 = vunpack.c.l.b16 %v8376
    %v8827 = vunpack.c.h.b16 %v8376
    %v8828 = vunpack.c.l.b16 %v8377
    %v8829 = vunpack.c.l.b16 %v8378
    %v8830 = vunpack.c.h.b16 %v8378
    %v8831 = vunpack.c.l.b16 %v8379
    %v8832 = vunpack.c.l.b16 %v8380
    %v8833 = vunpack.c.h.b16 %v8380
    %v8834 = vunpack.c.l.b16 %v8381
    %v8835 = vunpack.c.l.b16 %v8382
    %v8836 = vunpack.c.h.b16 %v8382
    %v8837 = vunpack.c.l.b16 %v8383
    %v8838 = vunpack.c.l.b16 %v8384
    %v8839 = vunpack.c.h.b16 %v8384
    %v8840 = vunpack.c.l.b16 %v8385
    %v8841 = vunpack.c.l.b16 %v8386
    %v8842 = vunpack.c.h.b16 %v8386
    %v8843 = vunpack.c.l.b16 %v8387
    %v8844 = vunpack.c.l.b16 %v8388
    %v8845 = vunpack.c.h.b16 %v8388
    %v8846 = vunpack.c.l.b16 %v8389
    %v8847 = vunpack.c.l.b16 %v8390
    %v8848 = vunpack.c.h.b16 %v8390
    %v8849 = vunpack.c.l.b16 %v8391
    %v8850 = vunpack.c.l.b16 %v8392
    %v8851 = vunpack.c.h.b16 %v8392
    %v8852 = vunpack.c.l.b16 %v8393
    %v8853 = vunpack.c.l.b16 %v8394
    %v8854 = vunpack.c.h.b16 %v8394
    %v8855 = vunpack.c.l.b16 %v8395
    %v8856 = vunpack.c.l.b16 %v8396
    %v8857 = vunpack.c.h.b16 %v8396
    %v8858 = vunpack.c.l.b16 %v8397
    %v8859 = vunpack.c.l.b16 %v8398
    %v8860 = vunpack.c.h.b16 %v8398
    %v8861 = vunpack.c.l.b16 %v8399
    %v8862 = vunpack.c.l.b16 %v8400
    %v8863 = vunpack.c.h.b16 %v8400
    %v8864 = vunpack.c.l.b16 %v8401
    %v8865 = vunpack.c.l.b16 %v8402
    %v8866 = vunpack.c.h.b16 %v8402
    %v8867 = vunpack.c.l.b16 %v8403
    %v8868 = vunpack.c.l.b16 %v8404
    %v8869 = vunpack.c.h.b16 %v8404
    %v8870 = vunpack.c.l.b16 %v8405
    %v8871 = vunpack.c.l.b16 %v8406
    %v8872 = vunpack.c.h.b16 %v8406
    %v8873 = vunpack.c.l.b16 %v8407
    %v8874 = vunpack.c.l.b16 %v8408
    %v8875 = vunpack.c.h.b16 %v8408
    %v8876 = vunpack.c.l.b16 %v8409
    %v8877 = vunpack.c.l.b16 %v8410
    %v8878 = vunpack.c.h.b16 %v8410
    %v8879 = vunpack.c.l.b16 %v8411
    %v8880 = vunpack.c.l.b16 %v8412
    %v8881 = vunpack.c.h.b16 %v8412
    %v8882 = vunpack.c.l.b16 %v8413
    %v8883 = vunpack.c.l.b16 %v8414
    %v8884 = vunpack.c.h.b16 %v8414
    %v8885 = vunpack.c.l.b16 %v8415
    %v8886 = vunpack.c.l.b16 %v8416
    %v8887 = vunpack.c.h.b16 %v8416
    %v8888 = vunpack.c.l.b16 %v8417
    %v8889 = vunpack.c.l.b16 %v8418
    %v8890 = vunpack.c.h.b16 %v8418
    %v8891 = vunpack.c.l.b16 %v8419
    %v8892 = vunpack.c.l.b16 %v8420
    %v8893 = vunpack.c.h.b16 %v8420
    %v8894 = vunpack.c.l.b16 %v8421
    %v8895 = vunpack.c.l.b16 %v8422
    %v8896 = vunpack.c.h.b16 %v8422
    %v8897 = vunpack.c.l.b16 %v8423
    %v8898 = vunpack.c.l.b16 %v8424
    %v8899 = vunpack.c.h.b16 %v8424
    %v8900 = vunpack.c.l.b16 %v8425
    %v8901 = vunpack.c.l.b16 %v8426
    %v8902 = vunpack.c.h.b16 %v8426
    %v8903 = vunpack.c.l.b16 %v8427
    %v8904 = vunpack.c.l.b16 %v8428
    %v8905 = vunpack.c.h.b16 %v8428
    %v8906 = vunpack.c.l.b16 %v8429
    %v8907 = vunpack.c.l.b16 %v8430
    %v8908 = vunpack.c.h.b16 %v8430
    %v8909 = vunpack.c.l.b16 %v8431
    %v8910 = vunpack.c.l.b16 %v8432
    %v8911 = vunpack.c.h.b16 %v8432
    %v8912 = vunpack.c.l.b16 %v8433
    %v8913 = vunpack.c.l.b16 %v8434
    %v8914 = vunpack.c.h.b16 %v8434
    %v8915 = vunpack.c.l.b16 %v8435
    %v8916 = vpack.c.b16 %v8631, %v8628
    %v8917 = vpack.c.b16 %v8632, %v8629
    %v8918 = vpack.c.b16 %v8633, %v8630
    %v8919 = vpack.c.b16 %v8637, %v8634
    %v8920 = vpack.c.b16 %v8638, %v8635
    %v8921 = vpack.c.b16 %v8639, %v8636
    %v8922 = vpack.c.b16 %v8643, %v8640
    %v8923 = vpack.c.b16 %v8644, %v8641
    %v8924 = vpack.c.b16 %v8645, %v8642
    %v8925 = vpack.c.b16 %v8649, %v8646
    %v8926 = vpack.c.b16 %v8650, %v8647
    %v8927 = vpack.c.b16 %v8651, %v8648
    %v8928 = vpack.c.b16 %v8655, %v8652
    %v8929 = vpack.c.b16 %v8656, %v8653
    %v8930 = vpack.c.b16 %v8657, %v8654
    %v8931 = vpack.c.b16 %v8661, %v8658
    %v8932 = vpack.c.b16 %v8662, %v8659
    %v8933 = vpack.c.b16 %v8663, %v8660
    %v8934 = vpack.c.b16 %v8667, %v8664
    %v8935 = vpack.c.b16 %v8668, %v8665
    %v8936 = vpack.c.b16 %v8669, %v8666
    %v8937 = vpack.c.b16 %v8673, %v8670
    %v8938 = vpack.c.b16 %v8674, %v8671
    %v8939 = vpack.c.b16 %v8675, %v8672
    %v8940 = vpack.c.b16 %v8679, %v8676
    %v8941 = vpack.c.b16 %v8680, %v8677
    %v8942 = vpack.c.b16 %v8681, %v8678
    %v8943 = vpack.c.b16 %v8685, %v8682
    %v8944 = vpack.c.b16 %v8686, %v8683
    %v8945 = vpack.c.b16 %v8687, %v8684
    %v8946 = vpack.c.b16 %v8691, %v8688
    %v8947 = vpack.c.b16 %v8692, %v8689
    %v8948 = vpack.c.b16 %v8693, %v8690
    %v8949 = vpack.c.b16 %v8697, %v8694
    %v8950 = vpack.c.b16 %v8698, %v8695
    %v8951 = vpack.c.b16 %v8699, %v8696
    %v8952 = vpack.c.b16 %v8703, %v8700
    %v8953 = vpack.c.b16 %v8704, %v8701
    %v8954 = vpack.c.b16 %v8705, %v8702
    %v8955 = vpack.c.b16 %v8709, %v8706
    %v8956 = vpack.c.b16 %v8710, %v8707
    %v8957 = vpack.c.b16 %v8711, %v8708
    %v8958 = vpack.c.b16 %v8715, %v8712
    %v8959 = vpack.c.b16 %v8716, %v8713
    %v8960 = vpack.c.b16 %v8717, %v8714
    %v8961 = vpack.c.b16 %v8721, %v8718
    %v8962 = vpack.c.b16 %v8722, %v8719
    %v8963 = vpack.c.b16 %v8723, %v8720
    %v8964 = vpack.c.b16 %v8727, %v8724
    %v8965 = vpack.c.b16 %v8728, %v8725
    %v8966 = vpack.c.b16 %v8729, %v8726
    %v8967 = vpack.c.b16 %v8733, %v8730
    %v8968 = vpack.c.b16 %v8734, %v8731
    %v8969 = vpack.c.b16 %v8735, %v8732
    %v8970 = vpack.c.b16 %v8739, %v8736
    %v8971 = vpack.c.b16 %v8740, %v8737
    %v8972 = vpack.c.b16 %v8741, %v8738
    %v8973 = vpack.c.b16 %v8745, %v8742
    %v8974 = vpack.c.b16 %v8746, %v8743
    %v8975 = vpack.c.b16 %v8747, %v8744
    %v8976 = vpack.c.b16 %v8751, %v8748
    %v8977 = vpack.c.b16 %v8752, %v8749
    %v8978 = vpack.c.b16 %v8753, %v8750
    %v8979 = vpack.c.b16 %v8757, %v8754
    %v8980 = vpack.c.b16 %v8758, %v8755
    %v8981 = vpack.c.b16 %v8759, %v8756
    %v8982 = vpack.c.b16 %v8763, %v8760
    %v8983 = vpack.c.b16 %v8764, %v8761
    %v8984 = vpack.c.b16 %v8765, %v8762
    %v8985 = vpack.c.b16 %v8769, %v8766
    %v8986 = vpack.c.b16 %v8770, %v8767
    %v8987 = vpack.c.b16 %v8771, %v8768
    %v8988 = vpack.c.b16 %v8775, %v8772
    %v8989 = vpack.c.b16 %v8776, %v8773
    %v8990 = vpack.c.b16 %v8777, %v8774
    %v8991 = vpack.c.b16 %v8781, %v8778
    %v8992 = vpack.c.b16 %v8782, %v8779
    %v8993 = vpack.c.b16 %v8783, %v8780
    %v8994 = vpack.c.b16 %v8787, %v8784
    %v8995 = vpack.c.b16 %v8788, %v8785
    %v8996 = vpack.c.b16 %v8789, %v8786
    %v8997 = vpack.c.b16 %v8793, %v8790
    %v8998 = vpack.c.b16 %v8794, %v8791
    %v8999 = vpack.c.b16 %v8795, %v8792
    %v9000 = vpack.c.b16 %v8799, %v8796
    %v9001 = vpack.c.b16 %v8800, %v8797
    %v9002 = vpack.c.b16 %v8801, %v8798
    %v9003 = vpack.c.b16 %v8805, %v8802
    %v9004 = vpack.c.b16 %v8806, %v8803
    %v9005 = vpack.c.b16 %v8807, %v8804
    %v9006 = vpack.c.b16 %v8811, %v8808
    %v9007 = vpack.c.b16 %v8812, %v8809
    %v9008 = vpack.c.b16 %v8813, %v8810
    %v9009 = vpack.c.b16 %v8817, %v8814
    %v9010 = vpack.c.b16 %v8818, %v8815
    %v9011 = vpack.c.b16 %v8819, %v8816
    %v9012 = vpack.c.b16 %v8823, %v8820
    %v9013 = vpack.c.b16 %v8824, %v8821
    %v9014 = vpack.c.b16 %v8825, %v8822
    %v9015 = vpack.c.b16 %v8829, %v8826
    %v9016 = vpack.c.b16 %v8830, %v8827
    %v9017 = vpack.c.b16 %v8831, %v8828
    %v9018 = vpack.c.b16 %v8835, %v8832
    %v9019 = vpack.c.b16 %v8836, %v8833
    %v9020 = vpack.c.b16 %v8837, %v8834
    %v9021 = vpack.c.b16 %v8841, %v8838
    %v9022 = vpack.c.b16 %v8842, %v8839
    %v9023 = vpack.c.b16 %v8843, %v8840
    %v9024 = vpack.c.b16 %v8847, %v8844
    %v9025 = vpack.c.b16 %v8848, %v8845
    %v9026 = vpack.c.b16 %v8849, %v8846
    %v9027 = vpack.c.b16 %v8853, %v8850
    %v9028 = vpack.c.b16 %v8854, %v8851
    %v9029 = vpack.c.b16 %v8855, %v8852
    %v9030 = vpack.c.b16 %v8859, %v8856
    %v9031 = vpack.c.b16 %v8860, %v8857
    %v9032 = vpack.c.b16 %v8861, %v8858
    %v9033 = vpack.c.b16 %v8865, %v8862
    %v9034 = vpack.c.b16 %v8866, %v8863
    %v9035 = vpack.c.b16 %v8867, %v8864
    %v9036 = vpack.c.b16 %v8871, %v8868
    %v9037 = vpack.c.b16 %v8872, %v8869
    %v9038 = vpack.c.b16 %v8873, %v8870
    %v9039 = vpack.c.b16 %v8877, %v8874
    %v9040 = vpack.c.b16 %v8878, %v8875
    %v9041 = vpack.c.b16 %v8879, %v8876
    %v9042 = vpack.c.b16 %v8883, %v8880
    %v9043 = vpack.c.b16 %v8884, %v8881
    %v9044 = vpack.c.b16 %v8885, %v8882
    %v9045 = vpack.c.b16 %v8889, %v8886
    %v9046 = vpack.c.b16 %v8890, %v8887
    %v9047 = vpack.c.b16 %v8891, %v8888
    %v9048 = vpack.c.b16 %v8895, %v8892
    %v9049 = vpack.c.b16 %v8896, %v8893
    %v9050 = vpack.c.b16 %v8897, %v8894
    %v9051 = vpack.c.b16 %v8901, %v8898
    %v9052 = vpack.c.b16 %v8902, %v8899
    %v9053 = vpack.c.b16 %v8903, %v8900
    %v9054 = vpack.c.b16 %v8907, %v8904
    %v9055 = vpack.c.b16 %v8908, %v8905
    %v9056 = vpack.c.b16 %v8909, %v8906
    %v9057 = vpack.c.b16 %v8913, %v8910
    %v9058 = vpack.c.b16 %v8914, %v8911
    %v9059 = vpack.c.b16 %v8915, %v8912
    %9204 = vmatprep.subr.bf16.mxu0 %v8938
    %9205 = vmatpush1.bf16.msra.mxu0 %v8937
    %9206 = vmatprep.subr.bf16.mxu0 %v8935
    %9207 = vmatpush1.bf16.msra.mxu0 %v8934
    %9208 = vmatprep.subr.bf16.mxu0 %v8932
    %9209 = vmatpush1.bf16.msra.mxu0 %v8931
    %9210 = vmatprep.subr.bf16.mxu0 %v8929
    %9211 = vmatpush1.bf16.msra.mxu0 %v8928
    %9212 = vmatprep.subr.bf16.mxu0 %v8926
    %9213 = vmatpush1.bf16.msra.mxu0 %v8925
    %9214 = vmatprep.subr.bf16.mxu0 %v8923
    %9215 = vmatpush1.bf16.msra.mxu0 %v8922
    %9216 = vmatprep.subr.bf16.mxu0 %v8920
    %9217 = vmatpush1.bf16.msra.mxu0 %v8919
    %9218 = vmatprep.subr.bf16.mxu0 %v8917
    %9219 = vmatpush1.bf16.msra.mxu0 %v8916
    %9220 = vmatprep.subr.bf16.mxu0 %v8962
    %9221 = vmatpush2.bf16.msra.mxu0 %v8961
    %9222 = vmatprep.subr.bf16.mxu0 %v8959
    %9223 = vmatpush2.bf16.msra.mxu0 %v8958
    %9224 = vmatprep.subr.bf16.mxu0 %v8956
    %9225 = vmatpush2.bf16.msra.mxu0 %v8955
    %9226 = vmatprep.subr.bf16.mxu0 %v8953
    %9227 = vmatpush2.bf16.msra.mxu0 %v8952
    %9228 = vmatprep.subr.bf16.mxu0 %v8950
    %9229 = vmatpush2.bf16.msra.mxu0 %v8949
    %9230 = vmatprep.subr.bf16.mxu0 %v8947
    %9231 = vmatpush2.bf16.msra.mxu0 %v8946
    %9232 = vmatprep.subr.bf16.mxu0 %v8944
    %9233 = vmatpush2.bf16.msra.mxu0 %v8943
    %9234 = vmatprep.subr.bf16.mxu0 %v8941
    %9235 = vmatpush2.bf16.msra.mxu0 %v8940
    %9236 = vmatprep.mubr.bf16.mxu0 %v8233
    %9237 = vmatmul.mubr.bf16.gmra.mxu0 %v8232
    %v9238 = vpop.f32.mrf.mxu0
    %v9239 = vadd.f32 0.0, %v9238
    %v9240 = vpop.f32.mrf.mxu0
    %v9241 = vadd.f32 0.0, %v9240
    %v9242 = vpop.f32.mrf.mxu0
    %v9243 = vadd.f32 0.0, %v9242
    %v9244 = vpop.f32.mrf.mxu0
    %v9245 = vadd.f32 0.0, %v9244
    %9246 = vmatprep.mubr.bf16.mxu0 %v8239
    %9247 = vmatmul.mubr.bf16.gmra.mxu0 %v8238
    %v9248 = vpop.f32.mrf.mxu0
    %v9249 = vadd.f32 0.0, %v9248
    %v9250 = vpop.f32.mrf.mxu0
    %v9251 = vadd.f32 0.0, %v9250
    %v9252 = vpop.f32.mrf.mxu0
    %v9253 = vadd.f32 0.0, %v9252
    %v9254 = vpop.f32.mrf.mxu0
    %v9255 = vadd.f32 0.0, %v9254
    %9256 = vdwg.mxu0
    %9257 = vmatprep.subr.bf16.mxu0 %v8986
    %9258 = vmatpush1.bf16.msra.mxu0 %v8985
    %9259 = vmatprep.subr.bf16.mxu0 %v8983
    %9260 = vmatpush1.bf16.msra.mxu0 %v8982
    %9261 = vmatprep.subr.bf16.mxu0 %v8980
    %9262 = vmatpush1.bf16.msra.mxu0 %v8979
    %9263 = vmatprep.subr.bf16.mxu0 %v8977
    %9264 = vmatpush1.bf16.msra.mxu0 %v8976
    %9265 = vmatprep.subr.bf16.mxu0 %v8974
    %9266 = vmatpush1.bf16.msra.mxu0 %v8973
    %9267 = vmatprep.subr.bf16.mxu0 %v8971
    %9268 = vmatpush1.bf16.msra.mxu0 %v8970
    %9269 = vmatprep.subr.bf16.mxu0 %v8968
    %9270 = vmatpush1.bf16.msra.mxu0 %v8967
    %9271 = vmatprep.subr.bf16.mxu0 %v8965
    %9272 = vmatpush1.bf16.msra.mxu0 %v8964
    %9273 = vmatprep.subr.bf16.mxu0 %v9010
    %9274 = vmatpush2.bf16.msra.mxu0 %v9009
    %9275 = vmatprep.subr.bf16.mxu0 %v9007
    %9276 = vmatpush2.bf16.msra.mxu0 %v9006
    %9277 = vmatprep.subr.bf16.mxu0 %v9004
    %9278 = vmatpush2.bf16.msra.mxu0 %v9003
    %9279 = vmatprep.subr.bf16.mxu0 %v9001
    %9280 = vmatpush2.bf16.msra.mxu0 %v9000
    %9281 = vmatprep.subr.bf16.mxu0 %v8998
    %9282 = vmatpush2.bf16.msra.mxu0 %v8997
    %9283 = vmatprep.subr.bf16.mxu0 %v8995
    %9284 = vmatpush2.bf16.msra.mxu0 %v8994
    %9285 = vmatprep.subr.bf16.mxu0 %v8992
    %9286 = vmatpush2.bf16.msra.mxu0 %v8991
    %9287 = vmatprep.subr.bf16.mxu0 %v8989
    %9288 = vmatpush2.bf16.msra.mxu0 %v8988
    %9289 = vmatprep.mubr.bf16.mxu0 %v8235
    %9290 = vmatmul.mubr.bf16.gmra.mxu0 %v8234
    %v9291 = vpop.f32.mrf.mxu0
    %v9292 = vadd.f32 %v9239, %v9291
    %v9293 = vpop.f32.mrf.mxu0
    %v9294 = vadd.f32 %v9241, %v9293
    %v9295 = vpop.f32.mrf.mxu0
    %v9296 = vadd.f32 %v9243, %v9295
    %v9297 = vpop.f32.mrf.mxu0
    %v9298 = vadd.f32 %v9245, %v9297
    %9299 = vmatprep.mubr.bf16.mxu0 %v8241
    %9300 = vmatmul.mubr.bf16.gmra.mxu0 %v8240
    %v9301 = vpop.f32.mrf.mxu0
    %v9302 = vadd.f32 %v9249, %v9301
    %v9303 = vpop.f32.mrf.mxu0
    %v9304 = vadd.f32 %v9251, %v9303
    %v9305 = vpop.f32.mrf.mxu0
    %v9306 = vadd.f32 %v9253, %v9305
    %v9307 = vpop.f32.mrf.mxu0
    %v9308 = vadd.f32 %v9255, %v9307
    %9309 = vdwg.mxu0
    %9310 = vmatprep.subr.bf16.mxu0 %v9034
    %9311 = vmatpush1.bf16.msra.mxu0 %v9033
    %9312 = vmatprep.subr.bf16.mxu0 %v9031
    %9313 = vmatpush1.bf16.msra.mxu0 %v9030
    %9314 = vmatprep.subr.bf16.mxu0 %v9028
    %9315 = vmatpush1.bf16.msra.mxu0 %v9027
    %9316 = vmatprep.subr.bf16.mxu0 %v9025
    %9317 = vmatpush1.bf16.msra.mxu0 %v9024
    %9318 = vmatprep.subr.bf16.mxu0 %v9022
    %9319 = vmatpush1.bf16.msra.mxu0 %v9021
    %9320 = vmatprep.subr.bf16.mxu0 %v9019
    %9321 = vmatpush1.bf16.msra.mxu0 %v9018
    %9322 = vmatprep.subr.bf16.mxu0 %v9016
    %9323 = vmatpush1.bf16.msra.mxu0 %v9015
    %9324 = vmatprep.subr.bf16.mxu0 %v9013
    %9325 = vmatpush1.bf16.msra.mxu0 %v9012
    %9326 = vmatprep.subr.bf16.mxu0 %v9058
    %9327 = vmatpush2.bf16.msra.mxu0 %v9057
    %9328 = vmatprep.subr.bf16.mxu0 %v9055
    %9329 = vmatpush2.bf16.msra.mxu0 %v9054
    %9330 = vmatprep.subr.bf16.mxu0 %v9052
    %9331 = vmatpush2.bf16.msra.mxu0 %v9051
    %9332 = vmatprep.subr.bf16.mxu0 %v9049
    %9333 = vmatpush2.bf16.msra.mxu0 %v9048
    %9334 = vmatprep.subr.bf16.mxu0 %v9046
    %9335 = vmatpush2.bf16.msra.mxu0 %v9045
    %9336 = vmatprep.subr.bf16.mxu0 %v9043
    %9337 = vmatpush2.bf16.msra.mxu0 %v9042
    %9338 = vmatprep.subr.bf16.mxu0 %v9040
    %9339 = vmatpush2.bf16.msra.mxu0 %v9039
    %9340 = vmatprep.subr.bf16.mxu0 %v9037
    %9341 = vmatpush2.bf16.msra.mxu0 %v9036
    %9342 = vmatprep.mubr.bf16.mxu0 %v8237
    %9343 = vmatmul.mubr.bf16.gmra.mxu0 %v8236
    %v9344 = vpop.f32.mrf.mxu0
    %v9345 = vadd.f32 %v9292, %v9344
    %v9346 = vpop.f32.mrf.mxu0
    %v9347 = vadd.f32 %v9294, %v9346
    %v9348 = vpop.f32.mrf.mxu0
    %v9349 = vadd.f32 %v9296, %v9348
    %v9350 = vpop.f32.mrf.mxu0
    %v9351 = vadd.f32 %v9298, %v9350
    %9352 = vmatprep.mubr.bf16.mxu0 %v8243
    %9353 = vmatmul.mubr.bf16.gmra.mxu0 %v8242
    %v9354 = vpop.f32.mrf.mxu0
    %v9355 = vadd.f32 %v9302, %v9354
    %v9356 = vpop.f32.mrf.mxu0
    %v9357 = vadd.f32 %v9304, %v9356
    %v9358 = vpop.f32.mrf.mxu0
    %v9359 = vadd.f32 %v9306, %v9358
    %v9360 = vpop.f32.mrf.mxu0
    %v9361 = vadd.f32 %v9308, %v9360
    %9362 = vdwg.mxu0
    %9363 = vmatprep.subr.bf16.mxu0 0
    %9364 = vmatpush1.bf16.msra.mxu0 %v8939
    %9365 = vmatprep.subr.bf16.mxu0 0
    %9366 = vmatpush1.bf16.msra.mxu0 %v8936
    %9367 = vmatprep.subr.bf16.mxu0 0
    %9368 = vmatpush1.bf16.msra.mxu0 %v8933
    %9369 = vmatprep.subr.bf16.mxu0 0
    %9370 = vmatpush1.bf16.msra.mxu0 %v8930
    %9371 = vmatprep.subr.bf16.mxu0 0
    %9372 = vmatpush1.bf16.msra.mxu0 %v8927
    %9373 = vmatprep.subr.bf16.mxu0 0
    %9374 = vmatpush1.bf16.msra.mxu0 %v8924
    %9375 = vmatprep.subr.bf16.mxu0 0
    %9376 = vmatpush1.bf16.msra.mxu0 %v8921
    %9377 = vmatprep.subr.bf16.mxu0 0
    %9378 = vmatpush1.bf16.msra.mxu0 %v8918
    %9379 = vmatprep.subr.bf16.mxu0 0
    %9380 = vmatpush2.bf16.msra.mxu0 %v8963
    %9381 = vmatprep.subr.bf16.mxu0 0
    %9382 = vmatpush2.bf16.msra.mxu0 %v8960
    %9383 = vmatprep.subr.bf16.mxu0 0
    %9384 = vmatpush2.bf16.msra.mxu0 %v8957
    %9385 = vmatprep.subr.bf16.mxu0 0
    %9386 = vmatpush2.bf16.msra.mxu0 %v8954
    %9387 = vmatprep.subr.bf16.mxu0 0
    %9388 = vmatpush2.bf16.msra.mxu0 %v8951
    %9389 = vmatprep.subr.bf16.mxu0 0
    %9390 = vmatpush2.bf16.msra.mxu0 %v8948
    %9391 = vmatprep.subr.bf16.mxu0 0
    %9392 = vmatpush2.bf16.msra.mxu0 %v8945
    %9393 = vmatprep.subr.bf16.mxu0 0
    %9394 = vmatpush2.bf16.msra.mxu0 %v8942
    %9395 = vmatprep.mubr.bf16.mxu0 %v8233
    %9396 = vmatmul.mubr.bf16.gmra.mxu0 %v8232
    %v9397 = vpop.f32.mrf.mxu0
    %v9398 = vadd.f32 0.0, %v9397
    %v9399 = vpop.f32.mrf.mxu0
    %v9400 = vpop.f32.mrf.mxu0
    %v9401 = vadd.f32 0.0, %v9400
    %v9402 = vpop.f32.mrf.mxu0
    %9403 = vmatprep.mubr.bf16.mxu0 %v8239
    %9404 = vmatmul.mubr.bf16.gmra.mxu0 %v8238
    %v9405 = vpop.f32.mrf.mxu0
    %v9406 = vadd.f32 0.0, %v9405
    %v9407 = vpop.f32.mrf.mxu0
    %v9408 = vpop.f32.mrf.mxu0
    %v9409 = vadd.f32 0.0, %v9408
    %v9410 = vpop.f32.mrf.mxu0
    %9411 = vdwg.mxu0
    %9412 = vmatprep.subr.bf16.mxu0 0
    %9413 = vmatpush1.bf16.msra.mxu0 %v8987
    %9414 = vmatprep.subr.bf16.mxu0 0
    %9415 = vmatpush1.bf16.msra.mxu0 %v8984
    %9416 = vmatprep.subr.bf16.mxu0 0
    %9417 = vmatpush1.bf16.msra.mxu0 %v8981
    %9418 = vmatprep.subr.bf16.mxu0 0
    %9419 = vmatpush1.bf16.msra.mxu0 %v8978
    %9420 = vmatprep.subr.bf16.mxu0 0
    %9421 = vmatpush1.bf16.msra.mxu0 %v8975
    %9422 = vmatprep.subr.bf16.mxu0 0
    %9423 = vmatpush1.bf16.msra.mxu0 %v8972
    %9424 = vmatprep.subr.bf16.mxu0 0
    %9425 = vmatpush1.bf16.msra.mxu0 %v8969
    %9426 = vmatprep.subr.bf16.mxu0 0
    %9427 = vmatpush1.bf16.msra.mxu0 %v8966
    %9428 = vmatprep.subr.bf16.mxu0 0
    %9429 = vmatpush2.bf16.msra.mxu0 %v9011
    %9430 = vmatprep.subr.bf16.mxu0 0
    %9431 = vmatpush2.bf16.msra.mxu0 %v9008
    %9432 = vmatprep.subr.bf16.mxu0 0
    %9433 = vmatpush2.bf16.msra.mxu0 %v9005
    %9434 = vmatprep.subr.bf16.mxu0 0
    %9435 = vmatpush2.bf16.msra.mxu0 %v9002
    %9436 = vmatprep.subr.bf16.mxu0 0
    %9437 = vmatpush2.bf16.msra.mxu0 %v8999
    %9438 = vmatprep.subr.bf16.mxu0 0
    %9439 = vmatpush2.bf16.msra.mxu0 %v8996
    %9440 = vmatprep.subr.bf16.mxu0 0
    %9441 = vmatpush2.bf16.msra.mxu0 %v8993
    %9442 = vmatprep.subr.bf16.mxu0 0
    %9443 = vmatpush2.bf16.msra.mxu0 %v8990
    %9444 = vmatprep.mubr.bf16.mxu0 %v8235
    %9445 = vmatmul.mubr.bf16.gmra.mxu0 %v8234
    %v9446 = vpop.f32.mrf.mxu0
    %v9447 = vadd.f32 %v9398, %v9446
    %v9448 = vpop.f32.mrf.mxu0
    %v9449 = vpop.f32.mrf.mxu0
    %v9450 = vadd.f32 %v9401, %v9449
    %v9451 = vpop.f32.mrf.mxu0
    %9452 = vmatprep.mubr.bf16.mxu0 %v8241
    %9453 = vmatmul.mubr.bf16.gmra.mxu0 %v8240
    %v9454 = vpop.f32.mrf.mxu0
    %v9455 = vadd.f32 %v9406, %v9454
    %v9456 = vpop.f32.mrf.mxu0
    %v9457 = vpop.f32.mrf.mxu0
    %v9458 = vadd.f32 %v9409, %v9457
    %v9459 = vpop.f32.mrf.mxu0
    %9460 = vdwg.mxu0
    %9461 = vmatprep.subr.bf16.mxu0 0
    %9462 = vmatpush1.bf16.msra.mxu0 %v9035
    %9463 = vmatprep.subr.bf16.mxu0 0
    %9464 = vmatpush1.bf16.msra.mxu0 %v9032
    %9465 = vmatprep.subr.bf16.mxu0 0
    %9466 = vmatpush1.bf16.msra.mxu0 %v9029
    %9467 = vmatprep.subr.bf16.mxu0 0
    %9468 = vmatpush1.bf16.msra.mxu0 %v9026
    %9469 = vmatprep.subr.bf16.mxu0 0
    %9470 = vmatpush1.bf16.msra.mxu0 %v9023
    %9471 = vmatprep.subr.bf16.mxu0 0
    %9472 = vmatpush1.bf16.msra.mxu0 %v9020
    %9473 = vmatprep.subr.bf16.mxu0 0
    %9474 = vmatpush1.bf16.msra.mxu0 %v9017
    %9475 = vmatprep.subr.bf16.mxu0 0
    %9476 = vmatpush1.bf16.msra.mxu0 %v9014
    %9477 = vmatprep.subr.bf16.mxu0 0
    %9478 = vmatpush2.bf16.msra.mxu0 %v9059
    %9479 = vmatprep.subr.bf16.mxu0 0
    %9480 = vmatpush2.bf16.msra.mxu0 %v9056
    %9481 = vmatprep.subr.bf16.mxu0 0
    %9482 = vmatpush2.bf16.msra.mxu0 %v9053
    %9483 = vmatprep.subr.bf16.mxu0 0
    %9484 = vmatpush2.bf16.msra.mxu0 %v9050
    %9485 = vmatprep.subr.bf16.mxu0 0
    %9486 = vmatpush2.bf16.msra.mxu0 %v9047
    %9487 = vmatprep.subr.bf16.mxu0 0
    %9488 = vmatpush2.bf16.msra.mxu0 %v9044
    %9489 = vmatprep.subr.bf16.mxu0 0
    %9490 = vmatpush2.bf16.msra.mxu0 %v9041
    %9491 = vmatprep.subr.bf16.mxu0 0
    %9492 = vmatpush2.bf16.msra.mxu0 %v9038
    %9493 = vmatprep.mubr.bf16.mxu0 %v8237
    %9494 = vmatmul.mubr.bf16.gmra.mxu0 %v8236
    %v9495 = vpop.f32.mrf.mxu0
    %v9496 = vadd.f32 %v9447, %v9495
    %v9497 = vpop.f32.mrf.mxu0
    %v9498 = vpop.f32.mrf.mxu0
    %v9499 = vadd.f32 %v9450, %v9498
    %v9500 = vpop.f32.mrf.mxu0
    %9501 = vmatprep.mubr.bf16.mxu0 %v8243
    %9502 = vmatmul.mubr.bf16.gmra.mxu0 %v8242
    %v9503 = vpop.f32.mrf.mxu0
    %v9504 = vadd.f32 %v9455, %v9503
    %v9505 = vpop.f32.mrf.mxu0
    %v9506 = vpop.f32.mrf.mxu0
    %v9507 = vadd.f32 %v9458, %v9506
    %v9508 = vpop.f32.mrf.mxu0
    %9509 = vdwg.mxu0
    %v9510 = vld [vmem:[%s7831] sm:$0xff]
    %v9511 = vld [vmem:[%s7831 + $0x8] sm:$0xff]
    %v9512 = vld [vmem:[%s7831 + $0x10] sm:$0xff]
    %v9513 = vld [vmem:[%s7831 + $0x18] sm:$0xff]
    %v9514 = vld [vmem:[%s7831 + $0x20] sm:$0xff]
    %v9515 = vld [vmem:[%s7831 + $0x28] sm:$0xff]
    %v9516 = vld [vmem:[%s7831 + $0x30] sm:$0xff]
    %v9517 = vld [vmem:[%s7831 + $0x38] sm:$0xff]
    %v9518 = vld [vmem:[%s7831] sm:$0xfe]
    %v9519 = vld [vmem:[%s7831 + $0x8] sm:$0xfe]
    %v9520 = vld [vmem:[%s7831 + $0x40] sm:$0x1]
    %v9521 = vld [vmem:[%s7831 + $0x48] sm:$0x1]
    %v9522 = vld [vmem:[%s7831] sm:$0xfc]
    %v9523 = vld [vmem:[%s7831 + $0x8] sm:$0xfc]
    %v9524 = vld [vmem:[%s7831 + $0x40] sm:$0x3]
    %v9525 = vld [vmem:[%s7831 + $0x48] sm:$0x3]
    %v9536 = vrot.slane %v9518, 1
    %v9537 = vrot.slane %v9512, 1
    %v9538 = vsel %vm3026, %v9536, %v9537
    %v9539 = vrot.slane %v9519, 1
    %v9540 = vrot.slane %v9513, 1
    %v9541 = vsel %vm3026, %v9539, %v9540
    %v9542 = vrot.slane %v9514, 1
    %v9543 = vsel %vm3026, %v9537, %v9542
    %v9544 = vrot.slane %v9515, 1
    %v9545 = vsel %vm3026, %v9540, %v9544
    %v9546 = vrot.slane %v9516, 1
    %v9547 = vsel %vm3026, %v9542, %v9546
    %v9548 = vrot.slane %v9517, 1
    %v9549 = vsel %vm3026, %v9544, %v9548
    %v9550 = vrot.slane %v9520, 1
    %v9551 = vsel %vm3026, %v9546, %v9550
    %v9552 = vrot.slane %v9521, 1
    %v9553 = vsel %vm3026, %v9548, %v9552
    %v9566 = vrot.slane %v9522, 2
    %v9567 = vrot.slane %v9512, 2
    %v9568 = vsel %vm3039, %v9566, %v9567
    %v9569 = vrot.slane %v9523, 2
    %v9570 = vrot.slane %v9513, 2
    %v9571 = vsel %vm3039, %v9569, %v9570
    %v9572 = vrot.slane %v9514, 2
    %v9573 = vsel %vm3039, %v9567, %v9572
    %v9574 = vrot.slane %v9515, 2
    %v9575 = vsel %vm3039, %v9570, %v9574
    %v9576 = vrot.slane %v9516, 2
    %v9577 = vsel %vm3039, %v9572, %v9576
    %v9578 = vrot.slane %v9517, 2
    %v9579 = vsel %vm3039, %v9574, %v9578
    %v9580 = vrot.slane %v9524, 2
    %v9581 = vsel %vm3039, %v9576, %v9580
    %v9582 = vrot.slane %v9525, 2
    %v9583 = vsel %vm3039, %v9578, %v9582
    %v9592 = vpack.c.bf16 %v9512, %v9510
    %v9593 = vpack.c.bf16 %v9513, %v9511
    %v9594 = vpack.c.bf16 %v9543, %v9538
    %v9595 = vpack.c.bf16 %v9545, %v9541
    %v9596 = vpack.c.bf16 %v9573, %v9568
    %v9597 = vpack.c.bf16 %v9575, %v9571
    %v9598 = vpack.c.bf16 %v9516, %v9514
    %v9599 = vpack.c.bf16 %v9517, %v9515
    %v9600 = vpack.c.bf16 %v9551, %v9547
    %v9601 = vpack.c.bf16 %v9553, %v9549
    %v9602 = vpack.c.bf16 %v9581, %v9577
    %v9603 = vpack.c.bf16 %v9583, %v9579
    %9604 = vmatprep.subr.bf16.mxu0 %v8938
    %9605 = vmatpush1.bf16.msra.mxu0 %v8937
    %9606 = vmatprep.subr.bf16.mxu0 %v8935
    %9607 = vmatpush1.bf16.msra.mxu0 %v8934
    %9608 = vmatprep.subr.bf16.mxu0 %v8932
    %9609 = vmatpush1.bf16.msra.mxu0 %v8931
    %9610 = vmatprep.subr.bf16.mxu0 %v8929
    %9611 = vmatpush1.bf16.msra.mxu0 %v8928
    %9612 = vmatprep.subr.bf16.mxu0 %v8926
    %9613 = vmatpush1.bf16.msra.mxu0 %v8925
    %9614 = vmatprep.subr.bf16.mxu0 %v8923
    %9615 = vmatpush1.bf16.msra.mxu0 %v8922
    %9616 = vmatprep.subr.bf16.mxu0 %v8920
    %9617 = vmatpush1.bf16.msra.mxu0 %v8919
    %9618 = vmatprep.subr.bf16.mxu0 %v8917
    %9619 = vmatpush1.bf16.msra.mxu0 %v8916
    %9620 = vmatprep.subr.bf16.mxu0 %v8962
    %9621 = vmatpush2.bf16.msra.mxu0 %v8961
    %9622 = vmatprep.subr.bf16.mxu0 %v8959
    %9623 = vmatpush2.bf16.msra.mxu0 %v8958
    %9624 = vmatprep.subr.bf16.mxu0 %v8956
    %9625 = vmatpush2.bf16.msra.mxu0 %v8955
    %9626 = vmatprep.subr.bf16.mxu0 %v8953
    %9627 = vmatpush2.bf16.msra.mxu0 %v8952
    %9628 = vmatprep.subr.bf16.mxu0 %v8950
    %9629 = vmatpush2.bf16.msra.mxu0 %v8949
    %9630 = vmatprep.subr.bf16.mxu0 %v8947
    %9631 = vmatpush2.bf16.msra.mxu0 %v8946
    %9632 = vmatprep.subr.bf16.mxu0 %v8944
    %9633 = vmatpush2.bf16.msra.mxu0 %v8943
    %9634 = vmatprep.subr.bf16.mxu0 %v8941
    %9635 = vmatpush2.bf16.msra.mxu0 %v8940
    %9636 = vmatprep.mubr.bf16.mxu0 %v9593
    %9637 = vmatmul.mubr.bf16.gmra.mxu0 %v9592
    %v9638 = vpop.f32.mrf.mxu0
    %v9639 = vadd.f32 0.0, %v9638
    %v9640 = vpop.f32.mrf.mxu0
    %v9641 = vadd.f32 0.0, %v9640
    %v9642 = vpop.f32.mrf.mxu0
    %v9643 = vadd.f32 0.0, %v9642
    %v9644 = vpop.f32.mrf.mxu0
    %v9645 = vadd.f32 0.0, %v9644
    %9646 = vmatprep.mubr.bf16.mxu0 %v9599
    %9647 = vmatmul.mubr.bf16.gmra.mxu0 %v9598
    %v9648 = vpop.f32.mrf.mxu0
    %v9649 = vadd.f32 0.0, %v9648
    %v9650 = vpop.f32.mrf.mxu0
    %v9651 = vadd.f32 0.0, %v9650
    %v9652 = vpop.f32.mrf.mxu0
    %v9653 = vadd.f32 0.0, %v9652
    %v9654 = vpop.f32.mrf.mxu0
    %v9655 = vadd.f32 0.0, %v9654
    %9656 = vdwg.mxu0
    %9657 = vmatprep.subr.bf16.mxu0 %v8986
    %9658 = vmatpush1.bf16.msra.mxu0 %v8985
    %9659 = vmatprep.subr.bf16.mxu0 %v8983
    %9660 = vmatpush1.bf16.msra.mxu0 %v8982
    %9661 = vmatprep.subr.bf16.mxu0 %v8980
    %9662 = vmatpush1.bf16.msra.mxu0 %v8979
    %9663 = vmatprep.subr.bf16.mxu0 %v8977
    %9664 = vmatpush1.bf16.msra.mxu0 %v8976
    %9665 = vmatprep.subr.bf16.mxu0 %v8974
    %9666 = vmatpush1.bf16.msra.mxu0 %v8973
    %9667 = vmatprep.subr.bf16.mxu0 %v8971
    %9668 = vmatpush1.bf16.msra.mxu0 %v8970
    %9669 = vmatprep.subr.bf16.mxu0 %v8968
    %9670 = vmatpush1.bf16.msra.mxu0 %v8967
    %9671 = vmatprep.subr.bf16.mxu0 %v8965
    %9672 = vmatpush1.bf16.msra.mxu0 %v8964
    %9673 = vmatprep.subr.bf16.mxu0 %v9010
    %9674 = vmatpush2.bf16.msra.mxu0 %v9009
    %9675 = vmatprep.subr.bf16.mxu0 %v9007
    %9676 = vmatpush2.bf16.msra.mxu0 %v9006
    %9677 = vmatprep.subr.bf16.mxu0 %v9004
    %9678 = vmatpush2.bf16.msra.mxu0 %v9003
    %9679 = vmatprep.subr.bf16.mxu0 %v9001
    %9680 = vmatpush2.bf16.msra.mxu0 %v9000
    %9681 = vmatprep.subr.bf16.mxu0 %v8998
    %9682 = vmatpush2.bf16.msra.mxu0 %v8997
    %9683 = vmatprep.subr.bf16.mxu0 %v8995
    %9684 = vmatpush2.bf16.msra.mxu0 %v8994
    %9685 = vmatprep.subr.bf16.mxu0 %v8992
    %9686 = vmatpush2.bf16.msra.mxu0 %v8991
    %9687 = vmatprep.subr.bf16.mxu0 %v8989
    %9688 = vmatpush2.bf16.msra.mxu0 %v8988
    %9689 = vmatprep.mubr.bf16.mxu0 %v9595
    %9690 = vmatmul.mubr.bf16.gmra.mxu0 %v9594
    %v9691 = vpop.f32.mrf.mxu0
    %v9692 = vadd.f32 %v9639, %v9691
    %v9693 = vpop.f32.mrf.mxu0
    %v9694 = vadd.f32 %v9641, %v9693
    %v9695 = vpop.f32.mrf.mxu0
    %v9696 = vadd.f32 %v9643, %v9695
    %v9697 = vpop.f32.mrf.mxu0
    %v9698 = vadd.f32 %v9645, %v9697
    %9699 = vmatprep.mubr.bf16.mxu0 %v9601
    %9700 = vmatmul.mubr.bf16.gmra.mxu0 %v9600
    %v9701 = vpop.f32.mrf.mxu0
    %v9702 = vadd.f32 %v9649, %v9701
    %v9703 = vpop.f32.mrf.mxu0
    %v9704 = vadd.f32 %v9651, %v9703
    %v9705 = vpop.f32.mrf.mxu0
    %v9706 = vadd.f32 %v9653, %v9705
    %v9707 = vpop.f32.mrf.mxu0
    %v9708 = vadd.f32 %v9655, %v9707
    %9709 = vdwg.mxu0
    %9710 = vmatprep.subr.bf16.mxu0 %v9034
    %9711 = vmatpush1.bf16.msra.mxu0 %v9033
    %9712 = vmatprep.subr.bf16.mxu0 %v9031
    %9713 = vmatpush1.bf16.msra.mxu0 %v9030
    %9714 = vmatprep.subr.bf16.mxu0 %v9028
    %9715 = vmatpush1.bf16.msra.mxu0 %v9027
    %9716 = vmatprep.subr.bf16.mxu0 %v9025
    %9717 = vmatpush1.bf16.msra.mxu0 %v9024
    %9718 = vmatprep.subr.bf16.mxu0 %v9022
    %9719 = vmatpush1.bf16.msra.mxu0 %v9021
    %9720 = vmatprep.subr.bf16.mxu0 %v9019
    %9721 = vmatpush1.bf16.msra.mxu0 %v9018
    %9722 = vmatprep.subr.bf16.mxu0 %v9016
    %9723 = vmatpush1.bf16.msra.mxu0 %v9015
    %9724 = vmatprep.subr.bf16.mxu0 %v9013
    %9725 = vmatpush1.bf16.msra.mxu0 %v9012
    %9726 = vmatprep.subr.bf16.mxu0 %v9058
    %9727 = vmatpush2.bf16.msra.mxu0 %v9057
    %9728 = vmatprep.subr.bf16.mxu0 %v9055
    %9729 = vmatpush2.bf16.msra.mxu0 %v9054
    %9730 = vmatprep.subr.bf16.mxu0 %v9052
    %9731 = vmatpush2.bf16.msra.mxu0 %v9051
    %9732 = vmatprep.subr.bf16.mxu0 %v9049
    %9733 = vmatpush2.bf16.msra.mxu0 %v9048
    %9734 = vmatprep.subr.bf16.mxu0 %v9046
    %9735 = vmatpush2.bf16.msra.mxu0 %v9045
    %9736 = vmatprep.subr.bf16.mxu0 %v9043
    %9737 = vmatpush2.bf16.msra.mxu0 %v9042
    %9738 = vmatprep.subr.bf16.mxu0 %v9040
    %9739 = vmatpush2.bf16.msra.mxu0 %v9039
    %9740 = vmatprep.subr.bf16.mxu0 %v9037
    %9741 = vmatpush2.bf16.msra.mxu0 %v9036
    %9742 = vmatprep.mubr.bf16.mxu0 %v9597
    %9743 = vmatmul.mubr.bf16.gmra.mxu0 %v9596
    %v9744 = vpop.f32.mrf.mxu0
    %v9745 = vadd.f32 %v9692, %v9744
    %v9746 = vpop.f32.mrf.mxu0
    %v9747 = vadd.f32 %v9694, %v9746
    %v9748 = vpop.f32.mrf.mxu0
    %v9749 = vadd.f32 %v9696, %v9748
    %v9750 = vpop.f32.mrf.mxu0
    %v9751 = vadd.f32 %v9698, %v9750
    %9752 = vmatprep.mubr.bf16.mxu0 %v9603
    %9753 = vmatmul.mubr.bf16.gmra.mxu0 %v9602
    %v9754 = vpop.f32.mrf.mxu0
    %v9755 = vadd.f32 %v9702, %v9754
    %v9756 = vpop.f32.mrf.mxu0
    %v9757 = vadd.f32 %v9704, %v9756
    %v9758 = vpop.f32.mrf.mxu0
    %v9759 = vadd.f32 %v9706, %v9758
    %v9760 = vpop.f32.mrf.mxu0
    %v9761 = vadd.f32 %v9708, %v9760
    %9762 = vdwg.mxu0
    %9763 = vmatprep.subr.bf16.mxu0 0
    %9764 = vmatpush1.bf16.msra.mxu0 %v8939
    %9765 = vmatprep.subr.bf16.mxu0 0
    %9766 = vmatpush1.bf16.msra.mxu0 %v8936
    %9767 = vmatprep.subr.bf16.mxu0 0
    %9768 = vmatpush1.bf16.msra.mxu0 %v8933
    %9769 = vmatprep.subr.bf16.mxu0 0
    %9770 = vmatpush1.bf16.msra.mxu0 %v8930
    %9771 = vmatprep.subr.bf16.mxu0 0
    %9772 = vmatpush1.bf16.msra.mxu0 %v8927
    %9773 = vmatprep.subr.bf16.mxu0 0
    %9774 = vmatpush1.bf16.msra.mxu0 %v8924
    %9775 = vmatprep.subr.bf16.mxu0 0
    %9776 = vmatpush1.bf16.msra.mxu0 %v8921
    %9777 = vmatprep.subr.bf16.mxu0 0
    %9778 = vmatpush1.bf16.msra.mxu0 %v8918
    %9779 = vmatprep.subr.bf16.mxu0 0
    %9780 = vmatpush2.bf16.msra.mxu0 %v8963
    %9781 = vmatprep.subr.bf16.mxu0 0
    %9782 = vmatpush2.bf16.msra.mxu0 %v8960
    %9783 = vmatprep.subr.bf16.mxu0 0
    %9784 = vmatpush2.bf16.msra.mxu0 %v8957
    %9785 = vmatprep.subr.bf16.mxu0 0
    %9786 = vmatpush2.bf16.msra.mxu0 %v8954
    %9787 = vmatprep.subr.bf16.mxu0 0
    %9788 = vmatpush2.bf16.msra.mxu0 %v8951
    %9789 = vmatprep.subr.bf16.mxu0 0
    %9790 = vmatpush2.bf16.msra.mxu0 %v8948
    %9791 = vmatprep.subr.bf16.mxu0 0
    %9792 = vmatpush2.bf16.msra.mxu0 %v8945
    %9793 = vmatprep.subr.bf16.mxu0 0
    %9794 = vmatpush2.bf16.msra.mxu0 %v8942
    %9795 = vmatprep.mubr.bf16.mxu0 %v9593
    %9796 = vmatmul.mubr.bf16.gmra.mxu0 %v9592
    %v9797 = vpop.f32.mrf.mxu0
    %v9798 = vadd.f32 0.0, %v9797
    %v9799 = vpop.f32.mrf.mxu0
    %v9800 = vpop.f32.mrf.mxu0
    %v9801 = vadd.f32 0.0, %v9800
    %v9802 = vpop.f32.mrf.mxu0
    %9803 = vmatprep.mubr.bf16.mxu0 %v9599
    %9804 = vmatmul.mubr.bf16.gmra.mxu0 %v9598
    %v9805 = vpop.f32.mrf.mxu0
    %v9806 = vadd.f32 0.0, %v9805
    %v9807 = vpop.f32.mrf.mxu0
    %v9808 = vpop.f32.mrf.mxu0
    %v9809 = vadd.f32 0.0, %v9808
    %v9810 = vpop.f32.mrf.mxu0
    %9811 = vdwg.mxu0
    %9812 = vmatprep.subr.bf16.mxu0 0
    %9813 = vmatpush1.bf16.msra.mxu0 %v8987
    %9814 = vmatprep.subr.bf16.mxu0 0
    %9815 = vmatpush1.bf16.msra.mxu0 %v8984
    %9816 = vmatprep.subr.bf16.mxu0 0
    %9817 = vmatpush1.bf16.msra.mxu0 %v8981
    %9818 = vmatprep.subr.bf16.mxu0 0
    %9819 = vmatpush1.bf16.msra.mxu0 %v8978
    %9820 = vmatprep.subr.bf16.mxu0 0
    %9821 = vmatpush1.bf16.msra.mxu0 %v8975
    %9822 = vmatprep.subr.bf16.mxu0 0
    %9823 = vmatpush1.bf16.msra.mxu0 %v8972
    %9824 = vmatprep.subr.bf16.mxu0 0
    %9825 = vmatpush1.bf16.msra.mxu0 %v8969
    %9826 = vmatprep.subr.bf16.mxu0 0
    %9827 = vmatpush1.bf16.msra.mxu0 %v8966
    %9828 = vmatprep.subr.bf16.mxu0 0
    %9829 = vmatpush2.bf16.msra.mxu0 %v9011
    %9830 = vmatprep.subr.bf16.mxu0 0
    %9831 = vmatpush2.bf16.msra.mxu0 %v9008
    %9832 = vmatprep.subr.bf16.mxu0 0
    %9833 = vmatpush2.bf16.msra.mxu0 %v9005
    %9834 = vmatprep.subr.bf16.mxu0 0
    %9835 = vmatpush2.bf16.msra.mxu0 %v9002
    %9836 = vmatprep.subr.bf16.mxu0 0
    %9837 = vmatpush2.bf16.msra.mxu0 %v8999
    %9838 = vmatprep.subr.bf16.mxu0 0
    %9839 = vmatpush2.bf16.msra.mxu0 %v8996
    %9840 = vmatprep.subr.bf16.mxu0 0
    %9841 = vmatpush2.bf16.msra.mxu0 %v8993
    %9842 = vmatprep.subr.bf16.mxu0 0
    %9843 = vmatpush2.bf16.msra.mxu0 %v8990
    %9844 = vmatprep.mubr.bf16.mxu0 %v9595
    %9845 = vmatmul.mubr.bf16.gmra.mxu0 %v9594
    %v9846 = vpop.f32.mrf.mxu0
    %v9847 = vadd.f32 %v9798, %v9846
    %v9848 = vpop.f32.mrf.mxu0
    %v9849 = vpop.f32.mrf.mxu0
    %v9850 = vadd.f32 %v9801, %v9849
    %v9851 = vpop.f32.mrf.mxu0
    %9852 = vmatprep.mubr.bf16.mxu0 %v9601
    %9853 = vmatmul.mubr.bf16.gmra.mxu0 %v9600
    %v9854 = vpop.f32.mrf.mxu0
    %v9855 = vadd.f32 %v9806, %v9854
    %v9856 = vpop.f32.mrf.mxu0
    %v9857 = vpop.f32.mrf.mxu0
    %v9858 = vadd.f32 %v9809, %v9857
    %v9859 = vpop.f32.mrf.mxu0
    %9860 = vdwg.mxu0
    %9861 = vmatprep.subr.bf16.mxu0 0
    %9862 = vmatpush1.bf16.msra.mxu0 %v9035
    %9863 = vmatprep.subr.bf16.mxu0 0
    %9864 = vmatpush1.bf16.msra.mxu0 %v9032
    %9865 = vmatprep.subr.bf16.mxu0 0
    %9866 = vmatpush1.bf16.msra.mxu0 %v9029
    %9867 = vmatprep.subr.bf16.mxu0 0
    %9868 = vmatpush1.bf16.msra.mxu0 %v9026
    %9869 = vmatprep.subr.bf16.mxu0 0
    %9870 = vmatpush1.bf16.msra.mxu0 %v9023
    %9871 = vmatprep.subr.bf16.mxu0 0
    %9872 = vmatpush1.bf16.msra.mxu0 %v9020
    %9873 = vmatprep.subr.bf16.mxu0 0
    %9874 = vmatpush1.bf16.msra.mxu0 %v9017
    %9875 = vmatprep.subr.bf16.mxu0 0
    %9876 = vmatpush1.bf16.msra.mxu0 %v9014
    %9877 = vmatprep.subr.bf16.mxu0 0
    %9878 = vmatpush2.bf16.msra.mxu0 %v9059
    %9879 = vmatprep.subr.bf16.mxu0 0
    %9880 = vmatpush2.bf16.msra.mxu0 %v9056
    %9881 = vmatprep.subr.bf16.mxu0 0
    %9882 = vmatpush2.bf16.msra.mxu0 %v9053
    %9883 = vmatprep.subr.bf16.mxu0 0
    %9884 = vmatpush2.bf16.msra.mxu0 %v9050
    %9885 = vmatprep.subr.bf16.mxu0 0
    %9886 = vmatpush2.bf16.msra.mxu0 %v9047
    %9887 = vmatprep.subr.bf16.mxu0 0
    %9888 = vmatpush2.bf16.msra.mxu0 %v9044
    %9889 = vmatprep.subr.bf16.mxu0 0
    %9890 = vmatpush2.bf16.msra.mxu0 %v9041
    %9891 = vmatprep.subr.bf16.mxu0 0
    %9892 = vmatpush2.bf16.msra.mxu0 %v9038
    %9893 = vmatprep.mubr.bf16.mxu0 %v9597
    %9894 = vmatmul.mubr.bf16.gmra.mxu0 %v9596
    %v9895 = vpop.f32.mrf.mxu0
    %v9896 = vadd.f32 %v9847, %v9895
    %v9897 = vpop.f32.mrf.mxu0
    %v9898 = vpop.f32.mrf.mxu0
    %v9899 = vadd.f32 %v9850, %v9898
    %v9900 = vpop.f32.mrf.mxu0
    %9901 = vmatprep.mubr.bf16.mxu0 %v9603
    %9902 = vmatmul.mubr.bf16.gmra.mxu0 %v9602
    %v9903 = vpop.f32.mrf.mxu0
    %v9904 = vadd.f32 %v9855, %v9903
    %v9905 = vpop.f32.mrf.mxu0
    %v9906 = vpop.f32.mrf.mxu0
    %v9907 = vadd.f32 %v9858, %v9906
    %v9908 = vpop.f32.mrf.mxu0
    %9909 = vdwg.mxu0
    %v9910 = vtanh.pop %v9345
    %v9911 = vtanh.pop %v9347
    %v9912 = vtanh.pop %v9496
    %v9913 = vtanh.pop %v9349
    %v9914 = vtanh.pop %v9351
    %v9915 = vtanh.pop %v9499
    %v9916 = vtanh.pop %v9355
    %v9917 = vtanh.pop %v9357
    %v9918 = vtanh.pop %v9504
    %v9919 = vtanh.pop %v9359
    %v9920 = vtanh.pop %v9361
    %v9921 = vtanh.pop %v9507
    %9922 = vst [vmem:[%s17] sm:$0xff] %v9910
    %9923 = vst [vmem:[%s17 + $0x8] sm:$0xff] %v9911
    %9924 = vst [vmem:[%s17 + $0x10] sm:$0xff] %v9912
    %9925 = vst [vmem:[%s17 + $0x18] sm:$0xff] %v9913
    %9926 = vst [vmem:[%s17 + $0x20] sm:$0xff] %v9914
    %9927 = vst [vmem:[%s17 + $0x28] sm:$0xff] %v9915
    %9928 = vst [vmem:[%s17 + $0x30] sm:$0xff] %v9916
    %9929 = vst [vmem:[%s17 + $0x38] sm:$0xff] %v9917
    %9930 = vst [vmem:[%s17 + $0x40] sm:$0xff] %v9918
    %9931 = vst [vmem:[%s17 + $0x48] sm:$0xff] %v9919
    %9932 = vst [vmem:[%s17 + $0x50] sm:$0xff] %v9920
    %9933 = vst [vmem:[%s17 + $0x58] sm:$0xff] %v9921
    %v9934 = vtanh.pop %v9745
    %v9935 = vtanh.pop %v9747
    %v9936 = vtanh.pop %v9896
    %v9937 = vtanh.pop %v9749
    %v9938 = vtanh.pop %v9751
    %v9939 = vtanh.pop %v9899
    %v9940 = vtanh.pop %v9755
    %v9941 = vtanh.pop %v9757
    %v9942 = vtanh.pop %v9904
    %v9943 = vtanh.pop %v9759
    %v9944 = vtanh.pop %v9761
    %v9945 = vtanh.pop %v9907
    %s9946 = scalar_lea.vmem %s17, 96
    %9947 = vst [vmem:[%s9946] sm:$0xff] %v9934
    %9948 = vst [vmem:[%s9946 + $0x8] sm:$0xff] %v9935
    %9949 = vst [vmem:[%s9946 + $0x10] sm:$0xff] %v9936
    %9950 = vst [vmem:[%s9946 + $0x18] sm:$0xff] %v9937
    %9951 = vst [vmem:[%s9946 + $0x20] sm:$0xff] %v9938
    %9952 = vst [vmem:[%s9946 + $0x28] sm:$0xff] %v9939
    %9953 = vst [vmem:[%s9946 + $0x30] sm:$0xff] %v9940
    %9954 = vst [vmem:[%s9946 + $0x38] sm:$0xff] %v9941
    %9955 = vst [vmem:[%s9946 + $0x40] sm:$0xff] %v9942
    %9956 = vst [vmem:[%s9946 + $0x48] sm:$0xff] %v9943
    %9957 = vst [vmem:[%s9946 + $0x50] sm:$0xff] %v9944
    %9958 = vst [vmem:[%s9946 + $0x58] sm:$0xff] %v9945
    // Predicated region
    $region114: #{generator_forward.1} parent=1 // pred_check
      _
    $region115: #{generator_forward.1} parent=1 // pred_check_branch
      %9960 = sbr.rel (0) target = $region117
    $region116: #{generator_forward.1} parent=1 // pred_region
      _
    $region117: #{generator_forward.1} parent=1 // pred_fallthru
      _
    // Predicated region
    $region118: #{generator_forward.1} parent=1 // pred_check
      _
    $region119: #{generator_forward.1} parent=1 // pred_check_branch
      %9962 = sbr.rel (0) target = $region121
    $region120: #{generator_forward.1} parent=1 // pred_region
      _
    $region121: #{generator_forward.1} parent=1 // pred_fallthru
      _
    %9963 = vsyncpa [#allocation7], 1
    %9964 = vsyncpa [#allocation9], 1
    %9965 = vsyncpa [#allocation12], 1
    %9966 = vsyncpa [#allocation15], 1
    %9967 = vsyncpa [#allocation18], 1
    %9968 = vsyncpa [#allocation21], 1

</llo_original>
